<compile_context>
chip_gen: v7x
topology: tpu7x:2x2x1
jax: 0.10.0
libtpu: 0.0.40
codegen_flags: <defaults>
</compile_context>

<pallas_src>
import jax
import jax.numpy as jnp
from jax.experimental import pallas as pl
from jax.experimental.pallas import tpu as pltpu

INPUT_DIM = 784
HIDDEN_DIM = INPUT_DIM // 2   # 392
LATENT_DIM = 64

# Lane-dense (multiple-of-128) padded internal dims.
HIDDEN_PAD = 512
LATENT_PAD = 128


def ae_kernel(x_ref,
              w1_ref, b1_ref,
              w2_ref, b2_ref,
              w3_ref, b3_ref,
              w4_ref, b4_ref,
              o_ref):
    """Full AE forward for one batch tile: 4 chained bf16 matmuls + activations."""
    x = x_ref[...]                                                 # bf16 (bt, 784)

    # Encoder
    h1 = jnp.dot(x, w1_ref[...], preferred_element_type=jnp.float32) + b1_ref[...]
    h1 = jnp.maximum(h1, 0.0).astype(jnp.bfloat16)                 # ReLU, bf16 for next MXU op
    z = jnp.dot(h1, w2_ref[...], preferred_element_type=jnp.float32) + b2_ref[...]
    z = jnp.maximum(z, 0.0).astype(jnp.bfloat16)                   # ReLU

    # Decoder
    h3 = jnp.dot(z, w3_ref[...], preferred_element_type=jnp.float32) + b3_ref[...]
    h3 = jnp.maximum(h3, 0.0).astype(jnp.bfloat16)                 # ReLU
    y = jnp.dot(h3, w4_ref[...], preferred_element_type=jnp.float32) + b4_ref[...]
    o_ref[...] = jnp.tanh(y)                                       # Tanh (EUP), f32 out


def ae_forward(x, kparams, *, batch_tile=256):
    """x: (B, INPUT_DIM) float-like.  kparams: padded bf16 weights / f32 biases
    as produced by prepare_params()."""
    B, D = x.shape
    assert D == INPUT_DIM

    bt = batch_tile
    B_pad = ((B + bt - 1) // bt) * bt

    x_bf16 = x.astype(jnp.bfloat16)
    if B_pad != B:
        x_bf16 = jnp.pad(x_bf16, ((0, B_pad - B), (0, 0)))

    w1, b1 = kparams["w1"], kparams["b1"]
    w2, b2 = kparams["w2"], kparams["b2"]
    w3, b3 = kparams["w3"], kparams["b3"]
    w4, b4 = kparams["w4"], kparams["b4"]

    # Weights/biases (~1.8 MB bf16 total) stay fully resident in VMEM; only the
    # batch dimension is tiled across the grid.
    full = lambda shape: pl.BlockSpec(shape, lambda i: (0, 0))

    out = pl.pallas_call(
        ae_kernel,
        out_shape=jax.ShapeDtypeStruct((B_pad, INPUT_DIM), jnp.float32),
        grid_spec=pltpu.PrefetchScalarGridSpec(
            num_scalar_prefetch=0,
            grid=(B_pad // bt,),
            in_specs=[
                pl.BlockSpec((bt, INPUT_DIM), lambda i: (i, 0)),  # x tile
                full(w1.shape), full(b1.shape),
                full(w2.shape), full(b2.shape),
                full(w3.shape), full(b3.shape),
                full(w4.shape), full(b4.shape),
            ],
            out_specs=pl.BlockSpec((bt, INPUT_DIM), lambda i: (i, 0)),
        ),
        compiler_params=pltpu.CompilerParams(
            dimension_semantics=("parallel",),
        ),
    )(x_bf16, w1, b1, w2, b2, w3, b3, w4, b4)

    return out[:B]


def init_params(key):
    """Deterministic f32 init mimicking nn.Linear's uniform(-1/sqrt(fan_in), ...).
    Returns UNpadded (in, out) weights and (1, out) biases."""
    dims = [
        (INPUT_DIM, HIDDEN_DIM),   # encoder[0]
        (HIDDEN_DIM, LATENT_DIM),  # encoder[2]
        (LATENT_DIM, HIDDEN_DIM),  # decoder[0]
        (HIDDEN_DIM, INPUT_DIM),   # decoder[2]
    ]
    params = {}
    keys = jax.random.split(key, 2 * len(dims))
    for idx, (fan_in, fan_out) in enumerate(dims):
        bound = 1.0 / jnp.sqrt(fan_in)
        w = jax.random.uniform(keys[2 * idx], (fan_in, fan_out),
                               minval=-bound, maxval=bound, dtype=jnp.float32)
        b = jax.random.uniform(keys[2 * idx + 1], (1, fan_out),
                               minval=-bound, maxval=bound, dtype=jnp.float32)
        params[f"w{idx + 1}"] = w
        params[f"b{idx + 1}"] = b
    return params


def prepare_params(params):
    """Zero-pad internal dims to multiples of 128 and cast weights to bf16.

    Zero padding keeps the math exact: padded hidden/latent units see zero
    weights and zero bias, so ReLU(0)=0 and their outgoing (zero) weights
    contribute nothing downstream."""
    def pad_w(w, in_pad, out_pad):
        fi, fo = w.shape
        return jnp.pad(w, ((0, in_pad - fi), (0, out_pad - fo))).astype(jnp.bfloat16)

    def pad_b(b, out_pad):
        return jnp.pad(b, ((0, 0), (0, out_pad - b.shape[1]))).astype(jnp.float32)

    return {
        "w1": pad_w(params["w1"], INPUT_DIM, HIDDEN_PAD),
        "b1": pad_b(params["b1"], HIDDEN_PAD),
        "w2": pad_w(params["w2"], HIDDEN_PAD, LATENT_PAD),
        "b2": pad_b(params["b2"], LATENT_PAD),
        "w3": pad_w(params["w3"], LATENT_PAD, HIDDEN_PAD),
        "b3": pad_b(params["b3"], HIDDEN_PAD),
        "w4": pad_w(params["w4"], HIDDEN_PAD, INPUT_DIM),
        "b4": pad_b(params["b4"], INPUT_DIM),
    }


def ae_forward_ref(x, p):
    """Pure-JAX f32 reference (unpadded params) for correctness checking."""
    h = jnp.maximum(x @ p["w1"] + p["b1"], 0.0)
    h = jnp.maximum(h @ p["w2"] + p["b2"], 0.0)
    h = jnp.maximum(h @ p["w3"] + p["b3"], 0.0)
    return jnp.tanh(h @ p["w4"] + p["b4"])


if __name__ == "__main__":
    key = jax.random.PRNGKey(0)
    pkey, xkey = jax.random.split(key)

    params = init_params(pkey)            # f32, unpadded (reference)
    kparams = prepare_params(params)      # bf16 weights / f32 biases, lane-padded

    # B=512 with batch_tile=256 -> grid of 2 ("parallel"), so the tiling /
    # pipelining path is actually exercised while staying small and fast.
    B = 512
    x = jax.random.normal(xkey, (B, INPUT_DIM), dtype=jnp.float32)

    out = ae_forward(x, kparams, batch_tile=256)
    out = jax.block_until_ready(out)

    ref = ae_forward_ref(x, params)
    assert out.shape == (B, INPUT_DIM)
    # bf16 matmul operands with f32 accumulation vs. pure-f32 reference:
    # allow bf16-level tolerance (outputs are tanh-bounded in [-1, 1]).
    assert jnp.allclose(out, ref, atol=3e-2, rtol=3e-2), "mismatch vs reference"

    print("KERNEL_OK")
</pallas_src>

<mosaic_0001>
module attributes {stable_mosaic.version = 11 : i64} {
  func.func @ae_kernel(%arg0: i32, %arg1: memref<256x784xbf16, #tpu.memory_space<vmem>>, %arg2: memref<784x512xbf16, #tpu.memory_space<vmem>>, %arg3: memref<1x512xf32, #tpu.memory_space<vmem>>, %arg4: memref<512x128xbf16, #tpu.memory_space<vmem>>, %arg5: memref<1x128xf32, #tpu.memory_space<vmem>>, %arg6: memref<128x512xbf16, #tpu.memory_space<vmem>>, %arg7: memref<1x512xf32, #tpu.memory_space<vmem>>, %arg8: memref<512x784xbf16, #tpu.memory_space<vmem>>, %arg9: memref<1x784xf32, #tpu.memory_space<vmem>>, %arg10: memref<256x784xf32, #tpu.memory_space<vmem>>) attributes {dimension_semantics = [#tpu.dimension_semantics<parallel>], iteration_bounds = array<i64: 2>, scalar_prefetch = 0 : i64, scratch_operands = 0 : i64, tpu.core_type = #tpu.core_type<tc>, window_params = [{transform_indices = @transform_0, window_bounds = array<i64: 256, 784>}, {pipeline_mode = #tpu.pipeline_mode<synchronous>, transform_indices = @transform_1, window_bounds = array<i64: 784, 512>}, {pipeline_mode = #tpu.pipeline_mode<synchronous>, transform_indices = @transform_2, window_bounds = array<i64: 1, 512>}, {pipeline_mode = #tpu.pipeline_mode<synchronous>, transform_indices = @transform_3, window_bounds = array<i64: 512, 128>}, {pipeline_mode = #tpu.pipeline_mode<synchronous>, transform_indices = @transform_4, window_bounds = array<i64: 1, 128>}, {pipeline_mode = #tpu.pipeline_mode<synchronous>, transform_indices = @transform_5, window_bounds = array<i64: 128, 512>}, {pipeline_mode = #tpu.pipeline_mode<synchronous>, transform_indices = @transform_6, window_bounds = array<i64: 1, 512>}, {pipeline_mode = #tpu.pipeline_mode<synchronous>, transform_indices = @transform_7, window_bounds = array<i64: 512, 784>}, {pipeline_mode = #tpu.pipeline_mode<synchronous>, transform_indices = @transform_8, window_bounds = array<i64: 1, 784>}, {transform_indices = @transform_9, window_bounds = array<i64: 256, 784>}]} {
    %c0 = arith.constant 0 : index
    %c0_0 = arith.constant 0 : index
    %0 = vector.load %arg1[%c0, %c0_0] : memref<256x784xbf16, #tpu.memory_space<vmem>>, vector<256x784xbf16>
    %c0_1 = arith.constant 0 : index
    %c0_2 = arith.constant 0 : index
    %1 = vector.load %arg2[%c0_1, %c0_2] : memref<784x512xbf16, #tpu.memory_space<vmem>>, vector<784x512xbf16>
    %cst = arith.constant dense<0.000000e+00> : vector<256x512xf32>
    %2 = tpu.matmul %0, %1, %cst {dimension_numbers = #tpu.dot_dimension_numbers<[1], [0], [0], [1], [0, 0, 1, 1], [], []>} : vector<256x784xbf16>, vector<784x512xbf16>, vector<256x512xf32> -> vector<256x512xf32>
    %c0_3 = arith.constant 0 : index
    %c0_4 = arith.constant 0 : index
    %3 = vector.load %arg3[%c0_3, %c0_4] : memref<1x512xf32, #tpu.memory_space<vmem>>, vector<1x512xf32>
    %4 = vector.broadcast %3 : vector<1x512xf32> to vector<256x512xf32>
    %5 = arith.addf %2, %4 : vector<256x512xf32>
    %cst_5 = arith.constant 0.000000e+00 : f32
    %6 = vector.broadcast %cst_5 : f32 to vector<256x512xf32>
    %7 = arith.maximumf %5, %6 : vector<256x512xf32>
    %8 = arith.truncf %7 : vector<256x512xf32> to vector<256x512xbf16>
    %c0_6 = arith.constant 0 : index
    %c0_7 = arith.constant 0 : index
    %9 = vector.load %arg4[%c0_6, %c0_7] : memref<512x128xbf16, #tpu.memory_space<vmem>>, vector<512x128xbf16>
    %cst_8 = arith.constant dense<0.000000e+00> : vector<256x128xf32>
    %10 = tpu.matmul %8, %9, %cst_8 {dimension_numbers = #tpu.dot_dimension_numbers<[1], [0], [0], [1], [0, 0, 1, 1], [], []>} : vector<256x512xbf16>, vector<512x128xbf16>, vector<256x128xf32> -> vector<256x128xf32>
    %c0_9 = arith.constant 0 : index
    %c0_10 = arith.constant 0 : index
    %11 = vector.load %arg5[%c0_9, %c0_10] : memref<1x128xf32, #tpu.memory_space<vmem>>, vector<1x128xf32>
    %12 = vector.broadcast %11 : vector<1x128xf32> to vector<256x128xf32>
    %13 = arith.addf %10, %12 : vector<256x128xf32>
    %cst_11 = arith.constant 0.000000e+00 : f32
    %14 = vector.broadcast %cst_11 : f32 to vector<256x128xf32>
    %15 = arith.maximumf %13, %14 : vector<256x128xf32>
    %16 = arith.truncf %15 : vector<256x128xf32> to vector<256x128xbf16>
    %c0_12 = arith.constant 0 : index
    %c0_13 = arith.constant 0 : index
    %17 = vector.load %arg6[%c0_12, %c0_13] : memref<128x512xbf16, #tpu.memory_space<vmem>>, vector<128x512xbf16>
    %cst_14 = arith.constant dense<0.000000e+00> : vector<256x512xf32>
    %18 = tpu.matmul %16, %17, %cst_14 {dimension_numbers = #tpu.dot_dimension_numbers<[1], [0], [0], [1], [0, 0, 1, 1], [], []>} : vector<256x128xbf16>, vector<128x512xbf16>, vector<256x512xf32> -> vector<256x512xf32>
    %c0_15 = arith.constant 0 : index
    %c0_16 = arith.constant 0 : index
    %19 = vector.load %arg7[%c0_15, %c0_16] : memref<1x512xf32, #tpu.memory_space<vmem>>, vector<1x512xf32>
    %20 = vector.broadcast %19 : vector<1x512xf32> to vector<256x512xf32>
    %21 = arith.addf %18, %20 : vector<256x512xf32>
    %cst_17 = arith.constant 0.000000e+00 : f32
    %22 = vector.broadcast %cst_17 : f32 to vector<256x512xf32>
    %23 = arith.maximumf %21, %22 : vector<256x512xf32>
    %24 = arith.truncf %23 : vector<256x512xf32> to vector<256x512xbf16>
    %c0_18 = arith.constant 0 : index
    %c0_19 = arith.constant 0 : index
    %25 = vector.load %arg8[%c0_18, %c0_19] : memref<512x784xbf16, #tpu.memory_space<vmem>>, vector<512x784xbf16>
    %cst_20 = arith.constant dense<0.000000e+00> : vector<256x784xf32>
    %26 = tpu.matmul %24, %25, %cst_20 {dimension_numbers = #tpu.dot_dimension_numbers<[1], [0], [0], [1], [0, 0, 1, 1], [], []>} : vector<256x512xbf16>, vector<512x784xbf16>, vector<256x784xf32> -> vector<256x784xf32>
    %c0_21 = arith.constant 0 : index
    %c0_22 = arith.constant 0 : index
    %27 = vector.load %arg9[%c0_21, %c0_22] : memref<1x784xf32, #tpu.memory_space<vmem>>, vector<1x784xf32>
    %28 = vector.broadcast %27 : vector<1x784xf32> to vector<256x784xf32>
    %29 = arith.addf %26, %28 : vector<256x784xf32>
    %30 = math.tanh %29 : vector<256x784xf32>
    %c0_23 = arith.constant 0 : index
    %c0_24 = arith.constant 0 : index
    %31 = vector.load %arg10[%c0_23, %c0_24] : memref<256x784xf32, #tpu.memory_space<vmem>>, vector<256x784xf32>
    tpu.vector_store %arg10[%c0_23, %c0_24], %30 {strides = array<i32>} : memref<256x784xf32, #tpu.memory_space<vmem>>, vector<256x784xf32>,
    return
  }
  func.func @transform_0(%arg0: i32) -> (i32, i32) {
    %c0_i32 = arith.constant 0 : i32
    %c0_i32_0 = arith.constant 0 : i32
    return %arg0, %c0_i32 : i32, i32
  }
  func.func @transform_1(%arg0: i32) -> (i32, i32) {
    %c0_i32 = arith.constant 0 : i32
    %c0_i32_0 = arith.constant 0 : i32
    %c0_i32_1 = arith.constant 0 : i32
    return %c0_i32, %c0_i32_0 : i32, i32
  }
  func.func @transform_2(%arg0: i32) -> (i32, i32) {
    %c0_i32 = arith.constant 0 : i32
    %c0_i32_0 = arith.constant 0 : i32
    %c0_i32_1 = arith.constant 0 : i32
    return %c0_i32, %c0_i32_0 : i32, i32
  }
  func.func @transform_3(%arg0: i32) -> (i32, i32) {
    %c0_i32 = arith.constant 0 : i32
    %c0_i32_0 = arith.constant 0 : i32
    %c0_i32_1 = arith.constant 0 : i32
    return %c0_i32, %c0_i32_0 : i32, i32
  }
  func.func @transform_4(%arg0: i32) -> (i32, i32) {
    %c0_i32 = arith.constant 0 : i32
    %c0_i32_0 = arith.constant 0 : i32
    %c0_i32_1 = arith.constant 0 : i32
    return %c0_i32, %c0_i32_0 : i32, i32
  }
  func.func @transform_5(%arg0: i32) -> (i32, i32) {
    %c0_i32 = arith.constant 0 : i32
    %c0_i32_0 = arith.constant 0 : i32
    %c0_i32_1 = arith.constant 0 : i32
    return %c0_i32, %c0_i32_0 : i32, i32
  }
  func.func @transform_6(%arg0: i32) -> (i32, i32) {
    %c0_i32 = arith.constant 0 : i32
    %c0_i32_0 = arith.constant 0 : i32
    %c0_i32_1 = arith.constant 0 : i32
    return %c0_i32, %c0_i32_0 : i32, i32
  }
  func.func @transform_7(%arg0: i32) -> (i32, i32) {
    %c0_i32 = arith.constant 0 : i32
    %c0_i32_0 = arith.constant 0 : i32
    %c0_i32_1 = arith.constant 0 : i32
    return %c0_i32, %c0_i32_0 : i32, i32
  }
  func.func @transform_8(%arg0: i32) -> (i32, i32) {
    %c0_i32 = arith.constant 0 : i32
    %c0_i32_0 = arith.constant 0 : i32
    %c0_i32_1 = arith.constant 0 : i32
    return %c0_i32, %c0_i32_0 : i32, i32
  }
  func.func @transform_9(%arg0: i32) -> (i32, i32) {
    %c0_i32 = arith.constant 0 : i32
    %c0_i32_0 = arith.constant 0 : i32
    return %arg0, %c0_i32 : i32, i32
  }
}

</mosaic_0001>

<llo_original>
// kernel: tpu_custom_call.1
$region0: #{tpu_custom_call.1}
  #allocation0 [shape = 'u32[]', space=smem, size = 0x4, offset = 0x4, fixed_abs, tag = 'smem constant byte address 0x4 - core index']
  #allocation1 [shape = 'u32[144,128]{1,0:T(1,128)}', space=vmem, size = 0x12000, scoped, tag = 'internal scratch']
  %s0 = inlined_call_operand.vmem [shape: bf16[512,784], index: 0, kind: input, shape index: {}]
  %s1 = inlined_call_operand.vmem [shape: bf16[784,512], index: 1, kind: input, shape index: {}]
  %s2 = inlined_call_operand.vmem [shape: f32[1,512], index: 2, kind: input, shape index: {}]
  %s3 = inlined_call_operand.vmem [shape: bf16[512,128], index: 3, kind: input, shape index: {}]
  %s4 = inlined_call_operand.vmem [shape: f32[1,128], index: 4, kind: input, shape index: {}]
  %s5 = inlined_call_operand.vmem [shape: bf16[128,512], index: 5, kind: input, shape index: {}]
  %s6 = inlined_call_operand.vmem [shape: f32[1,512], index: 6, kind: input, shape index: {}]
  %s7 = inlined_call_operand.vmem [shape: bf16[512,784], index: 7, kind: input, shape index: {}]
  %s8 = inlined_call_operand.vmem [shape: f32[1,784], index: 8, kind: input, shape index: {}]
  %s9 = inlined_call_operand.vmem [shape: f32[512,784], index: 9, kind: output, shape index: {}]
  %s10 = sld [smem:[#allocation0]]
  $region69: #{tpu_custom_call.1} parent=0
    _
  %s12 = ssub.s32 1, %s10
  %s13 = scalar_select 0, %s12, %s10
  loop: start=0, step=1, limit=4
  $region2: #{tpu_custom_call.1} parent=0 // loop_pre_header
    _
  $region3: #{tpu_custom_call.1} parent=0 // loop_header
    %s15 = sphi 0, %s19
    %p16 = scmp.ge.s32.totalorder %s15, 4
    %s25 = sphi 0, %s27
    %s28 = sphi 0, %s25
    %s29 = sphi 0, %s28
    %s45 = sphi 0, %s29
    %s49 = sphi 0, %s49
    %s51 = sphi 0, %s49
    %s52 = sphi 0, %s51
    %s66 = sphi 0, %s52
    %s70 = sphi 0, %s70
    %s72 = sphi 0, %s70
    %s73 = sphi 0, %s72
    %s87 = sphi 0, %s73
    %s91 = sphi 0, %s91
    %s93 = sphi 0, %s91
    %s94 = sphi 0, %s93
    %s108 = sphi 0, %s94
    %s112 = sphi 0, %s112
    %s114 = sphi 0, %s112
    %s115 = sphi 0, %s114
    %s129 = sphi 0, %s115
    %s133 = sphi 0, %s133
    %s135 = sphi 0, %s133
    %s136 = sphi 0, %s135
    %s150 = sphi 0, %s136
    %s154 = sphi 0, %s154
    %s156 = sphi 0, %s154
    %s157 = sphi 0, %s156
    %s171 = sphi 0, %s157
    %s175 = sphi 0, %s175
    %s177 = sphi 0, %s175
    %s178 = sphi 0, %s177
    %s192 = sphi 0, %s178
    %s196 = sphi 0, %s196
    %s198 = sphi 0, %s196
    %s199 = sphi 0, %s198
    %s213 = sphi 0, %s199
    %s219 = sphi 0, %s221
    %s222 = sphi 0, %s219
    %s223 = sphi 0, %s222
    %s239 = sphi 0, %s223
  $region4: #{tpu_custom_call.1} parent=0 // loop_header_branch
    %18 = sbr.rel (%p16) target = $region8
  $region5: #{tpu_custom_call.1} parent=0 // loop_body
    %s20 = ssub.s32 %s15, 1
    %s21 = ssub.s32 %s15, 2
    %s22 = sadd.s32 %s15, 1
    %s23 = ssub.s32 %s15, %s22
    %p24 = scmp.eq.s32.totalorder %s23, 0
    %s26 = sadd.s32 %s25, 1
    %s27 = scalar_select %p24, %s25, %s26
    %p30 = pneg %p24
    %p31 = scmp.eq.s32.totalorder %s15, 1
    %p32 = por %p30, %p31
    %p33 = scmp.ne.s32.totalorder %s25, %s28
    %p34 = scmp.eq.s32.totalorder %s15, 0
    %p35 = por %p33, %p34
    %p36 = scmp.ne.s32.totalorder %s25, %s28
    %p37 = scmp.eq.s32.totalorder %s20, 1
    %p38 = por %p36, %p37
    %p39 = scmp.ne.s32.totalorder %s28, %s29
    %p40 = scmp.eq.s32.totalorder %s20, 0
    %p41 = por %p39, %p40
    %p42 = scmp.ne.s32.totalorder %s28, %s29
    %p43 = scmp.eq.s32.totalorder %s21, 1
    %p44 = por %p42, %p43
    %p46 = scmp.ne.s32.totalorder %s29, %s45
    %p47 = scmp.eq.s32.totalorder %s21, 0
    %p48 = por %p46, %p47
    %s50 = sadd.s32 %s49, 1
    %p53 = scmp.eq.s32.totalorder %s15, 1
    %p54 = scmp.ne.s32.totalorder %s49, %s51
    %p55 = scmp.eq.s32.totalorder %s15, 0
    %p56 = por %p54, %p55
    %p57 = scmp.ne.s32.totalorder %s49, %s51
    %p58 = scmp.eq.s32.totalorder %s20, 1
    %p59 = por %p57, %p58
    %p60 = scmp.ne.s32.totalorder %s51, %s52
    %p61 = scmp.eq.s32.totalorder %s20, 0
    %p62 = por %p60, %p61
    %p63 = scmp.ne.s32.totalorder %s51, %s52
    %p64 = scmp.eq.s32.totalorder %s21, 1
    %p65 = por %p63, %p64
    %p67 = scmp.ne.s32.totalorder %s52, %s66
    %p68 = scmp.eq.s32.totalorder %s21, 0
    %p69 = por %p67, %p68
    %s71 = sadd.s32 %s70, 1
    %p74 = scmp.eq.s32.totalorder %s15, 1
    %p75 = scmp.ne.s32.totalorder %s70, %s72
    %p76 = scmp.eq.s32.totalorder %s15, 0
    %p77 = por %p75, %p76
    %p78 = scmp.ne.s32.totalorder %s70, %s72
    %p79 = scmp.eq.s32.totalorder %s20, 1
    %p80 = por %p78, %p79
    %p81 = scmp.ne.s32.totalorder %s72, %s73
    %p82 = scmp.eq.s32.totalorder %s20, 0
    %p83 = por %p81, %p82
    %p84 = scmp.ne.s32.totalorder %s72, %s73
    %p85 = scmp.eq.s32.totalorder %s21, 1
    %p86 = por %p84, %p85
    %p88 = scmp.ne.s32.totalorder %s73, %s87
    %p89 = scmp.eq.s32.totalorder %s21, 0
    %p90 = por %p88, %p89
    %s92 = sadd.s32 %s91, 1
    %p95 = scmp.eq.s32.totalorder %s15, 1
    %p96 = scmp.ne.s32.totalorder %s91, %s93
    %p97 = scmp.eq.s32.totalorder %s15, 0
    %p98 = por %p96, %p97
    %p99 = scmp.ne.s32.totalorder %s91, %s93
    %p100 = scmp.eq.s32.totalorder %s20, 1
    %p101 = por %p99, %p100
    %p102 = scmp.ne.s32.totalorder %s93, %s94
    %p103 = scmp.eq.s32.totalorder %s20, 0
    %p104 = por %p102, %p103
    %p105 = scmp.ne.s32.totalorder %s93, %s94
    %p106 = scmp.eq.s32.totalorder %s21, 1
    %p107 = por %p105, %p106
    %p109 = scmp.ne.s32.totalorder %s94, %s108
    %p110 = scmp.eq.s32.totalorder %s21, 0
    %p111 = por %p109, %p110
    %s113 = sadd.s32 %s112, 1
    %p116 = scmp.eq.s32.totalorder %s15, 1
    %p117 = scmp.ne.s32.totalorder %s112, %s114
    %p118 = scmp.eq.s32.totalorder %s15, 0
    %p119 = por %p117, %p118
    %p120 = scmp.ne.s32.totalorder %s112, %s114
    %p121 = scmp.eq.s32.totalorder %s20, 1
    %p122 = por %p120, %p121
    %p123 = scmp.ne.s32.totalorder %s114, %s115
    %p124 = scmp.eq.s32.totalorder %s20, 0
    %p125 = por %p123, %p124
    %p126 = scmp.ne.s32.totalorder %s114, %s115
    %p127 = scmp.eq.s32.totalorder %s21, 1
    %p128 = por %p126, %p127
    %p130 = scmp.ne.s32.totalorder %s115, %s129
    %p131 = scmp.eq.s32.totalorder %s21, 0
    %p132 = por %p130, %p131
    %s134 = sadd.s32 %s133, 1
    %p137 = scmp.eq.s32.totalorder %s15, 1
    %p138 = scmp.ne.s32.totalorder %s133, %s135
    %p139 = scmp.eq.s32.totalorder %s15, 0
    %p140 = por %p138, %p139
    %p141 = scmp.ne.s32.totalorder %s133, %s135
    %p142 = scmp.eq.s32.totalorder %s20, 1
    %p143 = por %p141, %p142
    %p144 = scmp.ne.s32.totalorder %s135, %s136
    %p145 = scmp.eq.s32.totalorder %s20, 0
    %p146 = por %p144, %p145
    %p147 = scmp.ne.s32.totalorder %s135, %s136
    %p148 = scmp.eq.s32.totalorder %s21, 1
    %p149 = por %p147, %p148
    %p151 = scmp.ne.s32.totalorder %s136, %s150
    %p152 = scmp.eq.s32.totalorder %s21, 0
    %p153 = por %p151, %p152
    %s155 = sadd.s32 %s154, 1
    %p158 = scmp.eq.s32.totalorder %s15, 1
    %p159 = scmp.ne.s32.totalorder %s154, %s156
    %p160 = scmp.eq.s32.totalorder %s15, 0
    %p161 = por %p159, %p160
    %p162 = scmp.ne.s32.totalorder %s154, %s156
    %p163 = scmp.eq.s32.totalorder %s20, 1
    %p164 = por %p162, %p163
    %p165 = scmp.ne.s32.totalorder %s156, %s157
    %p166 = scmp.eq.s32.totalorder %s20, 0
    %p167 = por %p165, %p166
    %p168 = scmp.ne.s32.totalorder %s156, %s157
    %p169 = scmp.eq.s32.totalorder %s21, 1
    %p170 = por %p168, %p169
    %p172 = scmp.ne.s32.totalorder %s157, %s171
    %p173 = scmp.eq.s32.totalorder %s21, 0
    %p174 = por %p172, %p173
    %s176 = sadd.s32 %s175, 1
    %p179 = scmp.eq.s32.totalorder %s15, 1
    %p180 = scmp.ne.s32.totalorder %s175, %s177
    %p181 = scmp.eq.s32.totalorder %s15, 0
    %p182 = por %p180, %p181
    %p183 = scmp.ne.s32.totalorder %s175, %s177
    %p184 = scmp.eq.s32.totalorder %s20, 1
    %p185 = por %p183, %p184
    %p186 = scmp.ne.s32.totalorder %s177, %s178
    %p187 = scmp.eq.s32.totalorder %s20, 0
    %p188 = por %p186, %p187
    %p189 = scmp.ne.s32.totalorder %s177, %s178
    %p190 = scmp.eq.s32.totalorder %s21, 1
    %p191 = por %p189, %p190
    %p193 = scmp.ne.s32.totalorder %s178, %s192
    %p194 = scmp.eq.s32.totalorder %s21, 0
    %p195 = por %p193, %p194
    %s197 = sadd.s32 %s196, 1
    %p200 = scmp.eq.s32.totalorder %s15, 1
    %p201 = scmp.ne.s32.totalorder %s196, %s198
    %p202 = scmp.eq.s32.totalorder %s15, 0
    %p203 = por %p201, %p202
    %p204 = scmp.ne.s32.totalorder %s196, %s198
    %p205 = scmp.eq.s32.totalorder %s20, 1
    %p206 = por %p204, %p205
    %p207 = scmp.ne.s32.totalorder %s198, %s199
    %p208 = scmp.eq.s32.totalorder %s20, 0
    %p209 = por %p207, %p208
    %p210 = scmp.ne.s32.totalorder %s198, %s199
    %p211 = scmp.eq.s32.totalorder %s21, 1
    %p212 = por %p210, %p211
    %p214 = scmp.ne.s32.totalorder %s199, %s213
    %p215 = scmp.eq.s32.totalorder %s21, 0
    %p216 = por %p214, %p215
    %s217 = ssub.s32 %s15, %s22
    %p218 = scmp.eq.s32.totalorder %s217, 0
    %s220 = sadd.s32 %s219, 1
    %s221 = scalar_select %p218, %s219, %s220
    %p224 = pneg %p218
    %p225 = scmp.eq.s32.totalorder %s15, 1
    %p226 = por %p224, %p225
    %p227 = scmp.ne.s32.totalorder %s219, %s222
    %p228 = scmp.eq.s32.totalorder %s15, 0
    %p229 = por %p227, %p228
    %p230 = scmp.ne.s32.totalorder %s219, %s222
    %p231 = scmp.eq.s32.totalorder %s20, 1
    %p232 = por %p230, %p231
    %p233 = scmp.ne.s32.totalorder %s222, %s223
    %p234 = scmp.eq.s32.totalorder %s20, 0
    %p235 = por %p233, %p234
    %p236 = scmp.ne.s32.totalorder %s222, %s223
    %p237 = scmp.eq.s32.totalorder %s21, 1
    %p238 = por %p236, %p237
    %p240 = scmp.ne.s32.totalorder %s223, %s239
    %p241 = scmp.eq.s32.totalorder %s21, 0
    %p242 = por %p240, %p241
    %p243 = scmp.le.s32.totalorder 1, %s15
    %p244 = scmp.lt.s32.totalorder %s15, 3
    %p245 = pnand %p243, %p244
    %p246 = pneg %p245
    // Predicated region
    $region9: #{tpu_custom_call.1} parent=5 // pred_check
      _
    $region10: #{tpu_custom_call.1} parent=5 // pred_check_branch
      %248 = sbr.rel (%p245) target = $region12
    $region11: #{tpu_custom_call.1} parent=5 // pred_region
      %s249 = ssub.s32 %s15, 1
      // Predicated region
      $region13: #{tpu_custom_call.1} parent=11 // pred_check
        %p250 = pneg %p62
      $region14: #{tpu_custom_call.1} parent=11 // pred_check_branch
        %252 = sbr.rel (%p250) target = $region16
      $region15: #{tpu_custom_call.1} parent=11 // pred_region
        _
      $region16: #{tpu_custom_call.1} parent=11 // pred_fallthru
        _
      // Predicated region
      $region17: #{tpu_custom_call.1} parent=11 // pred_check
        %p253 = pneg %p83
      $region18: #{tpu_custom_call.1} parent=11 // pred_check_branch
        %255 = sbr.rel (%p253) target = $region20
      $region19: #{tpu_custom_call.1} parent=11 // pred_region
        _
      $region20: #{tpu_custom_call.1} parent=11 // pred_fallthru
        _
      // Predicated region
      $region21: #{tpu_custom_call.1} parent=11 // pred_check
        %p256 = pneg %p104
      $region22: #{tpu_custom_call.1} parent=11 // pred_check_branch
        %258 = sbr.rel (%p256) target = $region24
      $region23: #{tpu_custom_call.1} parent=11 // pred_region
        _
      $region24: #{tpu_custom_call.1} parent=11 // pred_fallthru
        _
      // Predicated region
      $region25: #{tpu_custom_call.1} parent=11 // pred_check
        %p259 = pneg %p125
      $region26: #{tpu_custom_call.1} parent=11 // pred_check_branch
        %261 = sbr.rel (%p259) target = $region28
      $region27: #{tpu_custom_call.1} parent=11 // pred_region
        _
      $region28: #{tpu_custom_call.1} parent=11 // pred_fallthru
        _
      // Predicated region
      $region29: #{tpu_custom_call.1} parent=11 // pred_check
        %p262 = pneg %p146
      $region30: #{tpu_custom_call.1} parent=11 // pred_check_branch
        %264 = sbr.rel (%p262) target = $region32
      $region31: #{tpu_custom_call.1} parent=11 // pred_region
        _
      $region32: #{tpu_custom_call.1} parent=11 // pred_fallthru
        _
      // Predicated region
      $region33: #{tpu_custom_call.1} parent=11 // pred_check
        %p265 = pneg %p167
      $region34: #{tpu_custom_call.1} parent=11 // pred_check_branch
        %267 = sbr.rel (%p265) target = $region36
      $region35: #{tpu_custom_call.1} parent=11 // pred_region
        _
      $region36: #{tpu_custom_call.1} parent=11 // pred_fallthru
        _
      // Predicated region
      $region37: #{tpu_custom_call.1} parent=11 // pred_check
        %p268 = pneg %p188
      $region38: #{tpu_custom_call.1} parent=11 // pred_check_branch
        %270 = sbr.rel (%p268) target = $region40
      $region39: #{tpu_custom_call.1} parent=11 // pred_region
        _
      $region40: #{tpu_custom_call.1} parent=11 // pred_fallthru
        _
      // Predicated region
      $region41: #{tpu_custom_call.1} parent=11 // pred_check
        %p271 = pneg %p209
      $region42: #{tpu_custom_call.1} parent=11 // pred_check_branch
        %273 = sbr.rel (%p271) target = $region44
      $region43: #{tpu_custom_call.1} parent=11 // pred_region
        _
      $region44: #{tpu_custom_call.1} parent=11 // pred_fallthru
        _
    $region12: #{tpu_custom_call.1} parent=5 // pred_fallthru
      _
    %p274 = scmp.lt.s32.totalorder %s15, 2
    // Predicated region
    $region45: #{tpu_custom_call.1} parent=5 // pred_check
      %p275 = pneg %p274
    $region46: #{tpu_custom_call.1} parent=5 // pred_check_branch
      %277 = sbr.rel (%p275) target = $region48
    $region47: #{tpu_custom_call.1} parent=5 // pred_region
      // Predicated region
      $region49: #{tpu_custom_call.1} parent=47 // pred_check
        %p278 = pneg %p35
      $region50: #{tpu_custom_call.1} parent=47 // pred_check_branch
        %280 = sbr.rel (%p278) target = $region52
      $region51: #{tpu_custom_call.1} parent=47 // pred_region
        %s281 = smul.u32 32, %s15
        %p282 = scmp.lt.s32.totalorder %s281, 63
        %s283 = scalar_select %p282, %s281, 63
        %s284 = smul.addr %s283, 7
        %s285 = smul.addr %s284, 4
        %s286 = scalar_lea.vmem %s0, %s285
        %s287 = smul.u32 32, %s15
      $region52: #{tpu_custom_call.1} parent=47 // pred_fallthru
        _
    $region48: #{tpu_custom_call.1} parent=5 // pred_fallthru
      _
    %p288 = scmp.le.s32.totalorder 1, %s15
    %p289 = scmp.lt.s32.totalorder %s15, 3
    %p290 = pnand %p288, %p289
    %p291 = pneg %p290
    // Predicated region
    $region53: #{tpu_custom_call.1} parent=5 // pred_check
      _
    $region54: #{tpu_custom_call.1} parent=5 // pred_check_branch
      %293 = sbr.rel (%p290) target = $region56
    $region55: #{tpu_custom_call.1} parent=5 // pred_region
      %s294 = ssub.s32 %s15, 1
      %s295 = smul.u32 32, %s20
      %p296 = scmp.lt.s32.totalorder %s295, 63
      %s297 = scalar_select %p296, %s295, 63
      %s298 = smul.addr %s297, 7
      %s299 = smul.addr %s298, 4
      %s300 = scalar_lea.vmem %s0, %s299
      %p301 = pneg %p41
      %p302 = pneg %p38
      %p303 = pneg %p62
      %p304 = pneg %p59
      %p305 = pneg %p83
      %p306 = pneg %p80
      %p307 = pneg %p104
      %p308 = pneg %p101
      %p309 = pneg %p125
      %p310 = pneg %p122
      %p311 = pneg %p146
      %p312 = pneg %p143
      %p313 = pneg %p167
      %p314 = pneg %p164
      %p315 = pneg %p188
      %p316 = pneg %p185
      %p317 = pneg %p209
      %p318 = pneg %p206
      %p319 = pneg %p235
      %p320 = pneg %p232
      %s321 = smul.u32 32, %s20
      %p322 = scmp.lt.s32.totalorder %s321, 63
      %s323 = scalar_select %p322, %s321, 63
      %s324 = smul.addr %s323, 7
      %s325 = smul.addr %s324, 8
      %s326 = scalar_lea.vmem %s9, %s325
      %s327 = smul.u32 32, %s20
      %p328 = scmp.lt.s32.totalorder %s327, 63
      %s329 = scalar_select %p328, %s327, 63
      %s330 = smul.addr %s329, 7
      %s331 = smul.addr %s330, 4
      %s332 = scalar_lea.vmem %s0, %s331
      %s333 = smul.u32 32, %s20
      %s334 = smul.u32 32, %s20
      %p335 = scmp.lt.s32.totalorder %s334, 63
      %s336 = scalar_select %p335, %s334, 63
      %s337 = smul.addr %s336, 7
      %s338 = smul.addr %s337, 8
      %s339 = scalar_lea.vmem %s9, %s338
      %s340 = smul.u32 32, %s20
      %v342 = vld [vmem:[%s332] sm:$0xff]
      %v343 = vld [vmem:[%s332 + $0x8] sm:$0xff]
      %v344 = vld [vmem:[%s332 + $0x10] sm:$0xff]
      %v345 = vld [vmem:[%s332 + $0x18] sm:$0xf]
      %v346 = vld [vmem:[%s332 + $0x1c] sm:$0xff]
      %v347 = vld [vmem:[%s332 + $0x24] sm:$0xff]
      %v348 = vld [vmem:[%s332 + $0x2c] sm:$0xff]
      %v349 = vld [vmem:[%s332 + $0x34] sm:$0xf]
      %v350 = vld [vmem:[%s332 + $0x38] sm:$0xff]
      %v351 = vld [vmem:[%s332 + $0x40] sm:$0xff]
      %v352 = vld [vmem:[%s332 + $0x48] sm:$0xff]
      %v353 = vld [vmem:[%s332 + $0x50] sm:$0xf]
      %v354 = vld [vmem:[%s332 + $0x54] sm:$0xff]
      %v355 = vld [vmem:[%s332 + $0x5c] sm:$0xff]
      %v356 = vld [vmem:[%s332 + $0x64] sm:$0xff]
      %v357 = vld [vmem:[%s332 + $0x6c] sm:$0xf]
      %v358 = vld [vmem:[%s332 + $0x70] sm:$0xff]
      %v359 = vld [vmem:[%s332 + $0x78] sm:$0xff]
      %v360 = vld [vmem:[%s332 + $0x80] sm:$0xff]
      %v361 = vld [vmem:[%s332 + $0x88] sm:$0xf]
      %v362 = vld [vmem:[%s332 + $0x8c] sm:$0xff]
      %v363 = vld [vmem:[%s332 + $0x94] sm:$0xff]
      %v364 = vld [vmem:[%s332 + $0x9c] sm:$0xff]
      %v365 = vld [vmem:[%s332 + $0xa4] sm:$0xf]
      %v366 = vld [vmem:[%s332 + $0xa8] sm:$0xff]
      %v367 = vld [vmem:[%s332 + $0xb0] sm:$0xff]
      %v368 = vld [vmem:[%s332 + $0xb8] sm:$0xff]
      %v369 = vld [vmem:[%s332 + $0xc0] sm:$0xf]
      %v370 = vld [vmem:[%s332 + $0xc4] sm:$0xff]
      %v371 = vld [vmem:[%s332 + $0xcc] sm:$0xff]
      %v372 = vld [vmem:[%s332 + $0xd4] sm:$0xff]
      %v373 = vld [vmem:[%s332 + $0xdc] sm:$0xf]
      %v374 = vld [vmem:[%s332 + $0xe0] sm:$0xff]
      %v375 = vld [vmem:[%s332 + $0xe8] sm:$0xff]
      %v376 = vld [vmem:[%s332 + $0xf0] sm:$0xff]
      %v377 = vld [vmem:[%s332 + $0xf8] sm:$0xf]
      %v378 = vld [vmem:[%s332 + $0xfc] sm:$0xff]
      %v379 = vld [vmem:[%s332 + $0x104] sm:$0xff]
      %v380 = vld [vmem:[%s332 + $0x10c] sm:$0xff]
      %v381 = vld [vmem:[%s332 + $0x114] sm:$0xf]
      %v382 = vld [vmem:[%s332 + $0x118] sm:$0xff]
      %v383 = vld [vmem:[%s332 + $0x120] sm:$0xff]
      %v384 = vld [vmem:[%s332 + $0x128] sm:$0xff]
      %v385 = vld [vmem:[%s332 + $0x130] sm:$0xf]
      %v386 = vld [vmem:[%s332 + $0x134] sm:$0xff]
      %v387 = vld [vmem:[%s332 + $0x13c] sm:$0xff]
      %v388 = vld [vmem:[%s332 + $0x144] sm:$0xff]
      %v389 = vld [vmem:[%s332 + $0x14c] sm:$0xf]
      %v390 = vld [vmem:[%s332 + $0x150] sm:$0xff]
      %v391 = vld [vmem:[%s332 + $0x158] sm:$0xff]
      %v392 = vld [vmem:[%s332 + $0x160] sm:$0xff]
      %v393 = vld [vmem:[%s332 + $0x168] sm:$0xf]
      %v394 = vld [vmem:[%s332 + $0x16c] sm:$0xff]
      %v395 = vld [vmem:[%s332 + $0x174] sm:$0xff]
      %v396 = vld [vmem:[%s332 + $0x17c] sm:$0xff]
      %v397 = vld [vmem:[%s332 + $0x184] sm:$0xf]
      %v398 = vld [vmem:[%s332 + $0x188] sm:$0xff]
      %v399 = vld [vmem:[%s332 + $0x190] sm:$0xff]
      %v400 = vld [vmem:[%s332 + $0x198] sm:$0xff]
      %v401 = vld [vmem:[%s332 + $0x1a0] sm:$0xf]
      %v402 = vld [vmem:[%s332 + $0x1a4] sm:$0xff]
      %v403 = vld [vmem:[%s332 + $0x1ac] sm:$0xff]
      %v404 = vld [vmem:[%s332 + $0x1b4] sm:$0xff]
      %v405 = vld [vmem:[%s332 + $0x1bc] sm:$0xf]
      %v406 = vld [vmem:[%s332 + $0x1c0] sm:$0xff]
      %v407 = vld [vmem:[%s332 + $0x1c8] sm:$0xff]
      %v408 = vld [vmem:[%s332 + $0x1d0] sm:$0xff]
      %v409 = vld [vmem:[%s332 + $0x1d8] sm:$0xf]
      %v410 = vld [vmem:[%s332 + $0x1dc] sm:$0xff]
      %v411 = vld [vmem:[%s332 + $0x1e4] sm:$0xff]
      %v412 = vld [vmem:[%s332 + $0x1ec] sm:$0xff]
      %v413 = vld [vmem:[%s332 + $0x1f4] sm:$0xf]
      %v414 = vld [vmem:[%s332 + $0x1f8] sm:$0xff]
      %v415 = vld [vmem:[%s332 + $0x200] sm:$0xff]
      %v416 = vld [vmem:[%s332 + $0x208] sm:$0xff]
      %v417 = vld [vmem:[%s332 + $0x210] sm:$0xf]
      %v418 = vld [vmem:[%s332 + $0x214] sm:$0xff]
      %v419 = vld [vmem:[%s332 + $0x21c] sm:$0xff]
      %v420 = vld [vmem:[%s332 + $0x224] sm:$0xff]
      %v421 = vld [vmem:[%s332 + $0x22c] sm:$0xf]
      %v422 = vld [vmem:[%s332 + $0x230] sm:$0xff]
      %v423 = vld [vmem:[%s332 + $0x238] sm:$0xff]
      %v424 = vld [vmem:[%s332 + $0x240] sm:$0xff]
      %v425 = vld [vmem:[%s332 + $0x248] sm:$0xf]
      %v426 = vld [vmem:[%s332 + $0x24c] sm:$0xff]
      %v427 = vld [vmem:[%s332 + $0x254] sm:$0xff]
      %v428 = vld [vmem:[%s332 + $0x25c] sm:$0xff]
      %v429 = vld [vmem:[%s332 + $0x264] sm:$0xf]
      %v430 = vld [vmem:[%s332 + $0x268] sm:$0xff]
      %v431 = vld [vmem:[%s332 + $0x270] sm:$0xff]
      %v432 = vld [vmem:[%s332 + $0x278] sm:$0xff]
      %v433 = vld [vmem:[%s332 + $0x280] sm:$0xf]
      %v434 = vld [vmem:[%s332 + $0x284] sm:$0xff]
      %v435 = vld [vmem:[%s332 + $0x28c] sm:$0xff]
      %v436 = vld [vmem:[%s332 + $0x294] sm:$0xff]
      %v437 = vld [vmem:[%s332 + $0x29c] sm:$0xf]
      %v438 = vld [vmem:[%s332 + $0x2a0] sm:$0xff]
      %v439 = vld [vmem:[%s332 + $0x2a8] sm:$0xff]
      %v440 = vld [vmem:[%s332 + $0x2b0] sm:$0xff]
      %v441 = vld [vmem:[%s332 + $0x2b8] sm:$0xf]
      %v442 = vld [vmem:[%s332 + $0x2bc] sm:$0xff]
      %v443 = vld [vmem:[%s332 + $0x2c4] sm:$0xff]
      %v444 = vld [vmem:[%s332 + $0x2cc] sm:$0xff]
      %v445 = vld [vmem:[%s332 + $0x2d4] sm:$0xf]
      %v446 = vld [vmem:[%s332 + $0x2d8] sm:$0xff]
      %v447 = vld [vmem:[%s332 + $0x2e0] sm:$0xff]
      %v448 = vld [vmem:[%s332 + $0x2e8] sm:$0xff]
      %v449 = vld [vmem:[%s332 + $0x2f0] sm:$0xf]
      %v450 = vld [vmem:[%s332 + $0x2f4] sm:$0xff]
      %v451 = vld [vmem:[%s332 + $0x2fc] sm:$0xff]
      %v452 = vld [vmem:[%s332 + $0x304] sm:$0xff]
      %v453 = vld [vmem:[%s332 + $0x30c] sm:$0xf]
      %v454 = vld [vmem:[%s332 + $0x310] sm:$0xff]
      %v455 = vld [vmem:[%s332 + $0x318] sm:$0xff]
      %v456 = vld [vmem:[%s332 + $0x320] sm:$0xff]
      %v457 = vld [vmem:[%s332 + $0x328] sm:$0xf]
      %v458 = vld [vmem:[%s332 + $0x32c] sm:$0xff]
      %v459 = vld [vmem:[%s332 + $0x334] sm:$0xff]
      %v460 = vld [vmem:[%s332 + $0x33c] sm:$0xff]
      %v461 = vld [vmem:[%s332 + $0x344] sm:$0xf]
      %v462 = vld [vmem:[%s332 + $0x348] sm:$0xff]
      %v463 = vld [vmem:[%s332 + $0x350] sm:$0xff]
      %v464 = vld [vmem:[%s332 + $0x358] sm:$0xff]
      %v465 = vld [vmem:[%s332 + $0x360] sm:$0xf]
      %v466 = vld [vmem:[%s332 + $0x364] sm:$0xff]
      %v467 = vld [vmem:[%s332 + $0x36c] sm:$0xff]
      %v468 = vld [vmem:[%s332 + $0x374] sm:$0xff]
      %v469 = vld [vmem:[%s332 + $0x37c] sm:$0xf]
      %v470 = vld [vmem:[%s1] sm:$0xff]
      %v471 = vld [vmem:[%s1 + $0x8] sm:$0xff]
      %v472 = vld [vmem:[%s1 + $0x10] sm:$0xff]
      %v473 = vld [vmem:[%s1 + $0x18] sm:$0xff]
      %v474 = vld [vmem:[%s1 + $0x20] sm:$0xff]
      %v475 = vld [vmem:[%s1 + $0x28] sm:$0xff]
      %v476 = vld [vmem:[%s1 + $0x30] sm:$0xff]
      %v477 = vld [vmem:[%s1 + $0x38] sm:$0xff]
      %v478 = vld [vmem:[%s1 + $0x40] sm:$0xff]
      %v479 = vld [vmem:[%s1 + $0x48] sm:$0xff]
      %v480 = vld [vmem:[%s1 + $0x50] sm:$0xff]
      %v481 = vld [vmem:[%s1 + $0x58] sm:$0xff]
      %v482 = vld [vmem:[%s1 + $0x60] sm:$0xff]
      %v483 = vld [vmem:[%s1 + $0x68] sm:$0xff]
      %v484 = vld [vmem:[%s1 + $0x70] sm:$0xff]
      %v485 = vld [vmem:[%s1 + $0x78] sm:$0xff]
      %v486 = vld [vmem:[%s1 + $0x80] sm:$0xff]
      %v487 = vld [vmem:[%s1 + $0x88] sm:$0xff]
      %v488 = vld [vmem:[%s1 + $0x90] sm:$0xff]
      %v489 = vld [vmem:[%s1 + $0x98] sm:$0xff]
      %v490 = vld [vmem:[%s1 + $0xa0] sm:$0xff]
      %v491 = vld [vmem:[%s1 + $0xa8] sm:$0xff]
      %v492 = vld [vmem:[%s1 + $0xb0] sm:$0xff]
      %v493 = vld [vmem:[%s1 + $0xb8] sm:$0xff]
      %v494 = vld [vmem:[%s1 + $0xc0] sm:$0xff]
      %v495 = vld [vmem:[%s1 + $0xc8] sm:$0xff]
      %v496 = vld [vmem:[%s1 + $0xd0] sm:$0xff]
      %v497 = vld [vmem:[%s1 + $0xd8] sm:$0xff]
      %v498 = vld [vmem:[%s1 + $0xe0] sm:$0xff]
      %v499 = vld [vmem:[%s1 + $0xe8] sm:$0xff]
      %v500 = vld [vmem:[%s1 + $0xf0] sm:$0xff]
      %v501 = vld [vmem:[%s1 + $0xf8] sm:$0xff]
      %v502 = vld [vmem:[%s1 + $0x100] sm:$0xff]
      %v503 = vld [vmem:[%s1 + $0x108] sm:$0xff]
      %v504 = vld [vmem:[%s1 + $0x110] sm:$0xff]
      %v505 = vld [vmem:[%s1 + $0x118] sm:$0xff]
      %v506 = vld [vmem:[%s1 + $0x120] sm:$0xff]
      %v507 = vld [vmem:[%s1 + $0x128] sm:$0xff]
      %v508 = vld [vmem:[%s1 + $0x130] sm:$0xff]
      %v509 = vld [vmem:[%s1 + $0x138] sm:$0xff]
      %v510 = vld [vmem:[%s1 + $0x140] sm:$0xff]
      %v511 = vld [vmem:[%s1 + $0x148] sm:$0xff]
      %v512 = vld [vmem:[%s1 + $0x150] sm:$0xff]
      %v513 = vld [vmem:[%s1 + $0x158] sm:$0xff]
      %v514 = vld [vmem:[%s1 + $0x160] sm:$0xff]
      %v515 = vld [vmem:[%s1 + $0x168] sm:$0xff]
      %v516 = vld [vmem:[%s1 + $0x170] sm:$0xff]
      %v517 = vld [vmem:[%s1 + $0x178] sm:$0xff]
      %v518 = vld [vmem:[%s1 + $0x180] sm:$0xff]
      %v519 = vld [vmem:[%s1 + $0x188] sm:$0xff]
      %v520 = vld [vmem:[%s1 + $0x190] sm:$0xff]
      %v521 = vld [vmem:[%s1 + $0x198] sm:$0xff]
      %v522 = vld [vmem:[%s1 + $0x1a0] sm:$0xff]
      %v523 = vld [vmem:[%s1 + $0x1a8] sm:$0xff]
      %v524 = vld [vmem:[%s1 + $0x1b0] sm:$0xff]
      %v525 = vld [vmem:[%s1 + $0x1b8] sm:$0xff]
      %v526 = vld [vmem:[%s1 + $0x1c0] sm:$0xff]
      %v527 = vld [vmem:[%s1 + $0x1c8] sm:$0xff]
      %v528 = vld [vmem:[%s1 + $0x1d0] sm:$0xff]
      %v529 = vld [vmem:[%s1 + $0x1d8] sm:$0xff]
      %v530 = vld [vmem:[%s1 + $0x1e0] sm:$0xff]
      %v531 = vld [vmem:[%s1 + $0x1e8] sm:$0xff]
      %v532 = vld [vmem:[%s1 + $0x1f0] sm:$0xff]
      %v533 = vld [vmem:[%s1 + $0x1f8] sm:$0xff]
      %v534 = vld [vmem:[%s1 + $0x200] sm:$0xff]
      %v535 = vld [vmem:[%s1 + $0x208] sm:$0xff]
      %v536 = vld [vmem:[%s1 + $0x210] sm:$0xff]
      %v537 = vld [vmem:[%s1 + $0x218] sm:$0xff]
      %v538 = vld [vmem:[%s1 + $0x220] sm:$0xff]
      %v539 = vld [vmem:[%s1 + $0x228] sm:$0xff]
      %v540 = vld [vmem:[%s1 + $0x230] sm:$0xff]
      %v541 = vld [vmem:[%s1 + $0x238] sm:$0xff]
      %v542 = vld [vmem:[%s1 + $0x240] sm:$0xff]
      %v543 = vld [vmem:[%s1 + $0x248] sm:$0xff]
      %v544 = vld [vmem:[%s1 + $0x250] sm:$0xff]
      %v545 = vld [vmem:[%s1 + $0x258] sm:$0xff]
      %v546 = vld [vmem:[%s1 + $0x260] sm:$0xff]
      %v547 = vld [vmem:[%s1 + $0x268] sm:$0xff]
      %v548 = vld [vmem:[%s1 + $0x270] sm:$0xff]
      %v549 = vld [vmem:[%s1 + $0x278] sm:$0xff]
      %v550 = vld [vmem:[%s1 + $0x280] sm:$0xff]
      %v551 = vld [vmem:[%s1 + $0x288] sm:$0xff]
      %v552 = vld [vmem:[%s1 + $0x290] sm:$0xff]
      %v553 = vld [vmem:[%s1 + $0x298] sm:$0xff]
      %v554 = vld [vmem:[%s1 + $0x2a0] sm:$0xff]
      %v555 = vld [vmem:[%s1 + $0x2a8] sm:$0xff]
      %v556 = vld [vmem:[%s1 + $0x2b0] sm:$0xff]
      %v557 = vld [vmem:[%s1 + $0x2b8] sm:$0xff]
      %v558 = vld [vmem:[%s1 + $0x2c0] sm:$0xff]
      %v559 = vld [vmem:[%s1 + $0x2c8] sm:$0xff]
      %v560 = vld [vmem:[%s1 + $0x2d0] sm:$0xff]
      %v561 = vld [vmem:[%s1 + $0x2d8] sm:$0xff]
      %v562 = vld [vmem:[%s1 + $0x2e0] sm:$0xff]
      %v563 = vld [vmem:[%s1 + $0x2e8] sm:$0xff]
      %v564 = vld [vmem:[%s1 + $0x2f0] sm:$0xff]
      %v565 = vld [vmem:[%s1 + $0x2f8] sm:$0xff]
      %v566 = vld [vmem:[%s1 + $0x300] sm:$0xff]
      %v567 = vld [vmem:[%s1 + $0x308] sm:$0xff]
      %v568 = vld [vmem:[%s1 + $0x310] sm:$0xff]
      %v569 = vld [vmem:[%s1 + $0x318] sm:$0xff]
      %v570 = vld [vmem:[%s1 + $0x320] sm:$0xff]
      %v571 = vld [vmem:[%s1 + $0x328] sm:$0xff]
      %v572 = vld [vmem:[%s1 + $0x330] sm:$0xff]
      %v573 = vld [vmem:[%s1 + $0x338] sm:$0xff]
      %v574 = vld [vmem:[%s1 + $0x340] sm:$0xff]
      %v575 = vld [vmem:[%s1 + $0x348] sm:$0xff]
      %v576 = vld [vmem:[%s1 + $0x350] sm:$0xff]
      %v577 = vld [vmem:[%s1 + $0x358] sm:$0xff]
      %v578 = vld [vmem:[%s1 + $0x360] sm:$0xff]
      %v579 = vld [vmem:[%s1 + $0x368] sm:$0xff]
      %v580 = vld [vmem:[%s1 + $0x370] sm:$0xff]
      %v581 = vld [vmem:[%s1 + $0x378] sm:$0xff]
      %v582 = vld [vmem:[%s1 + $0x380] sm:$0xff]
      %v583 = vld [vmem:[%s1 + $0x388] sm:$0xff]
      %v584 = vld [vmem:[%s1 + $0x390] sm:$0xff]
      %v585 = vld [vmem:[%s1 + $0x398] sm:$0xff]
      %v586 = vld [vmem:[%s1 + $0x3a0] sm:$0xff]
      %v587 = vld [vmem:[%s1 + $0x3a8] sm:$0xff]
      %v588 = vld [vmem:[%s1 + $0x3b0] sm:$0xff]
      %v589 = vld [vmem:[%s1 + $0x3b8] sm:$0xff]
      %v590 = vld [vmem:[%s1 + $0x3c0] sm:$0xff]
      %v591 = vld [vmem:[%s1 + $0x3c8] sm:$0xff]
      %v592 = vld [vmem:[%s1 + $0x3d0] sm:$0xff]
      %v593 = vld [vmem:[%s1 + $0x3d8] sm:$0xff]
      %v594 = vld [vmem:[%s1 + $0x3e0] sm:$0xff]
      %v595 = vld [vmem:[%s1 + $0x3e8] sm:$0xff]
      %v596 = vld [vmem:[%s1 + $0x3f0] sm:$0xff]
      %v597 = vld [vmem:[%s1 + $0x3f8] sm:$0xff]
      %v598 = vld [vmem:[%s1 + $0x400] sm:$0xff]
      %v599 = vld [vmem:[%s1 + $0x408] sm:$0xff]
      %v600 = vld [vmem:[%s1 + $0x410] sm:$0xff]
      %v601 = vld [vmem:[%s1 + $0x418] sm:$0xff]
      %v602 = vld [vmem:[%s1 + $0x420] sm:$0xff]
      %v603 = vld [vmem:[%s1 + $0x428] sm:$0xff]
      %v604 = vld [vmem:[%s1 + $0x430] sm:$0xff]
      %v605 = vld [vmem:[%s1 + $0x438] sm:$0xff]
      %v606 = vld [vmem:[%s1 + $0x440] sm:$0xff]
      %v607 = vld [vmem:[%s1 + $0x448] sm:$0xff]
      %v608 = vld [vmem:[%s1 + $0x450] sm:$0xff]
      %v609 = vld [vmem:[%s1 + $0x458] sm:$0xff]
      %v610 = vld [vmem:[%s1 + $0x460] sm:$0xff]
      %v611 = vld [vmem:[%s1 + $0x468] sm:$0xff]
      %v612 = vld [vmem:[%s1 + $0x470] sm:$0xff]
      %v613 = vld [vmem:[%s1 + $0x478] sm:$0xff]
      %v614 = vld [vmem:[%s1 + $0x480] sm:$0xff]
      %v615 = vld [vmem:[%s1 + $0x488] sm:$0xff]
      %v616 = vld [vmem:[%s1 + $0x490] sm:$0xff]
      %v617 = vld [vmem:[%s1 + $0x498] sm:$0xff]
      %v618 = vld [vmem:[%s1 + $0x4a0] sm:$0xff]
      %v619 = vld [vmem:[%s1 + $0x4a8] sm:$0xff]
      %v620 = vld [vmem:[%s1 + $0x4b0] sm:$0xff]
      %v621 = vld [vmem:[%s1 + $0x4b8] sm:$0xff]
      %v622 = vld [vmem:[%s1 + $0x4c0] sm:$0xff]
      %v623 = vld [vmem:[%s1 + $0x4c8] sm:$0xff]
      %v624 = vld [vmem:[%s1 + $0x4d0] sm:$0xff]
      %v625 = vld [vmem:[%s1 + $0x4d8] sm:$0xff]
      %v626 = vld [vmem:[%s1 + $0x4e0] sm:$0xff]
      %v627 = vld [vmem:[%s1 + $0x4e8] sm:$0xff]
      %v628 = vld [vmem:[%s1 + $0x4f0] sm:$0xff]
      %v629 = vld [vmem:[%s1 + $0x4f8] sm:$0xff]
      %v630 = vld [vmem:[%s1 + $0x500] sm:$0xff]
      %v631 = vld [vmem:[%s1 + $0x508] sm:$0xff]
      %v632 = vld [vmem:[%s1 + $0x510] sm:$0xff]
      %v633 = vld [vmem:[%s1 + $0x518] sm:$0xff]
      %v634 = vld [vmem:[%s1 + $0x520] sm:$0xff]
      %v635 = vld [vmem:[%s1 + $0x528] sm:$0xff]
      %v636 = vld [vmem:[%s1 + $0x530] sm:$0xff]
      %v637 = vld [vmem:[%s1 + $0x538] sm:$0xff]
      %v638 = vld [vmem:[%s1 + $0x540] sm:$0xff]
      %v639 = vld [vmem:[%s1 + $0x548] sm:$0xff]
      %v640 = vld [vmem:[%s1 + $0x550] sm:$0xff]
      %v641 = vld [vmem:[%s1 + $0x558] sm:$0xff]
      %v642 = vld [vmem:[%s1 + $0x560] sm:$0xff]
      %v643 = vld [vmem:[%s1 + $0x568] sm:$0xff]
      %v644 = vld [vmem:[%s1 + $0x570] sm:$0xff]
      %v645 = vld [vmem:[%s1 + $0x578] sm:$0xff]
      %v646 = vld [vmem:[%s1 + $0x580] sm:$0xff]
      %v647 = vld [vmem:[%s1 + $0x588] sm:$0xff]
      %v648 = vld [vmem:[%s1 + $0x590] sm:$0xff]
      %v649 = vld [vmem:[%s1 + $0x598] sm:$0xff]
      %v650 = vld [vmem:[%s1 + $0x5a0] sm:$0xff]
      %v651 = vld [vmem:[%s1 + $0x5a8] sm:$0xff]
      %v652 = vld [vmem:[%s1 + $0x5b0] sm:$0xff]
      %v653 = vld [vmem:[%s1 + $0x5b8] sm:$0xff]
      %v654 = vld [vmem:[%s1 + $0x5c0] sm:$0xff]
      %v655 = vld [vmem:[%s1 + $0x5c8] sm:$0xff]
      %v656 = vld [vmem:[%s1 + $0x5d0] sm:$0xff]
      %v657 = vld [vmem:[%s1 + $0x5d8] sm:$0xff]
      %v658 = vld [vmem:[%s1 + $0x5e0] sm:$0xff]
      %v659 = vld [vmem:[%s1 + $0x5e8] sm:$0xff]
      %v660 = vld [vmem:[%s1 + $0x5f0] sm:$0xff]
      %v661 = vld [vmem:[%s1 + $0x5f8] sm:$0xff]
      %v662 = vld [vmem:[%s1 + $0x600] sm:$0xff]
      %v663 = vld [vmem:[%s1 + $0x608] sm:$0xff]
      %v664 = vld [vmem:[%s1 + $0x610] sm:$0xff]
      %v665 = vld [vmem:[%s1 + $0x618] sm:$0xff]
      %v666 = vld [vmem:[%s2] sm:$0xf]
      %v668 = vlaneseq
      %v669 = vshrl.u32 %v668, 7
      %v670 = vsub.s32 0, %v669
      %v671 = vrot.slane %v666, %v670
      %v672 = vlaneseq
      %v673 = vshrl.u32 %v672, 7
      %v674 = vsub.s32 1, %v673
      %v675 = vrot.slane %v666, %v674
      %v676 = vlaneseq
      %v677 = vshrl.u32 %v676, 7
      %v678 = vsub.s32 2, %v677
      %v679 = vrot.slane %v666, %v678
      %v680 = vlaneseq
      %v681 = vshrl.u32 %v680, 7
      %v682 = vsub.s32 3, %v681
      %v683 = vrot.slane %v666, %v682
      %v816 = vunpack.c.l.b16 %v342
      %v817 = vunpack.c.h.b16 %v342
      %v818 = vunpack.c.l.b16 %v343
      %v819 = vunpack.c.h.b16 %v343
      %v820 = vunpack.c.l.b16 %v344
      %v821 = vunpack.c.h.b16 %v344
      %v822 = vunpack.c.l.b16 %v345
      %v823 = vunpack.c.l.b16 %v346
      %v824 = vunpack.c.h.b16 %v346
      %v825 = vunpack.c.l.b16 %v347
      %v826 = vunpack.c.h.b16 %v347
      %v827 = vunpack.c.l.b16 %v348
      %v828 = vunpack.c.h.b16 %v348
      %v829 = vunpack.c.l.b16 %v349
      %v830 = vunpack.c.l.b16 %v350
      %v831 = vunpack.c.h.b16 %v350
      %v832 = vunpack.c.l.b16 %v351
      %v833 = vunpack.c.h.b16 %v351
      %v834 = vunpack.c.l.b16 %v352
      %v835 = vunpack.c.h.b16 %v352
      %v836 = vunpack.c.l.b16 %v353
      %v837 = vunpack.c.l.b16 %v354
      %v838 = vunpack.c.h.b16 %v354
      %v839 = vunpack.c.l.b16 %v355
      %v840 = vunpack.c.h.b16 %v355
      %v841 = vunpack.c.l.b16 %v356
      %v842 = vunpack.c.h.b16 %v356
      %v843 = vunpack.c.l.b16 %v357
      %v844 = vunpack.c.l.b16 %v358
      %v845 = vunpack.c.h.b16 %v358
      %v846 = vunpack.c.l.b16 %v359
      %v847 = vunpack.c.h.b16 %v359
      %v848 = vunpack.c.l.b16 %v360
      %v849 = vunpack.c.h.b16 %v360
      %v850 = vunpack.c.l.b16 %v361
      %v851 = vunpack.c.l.b16 %v362
      %v852 = vunpack.c.h.b16 %v362
      %v853 = vunpack.c.l.b16 %v363
      %v854 = vunpack.c.h.b16 %v363
      %v855 = vunpack.c.l.b16 %v364
      %v856 = vunpack.c.h.b16 %v364
      %v857 = vunpack.c.l.b16 %v365
      %v858 = vunpack.c.l.b16 %v366
      %v859 = vunpack.c.h.b16 %v366
      %v860 = vunpack.c.l.b16 %v367
      %v861 = vunpack.c.h.b16 %v367
      %v862 = vunpack.c.l.b16 %v368
      %v863 = vunpack.c.h.b16 %v368
      %v864 = vunpack.c.l.b16 %v369
      %v865 = vunpack.c.l.b16 %v370
      %v866 = vunpack.c.h.b16 %v370
      %v867 = vunpack.c.l.b16 %v371
      %v868 = vunpack.c.h.b16 %v371
      %v869 = vunpack.c.l.b16 %v372
      %v870 = vunpack.c.h.b16 %v372
      %v871 = vunpack.c.l.b16 %v373
      %v872 = vunpack.c.l.b16 %v374
      %v873 = vunpack.c.h.b16 %v374
      %v874 = vunpack.c.l.b16 %v375
      %v875 = vunpack.c.h.b16 %v375
      %v876 = vunpack.c.l.b16 %v376
      %v877 = vunpack.c.h.b16 %v376
      %v878 = vunpack.c.l.b16 %v377
      %v879 = vunpack.c.l.b16 %v378
      %v880 = vunpack.c.h.b16 %v378
      %v881 = vunpack.c.l.b16 %v379
      %v882 = vunpack.c.h.b16 %v379
      %v883 = vunpack.c.l.b16 %v380
      %v884 = vunpack.c.h.b16 %v380
      %v885 = vunpack.c.l.b16 %v381
      %v886 = vunpack.c.l.b16 %v382
      %v887 = vunpack.c.h.b16 %v382
      %v888 = vunpack.c.l.b16 %v383
      %v889 = vunpack.c.h.b16 %v383
      %v890 = vunpack.c.l.b16 %v384
      %v891 = vunpack.c.h.b16 %v384
      %v892 = vunpack.c.l.b16 %v385
      %v893 = vunpack.c.l.b16 %v386
      %v894 = vunpack.c.h.b16 %v386
      %v895 = vunpack.c.l.b16 %v387
      %v896 = vunpack.c.h.b16 %v387
      %v897 = vunpack.c.l.b16 %v388
      %v898 = vunpack.c.h.b16 %v388
      %v899 = vunpack.c.l.b16 %v389
      %v900 = vunpack.c.l.b16 %v390
      %v901 = vunpack.c.h.b16 %v390
      %v902 = vunpack.c.l.b16 %v391
      %v903 = vunpack.c.h.b16 %v391
      %v904 = vunpack.c.l.b16 %v392
      %v905 = vunpack.c.h.b16 %v392
      %v906 = vunpack.c.l.b16 %v393
      %v907 = vunpack.c.l.b16 %v394
      %v908 = vunpack.c.h.b16 %v394
      %v909 = vunpack.c.l.b16 %v395
      %v910 = vunpack.c.h.b16 %v395
      %v911 = vunpack.c.l.b16 %v396
      %v912 = vunpack.c.h.b16 %v396
      %v913 = vunpack.c.l.b16 %v397
      %v914 = vunpack.c.l.b16 %v398
      %v915 = vunpack.c.h.b16 %v398
      %v916 = vunpack.c.l.b16 %v399
      %v917 = vunpack.c.h.b16 %v399
      %v918 = vunpack.c.l.b16 %v400
      %v919 = vunpack.c.h.b16 %v400
      %v920 = vunpack.c.l.b16 %v401
      %v921 = vunpack.c.l.b16 %v402
      %v922 = vunpack.c.h.b16 %v402
      %v923 = vunpack.c.l.b16 %v403
      %v924 = vunpack.c.h.b16 %v403
      %v925 = vunpack.c.l.b16 %v404
      %v926 = vunpack.c.h.b16 %v404
      %v927 = vunpack.c.l.b16 %v405
      %v928 = vunpack.c.l.b16 %v406
      %v929 = vunpack.c.h.b16 %v406
      %v930 = vunpack.c.l.b16 %v407
      %v931 = vunpack.c.h.b16 %v407
      %v932 = vunpack.c.l.b16 %v408
      %v933 = vunpack.c.h.b16 %v408
      %v934 = vunpack.c.l.b16 %v409
      %v935 = vunpack.c.l.b16 %v410
      %v936 = vunpack.c.h.b16 %v410
      %v937 = vunpack.c.l.b16 %v411
      %v938 = vunpack.c.h.b16 %v411
      %v939 = vunpack.c.l.b16 %v412
      %v940 = vunpack.c.h.b16 %v412
      %v941 = vunpack.c.l.b16 %v413
      %v942 = vunpack.c.l.b16 %v414
      %v943 = vunpack.c.h.b16 %v414
      %v944 = vunpack.c.l.b16 %v415
      %v945 = vunpack.c.h.b16 %v415
      %v946 = vunpack.c.l.b16 %v416
      %v947 = vunpack.c.h.b16 %v416
      %v948 = vunpack.c.l.b16 %v417
      %v949 = vunpack.c.l.b16 %v418
      %v950 = vunpack.c.h.b16 %v418
      %v951 = vunpack.c.l.b16 %v419
      %v952 = vunpack.c.h.b16 %v419
      %v953 = vunpack.c.l.b16 %v420
      %v954 = vunpack.c.h.b16 %v420
      %v955 = vunpack.c.l.b16 %v421
      %v956 = vunpack.c.l.b16 %v422
      %v957 = vunpack.c.h.b16 %v422
      %v958 = vunpack.c.l.b16 %v423
      %v959 = vunpack.c.h.b16 %v423
      %v960 = vunpack.c.l.b16 %v424
      %v961 = vunpack.c.h.b16 %v424
      %v962 = vunpack.c.l.b16 %v425
      %v963 = vunpack.c.l.b16 %v426
      %v964 = vunpack.c.h.b16 %v426
      %v965 = vunpack.c.l.b16 %v427
      %v966 = vunpack.c.h.b16 %v427
      %v967 = vunpack.c.l.b16 %v428
      %v968 = vunpack.c.h.b16 %v428
      %v969 = vunpack.c.l.b16 %v429
      %v970 = vunpack.c.l.b16 %v430
      %v971 = vunpack.c.h.b16 %v430
      %v972 = vunpack.c.l.b16 %v431
      %v973 = vunpack.c.h.b16 %v431
      %v974 = vunpack.c.l.b16 %v432
      %v975 = vunpack.c.h.b16 %v432
      %v976 = vunpack.c.l.b16 %v433
      %v977 = vunpack.c.l.b16 %v434
      %v978 = vunpack.c.h.b16 %v434
      %v979 = vunpack.c.l.b16 %v435
      %v980 = vunpack.c.h.b16 %v435
      %v981 = vunpack.c.l.b16 %v436
      %v982 = vunpack.c.h.b16 %v436
      %v983 = vunpack.c.l.b16 %v437
      %v984 = vunpack.c.l.b16 %v438
      %v985 = vunpack.c.h.b16 %v438
      %v986 = vunpack.c.l.b16 %v439
      %v987 = vunpack.c.h.b16 %v439
      %v988 = vunpack.c.l.b16 %v440
      %v989 = vunpack.c.h.b16 %v440
      %v990 = vunpack.c.l.b16 %v441
      %v991 = vunpack.c.l.b16 %v442
      %v992 = vunpack.c.h.b16 %v442
      %v993 = vunpack.c.l.b16 %v443
      %v994 = vunpack.c.h.b16 %v443
      %v995 = vunpack.c.l.b16 %v444
      %v996 = vunpack.c.h.b16 %v444
      %v997 = vunpack.c.l.b16 %v445
      %v998 = vunpack.c.l.b16 %v446
      %v999 = vunpack.c.h.b16 %v446
      %v1000 = vunpack.c.l.b16 %v447
      %v1001 = vunpack.c.h.b16 %v447
      %v1002 = vunpack.c.l.b16 %v448
      %v1003 = vunpack.c.h.b16 %v448
      %v1004 = vunpack.c.l.b16 %v449
      %v1005 = vunpack.c.l.b16 %v450
      %v1006 = vunpack.c.h.b16 %v450
      %v1007 = vunpack.c.l.b16 %v451
      %v1008 = vunpack.c.h.b16 %v451
      %v1009 = vunpack.c.l.b16 %v452
      %v1010 = vunpack.c.h.b16 %v452
      %v1011 = vunpack.c.l.b16 %v453
      %v1012 = vunpack.c.l.b16 %v454
      %v1013 = vunpack.c.h.b16 %v454
      %v1014 = vunpack.c.l.b16 %v455
      %v1015 = vunpack.c.h.b16 %v455
      %v1016 = vunpack.c.l.b16 %v456
      %v1017 = vunpack.c.h.b16 %v456
      %v1018 = vunpack.c.l.b16 %v457
      %v1019 = vunpack.c.l.b16 %v458
      %v1020 = vunpack.c.h.b16 %v458
      %v1021 = vunpack.c.l.b16 %v459
      %v1022 = vunpack.c.h.b16 %v459
      %v1023 = vunpack.c.l.b16 %v460
      %v1024 = vunpack.c.h.b16 %v460
      %v1025 = vunpack.c.l.b16 %v461
      %v1026 = vunpack.c.l.b16 %v462
      %v1027 = vunpack.c.h.b16 %v462
      %v1028 = vunpack.c.l.b16 %v463
      %v1029 = vunpack.c.h.b16 %v463
      %v1030 = vunpack.c.l.b16 %v464
      %v1031 = vunpack.c.h.b16 %v464
      %v1032 = vunpack.c.l.b16 %v465
      %v1033 = vunpack.c.l.b16 %v466
      %v1034 = vunpack.c.h.b16 %v466
      %v1035 = vunpack.c.l.b16 %v467
      %v1036 = vunpack.c.h.b16 %v467
      %v1037 = vunpack.c.l.b16 %v468
      %v1038 = vunpack.c.h.b16 %v468
      %v1039 = vunpack.c.l.b16 %v469
      %v1040 = vpack.c.b16 %v823, %v816
      %v1041 = vpack.c.b16 %v824, %v817
      %v1042 = vpack.c.b16 %v825, %v818
      %v1043 = vpack.c.b16 %v826, %v819
      %v1044 = vpack.c.b16 %v827, %v820
      %v1045 = vpack.c.b16 %v828, %v821
      %v1046 = vpack.c.b16 %v829, %v822
      %v1047 = vpack.c.b16 %v837, %v830
      %v1048 = vpack.c.b16 %v838, %v831
      %v1049 = vpack.c.b16 %v839, %v832
      %v1050 = vpack.c.b16 %v840, %v833
      %v1051 = vpack.c.b16 %v841, %v834
      %v1052 = vpack.c.b16 %v842, %v835
      %v1053 = vpack.c.b16 %v843, %v836
      %v1054 = vpack.c.b16 %v851, %v844
      %v1055 = vpack.c.b16 %v852, %v845
      %v1056 = vpack.c.b16 %v853, %v846
      %v1057 = vpack.c.b16 %v854, %v847
      %v1058 = vpack.c.b16 %v855, %v848
      %v1059 = vpack.c.b16 %v856, %v849
      %v1060 = vpack.c.b16 %v857, %v850
      %v1061 = vpack.c.b16 %v865, %v858
      %v1062 = vpack.c.b16 %v866, %v859
      %v1063 = vpack.c.b16 %v867, %v860
      %v1064 = vpack.c.b16 %v868, %v861
      %v1065 = vpack.c.b16 %v869, %v862
      %v1066 = vpack.c.b16 %v870, %v863
      %v1067 = vpack.c.b16 %v871, %v864
      %v1068 = vpack.c.b16 %v879, %v872
      %v1069 = vpack.c.b16 %v880, %v873
      %v1070 = vpack.c.b16 %v881, %v874
      %v1071 = vpack.c.b16 %v882, %v875
      %v1072 = vpack.c.b16 %v883, %v876
      %v1073 = vpack.c.b16 %v884, %v877
      %v1074 = vpack.c.b16 %v885, %v878
      %v1075 = vpack.c.b16 %v893, %v886
      %v1076 = vpack.c.b16 %v894, %v887
      %v1077 = vpack.c.b16 %v895, %v888
      %v1078 = vpack.c.b16 %v896, %v889
      %v1079 = vpack.c.b16 %v897, %v890
      %v1080 = vpack.c.b16 %v898, %v891
      %v1081 = vpack.c.b16 %v899, %v892
      %v1082 = vpack.c.b16 %v907, %v900
      %v1083 = vpack.c.b16 %v908, %v901
      %v1084 = vpack.c.b16 %v909, %v902
      %v1085 = vpack.c.b16 %v910, %v903
      %v1086 = vpack.c.b16 %v911, %v904
      %v1087 = vpack.c.b16 %v912, %v905
      %v1088 = vpack.c.b16 %v913, %v906
      %v1089 = vpack.c.b16 %v921, %v914
      %v1090 = vpack.c.b16 %v922, %v915
      %v1091 = vpack.c.b16 %v923, %v916
      %v1092 = vpack.c.b16 %v924, %v917
      %v1093 = vpack.c.b16 %v925, %v918
      %v1094 = vpack.c.b16 %v926, %v919
      %v1095 = vpack.c.b16 %v927, %v920
      %v1096 = vpack.c.b16 %v935, %v928
      %v1097 = vpack.c.b16 %v936, %v929
      %v1098 = vpack.c.b16 %v937, %v930
      %v1099 = vpack.c.b16 %v938, %v931
      %v1100 = vpack.c.b16 %v939, %v932
      %v1101 = vpack.c.b16 %v940, %v933
      %v1102 = vpack.c.b16 %v941, %v934
      %v1103 = vpack.c.b16 %v949, %v942
      %v1104 = vpack.c.b16 %v950, %v943
      %v1105 = vpack.c.b16 %v951, %v944
      %v1106 = vpack.c.b16 %v952, %v945
      %v1107 = vpack.c.b16 %v953, %v946
      %v1108 = vpack.c.b16 %v954, %v947
      %v1109 = vpack.c.b16 %v955, %v948
      %v1110 = vpack.c.b16 %v963, %v956
      %v1111 = vpack.c.b16 %v964, %v957
      %v1112 = vpack.c.b16 %v965, %v958
      %v1113 = vpack.c.b16 %v966, %v959
      %v1114 = vpack.c.b16 %v967, %v960
      %v1115 = vpack.c.b16 %v968, %v961
      %v1116 = vpack.c.b16 %v969, %v962
      %v1117 = vpack.c.b16 %v977, %v970
      %v1118 = vpack.c.b16 %v978, %v971
      %v1119 = vpack.c.b16 %v979, %v972
      %v1120 = vpack.c.b16 %v980, %v973
      %v1121 = vpack.c.b16 %v981, %v974
      %v1122 = vpack.c.b16 %v982, %v975
      %v1123 = vpack.c.b16 %v983, %v976
      %v1124 = vpack.c.b16 %v991, %v984
      %v1125 = vpack.c.b16 %v992, %v985
      %v1126 = vpack.c.b16 %v993, %v986
      %v1127 = vpack.c.b16 %v994, %v987
      %v1128 = vpack.c.b16 %v995, %v988
      %v1129 = vpack.c.b16 %v996, %v989
      %v1130 = vpack.c.b16 %v997, %v990
      %v1131 = vpack.c.b16 %v1005, %v998
      %v1132 = vpack.c.b16 %v1006, %v999
      %v1133 = vpack.c.b16 %v1007, %v1000
      %v1134 = vpack.c.b16 %v1008, %v1001
      %v1135 = vpack.c.b16 %v1009, %v1002
      %v1136 = vpack.c.b16 %v1010, %v1003
      %v1137 = vpack.c.b16 %v1011, %v1004
      %v1138 = vpack.c.b16 %v1019, %v1012
      %v1139 = vpack.c.b16 %v1020, %v1013
      %v1140 = vpack.c.b16 %v1021, %v1014
      %v1141 = vpack.c.b16 %v1022, %v1015
      %v1142 = vpack.c.b16 %v1023, %v1016
      %v1143 = vpack.c.b16 %v1024, %v1017
      %v1144 = vpack.c.b16 %v1025, %v1018
      %v1145 = vpack.c.b16 %v1033, %v1026
      %v1146 = vpack.c.b16 %v1034, %v1027
      %v1147 = vpack.c.b16 %v1035, %v1028
      %v1148 = vpack.c.b16 %v1036, %v1029
      %v1149 = vpack.c.b16 %v1037, %v1030
      %v1150 = vpack.c.b16 %v1038, %v1031
      %v1151 = vpack.c.b16 %v1039, %v1032
      %v1444 = vunpack.c.l.b16 %v470
      %v1445 = vunpack.c.h.b16 %v470
      %v1446 = vunpack.c.l.b16 %v471
      %v1447 = vunpack.c.h.b16 %v471
      %v1448 = vunpack.c.l.b16 %v472
      %v1449 = vunpack.c.h.b16 %v472
      %v1450 = vunpack.c.l.b16 %v473
      %v1451 = vunpack.c.h.b16 %v473
      %v1452 = vunpack.c.l.b16 %v474
      %v1453 = vunpack.c.h.b16 %v474
      %v1454 = vunpack.c.l.b16 %v475
      %v1455 = vunpack.c.h.b16 %v475
      %v1456 = vunpack.c.l.b16 %v476
      %v1457 = vunpack.c.h.b16 %v476
      %v1458 = vunpack.c.l.b16 %v477
      %v1459 = vunpack.c.h.b16 %v477
      %v1460 = vunpack.c.l.b16 %v478
      %v1461 = vunpack.c.h.b16 %v478
      %v1462 = vunpack.c.l.b16 %v479
      %v1463 = vunpack.c.h.b16 %v479
      %v1464 = vunpack.c.l.b16 %v480
      %v1465 = vunpack.c.h.b16 %v480
      %v1466 = vunpack.c.l.b16 %v481
      %v1467 = vunpack.c.h.b16 %v481
      %v1468 = vunpack.c.l.b16 %v482
      %v1469 = vunpack.c.h.b16 %v482
      %v1470 = vunpack.c.l.b16 %v483
      %v1471 = vunpack.c.h.b16 %v483
      %v1472 = vunpack.c.l.b16 %v484
      %v1473 = vunpack.c.h.b16 %v484
      %v1474 = vunpack.c.l.b16 %v485
      %v1475 = vunpack.c.h.b16 %v485
      %v1476 = vunpack.c.l.b16 %v486
      %v1477 = vunpack.c.h.b16 %v486
      %v1478 = vunpack.c.l.b16 %v487
      %v1479 = vunpack.c.h.b16 %v487
      %v1480 = vunpack.c.l.b16 %v488
      %v1481 = vunpack.c.h.b16 %v488
      %v1482 = vunpack.c.l.b16 %v489
      %v1483 = vunpack.c.h.b16 %v489
      %v1484 = vunpack.c.l.b16 %v490
      %v1485 = vunpack.c.h.b16 %v490
      %v1486 = vunpack.c.l.b16 %v491
      %v1487 = vunpack.c.h.b16 %v491
      %v1488 = vunpack.c.l.b16 %v492
      %v1489 = vunpack.c.h.b16 %v492
      %v1490 = vunpack.c.l.b16 %v493
      %v1491 = vunpack.c.h.b16 %v493
      %v1492 = vunpack.c.l.b16 %v494
      %v1493 = vunpack.c.h.b16 %v494
      %v1494 = vunpack.c.l.b16 %v495
      %v1495 = vunpack.c.h.b16 %v495
      %v1496 = vunpack.c.l.b16 %v496
      %v1497 = vunpack.c.h.b16 %v496
      %v1498 = vunpack.c.l.b16 %v497
      %v1499 = vunpack.c.h.b16 %v497
      %v1500 = vunpack.c.l.b16 %v498
      %v1501 = vunpack.c.h.b16 %v498
      %v1502 = vunpack.c.l.b16 %v499
      %v1503 = vunpack.c.h.b16 %v499
      %v1504 = vunpack.c.l.b16 %v500
      %v1505 = vunpack.c.h.b16 %v500
      %v1506 = vunpack.c.l.b16 %v501
      %v1507 = vunpack.c.h.b16 %v501
      %v1508 = vunpack.c.l.b16 %v502
      %v1509 = vunpack.c.h.b16 %v502
      %v1510 = vunpack.c.l.b16 %v503
      %v1511 = vunpack.c.h.b16 %v503
      %v1512 = vunpack.c.l.b16 %v504
      %v1513 = vunpack.c.h.b16 %v504
      %v1514 = vunpack.c.l.b16 %v505
      %v1515 = vunpack.c.h.b16 %v505
      %v1516 = vunpack.c.l.b16 %v506
      %v1517 = vunpack.c.h.b16 %v506
      %v1518 = vunpack.c.l.b16 %v507
      %v1519 = vunpack.c.h.b16 %v507
      %v1520 = vunpack.c.l.b16 %v508
      %v1521 = vunpack.c.h.b16 %v508
      %v1522 = vunpack.c.l.b16 %v509
      %v1523 = vunpack.c.h.b16 %v509
      %v1524 = vunpack.c.l.b16 %v510
      %v1525 = vunpack.c.h.b16 %v510
      %v1526 = vunpack.c.l.b16 %v511
      %v1527 = vunpack.c.h.b16 %v511
      %v1528 = vunpack.c.l.b16 %v512
      %v1529 = vunpack.c.h.b16 %v512
      %v1530 = vunpack.c.l.b16 %v513
      %v1531 = vunpack.c.h.b16 %v513
      %v1532 = vunpack.c.l.b16 %v514
      %v1533 = vunpack.c.h.b16 %v514
      %v1534 = vunpack.c.l.b16 %v515
      %v1535 = vunpack.c.h.b16 %v515
      %v1536 = vunpack.c.l.b16 %v516
      %v1537 = vunpack.c.h.b16 %v516
      %v1538 = vunpack.c.l.b16 %v517
      %v1539 = vunpack.c.h.b16 %v517
      %v1540 = vunpack.c.l.b16 %v518
      %v1541 = vunpack.c.h.b16 %v518
      %v1542 = vunpack.c.l.b16 %v519
      %v1543 = vunpack.c.h.b16 %v519
      %v1544 = vunpack.c.l.b16 %v520
      %v1545 = vunpack.c.h.b16 %v520
      %v1546 = vunpack.c.l.b16 %v521
      %v1547 = vunpack.c.h.b16 %v521
      %v1548 = vunpack.c.l.b16 %v522
      %v1549 = vunpack.c.h.b16 %v522
      %v1550 = vunpack.c.l.b16 %v523
      %v1551 = vunpack.c.h.b16 %v523
      %v1552 = vunpack.c.l.b16 %v524
      %v1553 = vunpack.c.h.b16 %v524
      %v1554 = vunpack.c.l.b16 %v525
      %v1555 = vunpack.c.h.b16 %v525
      %v1556 = vunpack.c.l.b16 %v526
      %v1557 = vunpack.c.h.b16 %v526
      %v1558 = vunpack.c.l.b16 %v527
      %v1559 = vunpack.c.h.b16 %v527
      %v1560 = vunpack.c.l.b16 %v528
      %v1561 = vunpack.c.h.b16 %v528
      %v1562 = vunpack.c.l.b16 %v529
      %v1563 = vunpack.c.h.b16 %v529
      %v1564 = vunpack.c.l.b16 %v530
      %v1565 = vunpack.c.h.b16 %v530
      %v1566 = vunpack.c.l.b16 %v531
      %v1567 = vunpack.c.h.b16 %v531
      %v1568 = vunpack.c.l.b16 %v532
      %v1569 = vunpack.c.h.b16 %v532
      %v1570 = vunpack.c.l.b16 %v533
      %v1571 = vunpack.c.h.b16 %v533
      %v1572 = vunpack.c.l.b16 %v534
      %v1573 = vunpack.c.h.b16 %v534
      %v1574 = vunpack.c.l.b16 %v535
      %v1575 = vunpack.c.h.b16 %v535
      %v1576 = vunpack.c.l.b16 %v536
      %v1577 = vunpack.c.h.b16 %v536
      %v1578 = vunpack.c.l.b16 %v537
      %v1579 = vunpack.c.h.b16 %v537
      %v1580 = vunpack.c.l.b16 %v538
      %v1581 = vunpack.c.h.b16 %v538
      %v1582 = vunpack.c.l.b16 %v539
      %v1583 = vunpack.c.h.b16 %v539
      %v1584 = vunpack.c.l.b16 %v540
      %v1585 = vunpack.c.h.b16 %v540
      %v1586 = vunpack.c.l.b16 %v541
      %v1587 = vunpack.c.h.b16 %v541
      %v1588 = vunpack.c.l.b16 %v542
      %v1589 = vunpack.c.h.b16 %v542
      %v1590 = vunpack.c.l.b16 %v543
      %v1591 = vunpack.c.h.b16 %v543
      %v1592 = vunpack.c.l.b16 %v544
      %v1593 = vunpack.c.h.b16 %v544
      %v1594 = vunpack.c.l.b16 %v545
      %v1595 = vunpack.c.h.b16 %v545
      %v1596 = vunpack.c.l.b16 %v546
      %v1597 = vunpack.c.h.b16 %v546
      %v1598 = vunpack.c.l.b16 %v547
      %v1599 = vunpack.c.h.b16 %v547
      %v1600 = vunpack.c.l.b16 %v548
      %v1601 = vunpack.c.h.b16 %v548
      %v1602 = vunpack.c.l.b16 %v549
      %v1603 = vunpack.c.h.b16 %v549
      %v1604 = vunpack.c.l.b16 %v550
      %v1605 = vunpack.c.h.b16 %v550
      %v1606 = vunpack.c.l.b16 %v551
      %v1607 = vunpack.c.h.b16 %v551
      %v1608 = vunpack.c.l.b16 %v552
      %v1609 = vunpack.c.h.b16 %v552
      %v1610 = vunpack.c.l.b16 %v553
      %v1611 = vunpack.c.h.b16 %v553
      %v1612 = vunpack.c.l.b16 %v554
      %v1613 = vunpack.c.h.b16 %v554
      %v1614 = vunpack.c.l.b16 %v555
      %v1615 = vunpack.c.h.b16 %v555
      %v1616 = vunpack.c.l.b16 %v556
      %v1617 = vunpack.c.h.b16 %v556
      %v1618 = vunpack.c.l.b16 %v557
      %v1619 = vunpack.c.h.b16 %v557
      %v1620 = vunpack.c.l.b16 %v558
      %v1621 = vunpack.c.h.b16 %v558
      %v1622 = vunpack.c.l.b16 %v559
      %v1623 = vunpack.c.h.b16 %v559
      %v1624 = vunpack.c.l.b16 %v560
      %v1625 = vunpack.c.h.b16 %v560
      %v1626 = vunpack.c.l.b16 %v561
      %v1627 = vunpack.c.h.b16 %v561
      %v1628 = vunpack.c.l.b16 %v562
      %v1629 = vunpack.c.h.b16 %v562
      %v1630 = vunpack.c.l.b16 %v563
      %v1631 = vunpack.c.h.b16 %v563
      %v1632 = vunpack.c.l.b16 %v564
      %v1633 = vunpack.c.h.b16 %v564
      %v1634 = vunpack.c.l.b16 %v565
      %v1635 = vunpack.c.h.b16 %v565
      %v1636 = vunpack.c.l.b16 %v566
      %v1637 = vunpack.c.h.b16 %v566
      %v1638 = vunpack.c.l.b16 %v567
      %v1639 = vunpack.c.h.b16 %v567
      %v1640 = vunpack.c.l.b16 %v568
      %v1641 = vunpack.c.h.b16 %v568
      %v1642 = vunpack.c.l.b16 %v569
      %v1643 = vunpack.c.h.b16 %v569
      %v1644 = vunpack.c.l.b16 %v570
      %v1645 = vunpack.c.h.b16 %v570
      %v1646 = vunpack.c.l.b16 %v571
      %v1647 = vunpack.c.h.b16 %v571
      %v1648 = vunpack.c.l.b16 %v572
      %v1649 = vunpack.c.h.b16 %v572
      %v1650 = vunpack.c.l.b16 %v573
      %v1651 = vunpack.c.h.b16 %v573
      %v1652 = vunpack.c.l.b16 %v574
      %v1653 = vunpack.c.h.b16 %v574
      %v1654 = vunpack.c.l.b16 %v575
      %v1655 = vunpack.c.h.b16 %v575
      %v1656 = vunpack.c.l.b16 %v576
      %v1657 = vunpack.c.h.b16 %v576
      %v1658 = vunpack.c.l.b16 %v577
      %v1659 = vunpack.c.h.b16 %v577
      %v1660 = vunpack.c.l.b16 %v578
      %v1661 = vunpack.c.h.b16 %v578
      %v1662 = vunpack.c.l.b16 %v579
      %v1663 = vunpack.c.h.b16 %v579
      %v1664 = vunpack.c.l.b16 %v580
      %v1665 = vunpack.c.h.b16 %v580
      %v1666 = vunpack.c.l.b16 %v581
      %v1667 = vunpack.c.h.b16 %v581
      %v1668 = vunpack.c.l.b16 %v582
      %v1669 = vunpack.c.h.b16 %v582
      %v1670 = vunpack.c.l.b16 %v583
      %v1671 = vunpack.c.h.b16 %v583
      %v1672 = vunpack.c.l.b16 %v584
      %v1673 = vunpack.c.h.b16 %v584
      %v1674 = vunpack.c.l.b16 %v585
      %v1675 = vunpack.c.h.b16 %v585
      %v1676 = vunpack.c.l.b16 %v586
      %v1677 = vunpack.c.h.b16 %v586
      %v1678 = vunpack.c.l.b16 %v587
      %v1679 = vunpack.c.h.b16 %v587
      %v1680 = vunpack.c.l.b16 %v588
      %v1681 = vunpack.c.h.b16 %v588
      %v1682 = vunpack.c.l.b16 %v589
      %v1683 = vunpack.c.h.b16 %v589
      %v1684 = vunpack.c.l.b16 %v590
      %v1685 = vunpack.c.h.b16 %v590
      %v1686 = vunpack.c.l.b16 %v591
      %v1687 = vunpack.c.h.b16 %v591
      %v1688 = vunpack.c.l.b16 %v592
      %v1689 = vunpack.c.h.b16 %v592
      %v1690 = vunpack.c.l.b16 %v593
      %v1691 = vunpack.c.h.b16 %v593
      %v1692 = vunpack.c.l.b16 %v594
      %v1693 = vunpack.c.h.b16 %v594
      %v1694 = vunpack.c.l.b16 %v595
      %v1695 = vunpack.c.h.b16 %v595
      %v1696 = vunpack.c.l.b16 %v596
      %v1697 = vunpack.c.h.b16 %v596
      %v1698 = vunpack.c.l.b16 %v597
      %v1699 = vunpack.c.h.b16 %v597
      %v1700 = vunpack.c.l.b16 %v598
      %v1701 = vunpack.c.h.b16 %v598
      %v1702 = vunpack.c.l.b16 %v599
      %v1703 = vunpack.c.h.b16 %v599
      %v1704 = vunpack.c.l.b16 %v600
      %v1705 = vunpack.c.h.b16 %v600
      %v1706 = vunpack.c.l.b16 %v601
      %v1707 = vunpack.c.h.b16 %v601
      %v1708 = vunpack.c.l.b16 %v602
      %v1709 = vunpack.c.h.b16 %v602
      %v1710 = vunpack.c.l.b16 %v603
      %v1711 = vunpack.c.h.b16 %v603
      %v1712 = vunpack.c.l.b16 %v604
      %v1713 = vunpack.c.h.b16 %v604
      %v1714 = vunpack.c.l.b16 %v605
      %v1715 = vunpack.c.h.b16 %v605
      %v1716 = vunpack.c.l.b16 %v606
      %v1717 = vunpack.c.h.b16 %v606
      %v1718 = vunpack.c.l.b16 %v607
      %v1719 = vunpack.c.h.b16 %v607
      %v1720 = vunpack.c.l.b16 %v608
      %v1721 = vunpack.c.h.b16 %v608
      %v1722 = vunpack.c.l.b16 %v609
      %v1723 = vunpack.c.h.b16 %v609
      %v1724 = vunpack.c.l.b16 %v610
      %v1725 = vunpack.c.h.b16 %v610
      %v1726 = vunpack.c.l.b16 %v611
      %v1727 = vunpack.c.h.b16 %v611
      %v1728 = vunpack.c.l.b16 %v612
      %v1729 = vunpack.c.h.b16 %v612
      %v1730 = vunpack.c.l.b16 %v613
      %v1731 = vunpack.c.h.b16 %v613
      %v1732 = vunpack.c.l.b16 %v614
      %v1733 = vunpack.c.h.b16 %v614
      %v1734 = vunpack.c.l.b16 %v615
      %v1735 = vunpack.c.h.b16 %v615
      %v1736 = vunpack.c.l.b16 %v616
      %v1737 = vunpack.c.h.b16 %v616
      %v1738 = vunpack.c.l.b16 %v617
      %v1739 = vunpack.c.h.b16 %v617
      %v1740 = vunpack.c.l.b16 %v618
      %v1741 = vunpack.c.h.b16 %v618
      %v1742 = vunpack.c.l.b16 %v619
      %v1743 = vunpack.c.h.b16 %v619
      %v1744 = vunpack.c.l.b16 %v620
      %v1745 = vunpack.c.h.b16 %v620
      %v1746 = vunpack.c.l.b16 %v621
      %v1747 = vunpack.c.h.b16 %v621
      %v1748 = vunpack.c.l.b16 %v622
      %v1749 = vunpack.c.h.b16 %v622
      %v1750 = vunpack.c.l.b16 %v623
      %v1751 = vunpack.c.h.b16 %v623
      %v1752 = vunpack.c.l.b16 %v624
      %v1753 = vunpack.c.h.b16 %v624
      %v1754 = vunpack.c.l.b16 %v625
      %v1755 = vunpack.c.h.b16 %v625
      %v1756 = vunpack.c.l.b16 %v626
      %v1757 = vunpack.c.h.b16 %v626
      %v1758 = vunpack.c.l.b16 %v627
      %v1759 = vunpack.c.h.b16 %v627
      %v1760 = vunpack.c.l.b16 %v628
      %v1761 = vunpack.c.h.b16 %v628
      %v1762 = vunpack.c.l.b16 %v629
      %v1763 = vunpack.c.h.b16 %v629
      %v1764 = vunpack.c.l.b16 %v630
      %v1765 = vunpack.c.h.b16 %v630
      %v1766 = vunpack.c.l.b16 %v631
      %v1767 = vunpack.c.h.b16 %v631
      %v1768 = vunpack.c.l.b16 %v632
      %v1769 = vunpack.c.h.b16 %v632
      %v1770 = vunpack.c.l.b16 %v633
      %v1771 = vunpack.c.h.b16 %v633
      %v1772 = vunpack.c.l.b16 %v634
      %v1773 = vunpack.c.h.b16 %v634
      %v1774 = vunpack.c.l.b16 %v635
      %v1775 = vunpack.c.h.b16 %v635
      %v1776 = vunpack.c.l.b16 %v636
      %v1777 = vunpack.c.h.b16 %v636
      %v1778 = vunpack.c.l.b16 %v637
      %v1779 = vunpack.c.h.b16 %v637
      %v1780 = vunpack.c.l.b16 %v638
      %v1781 = vunpack.c.h.b16 %v638
      %v1782 = vunpack.c.l.b16 %v639
      %v1783 = vunpack.c.h.b16 %v639
      %v1784 = vunpack.c.l.b16 %v640
      %v1785 = vunpack.c.h.b16 %v640
      %v1786 = vunpack.c.l.b16 %v641
      %v1787 = vunpack.c.h.b16 %v641
      %v1788 = vunpack.c.l.b16 %v642
      %v1789 = vunpack.c.h.b16 %v642
      %v1790 = vunpack.c.l.b16 %v643
      %v1791 = vunpack.c.h.b16 %v643
      %v1792 = vunpack.c.l.b16 %v644
      %v1793 = vunpack.c.h.b16 %v644
      %v1794 = vunpack.c.l.b16 %v645
      %v1795 = vunpack.c.h.b16 %v645
      %v1796 = vunpack.c.l.b16 %v646
      %v1797 = vunpack.c.h.b16 %v646
      %v1798 = vunpack.c.l.b16 %v647
      %v1799 = vunpack.c.h.b16 %v647
      %v1800 = vunpack.c.l.b16 %v648
      %v1801 = vunpack.c.h.b16 %v648
      %v1802 = vunpack.c.l.b16 %v649
      %v1803 = vunpack.c.h.b16 %v649
      %v1804 = vunpack.c.l.b16 %v650
      %v1805 = vunpack.c.h.b16 %v650
      %v1806 = vunpack.c.l.b16 %v651
      %v1807 = vunpack.c.h.b16 %v651
      %v1808 = vunpack.c.l.b16 %v652
      %v1809 = vunpack.c.h.b16 %v652
      %v1810 = vunpack.c.l.b16 %v653
      %v1811 = vunpack.c.h.b16 %v653
      %v1812 = vunpack.c.l.b16 %v654
      %v1813 = vunpack.c.h.b16 %v654
      %v1814 = vunpack.c.l.b16 %v655
      %v1815 = vunpack.c.h.b16 %v655
      %v1816 = vunpack.c.l.b16 %v656
      %v1817 = vunpack.c.h.b16 %v656
      %v1818 = vunpack.c.l.b16 %v657
      %v1819 = vunpack.c.h.b16 %v657
      %v1820 = vunpack.c.l.b16 %v658
      %v1821 = vunpack.c.h.b16 %v658
      %v1822 = vunpack.c.l.b16 %v659
      %v1823 = vunpack.c.h.b16 %v659
      %v1824 = vunpack.c.l.b16 %v660
      %v1825 = vunpack.c.h.b16 %v660
      %v1826 = vunpack.c.l.b16 %v661
      %v1827 = vunpack.c.h.b16 %v661
      %v1828 = vunpack.c.l.b16 %v662
      %v1829 = vunpack.c.h.b16 %v662
      %v1830 = vunpack.c.l.b16 %v663
      %v1831 = vunpack.c.h.b16 %v663
      %v1832 = vunpack.c.l.b16 %v664
      %v1833 = vunpack.c.h.b16 %v664
      %v1834 = vunpack.c.l.b16 %v665
      %v1835 = vunpack.c.h.b16 %v665
      %v1836 = vpack.c.b16 %v1448, %v1444
      %v1837 = vpack.c.b16 %v1449, %v1445
      %v1838 = vpack.c.b16 %v1450, %v1446
      %v1839 = vpack.c.b16 %v1451, %v1447
      %v1840 = vpack.c.b16 %v1456, %v1452
      %v1841 = vpack.c.b16 %v1457, %v1453
      %v1842 = vpack.c.b16 %v1458, %v1454
      %v1843 = vpack.c.b16 %v1459, %v1455
      %v1844 = vpack.c.b16 %v1464, %v1460
      %v1845 = vpack.c.b16 %v1465, %v1461
      %v1846 = vpack.c.b16 %v1466, %v1462
      %v1847 = vpack.c.b16 %v1467, %v1463
      %v1848 = vpack.c.b16 %v1472, %v1468
      %v1849 = vpack.c.b16 %v1473, %v1469
      %v1850 = vpack.c.b16 %v1474, %v1470
      %v1851 = vpack.c.b16 %v1475, %v1471
      %v1852 = vpack.c.b16 %v1480, %v1476
      %v1853 = vpack.c.b16 %v1481, %v1477
      %v1854 = vpack.c.b16 %v1482, %v1478
      %v1855 = vpack.c.b16 %v1483, %v1479
      %v1856 = vpack.c.b16 %v1488, %v1484
      %v1857 = vpack.c.b16 %v1489, %v1485
      %v1858 = vpack.c.b16 %v1490, %v1486
      %v1859 = vpack.c.b16 %v1491, %v1487
      %v1860 = vpack.c.b16 %v1496, %v1492
      %v1861 = vpack.c.b16 %v1497, %v1493
      %v1862 = vpack.c.b16 %v1498, %v1494
      %v1863 = vpack.c.b16 %v1499, %v1495
      %v1864 = vpack.c.b16 %v1504, %v1500
      %v1865 = vpack.c.b16 %v1505, %v1501
      %v1866 = vpack.c.b16 %v1506, %v1502
      %v1867 = vpack.c.b16 %v1507, %v1503
      %v1868 = vpack.c.b16 %v1512, %v1508
      %v1869 = vpack.c.b16 %v1513, %v1509
      %v1870 = vpack.c.b16 %v1514, %v1510
      %v1871 = vpack.c.b16 %v1515, %v1511
      %v1872 = vpack.c.b16 %v1520, %v1516
      %v1873 = vpack.c.b16 %v1521, %v1517
      %v1874 = vpack.c.b16 %v1522, %v1518
      %v1875 = vpack.c.b16 %v1523, %v1519
      %v1876 = vpack.c.b16 %v1528, %v1524
      %v1877 = vpack.c.b16 %v1529, %v1525
      %v1878 = vpack.c.b16 %v1530, %v1526
      %v1879 = vpack.c.b16 %v1531, %v1527
      %v1880 = vpack.c.b16 %v1536, %v1532
      %v1881 = vpack.c.b16 %v1537, %v1533
      %v1882 = vpack.c.b16 %v1538, %v1534
      %v1883 = vpack.c.b16 %v1539, %v1535
      %v1884 = vpack.c.b16 %v1544, %v1540
      %v1885 = vpack.c.b16 %v1545, %v1541
      %v1886 = vpack.c.b16 %v1546, %v1542
      %v1887 = vpack.c.b16 %v1547, %v1543
      %v1888 = vpack.c.b16 %v1552, %v1548
      %v1889 = vpack.c.b16 %v1553, %v1549
      %v1890 = vpack.c.b16 %v1554, %v1550
      %v1891 = vpack.c.b16 %v1555, %v1551
      %v1892 = vpack.c.b16 %v1560, %v1556
      %v1893 = vpack.c.b16 %v1561, %v1557
      %v1894 = vpack.c.b16 %v1562, %v1558
      %v1895 = vpack.c.b16 %v1563, %v1559
      %v1896 = vpack.c.b16 %v1568, %v1564
      %v1897 = vpack.c.b16 %v1569, %v1565
      %v1898 = vpack.c.b16 %v1570, %v1566
      %v1899 = vpack.c.b16 %v1571, %v1567
      %v1900 = vpack.c.b16 %v1576, %v1572
      %v1901 = vpack.c.b16 %v1577, %v1573
      %v1902 = vpack.c.b16 %v1578, %v1574
      %v1903 = vpack.c.b16 %v1579, %v1575
      %v1904 = vpack.c.b16 %v1584, %v1580
      %v1905 = vpack.c.b16 %v1585, %v1581
      %v1906 = vpack.c.b16 %v1586, %v1582
      %v1907 = vpack.c.b16 %v1587, %v1583
      %v1908 = vpack.c.b16 %v1592, %v1588
      %v1909 = vpack.c.b16 %v1593, %v1589
      %v1910 = vpack.c.b16 %v1594, %v1590
      %v1911 = vpack.c.b16 %v1595, %v1591
      %v1912 = vpack.c.b16 %v1600, %v1596
      %v1913 = vpack.c.b16 %v1601, %v1597
      %v1914 = vpack.c.b16 %v1602, %v1598
      %v1915 = vpack.c.b16 %v1603, %v1599
      %v1916 = vpack.c.b16 %v1608, %v1604
      %v1917 = vpack.c.b16 %v1609, %v1605
      %v1918 = vpack.c.b16 %v1610, %v1606
      %v1919 = vpack.c.b16 %v1611, %v1607
      %v1920 = vpack.c.b16 %v1616, %v1612
      %v1921 = vpack.c.b16 %v1617, %v1613
      %v1922 = vpack.c.b16 %v1618, %v1614
      %v1923 = vpack.c.b16 %v1619, %v1615
      %v1924 = vpack.c.b16 %v1624, %v1620
      %v1925 = vpack.c.b16 %v1625, %v1621
      %v1926 = vpack.c.b16 %v1626, %v1622
      %v1927 = vpack.c.b16 %v1627, %v1623
      %v1928 = vpack.c.b16 %v1632, %v1628
      %v1929 = vpack.c.b16 %v1633, %v1629
      %v1930 = vpack.c.b16 %v1634, %v1630
      %v1931 = vpack.c.b16 %v1635, %v1631
      %v1932 = vpack.c.b16 %v1640, %v1636
      %v1933 = vpack.c.b16 %v1641, %v1637
      %v1934 = vpack.c.b16 %v1642, %v1638
      %v1935 = vpack.c.b16 %v1643, %v1639
      %v1936 = vpack.c.b16 %v1648, %v1644
      %v1937 = vpack.c.b16 %v1649, %v1645
      %v1938 = vpack.c.b16 %v1650, %v1646
      %v1939 = vpack.c.b16 %v1651, %v1647
      %v1940 = vpack.c.b16 %v1656, %v1652
      %v1941 = vpack.c.b16 %v1657, %v1653
      %v1942 = vpack.c.b16 %v1658, %v1654
      %v1943 = vpack.c.b16 %v1659, %v1655
      %v1944 = vpack.c.b16 %v1664, %v1660
      %v1945 = vpack.c.b16 %v1665, %v1661
      %v1946 = vpack.c.b16 %v1666, %v1662
      %v1947 = vpack.c.b16 %v1667, %v1663
      %v1948 = vpack.c.b16 %v1672, %v1668
      %v1949 = vpack.c.b16 %v1673, %v1669
      %v1950 = vpack.c.b16 %v1674, %v1670
      %v1951 = vpack.c.b16 %v1675, %v1671
      %v1952 = vpack.c.b16 %v1680, %v1676
      %v1953 = vpack.c.b16 %v1681, %v1677
      %v1954 = vpack.c.b16 %v1682, %v1678
      %v1955 = vpack.c.b16 %v1683, %v1679
      %v1956 = vpack.c.b16 %v1688, %v1684
      %v1957 = vpack.c.b16 %v1689, %v1685
      %v1958 = vpack.c.b16 %v1690, %v1686
      %v1959 = vpack.c.b16 %v1691, %v1687
      %v1960 = vpack.c.b16 %v1696, %v1692
      %v1961 = vpack.c.b16 %v1697, %v1693
      %v1962 = vpack.c.b16 %v1698, %v1694
      %v1963 = vpack.c.b16 %v1699, %v1695
      %v1964 = vpack.c.b16 %v1704, %v1700
      %v1965 = vpack.c.b16 %v1705, %v1701
      %v1966 = vpack.c.b16 %v1706, %v1702
      %v1967 = vpack.c.b16 %v1707, %v1703
      %v1968 = vpack.c.b16 %v1712, %v1708
      %v1969 = vpack.c.b16 %v1713, %v1709
      %v1970 = vpack.c.b16 %v1714, %v1710
      %v1971 = vpack.c.b16 %v1715, %v1711
      %v1972 = vpack.c.b16 %v1720, %v1716
      %v1973 = vpack.c.b16 %v1721, %v1717
      %v1974 = vpack.c.b16 %v1722, %v1718
      %v1975 = vpack.c.b16 %v1723, %v1719
      %v1976 = vpack.c.b16 %v1728, %v1724
      %v1977 = vpack.c.b16 %v1729, %v1725
      %v1978 = vpack.c.b16 %v1730, %v1726
      %v1979 = vpack.c.b16 %v1731, %v1727
      %v1980 = vpack.c.b16 %v1736, %v1732
      %v1981 = vpack.c.b16 %v1737, %v1733
      %v1982 = vpack.c.b16 %v1738, %v1734
      %v1983 = vpack.c.b16 %v1739, %v1735
      %v1984 = vpack.c.b16 %v1744, %v1740
      %v1985 = vpack.c.b16 %v1745, %v1741
      %v1986 = vpack.c.b16 %v1746, %v1742
      %v1987 = vpack.c.b16 %v1747, %v1743
      %v1988 = vpack.c.b16 %v1752, %v1748
      %v1989 = vpack.c.b16 %v1753, %v1749
      %v1990 = vpack.c.b16 %v1754, %v1750
      %v1991 = vpack.c.b16 %v1755, %v1751
      %v1992 = vpack.c.b16 %v1760, %v1756
      %v1993 = vpack.c.b16 %v1761, %v1757
      %v1994 = vpack.c.b16 %v1762, %v1758
      %v1995 = vpack.c.b16 %v1763, %v1759
      %v1996 = vpack.c.b16 %v1768, %v1764
      %v1997 = vpack.c.b16 %v1769, %v1765
      %v1998 = vpack.c.b16 %v1770, %v1766
      %v1999 = vpack.c.b16 %v1771, %v1767
      %v2000 = vpack.c.b16 %v1776, %v1772
      %v2001 = vpack.c.b16 %v1777, %v1773
      %v2002 = vpack.c.b16 %v1778, %v1774
      %v2003 = vpack.c.b16 %v1779, %v1775
      %v2004 = vpack.c.b16 %v1784, %v1780
      %v2005 = vpack.c.b16 %v1785, %v1781
      %v2006 = vpack.c.b16 %v1786, %v1782
      %v2007 = vpack.c.b16 %v1787, %v1783
      %v2008 = vpack.c.b16 %v1792, %v1788
      %v2009 = vpack.c.b16 %v1793, %v1789
      %v2010 = vpack.c.b16 %v1794, %v1790
      %v2011 = vpack.c.b16 %v1795, %v1791
      %v2012 = vpack.c.b16 %v1800, %v1796
      %v2013 = vpack.c.b16 %v1801, %v1797
      %v2014 = vpack.c.b16 %v1802, %v1798
      %v2015 = vpack.c.b16 %v1803, %v1799
      %v2016 = vpack.c.b16 %v1808, %v1804
      %v2017 = vpack.c.b16 %v1809, %v1805
      %v2018 = vpack.c.b16 %v1810, %v1806
      %v2019 = vpack.c.b16 %v1811, %v1807
      %v2020 = vpack.c.b16 %v1816, %v1812
      %v2021 = vpack.c.b16 %v1817, %v1813
      %v2022 = vpack.c.b16 %v1818, %v1814
      %v2023 = vpack.c.b16 %v1819, %v1815
      %v2024 = vpack.c.b16 %v1824, %v1820
      %v2025 = vpack.c.b16 %v1825, %v1821
      %v2026 = vpack.c.b16 %v1826, %v1822
      %v2027 = vpack.c.b16 %v1827, %v1823
      %v2028 = vpack.c.b16 %v1832, %v1828
      %v2029 = vpack.c.b16 %v1833, %v1829
      %v2030 = vpack.c.b16 %v1834, %v1830
      %v2031 = vpack.c.b16 %v1835, %v1831
      %vm2228 = vcmask 130048
      %v2230 = vsel %vm2228, %v1046, 0
      %v2233 = vsel %vm2228, %v1053, 0
      %v2236 = vsel %vm2228, %v1060, 0
      %v2239 = vsel %vm2228, %v1067, 0
      %v2242 = vsel %vm2228, %v1074, 0
      %v2245 = vsel %vm2228, %v1081, 0
      %v2248 = vsel %vm2228, %v1088, 0
      %v2251 = vsel %vm2228, %v1095, 0
      %v2254 = vsel %vm2228, %v1102, 0
      %v2257 = vsel %vm2228, %v1109, 0
      %v2260 = vsel %vm2228, %v1116, 0
      %v2263 = vsel %vm2228, %v1123, 0
      %v2266 = vsel %vm2228, %v1130, 0
      %v2269 = vsel %vm2228, %v1137, 0
      %v2272 = vsel %vm2228, %v1144, 0
      %v2275 = vsel %vm2228, %v1151, 0
      %2277 = vmatprep.subr.bf16.mxu0 %v1837
      %2278 = vmatpush1.bf16.msra.mxu0 %v1836
      %2279 = vmatprep.subr.bf16.mxu0 %v1841
      %2280 = vmatpush1.bf16.msra.mxu0 %v1840
      %2281 = vmatprep.subr.bf16.mxu0 %v1845
      %2282 = vmatpush1.bf16.msra.mxu0 %v1844
      %2283 = vmatprep.subr.bf16.mxu0 %v1849
      %2284 = vmatpush1.bf16.msra.mxu0 %v1848
      %2285 = vmatprep.subr.bf16.mxu0 %v1853
      %2286 = vmatpush1.bf16.msra.mxu0 %v1852
      %2287 = vmatprep.subr.bf16.mxu0 %v1857
      %2288 = vmatpush1.bf16.msra.mxu0 %v1856
      %2289 = vmatprep.subr.bf16.mxu0 %v1861
      %2290 = vmatpush1.bf16.msra.mxu0 %v1860
      %2291 = vmatprep.subr.bf16.mxu0 %v1865
      %2292 = vmatpush1.bf16.msra.mxu0 %v1864
      %2293 = vmatprep.subr.bf16.mxu0 %v1869
      %2294 = vmatpush1.bf16.msra.mxu0 %v1868
      %2295 = vmatprep.subr.bf16.mxu0 %v1873
      %2296 = vmatpush1.bf16.msra.mxu0 %v1872
      %2297 = vmatprep.subr.bf16.mxu0 %v1877
      %2298 = vmatpush1.bf16.msra.mxu0 %v1876
      %2299 = vmatprep.subr.bf16.mxu0 %v1881
      %2300 = vmatpush1.bf16.msra.mxu0 %v1880
      %2301 = vmatprep.subr.bf16.mxu0 %v1885
      %2302 = vmatpush1.bf16.msra.mxu0 %v1884
      %2303 = vmatprep.subr.bf16.mxu0 %v1889
      %2304 = vmatpush1.bf16.msra.mxu0 %v1888
      %2305 = vmatprep.subr.bf16.mxu0 %v1893
      %2306 = vmatpush1.bf16.msra.mxu0 %v1892
      %2307 = vmatprep.subr.bf16.mxu0 %v1897
      %2308 = vmatpush1.bf16.msra.mxu0 %v1896
      %2309 = vmatprep.mubr.bf16.mxu0 %v1041
      %2310 = vmatmul.mubr.bf16.gmra.mrb[0].mxu0 %v1040
      %v2311 = vpop.f32.mrb[0].mxu0
      %v2312 = vadd.f32 %v671, %v2311
      %v2313 = vpop.f32.mrb[0].mxu0
      %v2314 = vadd.f32 %v675, %v2313
      %v2315 = vpop.f32.mrb[0].mxu0
      %v2316 = vadd.f32 %v671, %v2315
      %v2317 = vpop.f32.mrb[0].mxu0
      %v2318 = vadd.f32 %v675, %v2317
      %2319 = vmatprep.mubr.bf16.mxu0 %v1048
      %2320 = vmatmul.mubr.bf16.gmra.mrb[0].mxu0 %v1047
      %v2321 = vpop.f32.mrb[0].mxu0
      %v2322 = vadd.f32 %v671, %v2321
      %v2323 = vpop.f32.mrb[0].mxu0
      %v2324 = vadd.f32 %v675, %v2323
      %v2325 = vpop.f32.mrb[0].mxu0
      %v2326 = vadd.f32 %v671, %v2325
      %v2327 = vpop.f32.mrb[0].mxu0
      %v2328 = vadd.f32 %v675, %v2327
      %2329 = vmatprep.mubr.bf16.mxu0 %v1055
      %2330 = vmatmul.mubr.bf16.gmra.mrb[0].mxu0 %v1054
      %v2331 = vpop.f32.mrb[0].mxu0
      %v2332 = vadd.f32 %v671, %v2331
      %v2333 = vpop.f32.mrb[0].mxu0
      %v2334 = vadd.f32 %v675, %v2333
      %v2335 = vpop.f32.mrb[0].mxu0
      %v2336 = vadd.f32 %v671, %v2335
      %v2337 = vpop.f32.mrb[0].mxu0
      %v2338 = vadd.f32 %v675, %v2337
      %2339 = vmatprep.mubr.bf16.mxu0 %v1062
      %2340 = vmatmul.mubr.bf16.gmra.mrb[0].mxu0 %v1061
      %v2341 = vpop.f32.mrb[0].mxu0
      %v2342 = vadd.f32 %v671, %v2341
      %v2343 = vpop.f32.mrb[0].mxu0
      %v2344 = vadd.f32 %v675, %v2343
      %v2345 = vpop.f32.mrb[0].mxu0
      %v2346 = vadd.f32 %v671, %v2345
      %v2347 = vpop.f32.mrb[0].mxu0
      %v2348 = vadd.f32 %v675, %v2347
      %2349 = vmatprep.mubr.bf16.mxu0 %v1069
      %2350 = vmatmul.mubr.bf16.gmra.mrb[0].mxu0 %v1068
      %v2351 = vpop.f32.mrb[0].mxu0
      %v2352 = vadd.f32 %v671, %v2351
      %v2353 = vpop.f32.mrb[0].mxu0
      %v2354 = vadd.f32 %v675, %v2353
      %v2355 = vpop.f32.mrb[0].mxu0
      %v2356 = vadd.f32 %v671, %v2355
      %v2357 = vpop.f32.mrb[0].mxu0
      %v2358 = vadd.f32 %v675, %v2357
      %2359 = vmatprep.mubr.bf16.mxu0 %v1076
      %2360 = vmatmul.mubr.bf16.gmra.mrb[0].mxu0 %v1075
      %v2361 = vpop.f32.mrb[0].mxu0
      %v2362 = vadd.f32 %v671, %v2361
      %v2363 = vpop.f32.mrb[0].mxu0
      %v2364 = vadd.f32 %v675, %v2363
      %v2365 = vpop.f32.mrb[0].mxu0
      %v2366 = vadd.f32 %v671, %v2365
      %v2367 = vpop.f32.mrb[0].mxu0
      %v2368 = vadd.f32 %v675, %v2367
      %2369 = vmatprep.mubr.bf16.mxu0 %v1083
      %2370 = vmatmul.mubr.bf16.gmra.mrb[0].mxu0 %v1082
      %v2371 = vpop.f32.mrb[0].mxu0
      %v2372 = vadd.f32 %v671, %v2371
      %v2373 = vpop.f32.mrb[0].mxu0
      %v2374 = vadd.f32 %v675, %v2373
      %v2375 = vpop.f32.mrb[0].mxu0
      %v2376 = vadd.f32 %v671, %v2375
      %v2377 = vpop.f32.mrb[0].mxu0
      %v2378 = vadd.f32 %v675, %v2377
      %2379 = vmatprep.mubr.bf16.mxu0 %v1090
      %2380 = vmatmul.mubr.bf16.gmra.mrb[0].mxu0 %v1089
      %v2381 = vpop.f32.mrb[0].mxu0
      %v2382 = vadd.f32 %v671, %v2381
      %v2383 = vpop.f32.mrb[0].mxu0
      %v2384 = vadd.f32 %v675, %v2383
      %v2385 = vpop.f32.mrb[0].mxu0
      %v2386 = vadd.f32 %v671, %v2385
      %v2387 = vpop.f32.mrb[0].mxu0
      %v2388 = vadd.f32 %v675, %v2387
      %2389 = vmatprep.mubr.bf16.mxu0 %v1097
      %2390 = vmatmul.mubr.bf16.gmra.mrb[0].mxu0 %v1096
      %v2391 = vpop.f32.mrb[0].mxu0
      %v2392 = vadd.f32 %v671, %v2391
      %v2393 = vpop.f32.mrb[0].mxu0
      %v2394 = vadd.f32 %v675, %v2393
      %v2395 = vpop.f32.mrb[0].mxu0
      %v2396 = vadd.f32 %v671, %v2395
      %v2397 = vpop.f32.mrb[0].mxu0
      %v2398 = vadd.f32 %v675, %v2397
      %2399 = vmatprep.mubr.bf16.mxu0 %v1104
      %2400 = vmatmul.mubr.bf16.gmra.mrb[0].mxu0 %v1103
      %v2401 = vpop.f32.mrb[0].mxu0
      %v2402 = vadd.f32 %v671, %v2401
      %v2403 = vpop.f32.mrb[0].mxu0
      %v2404 = vadd.f32 %v675, %v2403
      %v2405 = vpop.f32.mrb[0].mxu0
      %v2406 = vadd.f32 %v671, %v2405
      %v2407 = vpop.f32.mrb[0].mxu0
      %v2408 = vadd.f32 %v675, %v2407
      %2409 = vmatprep.mubr.bf16.mxu0 %v1111
      %2410 = vmatmul.mubr.bf16.gmra.mrb[0].mxu0 %v1110
      %v2411 = vpop.f32.mrb[0].mxu0
      %v2412 = vadd.f32 %v671, %v2411
      %v2413 = vpop.f32.mrb[0].mxu0
      %v2414 = vadd.f32 %v675, %v2413
      %v2415 = vpop.f32.mrb[0].mxu0
      %v2416 = vadd.f32 %v671, %v2415
      %v2417 = vpop.f32.mrb[0].mxu0
      %v2418 = vadd.f32 %v675, %v2417
      %2419 = vmatprep.mubr.bf16.mxu0 %v1118
      %2420 = vmatmul.mubr.bf16.gmra.mrb[0].mxu0 %v1117
      %v2421 = vpop.f32.mrb[0].mxu0
      %v2422 = vadd.f32 %v671, %v2421
      %v2423 = vpop.f32.mrb[0].mxu0
      %v2424 = vadd.f32 %v675, %v2423
      %v2425 = vpop.f32.mrb[0].mxu0
      %v2426 = vadd.f32 %v671, %v2425
      %v2427 = vpop.f32.mrb[0].mxu0
      %v2428 = vadd.f32 %v675, %v2427
      %2429 = vmatprep.mubr.bf16.mxu0 %v1125
      %2430 = vmatmul.mubr.bf16.gmra.mrb[0].mxu0 %v1124
      %v2431 = vpop.f32.mrb[0].mxu0
      %v2432 = vadd.f32 %v671, %v2431
      %v2433 = vpop.f32.mrb[0].mxu0
      %v2434 = vadd.f32 %v675, %v2433
      %v2435 = vpop.f32.mrb[0].mxu0
      %v2436 = vadd.f32 %v671, %v2435
      %v2437 = vpop.f32.mrb[0].mxu0
      %v2438 = vadd.f32 %v675, %v2437
      %2439 = vmatprep.mubr.bf16.mxu0 %v1132
      %2440 = vmatmul.mubr.bf16.gmra.mrb[0].mxu0 %v1131
      %v2441 = vpop.f32.mrb[0].mxu0
      %v2442 = vadd.f32 %v671, %v2441
      %v2443 = vpop.f32.mrb[0].mxu0
      %v2444 = vadd.f32 %v675, %v2443
      %v2445 = vpop.f32.mrb[0].mxu0
      %v2446 = vadd.f32 %v671, %v2445
      %v2447 = vpop.f32.mrb[0].mxu0
      %v2448 = vadd.f32 %v675, %v2447
      %2449 = vmatprep.mubr.bf16.mxu0 %v1139
      %2450 = vmatmul.mubr.bf16.gmra.mrb[0].mxu0 %v1138
      %v2451 = vpop.f32.mrb[0].mxu0
      %v2452 = vadd.f32 %v671, %v2451
      %v2453 = vpop.f32.mrb[0].mxu0
      %v2454 = vadd.f32 %v675, %v2453
      %v2455 = vpop.f32.mrb[0].mxu0
      %v2456 = vadd.f32 %v671, %v2455
      %v2457 = vpop.f32.mrb[0].mxu0
      %v2458 = vadd.f32 %v675, %v2457
      %2459 = vmatprep.mubr.bf16.mxu0 %v1146
      %2460 = vmatmul.mubr.bf16.gmra.mrb[0].mxu0 %v1145
      %v2461 = vpop.f32.mrb[0].mxu0
      %v2462 = vadd.f32 %v671, %v2461
      %v2463 = vpop.f32.mrb[0].mxu0
      %v2464 = vadd.f32 %v675, %v2463
      %v2465 = vpop.f32.mrb[0].mxu0
      %v2466 = vadd.f32 %v671, %v2465
      %v2467 = vpop.f32.mrb[0].mxu0
      %v2468 = vadd.f32 %v675, %v2467
      %2469 = vdwg.mxu0
      %2470 = vmatprep.subr.bf16.mxu0 %v1901
      %2471 = vmatpush1.bf16.msra.mxu0 %v1900
      %2472 = vmatprep.subr.bf16.mxu0 %v1905
      %2473 = vmatpush1.bf16.msra.mxu0 %v1904
      %2474 = vmatprep.subr.bf16.mxu0 %v1909
      %2475 = vmatpush1.bf16.msra.mxu0 %v1908
      %2476 = vmatprep.subr.bf16.mxu0 %v1913
      %2477 = vmatpush1.bf16.msra.mxu0 %v1912
      %2478 = vmatprep.subr.bf16.mxu0 %v1917
      %2479 = vmatpush1.bf16.msra.mxu0 %v1916
      %2480 = vmatprep.subr.bf16.mxu0 %v1921
      %2481 = vmatpush1.bf16.msra.mxu0 %v1920
      %2482 = vmatprep.subr.bf16.mxu0 %v1925
      %2483 = vmatpush1.bf16.msra.mxu0 %v1924
      %2484 = vmatprep.subr.bf16.mxu0 %v1929
      %2485 = vmatpush1.bf16.msra.mxu0 %v1928
      %2486 = vmatprep.subr.bf16.mxu0 %v1933
      %2487 = vmatpush1.bf16.msra.mxu0 %v1932
      %2488 = vmatprep.subr.bf16.mxu0 %v1937
      %2489 = vmatpush1.bf16.msra.mxu0 %v1936
      %2490 = vmatprep.subr.bf16.mxu0 %v1941
      %2491 = vmatpush1.bf16.msra.mxu0 %v1940
      %2492 = vmatprep.subr.bf16.mxu0 %v1945
      %2493 = vmatpush1.bf16.msra.mxu0 %v1944
      %2494 = vmatprep.subr.bf16.mxu0 %v1949
      %2495 = vmatpush1.bf16.msra.mxu0 %v1948
      %2496 = vmatprep.subr.bf16.mxu0 %v1953
      %2497 = vmatpush1.bf16.msra.mxu0 %v1952
      %2498 = vmatprep.subr.bf16.mxu0 %v1957
      %2499 = vmatpush1.bf16.msra.mxu0 %v1956
      %2500 = vmatprep.subr.bf16.mxu0 %v1961
      %2501 = vmatpush1.bf16.msra.mxu0 %v1960
      %2502 = vmatprep.mubr.bf16.mxu0 %v1043
      %2503 = vmatmul.mubr.bf16.gmra.mrb[0].mxu0 %v1042
      %v2504 = vpop.f32.mrb[0].mxu0
      %v2505 = vadd.f32 %v2312, %v2504
      %v2506 = vpop.f32.mrb[0].mxu0
      %v2507 = vadd.f32 %v2314, %v2506
      %v2508 = vpop.f32.mrb[0].mxu0
      %v2509 = vadd.f32 %v2316, %v2508
      %v2510 = vpop.f32.mrb[0].mxu0
      %v2511 = vadd.f32 %v2318, %v2510
      %2512 = vmatprep.mubr.bf16.mxu0 %v1050
      %2513 = vmatmul.mubr.bf16.gmra.mrb[0].mxu0 %v1049
      %v2514 = vpop.f32.mrb[0].mxu0
      %v2515 = vadd.f32 %v2322, %v2514
      %v2516 = vpop.f32.mrb[0].mxu0
      %v2517 = vadd.f32 %v2324, %v2516
      %v2518 = vpop.f32.mrb[0].mxu0
      %v2519 = vadd.f32 %v2326, %v2518
      %v2520 = vpop.f32.mrb[0].mxu0
      %v2521 = vadd.f32 %v2328, %v2520
      %2522 = vmatprep.mubr.bf16.mxu0 %v1057
      %2523 = vmatmul.mubr.bf16.gmra.mrb[0].mxu0 %v1056
      %v2524 = vpop.f32.mrb[0].mxu0
      %v2525 = vadd.f32 %v2332, %v2524
      %v2526 = vpop.f32.mrb[0].mxu0
      %v2527 = vadd.f32 %v2334, %v2526
      %v2528 = vpop.f32.mrb[0].mxu0
      %v2529 = vadd.f32 %v2336, %v2528
      %v2530 = vpop.f32.mrb[0].mxu0
      %v2531 = vadd.f32 %v2338, %v2530
      %2532 = vmatprep.mubr.bf16.mxu0 %v1064
      %2533 = vmatmul.mubr.bf16.gmra.mrb[0].mxu0 %v1063
      %v2534 = vpop.f32.mrb[0].mxu0
      %v2535 = vadd.f32 %v2342, %v2534
      %v2536 = vpop.f32.mrb[0].mxu0
      %v2537 = vadd.f32 %v2344, %v2536
      %v2538 = vpop.f32.mrb[0].mxu0
      %v2539 = vadd.f32 %v2346, %v2538
      %v2540 = vpop.f32.mrb[0].mxu0
      %v2541 = vadd.f32 %v2348, %v2540
      %2542 = vmatprep.mubr.bf16.mxu0 %v1071
      %2543 = vmatmul.mubr.bf16.gmra.mrb[0].mxu0 %v1070
      %v2544 = vpop.f32.mrb[0].mxu0
      %v2545 = vadd.f32 %v2352, %v2544
      %v2546 = vpop.f32.mrb[0].mxu0
      %v2547 = vadd.f32 %v2354, %v2546
      %v2548 = vpop.f32.mrb[0].mxu0
      %v2549 = vadd.f32 %v2356, %v2548
      %v2550 = vpop.f32.mrb[0].mxu0
      %v2551 = vadd.f32 %v2358, %v2550
      %2552 = vmatprep.mubr.bf16.mxu0 %v1078
      %2553 = vmatmul.mubr.bf16.gmra.mrb[0].mxu0 %v1077
      %v2554 = vpop.f32.mrb[0].mxu0
      %v2555 = vadd.f32 %v2362, %v2554
      %v2556 = vpop.f32.mrb[0].mxu0
      %v2557 = vadd.f32 %v2364, %v2556
      %v2558 = vpop.f32.mrb[0].mxu0
      %v2559 = vadd.f32 %v2366, %v2558
      %v2560 = vpop.f32.mrb[0].mxu0
      %v2561 = vadd.f32 %v2368, %v2560
      %2562 = vmatprep.mubr.bf16.mxu0 %v1085
      %2563 = vmatmul.mubr.bf16.gmra.mrb[0].mxu0 %v1084
      %v2564 = vpop.f32.mrb[0].mxu0
      %v2565 = vadd.f32 %v2372, %v2564
      %v2566 = vpop.f32.mrb[0].mxu0
      %v2567 = vadd.f32 %v2374, %v2566
      %v2568 = vpop.f32.mrb[0].mxu0
      %v2569 = vadd.f32 %v2376, %v2568
      %v2570 = vpop.f32.mrb[0].mxu0
      %v2571 = vadd.f32 %v2378, %v2570
      %2572 = vmatprep.mubr.bf16.mxu0 %v1092
      %2573 = vmatmul.mubr.bf16.gmra.mrb[0].mxu0 %v1091
      %v2574 = vpop.f32.mrb[0].mxu0
      %v2575 = vadd.f32 %v2382, %v2574
      %v2576 = vpop.f32.mrb[0].mxu0
      %v2577 = vadd.f32 %v2384, %v2576
      %v2578 = vpop.f32.mrb[0].mxu0
      %v2579 = vadd.f32 %v2386, %v2578
      %v2580 = vpop.f32.mrb[0].mxu0
      %v2581 = vadd.f32 %v2388, %v2580
      %2582 = vmatprep.mubr.bf16.mxu0 %v1099
      %2583 = vmatmul.mubr.bf16.gmra.mrb[0].mxu0 %v1098
      %v2584 = vpop.f32.mrb[0].mxu0
      %v2585 = vadd.f32 %v2392, %v2584
      %v2586 = vpop.f32.mrb[0].mxu0
      %v2587 = vadd.f32 %v2394, %v2586
      %v2588 = vpop.f32.mrb[0].mxu0
      %v2589 = vadd.f32 %v2396, %v2588
      %v2590 = vpop.f32.mrb[0].mxu0
      %v2591 = vadd.f32 %v2398, %v2590
      %2592 = vmatprep.mubr.bf16.mxu0 %v1106
      %2593 = vmatmul.mubr.bf16.gmra.mrb[0].mxu0 %v1105
      %v2594 = vpop.f32.mrb[0].mxu0
      %v2595 = vadd.f32 %v2402, %v2594
      %v2596 = vpop.f32.mrb[0].mxu0
      %v2597 = vadd.f32 %v2404, %v2596
      %v2598 = vpop.f32.mrb[0].mxu0
      %v2599 = vadd.f32 %v2406, %v2598
      %v2600 = vpop.f32.mrb[0].mxu0
      %v2601 = vadd.f32 %v2408, %v2600
      %2602 = vmatprep.mubr.bf16.mxu0 %v1113
      %2603 = vmatmul.mubr.bf16.gmra.mrb[0].mxu0 %v1112
      %v2604 = vpop.f32.mrb[0].mxu0
      %v2605 = vadd.f32 %v2412, %v2604
      %v2606 = vpop.f32.mrb[0].mxu0
      %v2607 = vadd.f32 %v2414, %v2606
      %v2608 = vpop.f32.mrb[0].mxu0
      %v2609 = vadd.f32 %v2416, %v2608
      %v2610 = vpop.f32.mrb[0].mxu0
      %v2611 = vadd.f32 %v2418, %v2610
      %2612 = vmatprep.mubr.bf16.mxu0 %v1120
      %2613 = vmatmul.mubr.bf16.gmra.mrb[0].mxu0 %v1119
      %v2614 = vpop.f32.mrb[0].mxu0
      %v2615 = vadd.f32 %v2422, %v2614
      %v2616 = vpop.f32.mrb[0].mxu0
      %v2617 = vadd.f32 %v2424, %v2616
      %v2618 = vpop.f32.mrb[0].mxu0
      %v2619 = vadd.f32 %v2426, %v2618
      %v2620 = vpop.f32.mrb[0].mxu0
      %v2621 = vadd.f32 %v2428, %v2620
      %2622 = vmatprep.mubr.bf16.mxu0 %v1127
      %2623 = vmatmul.mubr.bf16.gmra.mrb[0].mxu0 %v1126
      %v2624 = vpop.f32.mrb[0].mxu0
      %v2625 = vadd.f32 %v2432, %v2624
      %v2626 = vpop.f32.mrb[0].mxu0
      %v2627 = vadd.f32 %v2434, %v2626
      %v2628 = vpop.f32.mrb[0].mxu0
      %v2629 = vadd.f32 %v2436, %v2628
      %v2630 = vpop.f32.mrb[0].mxu0
      %v2631 = vadd.f32 %v2438, %v2630
      %2632 = vmatprep.mubr.bf16.mxu0 %v1134
      %2633 = vmatmul.mubr.bf16.gmra.mrb[0].mxu0 %v1133
      %v2634 = vpop.f32.mrb[0].mxu0
      %v2635 = vadd.f32 %v2442, %v2634
      %v2636 = vpop.f32.mrb[0].mxu0
      %v2637 = vadd.f32 %v2444, %v2636
      %v2638 = vpop.f32.mrb[0].mxu0
      %v2639 = vadd.f32 %v2446, %v2638
      %v2640 = vpop.f32.mrb[0].mxu0
      %v2641 = vadd.f32 %v2448, %v2640
      %2642 = vmatprep.mubr.bf16.mxu0 %v1141
      %2643 = vmatmul.mubr.bf16.gmra.mrb[0].mxu0 %v1140
      %v2644 = vpop.f32.mrb[0].mxu0
      %v2645 = vadd.f32 %v2452, %v2644
      %v2646 = vpop.f32.mrb[0].mxu0
      %v2647 = vadd.f32 %v2454, %v2646
      %v2648 = vpop.f32.mrb[0].mxu0
      %v2649 = vadd.f32 %v2456, %v2648
      %v2650 = vpop.f32.mrb[0].mxu0
      %v2651 = vadd.f32 %v2458, %v2650
      %2652 = vmatprep.mubr.bf16.mxu0 %v1148
      %2653 = vmatmul.mubr.bf16.gmra.mrb[0].mxu0 %v1147
      %v2654 = vpop.f32.mrb[0].mxu0
      %v2655 = vadd.f32 %v2462, %v2654
      %v2656 = vpop.f32.mrb[0].mxu0
      %v2657 = vadd.f32 %v2464, %v2656
      %v2658 = vpop.f32.mrb[0].mxu0
      %v2659 = vadd.f32 %v2466, %v2658
      %v2660 = vpop.f32.mrb[0].mxu0
      %v2661 = vadd.f32 %v2468, %v2660
      %2662 = vdwg.mxu0
      %2663 = vmatprep.subr.bf16.mxu0 %v1965
      %2664 = vmatpush1.bf16.msra.mxu0 %v1964
      %2665 = vmatprep.subr.bf16.mxu0 %v1969
      %2666 = vmatpush1.bf16.msra.mxu0 %v1968
      %2667 = vmatprep.subr.bf16.mxu0 %v1973
      %2668 = vmatpush1.bf16.msra.mxu0 %v1972
      %2669 = vmatprep.subr.bf16.mxu0 %v1977
      %2670 = vmatpush1.bf16.msra.mxu0 %v1976
      %2671 = vmatprep.subr.bf16.mxu0 %v1981
      %2672 = vmatpush1.bf16.msra.mxu0 %v1980
      %2673 = vmatprep.subr.bf16.mxu0 %v1985
      %2674 = vmatpush1.bf16.msra.mxu0 %v1984
      %2675 = vmatprep.subr.bf16.mxu0 %v1989
      %2676 = vmatpush1.bf16.msra.mxu0 %v1988
      %2677 = vmatprep.subr.bf16.mxu0 %v1993
      %2678 = vmatpush1.bf16.msra.mxu0 %v1992
      %2679 = vmatprep.subr.bf16.mxu0 %v1997
      %2680 = vmatpush1.bf16.msra.mxu0 %v1996
      %2681 = vmatprep.subr.bf16.mxu0 %v2001
      %2682 = vmatpush1.bf16.msra.mxu0 %v2000
      %2683 = vmatprep.subr.bf16.mxu0 %v2005
      %2684 = vmatpush1.bf16.msra.mxu0 %v2004
      %2685 = vmatprep.subr.bf16.mxu0 %v2009
      %2686 = vmatpush1.bf16.msra.mxu0 %v2008
      %2687 = vmatprep.subr.bf16.mxu0 %v2013
      %2688 = vmatpush1.bf16.msra.mxu0 %v2012
      %2689 = vmatprep.subr.bf16.mxu0 %v2017
      %2690 = vmatpush1.bf16.msra.mxu0 %v2016
      %2691 = vmatprep.subr.bf16.mxu0 %v2021
      %2692 = vmatpush1.bf16.msra.mxu0 %v2020
      %2693 = vmatprep.subr.bf16.mxu0 %v2025
      %2694 = vmatpush1.bf16.msra.mxu0 %v2024
      %2695 = vmatprep.mubr.bf16.mxu0 %v1045
      %2696 = vmatmul.mubr.bf16.gmra.mrb[0].mxu0 %v1044
      %v2697 = vpop.f32.mrb[0].mxu0
      %v2698 = vadd.f32 %v2505, %v2697
      %v2699 = vpop.f32.mrb[0].mxu0
      %v2700 = vadd.f32 %v2507, %v2699
      %v2701 = vpop.f32.mrb[0].mxu0
      %v2702 = vadd.f32 %v2509, %v2701
      %v2703 = vpop.f32.mrb[0].mxu0
      %v2704 = vadd.f32 %v2511, %v2703
      %2705 = vmatprep.mubr.bf16.mxu0 %v1052
      %2706 = vmatmul.mubr.bf16.gmra.mrb[0].mxu0 %v1051
      %v2707 = vpop.f32.mrb[0].mxu0
      %v2708 = vadd.f32 %v2515, %v2707
      %v2709 = vpop.f32.mrb[0].mxu0
      %v2710 = vadd.f32 %v2517, %v2709
      %v2711 = vpop.f32.mrb[0].mxu0
      %v2712 = vadd.f32 %v2519, %v2711
      %v2713 = vpop.f32.mrb[0].mxu0
      %v2714 = vadd.f32 %v2521, %v2713
      %2715 = vmatprep.mubr.bf16.mxu0 %v1059
      %2716 = vmatmul.mubr.bf16.gmra.mrb[0].mxu0 %v1058
      %v2717 = vpop.f32.mrb[0].mxu0
      %v2718 = vadd.f32 %v2525, %v2717
      %v2719 = vpop.f32.mrb[0].mxu0
      %v2720 = vadd.f32 %v2527, %v2719
      %v2721 = vpop.f32.mrb[0].mxu0
      %v2722 = vadd.f32 %v2529, %v2721
      %v2723 = vpop.f32.mrb[0].mxu0
      %v2724 = vadd.f32 %v2531, %v2723
      %2725 = vmatprep.mubr.bf16.mxu0 %v1066
      %2726 = vmatmul.mubr.bf16.gmra.mrb[0].mxu0 %v1065
      %v2727 = vpop.f32.mrb[0].mxu0
      %v2728 = vadd.f32 %v2535, %v2727
      %v2729 = vpop.f32.mrb[0].mxu0
      %v2730 = vadd.f32 %v2537, %v2729
      %v2731 = vpop.f32.mrb[0].mxu0
      %v2732 = vadd.f32 %v2539, %v2731
      %v2733 = vpop.f32.mrb[0].mxu0
      %v2734 = vadd.f32 %v2541, %v2733
      %2735 = vmatprep.mubr.bf16.mxu0 %v1073
      %2736 = vmatmul.mubr.bf16.gmra.mrb[0].mxu0 %v1072
      %v2737 = vpop.f32.mrb[0].mxu0
      %v2738 = vadd.f32 %v2545, %v2737
      %v2739 = vpop.f32.mrb[0].mxu0
      %v2740 = vadd.f32 %v2547, %v2739
      %v2741 = vpop.f32.mrb[0].mxu0
      %v2742 = vadd.f32 %v2549, %v2741
      %v2743 = vpop.f32.mrb[0].mxu0
      %v2744 = vadd.f32 %v2551, %v2743
      %2745 = vmatprep.mubr.bf16.mxu0 %v1080
      %2746 = vmatmul.mubr.bf16.gmra.mrb[0].mxu0 %v1079
      %v2747 = vpop.f32.mrb[0].mxu0
      %v2748 = vadd.f32 %v2555, %v2747
      %v2749 = vpop.f32.mrb[0].mxu0
      %v2750 = vadd.f32 %v2557, %v2749
      %v2751 = vpop.f32.mrb[0].mxu0
      %v2752 = vadd.f32 %v2559, %v2751
      %v2753 = vpop.f32.mrb[0].mxu0
      %v2754 = vadd.f32 %v2561, %v2753
      %2755 = vmatprep.mubr.bf16.mxu0 %v1087
      %2756 = vmatmul.mubr.bf16.gmra.mrb[0].mxu0 %v1086
      %v2757 = vpop.f32.mrb[0].mxu0
      %v2758 = vadd.f32 %v2565, %v2757
      %v2759 = vpop.f32.mrb[0].mxu0
      %v2760 = vadd.f32 %v2567, %v2759
      %v2761 = vpop.f32.mrb[0].mxu0
      %v2762 = vadd.f32 %v2569, %v2761
      %v2763 = vpop.f32.mrb[0].mxu0
      %v2764 = vadd.f32 %v2571, %v2763
      %2765 = vmatprep.mubr.bf16.mxu0 %v1094
      %2766 = vmatmul.mubr.bf16.gmra.mrb[0].mxu0 %v1093
      %v2767 = vpop.f32.mrb[0].mxu0
      %v2768 = vadd.f32 %v2575, %v2767
      %v2769 = vpop.f32.mrb[0].mxu0
      %v2770 = vadd.f32 %v2577, %v2769
      %v2771 = vpop.f32.mrb[0].mxu0
      %v2772 = vadd.f32 %v2579, %v2771
      %v2773 = vpop.f32.mrb[0].mxu0
      %v2774 = vadd.f32 %v2581, %v2773
      %2775 = vmatprep.mubr.bf16.mxu0 %v1101
      %2776 = vmatmul.mubr.bf16.gmra.mrb[0].mxu0 %v1100
      %v2777 = vpop.f32.mrb[0].mxu0
      %v2778 = vadd.f32 %v2585, %v2777
      %v2779 = vpop.f32.mrb[0].mxu0
      %v2780 = vadd.f32 %v2587, %v2779
      %v2781 = vpop.f32.mrb[0].mxu0
      %v2782 = vadd.f32 %v2589, %v2781
      %v2783 = vpop.f32.mrb[0].mxu0
      %v2784 = vadd.f32 %v2591, %v2783
      %2785 = vmatprep.mubr.bf16.mxu0 %v1108
      %2786 = vmatmul.mubr.bf16.gmra.mrb[0].mxu0 %v1107
      %v2787 = vpop.f32.mrb[0].mxu0
      %v2788 = vadd.f32 %v2595, %v2787
      %v2789 = vpop.f32.mrb[0].mxu0
      %v2790 = vadd.f32 %v2597, %v2789
      %v2791 = vpop.f32.mrb[0].mxu0
      %v2792 = vadd.f32 %v2599, %v2791
      %v2793 = vpop.f32.mrb[0].mxu0
      %v2794 = vadd.f32 %v2601, %v2793
      %2795 = vmatprep.mubr.bf16.mxu0 %v1115
      %2796 = vmatmul.mubr.bf16.gmra.mrb[0].mxu0 %v1114
      %v2797 = vpop.f32.mrb[0].mxu0
      %v2798 = vadd.f32 %v2605, %v2797
      %v2799 = vpop.f32.mrb[0].mxu0
      %v2800 = vadd.f32 %v2607, %v2799
      %v2801 = vpop.f32.mrb[0].mxu0
      %v2802 = vadd.f32 %v2609, %v2801
      %v2803 = vpop.f32.mrb[0].mxu0
      %v2804 = vadd.f32 %v2611, %v2803
      %2805 = vmatprep.mubr.bf16.mxu0 %v1122
      %2806 = vmatmul.mubr.bf16.gmra.mrb[0].mxu0 %v1121
      %v2807 = vpop.f32.mrb[0].mxu0
      %v2808 = vadd.f32 %v2615, %v2807
      %v2809 = vpop.f32.mrb[0].mxu0
      %v2810 = vadd.f32 %v2617, %v2809
      %v2811 = vpop.f32.mrb[0].mxu0
      %v2812 = vadd.f32 %v2619, %v2811
      %v2813 = vpop.f32.mrb[0].mxu0
      %v2814 = vadd.f32 %v2621, %v2813
      %2815 = vmatprep.mubr.bf16.mxu0 %v1129
      %2816 = vmatmul.mubr.bf16.gmra.mrb[0].mxu0 %v1128
      %v2817 = vpop.f32.mrb[0].mxu0
      %v2818 = vadd.f32 %v2625, %v2817
      %v2819 = vpop.f32.mrb[0].mxu0
      %v2820 = vadd.f32 %v2627, %v2819
      %v2821 = vpop.f32.mrb[0].mxu0
      %v2822 = vadd.f32 %v2629, %v2821
      %v2823 = vpop.f32.mrb[0].mxu0
      %v2824 = vadd.f32 %v2631, %v2823
      %2825 = vmatprep.mubr.bf16.mxu0 %v1136
      %2826 = vmatmul.mubr.bf16.gmra.mrb[0].mxu0 %v1135
      %v2827 = vpop.f32.mrb[0].mxu0
      %v2828 = vadd.f32 %v2635, %v2827
      %v2829 = vpop.f32.mrb[0].mxu0
      %v2830 = vadd.f32 %v2637, %v2829
      %v2831 = vpop.f32.mrb[0].mxu0
      %v2832 = vadd.f32 %v2639, %v2831
      %v2833 = vpop.f32.mrb[0].mxu0
      %v2834 = vadd.f32 %v2641, %v2833
      %2835 = vmatprep.mubr.bf16.mxu0 %v1143
      %2836 = vmatmul.mubr.bf16.gmra.mrb[0].mxu0 %v1142
      %v2837 = vpop.f32.mrb[0].mxu0
      %v2838 = vadd.f32 %v2645, %v2837
      %v2839 = vpop.f32.mrb[0].mxu0
      %v2840 = vadd.f32 %v2647, %v2839
      %v2841 = vpop.f32.mrb[0].mxu0
      %v2842 = vadd.f32 %v2649, %v2841
      %v2843 = vpop.f32.mrb[0].mxu0
      %v2844 = vadd.f32 %v2651, %v2843
      %2845 = vmatprep.mubr.bf16.mxu0 %v1150
      %2846 = vmatmul.mubr.bf16.gmra.mrb[0].mxu0 %v1149
      %v2847 = vpop.f32.mrb[0].mxu0
      %v2848 = vadd.f32 %v2655, %v2847
      %v2849 = vpop.f32.mrb[0].mxu0
      %v2850 = vadd.f32 %v2657, %v2849
      %v2851 = vpop.f32.mrb[0].mxu0
      %v2852 = vadd.f32 %v2659, %v2851
      %v2853 = vpop.f32.mrb[0].mxu0
      %v2854 = vadd.f32 %v2661, %v2853
      %2855 = vdwg.mxu0
      %2856 = vmatprep.subr.bf16.mxu0 %v2029
      %2857 = vmatpush1.bf16.msra.mxu0 %v2028
      %2858 = vmatprep.subr.bf16.mxu0 0
      %2859 = vmatpush1.bf16.msra.mxu0 0
      %2860 = vmatprep.subr.bf16.mxu0 0
      %2861 = vmatpush1.bf16.msra.mxu0 0
      %2862 = vmatprep.subr.bf16.mxu0 0
      %2863 = vmatpush1.bf16.msra.mxu0 0
      %2864 = vmatprep.subr.bf16.mxu0 0
      %2865 = vmatpush1.bf16.msra.mxu0 0
      %2866 = vmatprep.subr.bf16.mxu0 0
      %2867 = vmatpush1.bf16.msra.mxu0 0
      %2868 = vmatprep.subr.bf16.mxu0 0
      %2869 = vmatpush1.bf16.msra.mxu0 0
      %2870 = vmatprep.subr.bf16.mxu0 0
      %2871 = vmatpush1.bf16.msra.mxu0 0
      %2872 = vmatprep.subr.bf16.mxu0 0
      %2873 = vmatpush1.bf16.msra.mxu0 0
      %2874 = vmatprep.subr.bf16.mxu0 0
      %2875 = vmatpush1.bf16.msra.mxu0 0
      %2876 = vmatprep.subr.bf16.mxu0 0
      %2877 = vmatpush1.bf16.msra.mxu0 0
      %2878 = vmatprep.subr.bf16.mxu0 0
      %2879 = vmatpush1.bf16.msra.mxu0 0
      %2880 = vmatprep.subr.bf16.mxu0 0
      %2881 = vmatpush1.bf16.msra.mxu0 0
      %2882 = vmatprep.subr.bf16.mxu0 0
      %2883 = vmatpush1.bf16.msra.mxu0 0
      %2884 = vmatprep.subr.bf16.mxu0 0
      %2885 = vmatpush1.bf16.msra.mxu0 0
      %2886 = vmatprep.subr.bf16.mxu0 0
      %2887 = vmatpush1.bf16.msra.mxu0 0
      %2888 = vmatprep.mubr.bf16.mxu0 0
      %2889 = vmatmul.mubr.bf16.gmra.mrb[0].mxu0 %v2230
      %v2890 = vpop.f32.mrb[0].mxu0
      %v2891 = vadd.f32 %v2698, %v2890
      %v2892 = vpop.f32.mrb[0].mxu0
      %v2893 = vadd.f32 %v2700, %v2892
      %v2894 = vpop.f32.mrb[0].mxu0
      %v2895 = vadd.f32 %v2702, %v2894
      %v2896 = vpop.f32.mrb[0].mxu0
      %v2897 = vadd.f32 %v2704, %v2896
      %2898 = vmatprep.mubr.bf16.mxu0 0
      %2899 = vmatmul.mubr.bf16.gmra.mrb[0].mxu0 %v2233
      %v2900 = vpop.f32.mrb[0].mxu0
      %v2901 = vadd.f32 %v2708, %v2900
      %v2902 = vpop.f32.mrb[0].mxu0
      %v2903 = vadd.f32 %v2710, %v2902
      %v2904 = vpop.f32.mrb[0].mxu0
      %v2905 = vadd.f32 %v2712, %v2904
      %v2906 = vpop.f32.mrb[0].mxu0
      %v2907 = vadd.f32 %v2714, %v2906
      %2908 = vmatprep.mubr.bf16.mxu0 0
      %2909 = vmatmul.mubr.bf16.gmra.mrb[0].mxu0 %v2236
      %v2910 = vpop.f32.mrb[0].mxu0
      %v2911 = vadd.f32 %v2718, %v2910
      %v2912 = vpop.f32.mrb[0].mxu0
      %v2913 = vadd.f32 %v2720, %v2912
      %v2914 = vpop.f32.mrb[0].mxu0
      %v2915 = vadd.f32 %v2722, %v2914
      %v2916 = vpop.f32.mrb[0].mxu0
      %v2917 = vadd.f32 %v2724, %v2916
      %2918 = vmatprep.mubr.bf16.mxu0 0
      %2919 = vmatmul.mubr.bf16.gmra.mrb[0].mxu0 %v2239
      %v2920 = vpop.f32.mrb[0].mxu0
      %v2921 = vadd.f32 %v2728, %v2920
      %v2922 = vpop.f32.mrb[0].mxu0
      %v2923 = vadd.f32 %v2730, %v2922
      %v2924 = vpop.f32.mrb[0].mxu0
      %v2925 = vadd.f32 %v2732, %v2924
      %v2926 = vpop.f32.mrb[0].mxu0
      %v2927 = vadd.f32 %v2734, %v2926
      %2928 = vmatprep.mubr.bf16.mxu0 0
      %2929 = vmatmul.mubr.bf16.gmra.mrb[0].mxu0 %v2242
      %v2930 = vpop.f32.mrb[0].mxu0
      %v2931 = vadd.f32 %v2738, %v2930
      %v2932 = vpop.f32.mrb[0].mxu0
      %v2933 = vadd.f32 %v2740, %v2932
      %v2934 = vpop.f32.mrb[0].mxu0
      %v2935 = vadd.f32 %v2742, %v2934
      %v2936 = vpop.f32.mrb[0].mxu0
      %v2937 = vadd.f32 %v2744, %v2936
      %2938 = vmatprep.mubr.bf16.mxu0 0
      %2939 = vmatmul.mubr.bf16.gmra.mrb[0].mxu0 %v2245
      %v2940 = vpop.f32.mrb[0].mxu0
      %v2941 = vadd.f32 %v2748, %v2940
      %v2942 = vpop.f32.mrb[0].mxu0
      %v2943 = vadd.f32 %v2750, %v2942
      %v2944 = vpop.f32.mrb[0].mxu0
      %v2945 = vadd.f32 %v2752, %v2944
      %v2946 = vpop.f32.mrb[0].mxu0
      %v2947 = vadd.f32 %v2754, %v2946
      %2948 = vmatprep.mubr.bf16.mxu0 0
      %2949 = vmatmul.mubr.bf16.gmra.mrb[0].mxu0 %v2248
      %v2950 = vpop.f32.mrb[0].mxu0
      %v2951 = vadd.f32 %v2758, %v2950
      %v2952 = vpop.f32.mrb[0].mxu0
      %v2953 = vadd.f32 %v2760, %v2952
      %v2954 = vpop.f32.mrb[0].mxu0
      %v2955 = vadd.f32 %v2762, %v2954
      %v2956 = vpop.f32.mrb[0].mxu0
      %v2957 = vadd.f32 %v2764, %v2956
      %2958 = vmatprep.mubr.bf16.mxu0 0
      %2959 = vmatmul.mubr.bf16.gmra.mrb[0].mxu0 %v2251
      %v2960 = vpop.f32.mrb[0].mxu0
      %v2961 = vadd.f32 %v2768, %v2960
      %v2962 = vpop.f32.mrb[0].mxu0
      %v2963 = vadd.f32 %v2770, %v2962
      %v2964 = vpop.f32.mrb[0].mxu0
      %v2965 = vadd.f32 %v2772, %v2964
      %v2966 = vpop.f32.mrb[0].mxu0
      %v2967 = vadd.f32 %v2774, %v2966
      %2968 = vmatprep.mubr.bf16.mxu0 0
      %2969 = vmatmul.mubr.bf16.gmra.mrb[0].mxu0 %v2254
      %v2970 = vpop.f32.mrb[0].mxu0
      %v2971 = vadd.f32 %v2778, %v2970
      %v2972 = vpop.f32.mrb[0].mxu0
      %v2973 = vadd.f32 %v2780, %v2972
      %v2974 = vpop.f32.mrb[0].mxu0
      %v2975 = vadd.f32 %v2782, %v2974
      %v2976 = vpop.f32.mrb[0].mxu0
      %v2977 = vadd.f32 %v2784, %v2976
      %2978 = vmatprep.mubr.bf16.mxu0 0
      %2979 = vmatmul.mubr.bf16.gmra.mrb[0].mxu0 %v2257
      %v2980 = vpop.f32.mrb[0].mxu0
      %v2981 = vadd.f32 %v2788, %v2980
      %v2982 = vpop.f32.mrb[0].mxu0
      %v2983 = vadd.f32 %v2790, %v2982
      %v2984 = vpop.f32.mrb[0].mxu0
      %v2985 = vadd.f32 %v2792, %v2984
      %v2986 = vpop.f32.mrb[0].mxu0
      %v2987 = vadd.f32 %v2794, %v2986
      %2988 = vmatprep.mubr.bf16.mxu0 0
      %2989 = vmatmul.mubr.bf16.gmra.mrb[0].mxu0 %v2260
      %v2990 = vpop.f32.mrb[0].mxu0
      %v2991 = vadd.f32 %v2798, %v2990
      %v2992 = vpop.f32.mrb[0].mxu0
      %v2993 = vadd.f32 %v2800, %v2992
      %v2994 = vpop.f32.mrb[0].mxu0
      %v2995 = vadd.f32 %v2802, %v2994
      %v2996 = vpop.f32.mrb[0].mxu0
      %v2997 = vadd.f32 %v2804, %v2996
      %2998 = vmatprep.mubr.bf16.mxu0 0
      %2999 = vmatmul.mubr.bf16.gmra.mrb[0].mxu0 %v2263
      %v3000 = vpop.f32.mrb[0].mxu0
      %v3001 = vadd.f32 %v2808, %v3000
      %v3002 = vpop.f32.mrb[0].mxu0
      %v3003 = vadd.f32 %v2810, %v3002
      %v3004 = vpop.f32.mrb[0].mxu0
      %v3005 = vadd.f32 %v2812, %v3004
      %v3006 = vpop.f32.mrb[0].mxu0
      %v3007 = vadd.f32 %v2814, %v3006
      %3008 = vmatprep.mubr.bf16.mxu0 0
      %3009 = vmatmul.mubr.bf16.gmra.mrb[0].mxu0 %v2266
      %v3010 = vpop.f32.mrb[0].mxu0
      %v3011 = vadd.f32 %v2818, %v3010
      %v3012 = vpop.f32.mrb[0].mxu0
      %v3013 = vadd.f32 %v2820, %v3012
      %v3014 = vpop.f32.mrb[0].mxu0
      %v3015 = vadd.f32 %v2822, %v3014
      %v3016 = vpop.f32.mrb[0].mxu0
      %v3017 = vadd.f32 %v2824, %v3016
      %3018 = vmatprep.mubr.bf16.mxu0 0
      %3019 = vmatmul.mubr.bf16.gmra.mrb[0].mxu0 %v2269
      %v3020 = vpop.f32.mrb[0].mxu0
      %v3021 = vadd.f32 %v2828, %v3020
      %v3022 = vpop.f32.mrb[0].mxu0
      %v3023 = vadd.f32 %v2830, %v3022
      %v3024 = vpop.f32.mrb[0].mxu0
      %v3025 = vadd.f32 %v2832, %v3024
      %v3026 = vpop.f32.mrb[0].mxu0
      %v3027 = vadd.f32 %v2834, %v3026
      %3028 = vmatprep.mubr.bf16.mxu0 0
      %3029 = vmatmul.mubr.bf16.gmra.mrb[0].mxu0 %v2272
      %v3030 = vpop.f32.mrb[0].mxu0
      %v3031 = vadd.f32 %v2838, %v3030
      %v3032 = vpop.f32.mrb[0].mxu0
      %v3033 = vadd.f32 %v2840, %v3032
      %v3034 = vpop.f32.mrb[0].mxu0
      %v3035 = vadd.f32 %v2842, %v3034
      %v3036 = vpop.f32.mrb[0].mxu0
      %v3037 = vadd.f32 %v2844, %v3036
      %3038 = vmatprep.mubr.bf16.mxu0 0
      %3039 = vmatmul.mubr.bf16.gmra.mrb[0].mxu0 %v2275
      %v3040 = vpop.f32.mrb[0].mxu0
      %v3041 = vadd.f32 %v2848, %v3040
      %v3042 = vpop.f32.mrb[0].mxu0
      %v3043 = vadd.f32 %v2850, %v3042
      %v3044 = vpop.f32.mrb[0].mxu0
      %v3045 = vadd.f32 %v2852, %v3044
      %v3046 = vpop.f32.mrb[0].mxu0
      %v3047 = vadd.f32 %v2854, %v3046
      %3048 = vdwg.mxu0
      %3049 = vmatprep.subr.bf16.mxu0 %v1839
      %3050 = vmatpush1.bf16.msra.mxu0 %v1838
      %3051 = vmatprep.subr.bf16.mxu0 %v1843
      %3052 = vmatpush1.bf16.msra.mxu0 %v1842
      %3053 = vmatprep.subr.bf16.mxu0 %v1847
      %3054 = vmatpush1.bf16.msra.mxu0 %v1846
      %3055 = vmatprep.subr.bf16.mxu0 %v1851
      %3056 = vmatpush1.bf16.msra.mxu0 %v1850
      %3057 = vmatprep.subr.bf16.mxu0 %v1855
      %3058 = vmatpush1.bf16.msra.mxu0 %v1854
      %3059 = vmatprep.subr.bf16.mxu0 %v1859
      %3060 = vmatpush1.bf16.msra.mxu0 %v1858
      %3061 = vmatprep.subr.bf16.mxu0 %v1863
      %3062 = vmatpush1.bf16.msra.mxu0 %v1862
      %3063 = vmatprep.subr.bf16.mxu0 %v1867
      %3064 = vmatpush1.bf16.msra.mxu0 %v1866
      %3065 = vmatprep.subr.bf16.mxu0 %v1871
      %3066 = vmatpush1.bf16.msra.mxu0 %v1870
      %3067 = vmatprep.subr.bf16.mxu0 %v1875
      %3068 = vmatpush1.bf16.msra.mxu0 %v1874
      %3069 = vmatprep.subr.bf16.mxu0 %v1879
      %3070 = vmatpush1.bf16.msra.mxu0 %v1878
      %3071 = vmatprep.subr.bf16.mxu0 %v1883
      %3072 = vmatpush1.bf16.msra.mxu0 %v1882
      %3073 = vmatprep.subr.bf16.mxu0 %v1887
      %3074 = vmatpush1.bf16.msra.mxu0 %v1886
      %3075 = vmatprep.subr.bf16.mxu0 %v1891
      %3076 = vmatpush1.bf16.msra.mxu0 %v1890
      %3077 = vmatprep.subr.bf16.mxu0 %v1895
      %3078 = vmatpush1.bf16.msra.mxu0 %v1894
      %3079 = vmatprep.subr.bf16.mxu0 %v1899
      %3080 = vmatpush1.bf16.msra.mxu0 %v1898
      %3081 = vmatprep.mubr.bf16.mxu0 %v1041
      %3082 = vmatmul.mubr.bf16.gmra.mrb[0].mxu0 %v1040
      %v3083 = vpop.f32.mrb[0].mxu0
      %v3084 = vadd.f32 %v679, %v3083
      %v3085 = vpop.f32.mrb[0].mxu0
      %v3086 = vadd.f32 %v683, %v3085
      %v3087 = vpop.f32.mrb[0].mxu0
      %v3088 = vadd.f32 %v679, %v3087
      %v3089 = vpop.f32.mrb[0].mxu0
      %v3090 = vadd.f32 %v683, %v3089
      %3091 = vmatprep.mubr.bf16.mxu0 %v1048
      %3092 = vmatmul.mubr.bf16.gmra.mrb[0].mxu0 %v1047
      %v3093 = vpop.f32.mrb[0].mxu0
      %v3094 = vadd.f32 %v679, %v3093
      %v3095 = vpop.f32.mrb[0].mxu0
      %v3096 = vadd.f32 %v683, %v3095
      %v3097 = vpop.f32.mrb[0].mxu0
      %v3098 = vadd.f32 %v679, %v3097
      %v3099 = vpop.f32.mrb[0].mxu0
      %v3100 = vadd.f32 %v683, %v3099
      %3101 = vmatprep.mubr.bf16.mxu0 %v1055
      %3102 = vmatmul.mubr.bf16.gmra.mrb[0].mxu0 %v1054
      %v3103 = vpop.f32.mrb[0].mxu0
      %v3104 = vadd.f32 %v679, %v3103
      %v3105 = vpop.f32.mrb[0].mxu0
      %v3106 = vadd.f32 %v683, %v3105
      %v3107 = vpop.f32.mrb[0].mxu0
      %v3108 = vadd.f32 %v679, %v3107
      %v3109 = vpop.f32.mrb[0].mxu0
      %v3110 = vadd.f32 %v683, %v3109
      %3111 = vmatprep.mubr.bf16.mxu0 %v1062
      %3112 = vmatmul.mubr.bf16.gmra.mrb[0].mxu0 %v1061
      %v3113 = vpop.f32.mrb[0].mxu0
      %v3114 = vadd.f32 %v679, %v3113
      %v3115 = vpop.f32.mrb[0].mxu0
      %v3116 = vadd.f32 %v683, %v3115
      %v3117 = vpop.f32.mrb[0].mxu0
      %v3118 = vadd.f32 %v679, %v3117
      %v3119 = vpop.f32.mrb[0].mxu0
      %v3120 = vadd.f32 %v683, %v3119
      %3121 = vmatprep.mubr.bf16.mxu0 %v1069
      %3122 = vmatmul.mubr.bf16.gmra.mrb[0].mxu0 %v1068
      %v3123 = vpop.f32.mrb[0].mxu0
      %v3124 = vadd.f32 %v679, %v3123
      %v3125 = vpop.f32.mrb[0].mxu0
      %v3126 = vadd.f32 %v683, %v3125
      %v3127 = vpop.f32.mrb[0].mxu0
      %v3128 = vadd.f32 %v679, %v3127
      %v3129 = vpop.f32.mrb[0].mxu0
      %v3130 = vadd.f32 %v683, %v3129
      %3131 = vmatprep.mubr.bf16.mxu0 %v1076
      %3132 = vmatmul.mubr.bf16.gmra.mrb[0].mxu0 %v1075
      %v3133 = vpop.f32.mrb[0].mxu0
      %v3134 = vadd.f32 %v679, %v3133
      %v3135 = vpop.f32.mrb[0].mxu0
      %v3136 = vadd.f32 %v683, %v3135
      %v3137 = vpop.f32.mrb[0].mxu0
      %v3138 = vadd.f32 %v679, %v3137
      %v3139 = vpop.f32.mrb[0].mxu0
      %v3140 = vadd.f32 %v683, %v3139
      %3141 = vmatprep.mubr.bf16.mxu0 %v1083
      %3142 = vmatmul.mubr.bf16.gmra.mrb[0].mxu0 %v1082
      %v3143 = vpop.f32.mrb[0].mxu0
      %v3144 = vadd.f32 %v679, %v3143
      %v3145 = vpop.f32.mrb[0].mxu0
      %v3146 = vadd.f32 %v683, %v3145
      %v3147 = vpop.f32.mrb[0].mxu0
      %v3148 = vadd.f32 %v679, %v3147
      %v3149 = vpop.f32.mrb[0].mxu0
      %v3150 = vadd.f32 %v683, %v3149
      %3151 = vmatprep.mubr.bf16.mxu0 %v1090
      %3152 = vmatmul.mubr.bf16.gmra.mrb[0].mxu0 %v1089
      %v3153 = vpop.f32.mrb[0].mxu0
      %v3154 = vadd.f32 %v679, %v3153
      %v3155 = vpop.f32.mrb[0].mxu0
      %v3156 = vadd.f32 %v683, %v3155
      %v3157 = vpop.f32.mrb[0].mxu0
      %v3158 = vadd.f32 %v679, %v3157
      %v3159 = vpop.f32.mrb[0].mxu0
      %v3160 = vadd.f32 %v683, %v3159
      %3161 = vmatprep.mubr.bf16.mxu0 %v1097
      %3162 = vmatmul.mubr.bf16.gmra.mrb[0].mxu0 %v1096
      %v3163 = vpop.f32.mrb[0].mxu0
      %v3164 = vadd.f32 %v679, %v3163
      %v3165 = vpop.f32.mrb[0].mxu0
      %v3166 = vadd.f32 %v683, %v3165
      %v3167 = vpop.f32.mrb[0].mxu0
      %v3168 = vadd.f32 %v679, %v3167
      %v3169 = vpop.f32.mrb[0].mxu0
      %v3170 = vadd.f32 %v683, %v3169
      %3171 = vmatprep.mubr.bf16.mxu0 %v1104
      %3172 = vmatmul.mubr.bf16.gmra.mrb[0].mxu0 %v1103
      %v3173 = vpop.f32.mrb[0].mxu0
      %v3174 = vadd.f32 %v679, %v3173
      %v3175 = vpop.f32.mrb[0].mxu0
      %v3176 = vadd.f32 %v683, %v3175
      %v3177 = vpop.f32.mrb[0].mxu0
      %v3178 = vadd.f32 %v679, %v3177
      %v3179 = vpop.f32.mrb[0].mxu0
      %v3180 = vadd.f32 %v683, %v3179
      %3181 = vmatprep.mubr.bf16.mxu0 %v1111
      %3182 = vmatmul.mubr.bf16.gmra.mrb[0].mxu0 %v1110
      %v3183 = vpop.f32.mrb[0].mxu0
      %v3184 = vadd.f32 %v679, %v3183
      %v3185 = vpop.f32.mrb[0].mxu0
      %v3186 = vadd.f32 %v683, %v3185
      %v3187 = vpop.f32.mrb[0].mxu0
      %v3188 = vadd.f32 %v679, %v3187
      %v3189 = vpop.f32.mrb[0].mxu0
      %v3190 = vadd.f32 %v683, %v3189
      %3191 = vmatprep.mubr.bf16.mxu0 %v1118
      %3192 = vmatmul.mubr.bf16.gmra.mrb[0].mxu0 %v1117
      %v3193 = vpop.f32.mrb[0].mxu0
      %v3194 = vadd.f32 %v679, %v3193
      %v3195 = vpop.f32.mrb[0].mxu0
      %v3196 = vadd.f32 %v683, %v3195
      %v3197 = vpop.f32.mrb[0].mxu0
      %v3198 = vadd.f32 %v679, %v3197
      %v3199 = vpop.f32.mrb[0].mxu0
      %v3200 = vadd.f32 %v683, %v3199
      %3201 = vmatprep.mubr.bf16.mxu0 %v1125
      %3202 = vmatmul.mubr.bf16.gmra.mrb[0].mxu0 %v1124
      %v3203 = vpop.f32.mrb[0].mxu0
      %v3204 = vadd.f32 %v679, %v3203
      %v3205 = vpop.f32.mrb[0].mxu0
      %v3206 = vadd.f32 %v683, %v3205
      %v3207 = vpop.f32.mrb[0].mxu0
      %v3208 = vadd.f32 %v679, %v3207
      %v3209 = vpop.f32.mrb[0].mxu0
      %v3210 = vadd.f32 %v683, %v3209
      %3211 = vmatprep.mubr.bf16.mxu0 %v1132
      %3212 = vmatmul.mubr.bf16.gmra.mrb[0].mxu0 %v1131
      %v3213 = vpop.f32.mrb[0].mxu0
      %v3214 = vadd.f32 %v679, %v3213
      %v3215 = vpop.f32.mrb[0].mxu0
      %v3216 = vadd.f32 %v683, %v3215
      %v3217 = vpop.f32.mrb[0].mxu0
      %v3218 = vadd.f32 %v679, %v3217
      %v3219 = vpop.f32.mrb[0].mxu0
      %v3220 = vadd.f32 %v683, %v3219
      %3221 = vmatprep.mubr.bf16.mxu0 %v1139
      %3222 = vmatmul.mubr.bf16.gmra.mrb[0].mxu0 %v1138
      %v3223 = vpop.f32.mrb[0].mxu0
      %v3224 = vadd.f32 %v679, %v3223
      %v3225 = vpop.f32.mrb[0].mxu0
      %v3226 = vadd.f32 %v683, %v3225
      %v3227 = vpop.f32.mrb[0].mxu0
      %v3228 = vadd.f32 %v679, %v3227
      %v3229 = vpop.f32.mrb[0].mxu0
      %v3230 = vadd.f32 %v683, %v3229
      %3231 = vmatprep.mubr.bf16.mxu0 %v1146
      %3232 = vmatmul.mubr.bf16.gmra.mrb[0].mxu0 %v1145
      %v3233 = vpop.f32.mrb[0].mxu0
      %v3234 = vadd.f32 %v679, %v3233
      %v3235 = vpop.f32.mrb[0].mxu0
      %v3236 = vadd.f32 %v683, %v3235
      %v3237 = vpop.f32.mrb[0].mxu0
      %v3238 = vadd.f32 %v679, %v3237
      %v3239 = vpop.f32.mrb[0].mxu0
      %v3240 = vadd.f32 %v683, %v3239
      %3241 = vdwg.mxu0
      %3242 = vmatprep.subr.bf16.mxu0 %v1903
      %3243 = vmatpush1.bf16.msra.mxu0 %v1902
      %3244 = vmatprep.subr.bf16.mxu0 %v1907
      %3245 = vmatpush1.bf16.msra.mxu0 %v1906
      %3246 = vmatprep.subr.bf16.mxu0 %v1911
      %3247 = vmatpush1.bf16.msra.mxu0 %v1910
      %3248 = vmatprep.subr.bf16.mxu0 %v1915
      %3249 = vmatpush1.bf16.msra.mxu0 %v1914
      %3250 = vmatprep.subr.bf16.mxu0 %v1919
      %3251 = vmatpush1.bf16.msra.mxu0 %v1918
      %3252 = vmatprep.subr.bf16.mxu0 %v1923
      %3253 = vmatpush1.bf16.msra.mxu0 %v1922
      %3254 = vmatprep.subr.bf16.mxu0 %v1927
      %3255 = vmatpush1.bf16.msra.mxu0 %v1926
      %3256 = vmatprep.subr.bf16.mxu0 %v1931
      %3257 = vmatpush1.bf16.msra.mxu0 %v1930
      %3258 = vmatprep.subr.bf16.mxu0 %v1935
      %3259 = vmatpush1.bf16.msra.mxu0 %v1934
      %3260 = vmatprep.subr.bf16.mxu0 %v1939
      %3261 = vmatpush1.bf16.msra.mxu0 %v1938
      %3262 = vmatprep.subr.bf16.mxu0 %v1943
      %3263 = vmatpush1.bf16.msra.mxu0 %v1942
      %3264 = vmatprep.subr.bf16.mxu0 %v1947
      %3265 = vmatpush1.bf16.msra.mxu0 %v1946
      %3266 = vmatprep.subr.bf16.mxu0 %v1951
      %3267 = vmatpush1.bf16.msra.mxu0 %v1950
      %3268 = vmatprep.subr.bf16.mxu0 %v1955
      %3269 = vmatpush1.bf16.msra.mxu0 %v1954
      %3270 = vmatprep.subr.bf16.mxu0 %v1959
      %3271 = vmatpush1.bf16.msra.mxu0 %v1958
      %3272 = vmatprep.subr.bf16.mxu0 %v1963
      %3273 = vmatpush1.bf16.msra.mxu0 %v1962
      %3274 = vmatprep.mubr.bf16.mxu0 %v1043
      %3275 = vmatmul.mubr.bf16.gmra.mrb[0].mxu0 %v1042
      %v3276 = vpop.f32.mrb[0].mxu0
      %v3277 = vadd.f32 %v3084, %v3276
      %v3278 = vpop.f32.mrb[0].mxu0
      %v3279 = vadd.f32 %v3086, %v3278
      %v3280 = vpop.f32.mrb[0].mxu0
      %v3281 = vadd.f32 %v3088, %v3280
      %v3282 = vpop.f32.mrb[0].mxu0
      %v3283 = vadd.f32 %v3090, %v3282
      %3284 = vmatprep.mubr.bf16.mxu0 %v1050
      %3285 = vmatmul.mubr.bf16.gmra.mrb[0].mxu0 %v1049
      %v3286 = vpop.f32.mrb[0].mxu0
      %v3287 = vadd.f32 %v3094, %v3286
      %v3288 = vpop.f32.mrb[0].mxu0
      %v3289 = vadd.f32 %v3096, %v3288
      %v3290 = vpop.f32.mrb[0].mxu0
      %v3291 = vadd.f32 %v3098, %v3290
      %v3292 = vpop.f32.mrb[0].mxu0
      %v3293 = vadd.f32 %v3100, %v3292
      %3294 = vmatprep.mubr.bf16.mxu0 %v1057
      %3295 = vmatmul.mubr.bf16.gmra.mrb[0].mxu0 %v1056
      %v3296 = vpop.f32.mrb[0].mxu0
      %v3297 = vadd.f32 %v3104, %v3296
      %v3298 = vpop.f32.mrb[0].mxu0
      %v3299 = vadd.f32 %v3106, %v3298
      %v3300 = vpop.f32.mrb[0].mxu0
      %v3301 = vadd.f32 %v3108, %v3300
      %v3302 = vpop.f32.mrb[0].mxu0
      %v3303 = vadd.f32 %v3110, %v3302
      %3304 = vmatprep.mubr.bf16.mxu0 %v1064
      %3305 = vmatmul.mubr.bf16.gmra.mrb[0].mxu0 %v1063
      %v3306 = vpop.f32.mrb[0].mxu0
      %v3307 = vadd.f32 %v3114, %v3306
      %v3308 = vpop.f32.mrb[0].mxu0
      %v3309 = vadd.f32 %v3116, %v3308
      %v3310 = vpop.f32.mrb[0].mxu0
      %v3311 = vadd.f32 %v3118, %v3310
      %v3312 = vpop.f32.mrb[0].mxu0
      %v3313 = vadd.f32 %v3120, %v3312
      %3314 = vmatprep.mubr.bf16.mxu0 %v1071
      %3315 = vmatmul.mubr.bf16.gmra.mrb[0].mxu0 %v1070
      %v3316 = vpop.f32.mrb[0].mxu0
      %v3317 = vadd.f32 %v3124, %v3316
      %v3318 = vpop.f32.mrb[0].mxu0
      %v3319 = vadd.f32 %v3126, %v3318
      %v3320 = vpop.f32.mrb[0].mxu0
      %v3321 = vadd.f32 %v3128, %v3320
      %v3322 = vpop.f32.mrb[0].mxu0
      %v3323 = vadd.f32 %v3130, %v3322
      %3324 = vmatprep.mubr.bf16.mxu0 %v1078
      %3325 = vmatmul.mubr.bf16.gmra.mrb[0].mxu0 %v1077
      %v3326 = vpop.f32.mrb[0].mxu0
      %v3327 = vadd.f32 %v3134, %v3326
      %v3328 = vpop.f32.mrb[0].mxu0
      %v3329 = vadd.f32 %v3136, %v3328
      %v3330 = vpop.f32.mrb[0].mxu0
      %v3331 = vadd.f32 %v3138, %v3330
      %v3332 = vpop.f32.mrb[0].mxu0
      %v3333 = vadd.f32 %v3140, %v3332
      %3334 = vmatprep.mubr.bf16.mxu0 %v1085
      %3335 = vmatmul.mubr.bf16.gmra.mrb[0].mxu0 %v1084
      %v3336 = vpop.f32.mrb[0].mxu0
      %v3337 = vadd.f32 %v3144, %v3336
      %v3338 = vpop.f32.mrb[0].mxu0
      %v3339 = vadd.f32 %v3146, %v3338
      %v3340 = vpop.f32.mrb[0].mxu0
      %v3341 = vadd.f32 %v3148, %v3340
      %v3342 = vpop.f32.mrb[0].mxu0
      %v3343 = vadd.f32 %v3150, %v3342
      %3344 = vmatprep.mubr.bf16.mxu0 %v1092
      %3345 = vmatmul.mubr.bf16.gmra.mrb[0].mxu0 %v1091
      %v3346 = vpop.f32.mrb[0].mxu0
      %v3347 = vadd.f32 %v3154, %v3346
      %v3348 = vpop.f32.mrb[0].mxu0
      %v3349 = vadd.f32 %v3156, %v3348
      %v3350 = vpop.f32.mrb[0].mxu0
      %v3351 = vadd.f32 %v3158, %v3350
      %v3352 = vpop.f32.mrb[0].mxu0
      %v3353 = vadd.f32 %v3160, %v3352
      %3354 = vmatprep.mubr.bf16.mxu0 %v1099
      %3355 = vmatmul.mubr.bf16.gmra.mrb[0].mxu0 %v1098
      %v3356 = vpop.f32.mrb[0].mxu0
      %v3357 = vadd.f32 %v3164, %v3356
      %v3358 = vpop.f32.mrb[0].mxu0
      %v3359 = vadd.f32 %v3166, %v3358
      %v3360 = vpop.f32.mrb[0].mxu0
      %v3361 = vadd.f32 %v3168, %v3360
      %v3362 = vpop.f32.mrb[0].mxu0
      %v3363 = vadd.f32 %v3170, %v3362
      %3364 = vmatprep.mubr.bf16.mxu0 %v1106
      %3365 = vmatmul.mubr.bf16.gmra.mrb[0].mxu0 %v1105
      %v3366 = vpop.f32.mrb[0].mxu0
      %v3367 = vadd.f32 %v3174, %v3366
      %v3368 = vpop.f32.mrb[0].mxu0
      %v3369 = vadd.f32 %v3176, %v3368
      %v3370 = vpop.f32.mrb[0].mxu0
      %v3371 = vadd.f32 %v3178, %v3370
      %v3372 = vpop.f32.mrb[0].mxu0
      %v3373 = vadd.f32 %v3180, %v3372
      %3374 = vmatprep.mubr.bf16.mxu0 %v1113
      %3375 = vmatmul.mubr.bf16.gmra.mrb[0].mxu0 %v1112
      %v3376 = vpop.f32.mrb[0].mxu0
      %v3377 = vadd.f32 %v3184, %v3376
      %v3378 = vpop.f32.mrb[0].mxu0
      %v3379 = vadd.f32 %v3186, %v3378
      %v3380 = vpop.f32.mrb[0].mxu0
      %v3381 = vadd.f32 %v3188, %v3380
      %v3382 = vpop.f32.mrb[0].mxu0
      %v3383 = vadd.f32 %v3190, %v3382
      %3384 = vmatprep.mubr.bf16.mxu0 %v1120
      %3385 = vmatmul.mubr.bf16.gmra.mrb[0].mxu0 %v1119
      %v3386 = vpop.f32.mrb[0].mxu0
      %v3387 = vadd.f32 %v3194, %v3386
      %v3388 = vpop.f32.mrb[0].mxu0
      %v3389 = vadd.f32 %v3196, %v3388
      %v3390 = vpop.f32.mrb[0].mxu0
      %v3391 = vadd.f32 %v3198, %v3390
      %v3392 = vpop.f32.mrb[0].mxu0
      %v3393 = vadd.f32 %v3200, %v3392
      %3394 = vmatprep.mubr.bf16.mxu0 %v1127
      %3395 = vmatmul.mubr.bf16.gmra.mrb[0].mxu0 %v1126
      %v3396 = vpop.f32.mrb[0].mxu0
      %v3397 = vadd.f32 %v3204, %v3396
      %v3398 = vpop.f32.mrb[0].mxu0
      %v3399 = vadd.f32 %v3206, %v3398
      %v3400 = vpop.f32.mrb[0].mxu0
      %v3401 = vadd.f32 %v3208, %v3400
      %v3402 = vpop.f32.mrb[0].mxu0
      %v3403 = vadd.f32 %v3210, %v3402
      %3404 = vmatprep.mubr.bf16.mxu0 %v1134
      %3405 = vmatmul.mubr.bf16.gmra.mrb[0].mxu0 %v1133
      %v3406 = vpop.f32.mrb[0].mxu0
      %v3407 = vadd.f32 %v3214, %v3406
      %v3408 = vpop.f32.mrb[0].mxu0
      %v3409 = vadd.f32 %v3216, %v3408
      %v3410 = vpop.f32.mrb[0].mxu0
      %v3411 = vadd.f32 %v3218, %v3410
      %v3412 = vpop.f32.mrb[0].mxu0
      %v3413 = vadd.f32 %v3220, %v3412
      %3414 = vmatprep.mubr.bf16.mxu0 %v1141
      %3415 = vmatmul.mubr.bf16.gmra.mrb[0].mxu0 %v1140
      %v3416 = vpop.f32.mrb[0].mxu0
      %v3417 = vadd.f32 %v3224, %v3416
      %v3418 = vpop.f32.mrb[0].mxu0
      %v3419 = vadd.f32 %v3226, %v3418
      %v3420 = vpop.f32.mrb[0].mxu0
      %v3421 = vadd.f32 %v3228, %v3420
      %v3422 = vpop.f32.mrb[0].mxu0
      %v3423 = vadd.f32 %v3230, %v3422
      %3424 = vmatprep.mubr.bf16.mxu0 %v1148
      %3425 = vmatmul.mubr.bf16.gmra.mrb[0].mxu0 %v1147
      %v3426 = vpop.f32.mrb[0].mxu0
      %v3427 = vadd.f32 %v3234, %v3426
      %v3428 = vpop.f32.mrb[0].mxu0
      %v3429 = vadd.f32 %v3236, %v3428
      %v3430 = vpop.f32.mrb[0].mxu0
      %v3431 = vadd.f32 %v3238, %v3430
      %v3432 = vpop.f32.mrb[0].mxu0
      %v3433 = vadd.f32 %v3240, %v3432
      %3434 = vdwg.mxu0
      %3435 = vmatprep.subr.bf16.mxu0 %v1967
      %3436 = vmatpush1.bf16.msra.mxu0 %v1966
      %3437 = vmatprep.subr.bf16.mxu0 %v1971
      %3438 = vmatpush1.bf16.msra.mxu0 %v1970
      %3439 = vmatprep.subr.bf16.mxu0 %v1975
      %3440 = vmatpush1.bf16.msra.mxu0 %v1974
      %3441 = vmatprep.subr.bf16.mxu0 %v1979
      %3442 = vmatpush1.bf16.msra.mxu0 %v1978
      %3443 = vmatprep.subr.bf16.mxu0 %v1983
      %3444 = vmatpush1.bf16.msra.mxu0 %v1982
      %3445 = vmatprep.subr.bf16.mxu0 %v1987
      %3446 = vmatpush1.bf16.msra.mxu0 %v1986
      %3447 = vmatprep.subr.bf16.mxu0 %v1991
      %3448 = vmatpush1.bf16.msra.mxu0 %v1990
      %3449 = vmatprep.subr.bf16.mxu0 %v1995
      %3450 = vmatpush1.bf16.msra.mxu0 %v1994
      %3451 = vmatprep.subr.bf16.mxu0 %v1999
      %3452 = vmatpush1.bf16.msra.mxu0 %v1998
      %3453 = vmatprep.subr.bf16.mxu0 %v2003
      %3454 = vmatpush1.bf16.msra.mxu0 %v2002
      %3455 = vmatprep.subr.bf16.mxu0 %v2007
      %3456 = vmatpush1.bf16.msra.mxu0 %v2006
      %3457 = vmatprep.subr.bf16.mxu0 %v2011
      %3458 = vmatpush1.bf16.msra.mxu0 %v2010
      %3459 = vmatprep.subr.bf16.mxu0 %v2015
      %3460 = vmatpush1.bf16.msra.mxu0 %v2014
      %3461 = vmatprep.subr.bf16.mxu0 %v2019
      %3462 = vmatpush1.bf16.msra.mxu0 %v2018
      %3463 = vmatprep.subr.bf16.mxu0 %v2023
      %3464 = vmatpush1.bf16.msra.mxu0 %v2022
      %3465 = vmatprep.subr.bf16.mxu0 %v2027
      %3466 = vmatpush1.bf16.msra.mxu0 %v2026
      %3467 = vmatprep.mubr.bf16.mxu0 %v1045
      %3468 = vmatmul.mubr.bf16.gmra.mrb[0].mxu0 %v1044
      %v3469 = vpop.f32.mrb[0].mxu0
      %v3470 = vadd.f32 %v3277, %v3469
      %v3471 = vpop.f32.mrb[0].mxu0
      %v3472 = vadd.f32 %v3279, %v3471
      %v3473 = vpop.f32.mrb[0].mxu0
      %v3474 = vadd.f32 %v3281, %v3473
      %v3475 = vpop.f32.mrb[0].mxu0
      %v3476 = vadd.f32 %v3283, %v3475
      %3477 = vmatprep.mubr.bf16.mxu0 %v1052
      %3478 = vmatmul.mubr.bf16.gmra.mrb[0].mxu0 %v1051
      %v3479 = vpop.f32.mrb[0].mxu0
      %v3480 = vadd.f32 %v3287, %v3479
      %v3481 = vpop.f32.mrb[0].mxu0
      %v3482 = vadd.f32 %v3289, %v3481
      %v3483 = vpop.f32.mrb[0].mxu0
      %v3484 = vadd.f32 %v3291, %v3483
      %v3485 = vpop.f32.mrb[0].mxu0
      %v3486 = vadd.f32 %v3293, %v3485
      %3487 = vmatprep.mubr.bf16.mxu0 %v1059
      %3488 = vmatmul.mubr.bf16.gmra.mrb[0].mxu0 %v1058
      %v3489 = vpop.f32.mrb[0].mxu0
      %v3490 = vadd.f32 %v3297, %v3489
      %v3491 = vpop.f32.mrb[0].mxu0
      %v3492 = vadd.f32 %v3299, %v3491
      %v3493 = vpop.f32.mrb[0].mxu0
      %v3494 = vadd.f32 %v3301, %v3493
      %v3495 = vpop.f32.mrb[0].mxu0
      %v3496 = vadd.f32 %v3303, %v3495
      %3497 = vmatprep.mubr.bf16.mxu0 %v1066
      %3498 = vmatmul.mubr.bf16.gmra.mrb[0].mxu0 %v1065
      %v3499 = vpop.f32.mrb[0].mxu0
      %v3500 = vadd.f32 %v3307, %v3499
      %v3501 = vpop.f32.mrb[0].mxu0
      %v3502 = vadd.f32 %v3309, %v3501
      %v3503 = vpop.f32.mrb[0].mxu0
      %v3504 = vadd.f32 %v3311, %v3503
      %v3505 = vpop.f32.mrb[0].mxu0
      %v3506 = vadd.f32 %v3313, %v3505
      %3507 = vmatprep.mubr.bf16.mxu0 %v1073
      %3508 = vmatmul.mubr.bf16.gmra.mrb[0].mxu0 %v1072
      %v3509 = vpop.f32.mrb[0].mxu0
      %v3510 = vadd.f32 %v3317, %v3509
      %v3511 = vpop.f32.mrb[0].mxu0
      %v3512 = vadd.f32 %v3319, %v3511
      %v3513 = vpop.f32.mrb[0].mxu0
      %v3514 = vadd.f32 %v3321, %v3513
      %v3515 = vpop.f32.mrb[0].mxu0
      %v3516 = vadd.f32 %v3323, %v3515
      %3517 = vmatprep.mubr.bf16.mxu0 %v1080
      %3518 = vmatmul.mubr.bf16.gmra.mrb[0].mxu0 %v1079
      %v3519 = vpop.f32.mrb[0].mxu0
      %v3520 = vadd.f32 %v3327, %v3519
      %v3521 = vpop.f32.mrb[0].mxu0
      %v3522 = vadd.f32 %v3329, %v3521
      %v3523 = vpop.f32.mrb[0].mxu0
      %v3524 = vadd.f32 %v3331, %v3523
      %v3525 = vpop.f32.mrb[0].mxu0
      %v3526 = vadd.f32 %v3333, %v3525
      %3527 = vmatprep.mubr.bf16.mxu0 %v1087
      %3528 = vmatmul.mubr.bf16.gmra.mrb[0].mxu0 %v1086
      %v3529 = vpop.f32.mrb[0].mxu0
      %v3530 = vadd.f32 %v3337, %v3529
      %v3531 = vpop.f32.mrb[0].mxu0
      %v3532 = vadd.f32 %v3339, %v3531
      %v3533 = vpop.f32.mrb[0].mxu0
      %v3534 = vadd.f32 %v3341, %v3533
      %v3535 = vpop.f32.mrb[0].mxu0
      %v3536 = vadd.f32 %v3343, %v3535
      %3537 = vmatprep.mubr.bf16.mxu0 %v1094
      %3538 = vmatmul.mubr.bf16.gmra.mrb[0].mxu0 %v1093
      %v3539 = vpop.f32.mrb[0].mxu0
      %v3540 = vadd.f32 %v3347, %v3539
      %v3541 = vpop.f32.mrb[0].mxu0
      %v3542 = vadd.f32 %v3349, %v3541
      %v3543 = vpop.f32.mrb[0].mxu0
      %v3544 = vadd.f32 %v3351, %v3543
      %v3545 = vpop.f32.mrb[0].mxu0
      %v3546 = vadd.f32 %v3353, %v3545
      %3547 = vmatprep.mubr.bf16.mxu0 %v1101
      %3548 = vmatmul.mubr.bf16.gmra.mrb[0].mxu0 %v1100
      %v3549 = vpop.f32.mrb[0].mxu0
      %v3550 = vadd.f32 %v3357, %v3549
      %v3551 = vpop.f32.mrb[0].mxu0
      %v3552 = vadd.f32 %v3359, %v3551
      %v3553 = vpop.f32.mrb[0].mxu0
      %v3554 = vadd.f32 %v3361, %v3553
      %v3555 = vpop.f32.mrb[0].mxu0
      %v3556 = vadd.f32 %v3363, %v3555
      %3557 = vmatprep.mubr.bf16.mxu0 %v1108
      %3558 = vmatmul.mubr.bf16.gmra.mrb[0].mxu0 %v1107
      %v3559 = vpop.f32.mrb[0].mxu0
      %v3560 = vadd.f32 %v3367, %v3559
      %v3561 = vpop.f32.mrb[0].mxu0
      %v3562 = vadd.f32 %v3369, %v3561
      %v3563 = vpop.f32.mrb[0].mxu0
      %v3564 = vadd.f32 %v3371, %v3563
      %v3565 = vpop.f32.mrb[0].mxu0
      %v3566 = vadd.f32 %v3373, %v3565
      %3567 = vmatprep.mubr.bf16.mxu0 %v1115
      %3568 = vmatmul.mubr.bf16.gmra.mrb[0].mxu0 %v1114
      %v3569 = vpop.f32.mrb[0].mxu0
      %v3570 = vadd.f32 %v3377, %v3569
      %v3571 = vpop.f32.mrb[0].mxu0
      %v3572 = vadd.f32 %v3379, %v3571
      %v3573 = vpop.f32.mrb[0].mxu0
      %v3574 = vadd.f32 %v3381, %v3573
      %v3575 = vpop.f32.mrb[0].mxu0
      %v3576 = vadd.f32 %v3383, %v3575
      %3577 = vmatprep.mubr.bf16.mxu0 %v1122
      %3578 = vmatmul.mubr.bf16.gmra.mrb[0].mxu0 %v1121
      %v3579 = vpop.f32.mrb[0].mxu0
      %v3580 = vadd.f32 %v3387, %v3579
      %v3581 = vpop.f32.mrb[0].mxu0
      %v3582 = vadd.f32 %v3389, %v3581
      %v3583 = vpop.f32.mrb[0].mxu0
      %v3584 = vadd.f32 %v3391, %v3583
      %v3585 = vpop.f32.mrb[0].mxu0
      %v3586 = vadd.f32 %v3393, %v3585
      %3587 = vmatprep.mubr.bf16.mxu0 %v1129
      %3588 = vmatmul.mubr.bf16.gmra.mrb[0].mxu0 %v1128
      %v3589 = vpop.f32.mrb[0].mxu0
      %v3590 = vadd.f32 %v3397, %v3589
      %v3591 = vpop.f32.mrb[0].mxu0
      %v3592 = vadd.f32 %v3399, %v3591
      %v3593 = vpop.f32.mrb[0].mxu0
      %v3594 = vadd.f32 %v3401, %v3593
      %v3595 = vpop.f32.mrb[0].mxu0
      %v3596 = vadd.f32 %v3403, %v3595
      %3597 = vmatprep.mubr.bf16.mxu0 %v1136
      %3598 = vmatmul.mubr.bf16.gmra.mrb[0].mxu0 %v1135
      %v3599 = vpop.f32.mrb[0].mxu0
      %v3600 = vadd.f32 %v3407, %v3599
      %v3601 = vpop.f32.mrb[0].mxu0
      %v3602 = vadd.f32 %v3409, %v3601
      %v3603 = vpop.f32.mrb[0].mxu0
      %v3604 = vadd.f32 %v3411, %v3603
      %v3605 = vpop.f32.mrb[0].mxu0
      %v3606 = vadd.f32 %v3413, %v3605
      %3607 = vmatprep.mubr.bf16.mxu0 %v1143
      %3608 = vmatmul.mubr.bf16.gmra.mrb[0].mxu0 %v1142
      %v3609 = vpop.f32.mrb[0].mxu0
      %v3610 = vadd.f32 %v3417, %v3609
      %v3611 = vpop.f32.mrb[0].mxu0
      %v3612 = vadd.f32 %v3419, %v3611
      %v3613 = vpop.f32.mrb[0].mxu0
      %v3614 = vadd.f32 %v3421, %v3613
      %v3615 = vpop.f32.mrb[0].mxu0
      %v3616 = vadd.f32 %v3423, %v3615
      %3617 = vmatprep.mubr.bf16.mxu0 %v1150
      %3618 = vmatmul.mubr.bf16.gmra.mrb[0].mxu0 %v1149
      %v3619 = vpop.f32.mrb[0].mxu0
      %v3620 = vadd.f32 %v3427, %v3619
      %v3621 = vpop.f32.mrb[0].mxu0
      %v3622 = vadd.f32 %v3429, %v3621
      %v3623 = vpop.f32.mrb[0].mxu0
      %v3624 = vadd.f32 %v3431, %v3623
      %v3625 = vpop.f32.mrb[0].mxu0
      %v3626 = vadd.f32 %v3433, %v3625
      %3627 = vdwg.mxu0
      %3628 = vmatprep.subr.bf16.mxu0 %v2031
      %3629 = vmatpush1.bf16.msra.mxu0 %v2030
      %3630 = vmatprep.subr.bf16.mxu0 0
      %3631 = vmatpush1.bf16.msra.mxu0 0
      %3632 = vmatprep.subr.bf16.mxu0 0
      %3633 = vmatpush1.bf16.msra.mxu0 0
      %3634 = vmatprep.subr.bf16.mxu0 0
      %3635 = vmatpush1.bf16.msra.mxu0 0
      %3636 = vmatprep.subr.bf16.mxu0 0
      %3637 = vmatpush1.bf16.msra.mxu0 0
      %3638 = vmatprep.subr.bf16.mxu0 0
      %3639 = vmatpush1.bf16.msra.mxu0 0
      %3640 = vmatprep.subr.bf16.mxu0 0
      %3641 = vmatpush1.bf16.msra.mxu0 0
      %3642 = vmatprep.subr.bf16.mxu0 0
      %3643 = vmatpush1.bf16.msra.mxu0 0
      %3644 = vmatprep.subr.bf16.mxu0 0
      %3645 = vmatpush1.bf16.msra.mxu0 0
      %3646 = vmatprep.subr.bf16.mxu0 0
      %3647 = vmatpush1.bf16.msra.mxu0 0
      %3648 = vmatprep.subr.bf16.mxu0 0
      %3649 = vmatpush1.bf16.msra.mxu0 0
      %3650 = vmatprep.subr.bf16.mxu0 0
      %3651 = vmatpush1.bf16.msra.mxu0 0
      %3652 = vmatprep.subr.bf16.mxu0 0
      %3653 = vmatpush1.bf16.msra.mxu0 0
      %3654 = vmatprep.subr.bf16.mxu0 0
      %3655 = vmatpush1.bf16.msra.mxu0 0
      %3656 = vmatprep.subr.bf16.mxu0 0
      %3657 = vmatpush1.bf16.msra.mxu0 0
      %3658 = vmatprep.subr.bf16.mxu0 0
      %3659 = vmatpush1.bf16.msra.mxu0 0
      %3660 = vmatprep.mubr.bf16.mxu0 0
      %3661 = vmatmul.mubr.bf16.gmra.mrb[0].mxu0 %v2230
      %v3662 = vpop.f32.mrb[0].mxu0
      %v3663 = vadd.f32 %v3470, %v3662
      %v3664 = vpop.f32.mrb[0].mxu0
      %v3665 = vadd.f32 %v3472, %v3664
      %v3666 = vpop.f32.mrb[0].mxu0
      %v3667 = vadd.f32 %v3474, %v3666
      %v3668 = vpop.f32.mrb[0].mxu0
      %v3669 = vadd.f32 %v3476, %v3668
      %3670 = vmatprep.mubr.bf16.mxu0 0
      %3671 = vmatmul.mubr.bf16.gmra.mrb[0].mxu0 %v2233
      %v3672 = vpop.f32.mrb[0].mxu0
      %v3673 = vadd.f32 %v3480, %v3672
      %v3674 = vpop.f32.mrb[0].mxu0
      %v3675 = vadd.f32 %v3482, %v3674
      %v3676 = vpop.f32.mrb[0].mxu0
      %v3677 = vadd.f32 %v3484, %v3676
      %v3678 = vpop.f32.mrb[0].mxu0
      %v3679 = vadd.f32 %v3486, %v3678
      %3680 = vmatprep.mubr.bf16.mxu0 0
      %3681 = vmatmul.mubr.bf16.gmra.mrb[0].mxu0 %v2236
      %v3682 = vpop.f32.mrb[0].mxu0
      %v3683 = vadd.f32 %v3490, %v3682
      %v3684 = vpop.f32.mrb[0].mxu0
      %v3685 = vadd.f32 %v3492, %v3684
      %v3686 = vpop.f32.mrb[0].mxu0
      %v3687 = vadd.f32 %v3494, %v3686
      %v3688 = vpop.f32.mrb[0].mxu0
      %v3689 = vadd.f32 %v3496, %v3688
      %3690 = vmatprep.mubr.bf16.mxu0 0
      %3691 = vmatmul.mubr.bf16.gmra.mrb[0].mxu0 %v2239
      %v3692 = vpop.f32.mrb[0].mxu0
      %v3693 = vadd.f32 %v3500, %v3692
      %v3694 = vpop.f32.mrb[0].mxu0
      %v3695 = vadd.f32 %v3502, %v3694
      %v3696 = vpop.f32.mrb[0].mxu0
      %v3697 = vadd.f32 %v3504, %v3696
      %v3698 = vpop.f32.mrb[0].mxu0
      %v3699 = vadd.f32 %v3506, %v3698
      %3700 = vmatprep.mubr.bf16.mxu0 0
      %3701 = vmatmul.mubr.bf16.gmra.mrb[0].mxu0 %v2242
      %v3702 = vpop.f32.mrb[0].mxu0
      %v3703 = vadd.f32 %v3510, %v3702
      %v3704 = vpop.f32.mrb[0].mxu0
      %v3705 = vadd.f32 %v3512, %v3704
      %v3706 = vpop.f32.mrb[0].mxu0
      %v3707 = vadd.f32 %v3514, %v3706
      %v3708 = vpop.f32.mrb[0].mxu0
      %v3709 = vadd.f32 %v3516, %v3708
      %3710 = vmatprep.mubr.bf16.mxu0 0
      %3711 = vmatmul.mubr.bf16.gmra.mrb[0].mxu0 %v2245
      %v3712 = vpop.f32.mrb[0].mxu0
      %v3713 = vadd.f32 %v3520, %v3712
      %v3714 = vpop.f32.mrb[0].mxu0
      %v3715 = vadd.f32 %v3522, %v3714
      %v3716 = vpop.f32.mrb[0].mxu0
      %v3717 = vadd.f32 %v3524, %v3716
      %v3718 = vpop.f32.mrb[0].mxu0
      %v3719 = vadd.f32 %v3526, %v3718
      %3720 = vmatprep.mubr.bf16.mxu0 0
      %3721 = vmatmul.mubr.bf16.gmra.mrb[0].mxu0 %v2248
      %v3722 = vpop.f32.mrb[0].mxu0
      %v3723 = vadd.f32 %v3530, %v3722
      %v3724 = vpop.f32.mrb[0].mxu0
      %v3725 = vadd.f32 %v3532, %v3724
      %v3726 = vpop.f32.mrb[0].mxu0
      %v3727 = vadd.f32 %v3534, %v3726
      %v3728 = vpop.f32.mrb[0].mxu0
      %v3729 = vadd.f32 %v3536, %v3728
      %3730 = vmatprep.mubr.bf16.mxu0 0
      %3731 = vmatmul.mubr.bf16.gmra.mrb[0].mxu0 %v2251
      %v3732 = vpop.f32.mrb[0].mxu0
      %v3733 = vadd.f32 %v3540, %v3732
      %v3734 = vpop.f32.mrb[0].mxu0
      %v3735 = vadd.f32 %v3542, %v3734
      %v3736 = vpop.f32.mrb[0].mxu0
      %v3737 = vadd.f32 %v3544, %v3736
      %v3738 = vpop.f32.mrb[0].mxu0
      %v3739 = vadd.f32 %v3546, %v3738
      %3740 = vmatprep.mubr.bf16.mxu0 0
      %3741 = vmatmul.mubr.bf16.gmra.mrb[0].mxu0 %v2254
      %v3742 = vpop.f32.mrb[0].mxu0
      %v3743 = vadd.f32 %v3550, %v3742
      %v3744 = vpop.f32.mrb[0].mxu0
      %v3745 = vadd.f32 %v3552, %v3744
      %v3746 = vpop.f32.mrb[0].mxu0
      %v3747 = vadd.f32 %v3554, %v3746
      %v3748 = vpop.f32.mrb[0].mxu0
      %v3749 = vadd.f32 %v3556, %v3748
      %3750 = vmatprep.mubr.bf16.mxu0 0
      %3751 = vmatmul.mubr.bf16.gmra.mrb[0].mxu0 %v2257
      %v3752 = vpop.f32.mrb[0].mxu0
      %v3753 = vadd.f32 %v3560, %v3752
      %v3754 = vpop.f32.mrb[0].mxu0
      %v3755 = vadd.f32 %v3562, %v3754
      %v3756 = vpop.f32.mrb[0].mxu0
      %v3757 = vadd.f32 %v3564, %v3756
      %v3758 = vpop.f32.mrb[0].mxu0
      %v3759 = vadd.f32 %v3566, %v3758
      %3760 = vmatprep.mubr.bf16.mxu0 0
      %3761 = vmatmul.mubr.bf16.gmra.mrb[0].mxu0 %v2260
      %v3762 = vpop.f32.mrb[0].mxu0
      %v3763 = vadd.f32 %v3570, %v3762
      %v3764 = vpop.f32.mrb[0].mxu0
      %v3765 = vadd.f32 %v3572, %v3764
      %v3766 = vpop.f32.mrb[0].mxu0
      %v3767 = vadd.f32 %v3574, %v3766
      %v3768 = vpop.f32.mrb[0].mxu0
      %v3769 = vadd.f32 %v3576, %v3768
      %3770 = vmatprep.mubr.bf16.mxu0 0
      %3771 = vmatmul.mubr.bf16.gmra.mrb[0].mxu0 %v2263
      %v3772 = vpop.f32.mrb[0].mxu0
      %v3773 = vadd.f32 %v3580, %v3772
      %v3774 = vpop.f32.mrb[0].mxu0
      %v3775 = vadd.f32 %v3582, %v3774
      %v3776 = vpop.f32.mrb[0].mxu0
      %v3777 = vadd.f32 %v3584, %v3776
      %v3778 = vpop.f32.mrb[0].mxu0
      %v3779 = vadd.f32 %v3586, %v3778
      %3780 = vmatprep.mubr.bf16.mxu0 0
      %3781 = vmatmul.mubr.bf16.gmra.mrb[0].mxu0 %v2266
      %v3782 = vpop.f32.mrb[0].mxu0
      %v3783 = vadd.f32 %v3590, %v3782
      %v3784 = vpop.f32.mrb[0].mxu0
      %v3785 = vadd.f32 %v3592, %v3784
      %v3786 = vpop.f32.mrb[0].mxu0
      %v3787 = vadd.f32 %v3594, %v3786
      %v3788 = vpop.f32.mrb[0].mxu0
      %v3789 = vadd.f32 %v3596, %v3788
      %3790 = vmatprep.mubr.bf16.mxu0 0
      %3791 = vmatmul.mubr.bf16.gmra.mrb[0].mxu0 %v2269
      %v3792 = vpop.f32.mrb[0].mxu0
      %v3793 = vadd.f32 %v3600, %v3792
      %v3794 = vpop.f32.mrb[0].mxu0
      %v3795 = vadd.f32 %v3602, %v3794
      %v3796 = vpop.f32.mrb[0].mxu0
      %v3797 = vadd.f32 %v3604, %v3796
      %v3798 = vpop.f32.mrb[0].mxu0
      %v3799 = vadd.f32 %v3606, %v3798
      %3800 = vmatprep.mubr.bf16.mxu0 0
      %3801 = vmatmul.mubr.bf16.gmra.mrb[0].mxu0 %v2272
      %v3802 = vpop.f32.mrb[0].mxu0
      %v3803 = vadd.f32 %v3610, %v3802
      %v3804 = vpop.f32.mrb[0].mxu0
      %v3805 = vadd.f32 %v3612, %v3804
      %v3806 = vpop.f32.mrb[0].mxu0
      %v3807 = vadd.f32 %v3614, %v3806
      %v3808 = vpop.f32.mrb[0].mxu0
      %v3809 = vadd.f32 %v3616, %v3808
      %3810 = vmatprep.mubr.bf16.mxu0 0
      %3811 = vmatmul.mubr.bf16.gmra.mrb[0].mxu0 %v2275
      %v3812 = vpop.f32.mrb[0].mxu0
      %v3813 = vadd.f32 %v3620, %v3812
      %v3814 = vpop.f32.mrb[0].mxu0
      %v3815 = vadd.f32 %v3622, %v3814
      %v3816 = vpop.f32.mrb[0].mxu0
      %v3817 = vadd.f32 %v3624, %v3816
      %v3818 = vpop.f32.mrb[0].mxu0
      %v3819 = vadd.f32 %v3626, %v3818
      %3820 = vdwg.mxu0
      %v3821 = vmax.f32 %v2891, 0.0
      %v3822 = vmax.f32 %v2893, 0.0
      %v3823 = vmax.f32 %v3663, 0.0
      %v3824 = vmax.f32 %v3665, 0.0
      %v3825 = vmax.f32 %v2895, 0.0
      %v3826 = vmax.f32 %v2897, 0.0
      %v3827 = vmax.f32 %v3667, 0.0
      %v3828 = vmax.f32 %v3669, 0.0
      %v3829 = vmax.f32 %v2901, 0.0
      %v3830 = vmax.f32 %v2903, 0.0
      %v3831 = vmax.f32 %v3673, 0.0
      %v3832 = vmax.f32 %v3675, 0.0
      %v3833 = vmax.f32 %v2905, 0.0
      %v3834 = vmax.f32 %v2907, 0.0
      %v3835 = vmax.f32 %v3677, 0.0
      %v3836 = vmax.f32 %v3679, 0.0
      %v3837 = vmax.f32 %v2911, 0.0
      %v3838 = vmax.f32 %v2913, 0.0
      %v3839 = vmax.f32 %v3683, 0.0
      %v3840 = vmax.f32 %v3685, 0.0
      %v3841 = vmax.f32 %v2915, 0.0
      %v3842 = vmax.f32 %v2917, 0.0
      %v3843 = vmax.f32 %v3687, 0.0
      %v3844 = vmax.f32 %v3689, 0.0
      %v3845 = vmax.f32 %v2921, 0.0
      %v3846 = vmax.f32 %v2923, 0.0
      %v3847 = vmax.f32 %v3693, 0.0
      %v3848 = vmax.f32 %v3695, 0.0
      %v3849 = vmax.f32 %v2925, 0.0
      %v3850 = vmax.f32 %v2927, 0.0
      %v3851 = vmax.f32 %v3697, 0.0
      %v3852 = vmax.f32 %v3699, 0.0
      %v3853 = vmax.f32 %v2931, 0.0
      %v3854 = vmax.f32 %v2933, 0.0
      %v3855 = vmax.f32 %v3703, 0.0
      %v3856 = vmax.f32 %v3705, 0.0
      %v3857 = vmax.f32 %v2935, 0.0
      %v3858 = vmax.f32 %v2937, 0.0
      %v3859 = vmax.f32 %v3707, 0.0
      %v3860 = vmax.f32 %v3709, 0.0
      %v3861 = vmax.f32 %v2941, 0.0
      %v3862 = vmax.f32 %v2943, 0.0
      %v3863 = vmax.f32 %v3713, 0.0
      %v3864 = vmax.f32 %v3715, 0.0
      %v3865 = vmax.f32 %v2945, 0.0
      %v3866 = vmax.f32 %v2947, 0.0
      %v3867 = vmax.f32 %v3717, 0.0
      %v3868 = vmax.f32 %v3719, 0.0
      %v3869 = vmax.f32 %v2951, 0.0
      %v3870 = vmax.f32 %v2953, 0.0
      %v3871 = vmax.f32 %v3723, 0.0
      %v3872 = vmax.f32 %v3725, 0.0
      %v3873 = vmax.f32 %v2955, 0.0
      %v3874 = vmax.f32 %v2957, 0.0
      %v3875 = vmax.f32 %v3727, 0.0
      %v3876 = vmax.f32 %v3729, 0.0
      %v3877 = vmax.f32 %v2961, 0.0
      %v3878 = vmax.f32 %v2963, 0.0
      %v3879 = vmax.f32 %v3733, 0.0
      %v3880 = vmax.f32 %v3735, 0.0
      %v3881 = vmax.f32 %v2965, 0.0
      %v3882 = vmax.f32 %v2967, 0.0
      %v3883 = vmax.f32 %v3737, 0.0
      %v3884 = vmax.f32 %v3739, 0.0
      %v3885 = vmax.f32 %v2971, 0.0
      %v3886 = vmax.f32 %v2973, 0.0
      %v3887 = vmax.f32 %v3743, 0.0
      %v3888 = vmax.f32 %v3745, 0.0
      %v3889 = vmax.f32 %v2975, 0.0
      %v3890 = vmax.f32 %v2977, 0.0
      %v3891 = vmax.f32 %v3747, 0.0
      %v3892 = vmax.f32 %v3749, 0.0
      %v3893 = vmax.f32 %v2981, 0.0
      %v3894 = vmax.f32 %v2983, 0.0
      %v3895 = vmax.f32 %v3753, 0.0
      %v3896 = vmax.f32 %v3755, 0.0
      %v3897 = vmax.f32 %v2985, 0.0
      %v3898 = vmax.f32 %v2987, 0.0
      %v3899 = vmax.f32 %v3757, 0.0
      %v3900 = vmax.f32 %v3759, 0.0
      %v3901 = vmax.f32 %v2991, 0.0
      %v3902 = vmax.f32 %v2993, 0.0
      %v3903 = vmax.f32 %v3763, 0.0
      %v3904 = vmax.f32 %v3765, 0.0
      %v3905 = vmax.f32 %v2995, 0.0
      %v3906 = vmax.f32 %v2997, 0.0
      %v3907 = vmax.f32 %v3767, 0.0
      %v3908 = vmax.f32 %v3769, 0.0
      %v3909 = vmax.f32 %v3001, 0.0
      %v3910 = vmax.f32 %v3003, 0.0
      %v3911 = vmax.f32 %v3773, 0.0
      %v3912 = vmax.f32 %v3775, 0.0
      %v3913 = vmax.f32 %v3005, 0.0
      %v3914 = vmax.f32 %v3007, 0.0
      %v3915 = vmax.f32 %v3777, 0.0
      %v3916 = vmax.f32 %v3779, 0.0
      %v3917 = vmax.f32 %v3011, 0.0
      %v3918 = vmax.f32 %v3013, 0.0
      %v3919 = vmax.f32 %v3783, 0.0
      %v3920 = vmax.f32 %v3785, 0.0
      %v3921 = vmax.f32 %v3015, 0.0
      %v3922 = vmax.f32 %v3017, 0.0
      %v3923 = vmax.f32 %v3787, 0.0
      %v3924 = vmax.f32 %v3789, 0.0
      %v3925 = vmax.f32 %v3021, 0.0
      %v3926 = vmax.f32 %v3023, 0.0
      %v3927 = vmax.f32 %v3793, 0.0
      %v3928 = vmax.f32 %v3795, 0.0
      %v3929 = vmax.f32 %v3025, 0.0
      %v3930 = vmax.f32 %v3027, 0.0
      %v3931 = vmax.f32 %v3797, 0.0
      %v3932 = vmax.f32 %v3799, 0.0
      %v3933 = vmax.f32 %v3031, 0.0
      %v3934 = vmax.f32 %v3033, 0.0
      %v3935 = vmax.f32 %v3803, 0.0
      %v3936 = vmax.f32 %v3805, 0.0
      %v3937 = vmax.f32 %v3035, 0.0
      %v3938 = vmax.f32 %v3037, 0.0
      %v3939 = vmax.f32 %v3807, 0.0
      %v3940 = vmax.f32 %v3809, 0.0
      %v3941 = vmax.f32 %v3041, 0.0
      %v3942 = vmax.f32 %v3043, 0.0
      %v3943 = vmax.f32 %v3813, 0.0
      %v3944 = vmax.f32 %v3815, 0.0
      %v3945 = vmax.f32 %v3045, 0.0
      %v3946 = vmax.f32 %v3047, 0.0
      %v3947 = vmax.f32 %v3817, 0.0
      %v3948 = vmax.f32 %v3819, 0.0
      %v3949 = vpack.c.bf16 %v3825, %v3821
      %v3950 = vpack.c.bf16 %v3826, %v3822
      %v3951 = vpack.c.bf16 %v3827, %v3823
      %v3952 = vpack.c.bf16 %v3828, %v3824
      %v3953 = vpack.c.bf16 %v3833, %v3829
      %v3954 = vpack.c.bf16 %v3834, %v3830
      %v3955 = vpack.c.bf16 %v3835, %v3831
      %v3956 = vpack.c.bf16 %v3836, %v3832
      %v3957 = vpack.c.bf16 %v3841, %v3837
      %v3958 = vpack.c.bf16 %v3842, %v3838
      %v3959 = vpack.c.bf16 %v3843, %v3839
      %v3960 = vpack.c.bf16 %v3844, %v3840
      %v3961 = vpack.c.bf16 %v3849, %v3845
      %v3962 = vpack.c.bf16 %v3850, %v3846
      %v3963 = vpack.c.bf16 %v3851, %v3847
      %v3964 = vpack.c.bf16 %v3852, %v3848
      %v3965 = vpack.c.bf16 %v3857, %v3853
      %v3966 = vpack.c.bf16 %v3858, %v3854
      %v3967 = vpack.c.bf16 %v3859, %v3855
      %v3968 = vpack.c.bf16 %v3860, %v3856
      %v3969 = vpack.c.bf16 %v3865, %v3861
      %v3970 = vpack.c.bf16 %v3866, %v3862
      %v3971 = vpack.c.bf16 %v3867, %v3863
      %v3972 = vpack.c.bf16 %v3868, %v3864
      %v3973 = vpack.c.bf16 %v3873, %v3869
      %v3974 = vpack.c.bf16 %v3874, %v3870
      %v3975 = vpack.c.bf16 %v3875, %v3871
      %v3976 = vpack.c.bf16 %v3876, %v3872
      %v3977 = vpack.c.bf16 %v3881, %v3877
      %v3978 = vpack.c.bf16 %v3882, %v3878
      %v3979 = vpack.c.bf16 %v3883, %v3879
      %v3980 = vpack.c.bf16 %v3884, %v3880
      %v3981 = vpack.c.bf16 %v3889, %v3885
      %v3982 = vpack.c.bf16 %v3890, %v3886
      %v3983 = vpack.c.bf16 %v3891, %v3887
      %v3984 = vpack.c.bf16 %v3892, %v3888
      %v3985 = vpack.c.bf16 %v3897, %v3893
      %v3986 = vpack.c.bf16 %v3898, %v3894
      %v3987 = vpack.c.bf16 %v3899, %v3895
      %v3988 = vpack.c.bf16 %v3900, %v3896
      %v3989 = vpack.c.bf16 %v3905, %v3901
      %v3990 = vpack.c.bf16 %v3906, %v3902
      %v3991 = vpack.c.bf16 %v3907, %v3903
      %v3992 = vpack.c.bf16 %v3908, %v3904
      %v3993 = vpack.c.bf16 %v3913, %v3909
      %v3994 = vpack.c.bf16 %v3914, %v3910
      %v3995 = vpack.c.bf16 %v3915, %v3911
      %v3996 = vpack.c.bf16 %v3916, %v3912
      %v3997 = vpack.c.bf16 %v3921, %v3917
      %v3998 = vpack.c.bf16 %v3922, %v3918
      %v3999 = vpack.c.bf16 %v3923, %v3919
      %v4000 = vpack.c.bf16 %v3924, %v3920
      %v4001 = vpack.c.bf16 %v3929, %v3925
      %v4002 = vpack.c.bf16 %v3930, %v3926
      %v4003 = vpack.c.bf16 %v3931, %v3927
      %v4004 = vpack.c.bf16 %v3932, %v3928
      %v4005 = vpack.c.bf16 %v3937, %v3933
      %v4006 = vpack.c.bf16 %v3938, %v3934
      %v4007 = vpack.c.bf16 %v3939, %v3935
      %v4008 = vpack.c.bf16 %v3940, %v3936
      %v4009 = vpack.c.bf16 %v3945, %v3941
      %v4010 = vpack.c.bf16 %v3946, %v3942
      %v4011 = vpack.c.bf16 %v3947, %v3943
      %v4012 = vpack.c.bf16 %v3948, %v3944
      %v4013 = vld [vmem:[%s3] sm:$0xf]
      %v4014 = vld [vmem:[%s3 + $0x4] sm:$0xf]
      %v4015 = vld [vmem:[%s3 + $0x8] sm:$0xf]
      %v4016 = vld [vmem:[%s3 + $0xc] sm:$0xf]
      %v4017 = vld [vmem:[%s3 + $0x10] sm:$0xf]
      %v4018 = vld [vmem:[%s3 + $0x14] sm:$0xf]
      %v4019 = vld [vmem:[%s3 + $0x18] sm:$0xf]
      %v4020 = vld [vmem:[%s3 + $0x1c] sm:$0xf]
      %v4021 = vld [vmem:[%s3 + $0x20] sm:$0xf]
      %v4022 = vld [vmem:[%s3 + $0x24] sm:$0xf]
      %v4023 = vld [vmem:[%s3 + $0x28] sm:$0xf]
      %v4024 = vld [vmem:[%s3 + $0x2c] sm:$0xf]
      %v4025 = vld [vmem:[%s3 + $0x30] sm:$0xf]
      %v4026 = vld [vmem:[%s3 + $0x34] sm:$0xf]
      %v4027 = vld [vmem:[%s3 + $0x38] sm:$0xf]
      %v4028 = vld [vmem:[%s3 + $0x3c] sm:$0xf]
      %v4029 = vld [vmem:[%s3 + $0x40] sm:$0xf]
      %v4030 = vld [vmem:[%s3 + $0x44] sm:$0xf]
      %v4031 = vld [vmem:[%s3 + $0x48] sm:$0xf]
      %v4032 = vld [vmem:[%s3 + $0x4c] sm:$0xf]
      %v4033 = vld [vmem:[%s3 + $0x50] sm:$0xf]
      %v4034 = vld [vmem:[%s3 + $0x54] sm:$0xf]
      %v4035 = vld [vmem:[%s3 + $0x58] sm:$0xf]
      %v4036 = vld [vmem:[%s3 + $0x5c] sm:$0xf]
      %v4037 = vld [vmem:[%s3 + $0x60] sm:$0xf]
      %v4038 = vld [vmem:[%s3 + $0x64] sm:$0xf]
      %v4039 = vld [vmem:[%s3 + $0x68] sm:$0xf]
      %v4040 = vld [vmem:[%s3 + $0x6c] sm:$0xf]
      %v4041 = vld [vmem:[%s3 + $0x70] sm:$0xf]
      %v4042 = vld [vmem:[%s3 + $0x74] sm:$0xf]
      %v4043 = vld [vmem:[%s3 + $0x78] sm:$0xf]
      %v4044 = vld [vmem:[%s3 + $0x7c] sm:$0xf]
      %v4045 = vld [vmem:[%s3 + $0x80] sm:$0xf]
      %v4046 = vld [vmem:[%s3 + $0x84] sm:$0xf]
      %v4047 = vld [vmem:[%s3 + $0x88] sm:$0xf]
      %v4048 = vld [vmem:[%s3 + $0x8c] sm:$0xf]
      %v4049 = vld [vmem:[%s3 + $0x90] sm:$0xf]
      %v4050 = vld [vmem:[%s3 + $0x94] sm:$0xf]
      %v4051 = vld [vmem:[%s3 + $0x98] sm:$0xf]
      %v4052 = vld [vmem:[%s3 + $0x9c] sm:$0xf]
      %v4053 = vld [vmem:[%s3 + $0xa0] sm:$0xf]
      %v4054 = vld [vmem:[%s3 + $0xa4] sm:$0xf]
      %v4055 = vld [vmem:[%s3 + $0xa8] sm:$0xf]
      %v4056 = vld [vmem:[%s3 + $0xac] sm:$0xf]
      %v4057 = vld [vmem:[%s3 + $0xb0] sm:$0xf]
      %v4058 = vld [vmem:[%s3 + $0xb4] sm:$0xf]
      %v4059 = vld [vmem:[%s3 + $0xb8] sm:$0xf]
      %v4060 = vld [vmem:[%s3 + $0xbc] sm:$0xf]
      %v4061 = vld [vmem:[%s3 + $0xc0] sm:$0xf]
      %v4062 = vld [vmem:[%s3 + $0xc4] sm:$0xf]
      %v4063 = vld [vmem:[%s3 + $0xc8] sm:$0xf]
      %v4064 = vld [vmem:[%s3 + $0xcc] sm:$0xf]
      %v4065 = vld [vmem:[%s3 + $0xd0] sm:$0xf]
      %v4066 = vld [vmem:[%s3 + $0xd4] sm:$0xf]
      %v4067 = vld [vmem:[%s3 + $0xd8] sm:$0xf]
      %v4068 = vld [vmem:[%s3 + $0xdc] sm:$0xf]
      %v4069 = vld [vmem:[%s3 + $0xe0] sm:$0xf]
      %v4070 = vld [vmem:[%s3 + $0xe4] sm:$0xf]
      %v4071 = vld [vmem:[%s3 + $0xe8] sm:$0xf]
      %v4072 = vld [vmem:[%s3 + $0xec] sm:$0xf]
      %v4073 = vld [vmem:[%s3 + $0xf0] sm:$0xf]
      %v4074 = vld [vmem:[%s3 + $0xf4] sm:$0xf]
      %v4075 = vld [vmem:[%s3 + $0xf8] sm:$0xf]
      %v4076 = vld [vmem:[%s3 + $0xfc] sm:$0xf]
      %v4077 = vld [vmem:[%s4] sm:$0x1]
      %v4079 = vlaneseq
      %v4080 = vshrl.u32 %v4079, 7
      %v4081 = vsub.s32 0, %v4080
      %v4082 = vrot.slane %v4077, %v4081
      %v4148 = vunpack.c.l.b16 %v4013
      %v4149 = vunpack.c.l.b16 %v4014
      %v4150 = vunpack.c.l.b16 %v4015
      %v4151 = vunpack.c.l.b16 %v4016
      %v4152 = vunpack.c.l.b16 %v4017
      %v4153 = vunpack.c.l.b16 %v4018
      %v4154 = vunpack.c.l.b16 %v4019
      %v4155 = vunpack.c.l.b16 %v4020
      %v4156 = vunpack.c.l.b16 %v4021
      %v4157 = vunpack.c.l.b16 %v4022
      %v4158 = vunpack.c.l.b16 %v4023
      %v4159 = vunpack.c.l.b16 %v4024
      %v4160 = vunpack.c.l.b16 %v4025
      %v4161 = vunpack.c.l.b16 %v4026
      %v4162 = vunpack.c.l.b16 %v4027
      %v4163 = vunpack.c.l.b16 %v4028
      %v4164 = vunpack.c.l.b16 %v4029
      %v4165 = vunpack.c.l.b16 %v4030
      %v4166 = vunpack.c.l.b16 %v4031
      %v4167 = vunpack.c.l.b16 %v4032
      %v4168 = vunpack.c.l.b16 %v4033
      %v4169 = vunpack.c.l.b16 %v4034
      %v4170 = vunpack.c.l.b16 %v4035
      %v4171 = vunpack.c.l.b16 %v4036
      %v4172 = vunpack.c.l.b16 %v4037
      %v4173 = vunpack.c.l.b16 %v4038
      %v4174 = vunpack.c.l.b16 %v4039
      %v4175 = vunpack.c.l.b16 %v4040
      %v4176 = vunpack.c.l.b16 %v4041
      %v4177 = vunpack.c.l.b16 %v4042
      %v4178 = vunpack.c.l.b16 %v4043
      %v4179 = vunpack.c.l.b16 %v4044
      %v4180 = vunpack.c.l.b16 %v4045
      %v4181 = vunpack.c.l.b16 %v4046
      %v4182 = vunpack.c.l.b16 %v4047
      %v4183 = vunpack.c.l.b16 %v4048
      %v4184 = vunpack.c.l.b16 %v4049
      %v4185 = vunpack.c.l.b16 %v4050
      %v4186 = vunpack.c.l.b16 %v4051
      %v4187 = vunpack.c.l.b16 %v4052
      %v4188 = vunpack.c.l.b16 %v4053
      %v4189 = vunpack.c.l.b16 %v4054
      %v4190 = vunpack.c.l.b16 %v4055
      %v4191 = vunpack.c.l.b16 %v4056
      %v4192 = vunpack.c.l.b16 %v4057
      %v4193 = vunpack.c.l.b16 %v4058
      %v4194 = vunpack.c.l.b16 %v4059
      %v4195 = vunpack.c.l.b16 %v4060
      %v4196 = vunpack.c.l.b16 %v4061
      %v4197 = vunpack.c.l.b16 %v4062
      %v4198 = vunpack.c.l.b16 %v4063
      %v4199 = vunpack.c.l.b16 %v4064
      %v4200 = vunpack.c.l.b16 %v4065
      %v4201 = vunpack.c.l.b16 %v4066
      %v4202 = vunpack.c.l.b16 %v4067
      %v4203 = vunpack.c.l.b16 %v4068
      %v4204 = vunpack.c.l.b16 %v4069
      %v4205 = vunpack.c.l.b16 %v4070
      %v4206 = vunpack.c.l.b16 %v4071
      %v4207 = vunpack.c.l.b16 %v4072
      %v4208 = vunpack.c.l.b16 %v4073
      %v4209 = vunpack.c.l.b16 %v4074
      %v4210 = vunpack.c.l.b16 %v4075
      %v4211 = vunpack.c.l.b16 %v4076
      %v4212 = vpack.c.b16 %v4149, %v4148
      %v4213 = vpack.c.b16 %v4151, %v4150
      %v4214 = vpack.c.b16 %v4153, %v4152
      %v4215 = vpack.c.b16 %v4155, %v4154
      %v4216 = vpack.c.b16 %v4157, %v4156
      %v4217 = vpack.c.b16 %v4159, %v4158
      %v4218 = vpack.c.b16 %v4161, %v4160
      %v4219 = vpack.c.b16 %v4163, %v4162
      %v4220 = vpack.c.b16 %v4165, %v4164
      %v4221 = vpack.c.b16 %v4167, %v4166
      %v4222 = vpack.c.b16 %v4169, %v4168
      %v4223 = vpack.c.b16 %v4171, %v4170
      %v4224 = vpack.c.b16 %v4173, %v4172
      %v4225 = vpack.c.b16 %v4175, %v4174
      %v4226 = vpack.c.b16 %v4177, %v4176
      %v4227 = vpack.c.b16 %v4179, %v4178
      %v4228 = vpack.c.b16 %v4181, %v4180
      %v4229 = vpack.c.b16 %v4183, %v4182
      %v4230 = vpack.c.b16 %v4185, %v4184
      %v4231 = vpack.c.b16 %v4187, %v4186
      %v4232 = vpack.c.b16 %v4189, %v4188
      %v4233 = vpack.c.b16 %v4191, %v4190
      %v4234 = vpack.c.b16 %v4193, %v4192
      %v4235 = vpack.c.b16 %v4195, %v4194
      %v4236 = vpack.c.b16 %v4197, %v4196
      %v4237 = vpack.c.b16 %v4199, %v4198
      %v4238 = vpack.c.b16 %v4201, %v4200
      %v4239 = vpack.c.b16 %v4203, %v4202
      %v4240 = vpack.c.b16 %v4205, %v4204
      %v4241 = vpack.c.b16 %v4207, %v4206
      %v4242 = vpack.c.b16 %v4209, %v4208
      %v4243 = vpack.c.b16 %v4211, %v4210
      %4276 = vmatprep.subr.bf16.mxu0 0
      %4277 = vmatpush1.bf16.msra.mxu0 %v4212
      %4278 = vmatprep.subr.bf16.mxu0 0
      %4279 = vmatpush1.bf16.msra.mxu0 %v4213
      %4280 = vmatprep.subr.bf16.mxu0 0
      %4281 = vmatpush1.bf16.msra.mxu0 %v4214
      %4282 = vmatprep.subr.bf16.mxu0 0
      %4283 = vmatpush1.bf16.msra.mxu0 %v4215
      %4284 = vmatprep.subr.bf16.mxu0 0
      %4285 = vmatpush1.bf16.msra.mxu0 %v4216
      %4286 = vmatprep.subr.bf16.mxu0 0
      %4287 = vmatpush1.bf16.msra.mxu0 %v4217
      %4288 = vmatprep.subr.bf16.mxu0 0
      %4289 = vmatpush1.bf16.msra.mxu0 %v4218
      %4290 = vmatprep.subr.bf16.mxu0 0
      %4291 = vmatpush1.bf16.msra.mxu0 %v4219
      %4292 = vmatprep.subr.bf16.mxu0 0
      %4293 = vmatpush1.bf16.msra.mxu0 %v4220
      %4294 = vmatprep.subr.bf16.mxu0 0
      %4295 = vmatpush1.bf16.msra.mxu0 %v4221
      %4296 = vmatprep.subr.bf16.mxu0 0
      %4297 = vmatpush1.bf16.msra.mxu0 %v4222
      %4298 = vmatprep.subr.bf16.mxu0 0
      %4299 = vmatpush1.bf16.msra.mxu0 %v4223
      %4300 = vmatprep.subr.bf16.mxu0 0
      %4301 = vmatpush1.bf16.msra.mxu0 %v4224
      %4302 = vmatprep.subr.bf16.mxu0 0
      %4303 = vmatpush1.bf16.msra.mxu0 %v4225
      %4304 = vmatprep.subr.bf16.mxu0 0
      %4305 = vmatpush1.bf16.msra.mxu0 %v4226
      %4306 = vmatprep.subr.bf16.mxu0 0
      %4307 = vmatpush1.bf16.msra.mxu0 %v4227
      %4308 = vmatprep.mubr.bf16.mxu0 %v3950
      %4309 = vmatmul.mubr.bf16.gmra.mrb[0].mxu0 %v3949
      %v4310 = vpop.f32.mrb[0].mxu0
      %v4311 = vadd.f32 %v4082, %v4310
      %v4312 = vpop.f32.mrb[0].mxu0
      %v4313 = vpop.f32.mrb[0].mxu0
      %v4314 = vadd.f32 %v4082, %v4313
      %v4315 = vpop.f32.mrb[0].mxu0
      %4316 = vmatprep.mubr.bf16.mxu0 %v3954
      %4317 = vmatmul.mubr.bf16.gmra.mrb[0].mxu0 %v3953
      %v4318 = vpop.f32.mrb[0].mxu0
      %v4319 = vadd.f32 %v4082, %v4318
      %v4320 = vpop.f32.mrb[0].mxu0
      %v4321 = vpop.f32.mrb[0].mxu0
      %v4322 = vadd.f32 %v4082, %v4321
      %v4323 = vpop.f32.mrb[0].mxu0
      %4324 = vmatprep.mubr.bf16.mxu0 %v3958
      %4325 = vmatmul.mubr.bf16.gmra.mrb[0].mxu0 %v3957
      %v4326 = vpop.f32.mrb[0].mxu0
      %v4327 = vadd.f32 %v4082, %v4326
      %v4328 = vpop.f32.mrb[0].mxu0
      %v4329 = vpop.f32.mrb[0].mxu0
      %v4330 = vadd.f32 %v4082, %v4329
      %v4331 = vpop.f32.mrb[0].mxu0
      %4332 = vmatprep.mubr.bf16.mxu0 %v3962
      %4333 = vmatmul.mubr.bf16.gmra.mrb[0].mxu0 %v3961
      %v4334 = vpop.f32.mrb[0].mxu0
      %v4335 = vadd.f32 %v4082, %v4334
      %v4336 = vpop.f32.mrb[0].mxu0
      %v4337 = vpop.f32.mrb[0].mxu0
      %v4338 = vadd.f32 %v4082, %v4337
      %v4339 = vpop.f32.mrb[0].mxu0
      %4340 = vmatprep.mubr.bf16.mxu0 %v3966
      %4341 = vmatmul.mubr.bf16.gmra.mrb[0].mxu0 %v3965
      %v4342 = vpop.f32.mrb[0].mxu0
      %v4343 = vadd.f32 %v4082, %v4342
      %v4344 = vpop.f32.mrb[0].mxu0
      %v4345 = vpop.f32.mrb[0].mxu0
      %v4346 = vadd.f32 %v4082, %v4345
      %v4347 = vpop.f32.mrb[0].mxu0
      %4348 = vmatprep.mubr.bf16.mxu0 %v3970
      %4349 = vmatmul.mubr.bf16.gmra.mrb[0].mxu0 %v3969
      %v4350 = vpop.f32.mrb[0].mxu0
      %v4351 = vadd.f32 %v4082, %v4350
      %v4352 = vpop.f32.mrb[0].mxu0
      %v4353 = vpop.f32.mrb[0].mxu0
      %v4354 = vadd.f32 %v4082, %v4353
      %v4355 = vpop.f32.mrb[0].mxu0
      %4356 = vmatprep.mubr.bf16.mxu0 %v3974
      %4357 = vmatmul.mubr.bf16.gmra.mrb[0].mxu0 %v3973
      %v4358 = vpop.f32.mrb[0].mxu0
      %v4359 = vadd.f32 %v4082, %v4358
      %v4360 = vpop.f32.mrb[0].mxu0
      %v4361 = vpop.f32.mrb[0].mxu0
      %v4362 = vadd.f32 %v4082, %v4361
      %v4363 = vpop.f32.mrb[0].mxu0
      %4364 = vmatprep.mubr.bf16.mxu0 %v3978
      %4365 = vmatmul.mubr.bf16.gmra.mrb[0].mxu0 %v3977
      %v4366 = vpop.f32.mrb[0].mxu0
      %v4367 = vadd.f32 %v4082, %v4366
      %v4368 = vpop.f32.mrb[0].mxu0
      %v4369 = vpop.f32.mrb[0].mxu0
      %v4370 = vadd.f32 %v4082, %v4369
      %v4371 = vpop.f32.mrb[0].mxu0
      %4372 = vmatprep.mubr.bf16.mxu0 %v3982
      %4373 = vmatmul.mubr.bf16.gmra.mrb[0].mxu0 %v3981
      %v4374 = vpop.f32.mrb[0].mxu0
      %v4375 = vadd.f32 %v4082, %v4374
      %v4376 = vpop.f32.mrb[0].mxu0
      %v4377 = vpop.f32.mrb[0].mxu0
      %v4378 = vadd.f32 %v4082, %v4377
      %v4379 = vpop.f32.mrb[0].mxu0
      %4380 = vmatprep.mubr.bf16.mxu0 %v3986
      %4381 = vmatmul.mubr.bf16.gmra.mrb[0].mxu0 %v3985
      %v4382 = vpop.f32.mrb[0].mxu0
      %v4383 = vadd.f32 %v4082, %v4382
      %v4384 = vpop.f32.mrb[0].mxu0
      %v4385 = vpop.f32.mrb[0].mxu0
      %v4386 = vadd.f32 %v4082, %v4385
      %v4387 = vpop.f32.mrb[0].mxu0
      %4388 = vmatprep.mubr.bf16.mxu0 %v3990
      %4389 = vmatmul.mubr.bf16.gmra.mrb[0].mxu0 %v3989
      %v4390 = vpop.f32.mrb[0].mxu0
      %v4391 = vadd.f32 %v4082, %v4390
      %v4392 = vpop.f32.mrb[0].mxu0
      %v4393 = vpop.f32.mrb[0].mxu0
      %v4394 = vadd.f32 %v4082, %v4393
      %v4395 = vpop.f32.mrb[0].mxu0
      %4396 = vmatprep.mubr.bf16.mxu0 %v3994
      %4397 = vmatmul.mubr.bf16.gmra.mrb[0].mxu0 %v3993
      %v4398 = vpop.f32.mrb[0].mxu0
      %v4399 = vadd.f32 %v4082, %v4398
      %v4400 = vpop.f32.mrb[0].mxu0
      %v4401 = vpop.f32.mrb[0].mxu0
      %v4402 = vadd.f32 %v4082, %v4401
      %v4403 = vpop.f32.mrb[0].mxu0
      %4404 = vmatprep.mubr.bf16.mxu0 %v3998
      %4405 = vmatmul.mubr.bf16.gmra.mrb[0].mxu0 %v3997
      %v4406 = vpop.f32.mrb[0].mxu0
      %v4407 = vadd.f32 %v4082, %v4406
      %v4408 = vpop.f32.mrb[0].mxu0
      %v4409 = vpop.f32.mrb[0].mxu0
      %v4410 = vadd.f32 %v4082, %v4409
      %v4411 = vpop.f32.mrb[0].mxu0
      %4412 = vmatprep.mubr.bf16.mxu0 %v4002
      %4413 = vmatmul.mubr.bf16.gmra.mrb[0].mxu0 %v4001
      %v4414 = vpop.f32.mrb[0].mxu0
      %v4415 = vadd.f32 %v4082, %v4414
      %v4416 = vpop.f32.mrb[0].mxu0
      %v4417 = vpop.f32.mrb[0].mxu0
      %v4418 = vadd.f32 %v4082, %v4417
      %v4419 = vpop.f32.mrb[0].mxu0
      %4420 = vmatprep.mubr.bf16.mxu0 %v4006
      %4421 = vmatmul.mubr.bf16.gmra.mrb[0].mxu0 %v4005
      %v4422 = vpop.f32.mrb[0].mxu0
      %v4423 = vadd.f32 %v4082, %v4422
      %v4424 = vpop.f32.mrb[0].mxu0
      %v4425 = vpop.f32.mrb[0].mxu0
      %v4426 = vadd.f32 %v4082, %v4425
      %v4427 = vpop.f32.mrb[0].mxu0
      %4428 = vmatprep.mubr.bf16.mxu0 %v4010
      %4429 = vmatmul.mubr.bf16.gmra.mrb[0].mxu0 %v4009
      %v4430 = vpop.f32.mrb[0].mxu0
      %v4431 = vadd.f32 %v4082, %v4430
      %v4432 = vpop.f32.mrb[0].mxu0
      %v4433 = vpop.f32.mrb[0].mxu0
      %v4434 = vadd.f32 %v4082, %v4433
      %v4435 = vpop.f32.mrb[0].mxu0
      %4436 = vdwg.mxu0
      %4437 = vmatprep.subr.bf16.mxu0 0
      %4438 = vmatpush1.bf16.msra.mxu0 %v4228
      %4439 = vmatprep.subr.bf16.mxu0 0
      %4440 = vmatpush1.bf16.msra.mxu0 %v4229
      %4441 = vmatprep.subr.bf16.mxu0 0
      %4442 = vmatpush1.bf16.msra.mxu0 %v4230
      %4443 = vmatprep.subr.bf16.mxu0 0
      %4444 = vmatpush1.bf16.msra.mxu0 %v4231
      %4445 = vmatprep.subr.bf16.mxu0 0
      %4446 = vmatpush1.bf16.msra.mxu0 %v4232
      %4447 = vmatprep.subr.bf16.mxu0 0
      %4448 = vmatpush1.bf16.msra.mxu0 %v4233
      %4449 = vmatprep.subr.bf16.mxu0 0
      %4450 = vmatpush1.bf16.msra.mxu0 %v4234
      %4451 = vmatprep.subr.bf16.mxu0 0
      %4452 = vmatpush1.bf16.msra.mxu0 %v4235
      %4453 = vmatprep.subr.bf16.mxu0 0
      %4454 = vmatpush1.bf16.msra.mxu0 %v4236
      %4455 = vmatprep.subr.bf16.mxu0 0
      %4456 = vmatpush1.bf16.msra.mxu0 %v4237
      %4457 = vmatprep.subr.bf16.mxu0 0
      %4458 = vmatpush1.bf16.msra.mxu0 %v4238
      %4459 = vmatprep.subr.bf16.mxu0 0
      %4460 = vmatpush1.bf16.msra.mxu0 %v4239
      %4461 = vmatprep.subr.bf16.mxu0 0
      %4462 = vmatpush1.bf16.msra.mxu0 %v4240
      %4463 = vmatprep.subr.bf16.mxu0 0
      %4464 = vmatpush1.bf16.msra.mxu0 %v4241
      %4465 = vmatprep.subr.bf16.mxu0 0
      %4466 = vmatpush1.bf16.msra.mxu0 %v4242
      %4467 = vmatprep.subr.bf16.mxu0 0
      %4468 = vmatpush1.bf16.msra.mxu0 %v4243
      %4469 = vmatprep.mubr.bf16.mxu0 %v3952
      %4470 = vmatmul.mubr.bf16.gmra.mrb[0].mxu0 %v3951
      %v4471 = vpop.f32.mrb[0].mxu0
      %v4472 = vadd.f32 %v4311, %v4471
      %v4473 = vpop.f32.mrb[0].mxu0
      %v4474 = vpop.f32.mrb[0].mxu0
      %v4475 = vadd.f32 %v4314, %v4474
      %v4476 = vpop.f32.mrb[0].mxu0
      %4477 = vmatprep.mubr.bf16.mxu0 %v3956
      %4478 = vmatmul.mubr.bf16.gmra.mrb[0].mxu0 %v3955
      %v4479 = vpop.f32.mrb[0].mxu0
      %v4480 = vadd.f32 %v4319, %v4479
      %v4481 = vpop.f32.mrb[0].mxu0
      %v4482 = vpop.f32.mrb[0].mxu0
      %v4483 = vadd.f32 %v4322, %v4482
      %v4484 = vpop.f32.mrb[0].mxu0
      %4485 = vmatprep.mubr.bf16.mxu0 %v3960
      %4486 = vmatmul.mubr.bf16.gmra.mrb[0].mxu0 %v3959
      %v4487 = vpop.f32.mrb[0].mxu0
      %v4488 = vadd.f32 %v4327, %v4487
      %v4489 = vpop.f32.mrb[0].mxu0
      %v4490 = vpop.f32.mrb[0].mxu0
      %v4491 = vadd.f32 %v4330, %v4490
      %v4492 = vpop.f32.mrb[0].mxu0
      %4493 = vmatprep.mubr.bf16.mxu0 %v3964
      %4494 = vmatmul.mubr.bf16.gmra.mrb[0].mxu0 %v3963
      %v4495 = vpop.f32.mrb[0].mxu0
      %v4496 = vadd.f32 %v4335, %v4495
      %v4497 = vpop.f32.mrb[0].mxu0
      %v4498 = vpop.f32.mrb[0].mxu0
      %v4499 = vadd.f32 %v4338, %v4498
      %v4500 = vpop.f32.mrb[0].mxu0
      %4501 = vmatprep.mubr.bf16.mxu0 %v3968
      %4502 = vmatmul.mubr.bf16.gmra.mrb[0].mxu0 %v3967
      %v4503 = vpop.f32.mrb[0].mxu0
      %v4504 = vadd.f32 %v4343, %v4503
      %v4505 = vpop.f32.mrb[0].mxu0
      %v4506 = vpop.f32.mrb[0].mxu0
      %v4507 = vadd.f32 %v4346, %v4506
      %v4508 = vpop.f32.mrb[0].mxu0
      %4509 = vmatprep.mubr.bf16.mxu0 %v3972
      %4510 = vmatmul.mubr.bf16.gmra.mrb[0].mxu0 %v3971
      %v4511 = vpop.f32.mrb[0].mxu0
      %v4512 = vadd.f32 %v4351, %v4511
      %v4513 = vpop.f32.mrb[0].mxu0
      %v4514 = vpop.f32.mrb[0].mxu0
      %v4515 = vadd.f32 %v4354, %v4514
      %v4516 = vpop.f32.mrb[0].mxu0
      %4517 = vmatprep.mubr.bf16.mxu0 %v3976
      %4518 = vmatmul.mubr.bf16.gmra.mrb[0].mxu0 %v3975
      %v4519 = vpop.f32.mrb[0].mxu0
      %v4520 = vadd.f32 %v4359, %v4519
      %v4521 = vpop.f32.mrb[0].mxu0
      %v4522 = vpop.f32.mrb[0].mxu0
      %v4523 = vadd.f32 %v4362, %v4522
      %v4524 = vpop.f32.mrb[0].mxu0
      %4525 = vmatprep.mubr.bf16.mxu0 %v3980
      %4526 = vmatmul.mubr.bf16.gmra.mrb[0].mxu0 %v3979
      %v4527 = vpop.f32.mrb[0].mxu0
      %v4528 = vadd.f32 %v4367, %v4527
      %v4529 = vpop.f32.mrb[0].mxu0
      %v4530 = vpop.f32.mrb[0].mxu0
      %v4531 = vadd.f32 %v4370, %v4530
      %v4532 = vpop.f32.mrb[0].mxu0
      %4533 = vmatprep.mubr.bf16.mxu0 %v3984
      %4534 = vmatmul.mubr.bf16.gmra.mrb[0].mxu0 %v3983
      %v4535 = vpop.f32.mrb[0].mxu0
      %v4536 = vadd.f32 %v4375, %v4535
      %v4537 = vpop.f32.mrb[0].mxu0
      %v4538 = vpop.f32.mrb[0].mxu0
      %v4539 = vadd.f32 %v4378, %v4538
      %v4540 = vpop.f32.mrb[0].mxu0
      %4541 = vmatprep.mubr.bf16.mxu0 %v3988
      %4542 = vmatmul.mubr.bf16.gmra.mrb[0].mxu0 %v3987
      %v4543 = vpop.f32.mrb[0].mxu0
      %v4544 = vadd.f32 %v4383, %v4543
      %v4545 = vpop.f32.mrb[0].mxu0
      %v4546 = vpop.f32.mrb[0].mxu0
      %v4547 = vadd.f32 %v4386, %v4546
      %v4548 = vpop.f32.mrb[0].mxu0
      %4549 = vmatprep.mubr.bf16.mxu0 %v3992
      %4550 = vmatmul.mubr.bf16.gmra.mrb[0].mxu0 %v3991
      %v4551 = vpop.f32.mrb[0].mxu0
      %v4552 = vadd.f32 %v4391, %v4551
      %v4553 = vpop.f32.mrb[0].mxu0
      %v4554 = vpop.f32.mrb[0].mxu0
      %v4555 = vadd.f32 %v4394, %v4554
      %v4556 = vpop.f32.mrb[0].mxu0
      %4557 = vmatprep.mubr.bf16.mxu0 %v3996
      %4558 = vmatmul.mubr.bf16.gmra.mrb[0].mxu0 %v3995
      %v4559 = vpop.f32.mrb[0].mxu0
      %v4560 = vadd.f32 %v4399, %v4559
      %v4561 = vpop.f32.mrb[0].mxu0
      %v4562 = vpop.f32.mrb[0].mxu0
      %v4563 = vadd.f32 %v4402, %v4562
      %v4564 = vpop.f32.mrb[0].mxu0
      %4565 = vmatprep.mubr.bf16.mxu0 %v4000
      %4566 = vmatmul.mubr.bf16.gmra.mrb[0].mxu0 %v3999
      %v4567 = vpop.f32.mrb[0].mxu0
      %v4568 = vadd.f32 %v4407, %v4567
      %v4569 = vpop.f32.mrb[0].mxu0
      %v4570 = vpop.f32.mrb[0].mxu0
      %v4571 = vadd.f32 %v4410, %v4570
      %v4572 = vpop.f32.mrb[0].mxu0
      %4573 = vmatprep.mubr.bf16.mxu0 %v4004
      %4574 = vmatmul.mubr.bf16.gmra.mrb[0].mxu0 %v4003
      %v4575 = vpop.f32.mrb[0].mxu0
      %v4576 = vadd.f32 %v4415, %v4575
      %v4577 = vpop.f32.mrb[0].mxu0
      %v4578 = vpop.f32.mrb[0].mxu0
      %v4579 = vadd.f32 %v4418, %v4578
      %v4580 = vpop.f32.mrb[0].mxu0
      %4581 = vmatprep.mubr.bf16.mxu0 %v4008
      %4582 = vmatmul.mubr.bf16.gmra.mrb[0].mxu0 %v4007
      %v4583 = vpop.f32.mrb[0].mxu0
      %v4584 = vadd.f32 %v4423, %v4583
      %v4585 = vpop.f32.mrb[0].mxu0
      %v4586 = vpop.f32.mrb[0].mxu0
      %v4587 = vadd.f32 %v4426, %v4586
      %v4588 = vpop.f32.mrb[0].mxu0
      %4589 = vmatprep.mubr.bf16.mxu0 %v4012
      %4590 = vmatmul.mubr.bf16.gmra.mrb[0].mxu0 %v4011
      %v4591 = vpop.f32.mrb[0].mxu0
      %v4592 = vadd.f32 %v4431, %v4591
      %v4593 = vpop.f32.mrb[0].mxu0
      %v4594 = vpop.f32.mrb[0].mxu0
      %v4595 = vadd.f32 %v4434, %v4594
      %v4596 = vpop.f32.mrb[0].mxu0
      %4597 = vdwg.mxu0
      %v4598 = vmax.f32 %v4472, 0.0
      %v4599 = vmax.f32 %v4475, 0.0
      %v4600 = vmax.f32 %v4480, 0.0
      %v4601 = vmax.f32 %v4483, 0.0
      %v4602 = vmax.f32 %v4488, 0.0
      %v4603 = vmax.f32 %v4491, 0.0
      %v4604 = vmax.f32 %v4496, 0.0
      %v4605 = vmax.f32 %v4499, 0.0
      %v4606 = vmax.f32 %v4504, 0.0
      %v4607 = vmax.f32 %v4507, 0.0
      %v4608 = vmax.f32 %v4512, 0.0
      %v4609 = vmax.f32 %v4515, 0.0
      %v4610 = vmax.f32 %v4520, 0.0
      %v4611 = vmax.f32 %v4523, 0.0
      %v4612 = vmax.f32 %v4528, 0.0
      %v4613 = vmax.f32 %v4531, 0.0
      %v4614 = vmax.f32 %v4536, 0.0
      %v4615 = vmax.f32 %v4539, 0.0
      %v4616 = vmax.f32 %v4544, 0.0
      %v4617 = vmax.f32 %v4547, 0.0
      %v4618 = vmax.f32 %v4552, 0.0
      %v4619 = vmax.f32 %v4555, 0.0
      %v4620 = vmax.f32 %v4560, 0.0
      %v4621 = vmax.f32 %v4563, 0.0
      %v4622 = vmax.f32 %v4568, 0.0
      %v4623 = vmax.f32 %v4571, 0.0
      %v4624 = vmax.f32 %v4576, 0.0
      %v4625 = vmax.f32 %v4579, 0.0
      %v4626 = vmax.f32 %v4584, 0.0
      %v4627 = vmax.f32 %v4587, 0.0
      %v4628 = vmax.f32 %v4592, 0.0
      %v4629 = vmax.f32 %v4595, 0.0
      %v4630 = vpack.c.bf16 %v4599, %v4598
      %v4631 = vpack.c.bf16 %v4601, %v4600
      %v4632 = vpack.c.bf16 %v4603, %v4602
      %v4633 = vpack.c.bf16 %v4605, %v4604
      %v4634 = vpack.c.bf16 %v4607, %v4606
      %v4635 = vpack.c.bf16 %v4609, %v4608
      %v4636 = vpack.c.bf16 %v4611, %v4610
      %v4637 = vpack.c.bf16 %v4613, %v4612
      %v4638 = vpack.c.bf16 %v4615, %v4614
      %v4639 = vpack.c.bf16 %v4617, %v4616
      %v4640 = vpack.c.bf16 %v4619, %v4618
      %v4641 = vpack.c.bf16 %v4621, %v4620
      %v4642 = vpack.c.bf16 %v4623, %v4622
      %v4643 = vpack.c.bf16 %v4625, %v4624
      %v4644 = vpack.c.bf16 %v4627, %v4626
      %v4645 = vpack.c.bf16 %v4629, %v4628
      %v4646 = vld [vmem:[%s5] sm:$0xff]
      %v4647 = vld [vmem:[%s5 + $0x8] sm:$0xff]
      %v4648 = vld [vmem:[%s5 + $0x10] sm:$0xff]
      %v4649 = vld [vmem:[%s5 + $0x18] sm:$0xff]
      %v4650 = vld [vmem:[%s5 + $0x20] sm:$0xff]
      %v4651 = vld [vmem:[%s5 + $0x28] sm:$0xff]
      %v4652 = vld [vmem:[%s5 + $0x30] sm:$0xff]
      %v4653 = vld [vmem:[%s5 + $0x38] sm:$0xff]
      %v4654 = vld [vmem:[%s5 + $0x40] sm:$0xff]
      %v4655 = vld [vmem:[%s5 + $0x48] sm:$0xff]
      %v4656 = vld [vmem:[%s5 + $0x50] sm:$0xff]
      %v4657 = vld [vmem:[%s5 + $0x58] sm:$0xff]
      %v4658 = vld [vmem:[%s5 + $0x60] sm:$0xff]
      %v4659 = vld [vmem:[%s5 + $0x68] sm:$0xff]
      %v4660 = vld [vmem:[%s5 + $0x70] sm:$0xff]
      %v4661 = vld [vmem:[%s5 + $0x78] sm:$0xff]
      %v4662 = vld [vmem:[%s5 + $0x80] sm:$0xff]
      %v4663 = vld [vmem:[%s5 + $0x88] sm:$0xff]
      %v4664 = vld [vmem:[%s5 + $0x90] sm:$0xff]
      %v4665 = vld [vmem:[%s5 + $0x98] sm:$0xff]
      %v4666 = vld [vmem:[%s5 + $0xa0] sm:$0xff]
      %v4667 = vld [vmem:[%s5 + $0xa8] sm:$0xff]
      %v4668 = vld [vmem:[%s5 + $0xb0] sm:$0xff]
      %v4669 = vld [vmem:[%s5 + $0xb8] sm:$0xff]
      %v4670 = vld [vmem:[%s5 + $0xc0] sm:$0xff]
      %v4671 = vld [vmem:[%s5 + $0xc8] sm:$0xff]
      %v4672 = vld [vmem:[%s5 + $0xd0] sm:$0xff]
      %v4673 = vld [vmem:[%s5 + $0xd8] sm:$0xff]
      %v4674 = vld [vmem:[%s5 + $0xe0] sm:$0xff]
      %v4675 = vld [vmem:[%s5 + $0xe8] sm:$0xff]
      %v4676 = vld [vmem:[%s5 + $0xf0] sm:$0xff]
      %v4677 = vld [vmem:[%s5 + $0xf8] sm:$0xff]
      %v4678 = vld [vmem:[%s6] sm:$0xf]
      %v4680 = vlaneseq
      %v4681 = vshrl.u32 %v4680, 7
      %v4682 = vsub.s32 0, %v4681
      %v4683 = vrot.slane %v4678, %v4682
      %v4684 = vlaneseq
      %v4685 = vshrl.u32 %v4684, 7
      %v4686 = vsub.s32 1, %v4685
      %v4687 = vrot.slane %v4678, %v4686
      %v4688 = vlaneseq
      %v4689 = vshrl.u32 %v4688, 7
      %v4690 = vsub.s32 2, %v4689
      %v4691 = vrot.slane %v4678, %v4690
      %v4692 = vlaneseq
      %v4693 = vshrl.u32 %v4692, 7
      %v4694 = vsub.s32 3, %v4693
      %v4695 = vrot.slane %v4678, %v4694
      %v4732 = vunpack.c.l.b16 %v4646
      %v4733 = vunpack.c.h.b16 %v4646
      %v4734 = vunpack.c.l.b16 %v4647
      %v4735 = vunpack.c.h.b16 %v4647
      %v4736 = vunpack.c.l.b16 %v4648
      %v4737 = vunpack.c.h.b16 %v4648
      %v4738 = vunpack.c.l.b16 %v4649
      %v4739 = vunpack.c.h.b16 %v4649
      %v4740 = vunpack.c.l.b16 %v4650
      %v4741 = vunpack.c.h.b16 %v4650
      %v4742 = vunpack.c.l.b16 %v4651
      %v4743 = vunpack.c.h.b16 %v4651
      %v4744 = vunpack.c.l.b16 %v4652
      %v4745 = vunpack.c.h.b16 %v4652
      %v4746 = vunpack.c.l.b16 %v4653
      %v4747 = vunpack.c.h.b16 %v4653
      %v4748 = vunpack.c.l.b16 %v4654
      %v4749 = vunpack.c.h.b16 %v4654
      %v4750 = vunpack.c.l.b16 %v4655
      %v4751 = vunpack.c.h.b16 %v4655
      %v4752 = vunpack.c.l.b16 %v4656
      %v4753 = vunpack.c.h.b16 %v4656
      %v4754 = vunpack.c.l.b16 %v4657
      %v4755 = vunpack.c.h.b16 %v4657
      %v4756 = vunpack.c.l.b16 %v4658
      %v4757 = vunpack.c.h.b16 %v4658
      %v4758 = vunpack.c.l.b16 %v4659
      %v4759 = vunpack.c.h.b16 %v4659
      %v4760 = vunpack.c.l.b16 %v4660
      %v4761 = vunpack.c.h.b16 %v4660
      %v4762 = vunpack.c.l.b16 %v4661
      %v4763 = vunpack.c.h.b16 %v4661
      %v4764 = vunpack.c.l.b16 %v4662
      %v4765 = vunpack.c.h.b16 %v4662
      %v4766 = vunpack.c.l.b16 %v4663
      %v4767 = vunpack.c.h.b16 %v4663
      %v4768 = vunpack.c.l.b16 %v4664
      %v4769 = vunpack.c.h.b16 %v4664
      %v4770 = vunpack.c.l.b16 %v4665
      %v4771 = vunpack.c.h.b16 %v4665
      %v4772 = vunpack.c.l.b16 %v4666
      %v4773 = vunpack.c.h.b16 %v4666
      %v4774 = vunpack.c.l.b16 %v4667
      %v4775 = vunpack.c.h.b16 %v4667
      %v4776 = vunpack.c.l.b16 %v4668
      %v4777 = vunpack.c.h.b16 %v4668
      %v4778 = vunpack.c.l.b16 %v4669
      %v4779 = vunpack.c.h.b16 %v4669
      %v4780 = vunpack.c.l.b16 %v4670
      %v4781 = vunpack.c.h.b16 %v4670
      %v4782 = vunpack.c.l.b16 %v4671
      %v4783 = vunpack.c.h.b16 %v4671
      %v4784 = vunpack.c.l.b16 %v4672
      %v4785 = vunpack.c.h.b16 %v4672
      %v4786 = vunpack.c.l.b16 %v4673
      %v4787 = vunpack.c.h.b16 %v4673
      %v4788 = vunpack.c.l.b16 %v4674
      %v4789 = vunpack.c.h.b16 %v4674
      %v4790 = vunpack.c.l.b16 %v4675
      %v4791 = vunpack.c.h.b16 %v4675
      %v4792 = vunpack.c.l.b16 %v4676
      %v4793 = vunpack.c.h.b16 %v4676
      %v4794 = vunpack.c.l.b16 %v4677
      %v4795 = vunpack.c.h.b16 %v4677
      %v4796 = vpack.c.b16 %v4736, %v4732
      %v4797 = vpack.c.b16 %v4737, %v4733
      %v4798 = vpack.c.b16 %v4738, %v4734
      %v4799 = vpack.c.b16 %v4739, %v4735
      %v4800 = vpack.c.b16 %v4744, %v4740
      %v4801 = vpack.c.b16 %v4745, %v4741
      %v4802 = vpack.c.b16 %v4746, %v4742
      %v4803 = vpack.c.b16 %v4747, %v4743
      %v4804 = vpack.c.b16 %v4752, %v4748
      %v4805 = vpack.c.b16 %v4753, %v4749
      %v4806 = vpack.c.b16 %v4754, %v4750
      %v4807 = vpack.c.b16 %v4755, %v4751
      %v4808 = vpack.c.b16 %v4760, %v4756
      %v4809 = vpack.c.b16 %v4761, %v4757
      %v4810 = vpack.c.b16 %v4762, %v4758
      %v4811 = vpack.c.b16 %v4763, %v4759
      %v4812 = vpack.c.b16 %v4768, %v4764
      %v4813 = vpack.c.b16 %v4769, %v4765
      %v4814 = vpack.c.b16 %v4770, %v4766
      %v4815 = vpack.c.b16 %v4771, %v4767
      %v4816 = vpack.c.b16 %v4776, %v4772
      %v4817 = vpack.c.b16 %v4777, %v4773
      %v4818 = vpack.c.b16 %v4778, %v4774
      %v4819 = vpack.c.b16 %v4779, %v4775
      %v4820 = vpack.c.b16 %v4784, %v4780
      %v4821 = vpack.c.b16 %v4785, %v4781
      %v4822 = vpack.c.b16 %v4786, %v4782
      %v4823 = vpack.c.b16 %v4787, %v4783
      %v4824 = vpack.c.b16 %v4792, %v4788
      %v4825 = vpack.c.b16 %v4793, %v4789
      %v4826 = vpack.c.b16 %v4794, %v4790
      %v4827 = vpack.c.b16 %v4795, %v4791
      %4860 = vmatprep.subr.bf16.mxu0 %v4797
      %4861 = vmatpush1.bf16.msra.mxu0 %v4796
      %4862 = vmatprep.subr.bf16.mxu0 %v4801
      %4863 = vmatpush1.bf16.msra.mxu0 %v4800
      %4864 = vmatprep.subr.bf16.mxu0 %v4805
      %4865 = vmatpush1.bf16.msra.mxu0 %v4804
      %4866 = vmatprep.subr.bf16.mxu0 %v4809
      %4867 = vmatpush1.bf16.msra.mxu0 %v4808
      %4868 = vmatprep.subr.bf16.mxu0 %v4813
      %4869 = vmatpush1.bf16.msra.mxu0 %v4812
      %4870 = vmatprep.subr.bf16.mxu0 %v4817
      %4871 = vmatpush1.bf16.msra.mxu0 %v4816
      %4872 = vmatprep.subr.bf16.mxu0 %v4821
      %4873 = vmatpush1.bf16.msra.mxu0 %v4820
      %4874 = vmatprep.subr.bf16.mxu0 %v4825
      %4875 = vmatpush1.bf16.msra.mxu0 %v4824
      %4876 = vmatprep.subr.bf16.mxu0 0
      %4877 = vmatpush1.bf16.msra.mxu0 0
      %4878 = vmatprep.subr.bf16.mxu0 0
      %4879 = vmatpush1.bf16.msra.mxu0 0
      %4880 = vmatprep.subr.bf16.mxu0 0
      %4881 = vmatpush1.bf16.msra.mxu0 0
      %4882 = vmatprep.subr.bf16.mxu0 0
      %4883 = vmatpush1.bf16.msra.mxu0 0
      %4884 = vmatprep.subr.bf16.mxu0 0
      %4885 = vmatpush1.bf16.msra.mxu0 0
      %4886 = vmatprep.subr.bf16.mxu0 0
      %4887 = vmatpush1.bf16.msra.mxu0 0
      %4888 = vmatprep.subr.bf16.mxu0 0
      %4889 = vmatpush1.bf16.msra.mxu0 0
      %4890 = vmatprep.subr.bf16.mxu0 0
      %4891 = vmatpush1.bf16.msra.mxu0 0
      %4892 = vmatprep.mubr.bf16.mxu0 0
      %4893 = vmatmul.mubr.bf16.gmra.mrb[0].mxu0 %v4630
      %v4894 = vpop.f32.mrb[0].mxu0
      %v4895 = vadd.f32 %v4683, %v4894
      %v4896 = vpop.f32.mrb[0].mxu0
      %v4897 = vadd.f32 %v4687, %v4896
      %v4898 = vpop.f32.mrb[0].mxu0
      %v4899 = vadd.f32 %v4683, %v4898
      %v4900 = vpop.f32.mrb[0].mxu0
      %v4901 = vadd.f32 %v4687, %v4900
      %4902 = vmatprep.mubr.bf16.mxu0 0
      %4903 = vmatmul.mubr.bf16.gmra.mrb[0].mxu0 %v4631
      %v4904 = vpop.f32.mrb[0].mxu0
      %v4905 = vadd.f32 %v4683, %v4904
      %v4906 = vpop.f32.mrb[0].mxu0
      %v4907 = vadd.f32 %v4687, %v4906
      %v4908 = vpop.f32.mrb[0].mxu0
      %v4909 = vadd.f32 %v4683, %v4908
      %v4910 = vpop.f32.mrb[0].mxu0
      %v4911 = vadd.f32 %v4687, %v4910
      %4912 = vmatprep.mubr.bf16.mxu0 0
      %4913 = vmatmul.mubr.bf16.gmra.mrb[0].mxu0 %v4632
      %v4914 = vpop.f32.mrb[0].mxu0
      %v4915 = vadd.f32 %v4683, %v4914
      %v4916 = vpop.f32.mrb[0].mxu0
      %v4917 = vadd.f32 %v4687, %v4916
      %v4918 = vpop.f32.mrb[0].mxu0
      %v4919 = vadd.f32 %v4683, %v4918
      %v4920 = vpop.f32.mrb[0].mxu0
      %v4921 = vadd.f32 %v4687, %v4920
      %4922 = vmatprep.mubr.bf16.mxu0 0
      %4923 = vmatmul.mubr.bf16.gmra.mrb[0].mxu0 %v4633
      %v4924 = vpop.f32.mrb[0].mxu0
      %v4925 = vadd.f32 %v4683, %v4924
      %v4926 = vpop.f32.mrb[0].mxu0
      %v4927 = vadd.f32 %v4687, %v4926
      %v4928 = vpop.f32.mrb[0].mxu0
      %v4929 = vadd.f32 %v4683, %v4928
      %v4930 = vpop.f32.mrb[0].mxu0
      %v4931 = vadd.f32 %v4687, %v4930
      %4932 = vmatprep.mubr.bf16.mxu0 0
      %4933 = vmatmul.mubr.bf16.gmra.mrb[0].mxu0 %v4634
      %v4934 = vpop.f32.mrb[0].mxu0
      %v4935 = vadd.f32 %v4683, %v4934
      %v4936 = vpop.f32.mrb[0].mxu0
      %v4937 = vadd.f32 %v4687, %v4936
      %v4938 = vpop.f32.mrb[0].mxu0
      %v4939 = vadd.f32 %v4683, %v4938
      %v4940 = vpop.f32.mrb[0].mxu0
      %v4941 = vadd.f32 %v4687, %v4940
      %4942 = vmatprep.mubr.bf16.mxu0 0
      %4943 = vmatmul.mubr.bf16.gmra.mrb[0].mxu0 %v4635
      %v4944 = vpop.f32.mrb[0].mxu0
      %v4945 = vadd.f32 %v4683, %v4944
      %v4946 = vpop.f32.mrb[0].mxu0
      %v4947 = vadd.f32 %v4687, %v4946
      %v4948 = vpop.f32.mrb[0].mxu0
      %v4949 = vadd.f32 %v4683, %v4948
      %v4950 = vpop.f32.mrb[0].mxu0
      %v4951 = vadd.f32 %v4687, %v4950
      %4952 = vmatprep.mubr.bf16.mxu0 0
      %4953 = vmatmul.mubr.bf16.gmra.mrb[0].mxu0 %v4636
      %v4954 = vpop.f32.mrb[0].mxu0
      %v4955 = vadd.f32 %v4683, %v4954
      %v4956 = vpop.f32.mrb[0].mxu0
      %v4957 = vadd.f32 %v4687, %v4956
      %v4958 = vpop.f32.mrb[0].mxu0
      %v4959 = vadd.f32 %v4683, %v4958
      %v4960 = vpop.f32.mrb[0].mxu0
      %v4961 = vadd.f32 %v4687, %v4960
      %4962 = vmatprep.mubr.bf16.mxu0 0
      %4963 = vmatmul.mubr.bf16.gmra.mrb[0].mxu0 %v4637
      %v4964 = vpop.f32.mrb[0].mxu0
      %v4965 = vadd.f32 %v4683, %v4964
      %v4966 = vpop.f32.mrb[0].mxu0
      %v4967 = vadd.f32 %v4687, %v4966
      %v4968 = vpop.f32.mrb[0].mxu0
      %v4969 = vadd.f32 %v4683, %v4968
      %v4970 = vpop.f32.mrb[0].mxu0
      %v4971 = vadd.f32 %v4687, %v4970
      %4972 = vmatprep.mubr.bf16.mxu0 0
      %4973 = vmatmul.mubr.bf16.gmra.mrb[0].mxu0 %v4638
      %v4974 = vpop.f32.mrb[0].mxu0
      %v4975 = vadd.f32 %v4683, %v4974
      %v4976 = vpop.f32.mrb[0].mxu0
      %v4977 = vadd.f32 %v4687, %v4976
      %v4978 = vpop.f32.mrb[0].mxu0
      %v4979 = vadd.f32 %v4683, %v4978
      %v4980 = vpop.f32.mrb[0].mxu0
      %v4981 = vadd.f32 %v4687, %v4980
      %4982 = vmatprep.mubr.bf16.mxu0 0
      %4983 = vmatmul.mubr.bf16.gmra.mrb[0].mxu0 %v4639
      %v4984 = vpop.f32.mrb[0].mxu0
      %v4985 = vadd.f32 %v4683, %v4984
      %v4986 = vpop.f32.mrb[0].mxu0
      %v4987 = vadd.f32 %v4687, %v4986
      %v4988 = vpop.f32.mrb[0].mxu0
      %v4989 = vadd.f32 %v4683, %v4988
      %v4990 = vpop.f32.mrb[0].mxu0
      %v4991 = vadd.f32 %v4687, %v4990
      %4992 = vmatprep.mubr.bf16.mxu0 0
      %4993 = vmatmul.mubr.bf16.gmra.mrb[0].mxu0 %v4640
      %v4994 = vpop.f32.mrb[0].mxu0
      %v4995 = vadd.f32 %v4683, %v4994
      %v4996 = vpop.f32.mrb[0].mxu0
      %v4997 = vadd.f32 %v4687, %v4996
      %v4998 = vpop.f32.mrb[0].mxu0
      %v4999 = vadd.f32 %v4683, %v4998
      %v5000 = vpop.f32.mrb[0].mxu0
      %v5001 = vadd.f32 %v4687, %v5000
      %5002 = vmatprep.mubr.bf16.mxu0 0
      %5003 = vmatmul.mubr.bf16.gmra.mrb[0].mxu0 %v4641
      %v5004 = vpop.f32.mrb[0].mxu0
      %v5005 = vadd.f32 %v4683, %v5004
      %v5006 = vpop.f32.mrb[0].mxu0
      %v5007 = vadd.f32 %v4687, %v5006
      %v5008 = vpop.f32.mrb[0].mxu0
      %v5009 = vadd.f32 %v4683, %v5008
      %v5010 = vpop.f32.mrb[0].mxu0
      %v5011 = vadd.f32 %v4687, %v5010
      %5012 = vmatprep.mubr.bf16.mxu0 0
      %5013 = vmatmul.mubr.bf16.gmra.mrb[0].mxu0 %v4642
      %v5014 = vpop.f32.mrb[0].mxu0
      %v5015 = vadd.f32 %v4683, %v5014
      %v5016 = vpop.f32.mrb[0].mxu0
      %v5017 = vadd.f32 %v4687, %v5016
      %v5018 = vpop.f32.mrb[0].mxu0
      %v5019 = vadd.f32 %v4683, %v5018
      %v5020 = vpop.f32.mrb[0].mxu0
      %v5021 = vadd.f32 %v4687, %v5020
      %5022 = vmatprep.mubr.bf16.mxu0 0
      %5023 = vmatmul.mubr.bf16.gmra.mrb[0].mxu0 %v4643
      %v5024 = vpop.f32.mrb[0].mxu0
      %v5025 = vadd.f32 %v4683, %v5024
      %v5026 = vpop.f32.mrb[0].mxu0
      %v5027 = vadd.f32 %v4687, %v5026
      %v5028 = vpop.f32.mrb[0].mxu0
      %v5029 = vadd.f32 %v4683, %v5028
      %v5030 = vpop.f32.mrb[0].mxu0
      %v5031 = vadd.f32 %v4687, %v5030
      %5032 = vmatprep.mubr.bf16.mxu0 0
      %5033 = vmatmul.mubr.bf16.gmra.mrb[0].mxu0 %v4644
      %v5034 = vpop.f32.mrb[0].mxu0
      %v5035 = vadd.f32 %v4683, %v5034
      %v5036 = vpop.f32.mrb[0].mxu0
      %v5037 = vadd.f32 %v4687, %v5036
      %v5038 = vpop.f32.mrb[0].mxu0
      %v5039 = vadd.f32 %v4683, %v5038
      %v5040 = vpop.f32.mrb[0].mxu0
      %v5041 = vadd.f32 %v4687, %v5040
      %5042 = vmatprep.mubr.bf16.mxu0 0
      %5043 = vmatmul.mubr.bf16.gmra.mrb[0].mxu0 %v4645
      %v5044 = vpop.f32.mrb[0].mxu0
      %v5045 = vadd.f32 %v4683, %v5044
      %v5046 = vpop.f32.mrb[0].mxu0
      %v5047 = vadd.f32 %v4687, %v5046
      %v5048 = vpop.f32.mrb[0].mxu0
      %v5049 = vadd.f32 %v4683, %v5048
      %v5050 = vpop.f32.mrb[0].mxu0
      %v5051 = vadd.f32 %v4687, %v5050
      %5052 = vdwg.mxu0
      %5053 = vmatprep.subr.bf16.mxu0 %v4799
      %5054 = vmatpush1.bf16.msra.mxu0 %v4798
      %5055 = vmatprep.subr.bf16.mxu0 %v4803
      %5056 = vmatpush1.bf16.msra.mxu0 %v4802
      %5057 = vmatprep.subr.bf16.mxu0 %v4807
      %5058 = vmatpush1.bf16.msra.mxu0 %v4806
      %5059 = vmatprep.subr.bf16.mxu0 %v4811
      %5060 = vmatpush1.bf16.msra.mxu0 %v4810
      %5061 = vmatprep.subr.bf16.mxu0 %v4815
      %5062 = vmatpush1.bf16.msra.mxu0 %v4814
      %5063 = vmatprep.subr.bf16.mxu0 %v4819
      %5064 = vmatpush1.bf16.msra.mxu0 %v4818
      %5065 = vmatprep.subr.bf16.mxu0 %v4823
      %5066 = vmatpush1.bf16.msra.mxu0 %v4822
      %5067 = vmatprep.subr.bf16.mxu0 %v4827
      %5068 = vmatpush1.bf16.msra.mxu0 %v4826
      %5069 = vmatprep.subr.bf16.mxu0 0
      %5070 = vmatpush1.bf16.msra.mxu0 0
      %5071 = vmatprep.subr.bf16.mxu0 0
      %5072 = vmatpush1.bf16.msra.mxu0 0
      %5073 = vmatprep.subr.bf16.mxu0 0
      %5074 = vmatpush1.bf16.msra.mxu0 0
      %5075 = vmatprep.subr.bf16.mxu0 0
      %5076 = vmatpush1.bf16.msra.mxu0 0
      %5077 = vmatprep.subr.bf16.mxu0 0
      %5078 = vmatpush1.bf16.msra.mxu0 0
      %5079 = vmatprep.subr.bf16.mxu0 0
      %5080 = vmatpush1.bf16.msra.mxu0 0
      %5081 = vmatprep.subr.bf16.mxu0 0
      %5082 = vmatpush1.bf16.msra.mxu0 0
      %5083 = vmatprep.subr.bf16.mxu0 0
      %5084 = vmatpush1.bf16.msra.mxu0 0
      %5085 = vmatprep.mubr.bf16.mxu0 0
      %5086 = vmatmul.mubr.bf16.gmra.mrb[0].mxu0 %v4630
      %v5087 = vpop.f32.mrb[0].mxu0
      %v5088 = vadd.f32 %v4691, %v5087
      %v5089 = vpop.f32.mrb[0].mxu0
      %v5090 = vadd.f32 %v4695, %v5089
      %v5091 = vpop.f32.mrb[0].mxu0
      %v5092 = vadd.f32 %v4691, %v5091
      %v5093 = vpop.f32.mrb[0].mxu0
      %v5094 = vadd.f32 %v4695, %v5093
      %5095 = vmatprep.mubr.bf16.mxu0 0
      %5096 = vmatmul.mubr.bf16.gmra.mrb[0].mxu0 %v4631
      %v5097 = vpop.f32.mrb[0].mxu0
      %v5098 = vadd.f32 %v4691, %v5097
      %v5099 = vpop.f32.mrb[0].mxu0
      %v5100 = vadd.f32 %v4695, %v5099
      %v5101 = vpop.f32.mrb[0].mxu0
      %v5102 = vadd.f32 %v4691, %v5101
      %v5103 = vpop.f32.mrb[0].mxu0
      %v5104 = vadd.f32 %v4695, %v5103
      %5105 = vmatprep.mubr.bf16.mxu0 0
      %5106 = vmatmul.mubr.bf16.gmra.mrb[0].mxu0 %v4632
      %v5107 = vpop.f32.mrb[0].mxu0
      %v5108 = vadd.f32 %v4691, %v5107
      %v5109 = vpop.f32.mrb[0].mxu0
      %v5110 = vadd.f32 %v4695, %v5109
      %v5111 = vpop.f32.mrb[0].mxu0
      %v5112 = vadd.f32 %v4691, %v5111
      %v5113 = vpop.f32.mrb[0].mxu0
      %v5114 = vadd.f32 %v4695, %v5113
      %5115 = vmatprep.mubr.bf16.mxu0 0
      %5116 = vmatmul.mubr.bf16.gmra.mrb[0].mxu0 %v4633
      %v5117 = vpop.f32.mrb[0].mxu0
      %v5118 = vadd.f32 %v4691, %v5117
      %v5119 = vpop.f32.mrb[0].mxu0
      %v5120 = vadd.f32 %v4695, %v5119
      %v5121 = vpop.f32.mrb[0].mxu0
      %v5122 = vadd.f32 %v4691, %v5121
      %v5123 = vpop.f32.mrb[0].mxu0
      %v5124 = vadd.f32 %v4695, %v5123
      %5125 = vmatprep.mubr.bf16.mxu0 0
      %5126 = vmatmul.mubr.bf16.gmra.mrb[0].mxu0 %v4634
      %v5127 = vpop.f32.mrb[0].mxu0
      %v5128 = vadd.f32 %v4691, %v5127
      %v5129 = vpop.f32.mrb[0].mxu0
      %v5130 = vadd.f32 %v4695, %v5129
      %v5131 = vpop.f32.mrb[0].mxu0
      %v5132 = vadd.f32 %v4691, %v5131
      %v5133 = vpop.f32.mrb[0].mxu0
      %v5134 = vadd.f32 %v4695, %v5133
      %5135 = vmatprep.mubr.bf16.mxu0 0
      %5136 = vmatmul.mubr.bf16.gmra.mrb[0].mxu0 %v4635
      %v5137 = vpop.f32.mrb[0].mxu0
      %v5138 = vadd.f32 %v4691, %v5137
      %v5139 = vpop.f32.mrb[0].mxu0
      %v5140 = vadd.f32 %v4695, %v5139
      %v5141 = vpop.f32.mrb[0].mxu0
      %v5142 = vadd.f32 %v4691, %v5141
      %v5143 = vpop.f32.mrb[0].mxu0
      %v5144 = vadd.f32 %v4695, %v5143
      %5145 = vmatprep.mubr.bf16.mxu0 0
      %5146 = vmatmul.mubr.bf16.gmra.mrb[0].mxu0 %v4636
      %v5147 = vpop.f32.mrb[0].mxu0
      %v5148 = vadd.f32 %v4691, %v5147
      %v5149 = vpop.f32.mrb[0].mxu0
      %v5150 = vadd.f32 %v4695, %v5149
      %v5151 = vpop.f32.mrb[0].mxu0
      %v5152 = vadd.f32 %v4691, %v5151
      %v5153 = vpop.f32.mrb[0].mxu0
      %v5154 = vadd.f32 %v4695, %v5153
      %5155 = vmatprep.mubr.bf16.mxu0 0
      %5156 = vmatmul.mubr.bf16.gmra.mrb[0].mxu0 %v4637
      %v5157 = vpop.f32.mrb[0].mxu0
      %v5158 = vadd.f32 %v4691, %v5157
      %v5159 = vpop.f32.mrb[0].mxu0
      %v5160 = vadd.f32 %v4695, %v5159
      %v5161 = vpop.f32.mrb[0].mxu0
      %v5162 = vadd.f32 %v4691, %v5161
      %v5163 = vpop.f32.mrb[0].mxu0
      %v5164 = vadd.f32 %v4695, %v5163
      %5165 = vmatprep.mubr.bf16.mxu0 0
      %5166 = vmatmul.mubr.bf16.gmra.mrb[0].mxu0 %v4638
      %v5167 = vpop.f32.mrb[0].mxu0
      %v5168 = vadd.f32 %v4691, %v5167
      %v5169 = vpop.f32.mrb[0].mxu0
      %v5170 = vadd.f32 %v4695, %v5169
      %v5171 = vpop.f32.mrb[0].mxu0
      %v5172 = vadd.f32 %v4691, %v5171
      %v5173 = vpop.f32.mrb[0].mxu0
      %v5174 = vadd.f32 %v4695, %v5173
      %5175 = vmatprep.mubr.bf16.mxu0 0
      %5176 = vmatmul.mubr.bf16.gmra.mrb[0].mxu0 %v4639
      %v5177 = vpop.f32.mrb[0].mxu0
      %v5178 = vadd.f32 %v4691, %v5177
      %v5179 = vpop.f32.mrb[0].mxu0
      %v5180 = vadd.f32 %v4695, %v5179
      %v5181 = vpop.f32.mrb[0].mxu0
      %v5182 = vadd.f32 %v4691, %v5181
      %v5183 = vpop.f32.mrb[0].mxu0
      %v5184 = vadd.f32 %v4695, %v5183
      %5185 = vmatprep.mubr.bf16.mxu0 0
      %5186 = vmatmul.mubr.bf16.gmra.mrb[0].mxu0 %v4640
      %v5187 = vpop.f32.mrb[0].mxu0
      %v5188 = vadd.f32 %v4691, %v5187
      %v5189 = vpop.f32.mrb[0].mxu0
      %v5190 = vadd.f32 %v4695, %v5189
      %v5191 = vpop.f32.mrb[0].mxu0
      %v5192 = vadd.f32 %v4691, %v5191
      %v5193 = vpop.f32.mrb[0].mxu0
      %v5194 = vadd.f32 %v4695, %v5193
      %5195 = vmatprep.mubr.bf16.mxu0 0
      %5196 = vmatmul.mubr.bf16.gmra.mrb[0].mxu0 %v4641
      %v5197 = vpop.f32.mrb[0].mxu0
      %v5198 = vadd.f32 %v4691, %v5197
      %v5199 = vpop.f32.mrb[0].mxu0
      %v5200 = vadd.f32 %v4695, %v5199
      %v5201 = vpop.f32.mrb[0].mxu0
      %v5202 = vadd.f32 %v4691, %v5201
      %v5203 = vpop.f32.mrb[0].mxu0
      %v5204 = vadd.f32 %v4695, %v5203
      %5205 = vmatprep.mubr.bf16.mxu0 0
      %5206 = vmatmul.mubr.bf16.gmra.mrb[0].mxu0 %v4642
      %v5207 = vpop.f32.mrb[0].mxu0
      %v5208 = vadd.f32 %v4691, %v5207
      %v5209 = vpop.f32.mrb[0].mxu0
      %v5210 = vadd.f32 %v4695, %v5209
      %v5211 = vpop.f32.mrb[0].mxu0
      %v5212 = vadd.f32 %v4691, %v5211
      %v5213 = vpop.f32.mrb[0].mxu0
      %v5214 = vadd.f32 %v4695, %v5213
      %5215 = vmatprep.mubr.bf16.mxu0 0
      %5216 = vmatmul.mubr.bf16.gmra.mrb[0].mxu0 %v4643
      %v5217 = vpop.f32.mrb[0].mxu0
      %v5218 = vadd.f32 %v4691, %v5217
      %v5219 = vpop.f32.mrb[0].mxu0
      %v5220 = vadd.f32 %v4695, %v5219
      %v5221 = vpop.f32.mrb[0].mxu0
      %v5222 = vadd.f32 %v4691, %v5221
      %v5223 = vpop.f32.mrb[0].mxu0
      %v5224 = vadd.f32 %v4695, %v5223
      %5225 = vmatprep.mubr.bf16.mxu0 0
      %5226 = vmatmul.mubr.bf16.gmra.mrb[0].mxu0 %v4644
      %v5227 = vpop.f32.mrb[0].mxu0
      %v5228 = vadd.f32 %v4691, %v5227
      %v5229 = vpop.f32.mrb[0].mxu0
      %v5230 = vadd.f32 %v4695, %v5229
      %v5231 = vpop.f32.mrb[0].mxu0
      %v5232 = vadd.f32 %v4691, %v5231
      %v5233 = vpop.f32.mrb[0].mxu0
      %v5234 = vadd.f32 %v4695, %v5233
      %5235 = vmatprep.mubr.bf16.mxu0 0
      %5236 = vmatmul.mubr.bf16.gmra.mrb[0].mxu0 %v4645
      %v5237 = vpop.f32.mrb[0].mxu0
      %v5238 = vadd.f32 %v4691, %v5237
      %v5239 = vpop.f32.mrb[0].mxu0
      %v5240 = vadd.f32 %v4695, %v5239
      %v5241 = vpop.f32.mrb[0].mxu0
      %v5242 = vadd.f32 %v4691, %v5241
      %v5243 = vpop.f32.mrb[0].mxu0
      %v5244 = vadd.f32 %v4695, %v5243
      %5245 = vdwg.mxu0
      %v5246 = vmax.f32 %v4895, 0.0
      %v5247 = vmax.f32 %v4897, 0.0
      %v5248 = vmax.f32 %v5088, 0.0
      %v5249 = vmax.f32 %v5090, 0.0
      %v5250 = vmax.f32 %v4899, 0.0
      %v5251 = vmax.f32 %v4901, 0.0
      %v5252 = vmax.f32 %v5092, 0.0
      %v5253 = vmax.f32 %v5094, 0.0
      %v5254 = vmax.f32 %v4905, 0.0
      %v5255 = vmax.f32 %v4907, 0.0
      %v5256 = vmax.f32 %v5098, 0.0
      %v5257 = vmax.f32 %v5100, 0.0
      %v5258 = vmax.f32 %v4909, 0.0
      %v5259 = vmax.f32 %v4911, 0.0
      %v5260 = vmax.f32 %v5102, 0.0
      %v5261 = vmax.f32 %v5104, 0.0
      %v5262 = vmax.f32 %v4915, 0.0
      %v5263 = vmax.f32 %v4917, 0.0
      %v5264 = vmax.f32 %v5108, 0.0
      %v5265 = vmax.f32 %v5110, 0.0
      %v5266 = vmax.f32 %v4919, 0.0
      %v5267 = vmax.f32 %v4921, 0.0
      %v5268 = vmax.f32 %v5112, 0.0
      %v5269 = vmax.f32 %v5114, 0.0
      %v5270 = vmax.f32 %v4925, 0.0
      %v5271 = vmax.f32 %v4927, 0.0
      %v5272 = vmax.f32 %v5118, 0.0
      %v5273 = vmax.f32 %v5120, 0.0
      %v5274 = vmax.f32 %v4929, 0.0
      %v5275 = vmax.f32 %v4931, 0.0
      %v5276 = vmax.f32 %v5122, 0.0
      %v5277 = vmax.f32 %v5124, 0.0
      %v5278 = vmax.f32 %v4935, 0.0
      %v5279 = vmax.f32 %v4937, 0.0
      %v5280 = vmax.f32 %v5128, 0.0
      %v5281 = vmax.f32 %v5130, 0.0
      %v5282 = vmax.f32 %v4939, 0.0
      %v5283 = vmax.f32 %v4941, 0.0
      %v5284 = vmax.f32 %v5132, 0.0
      %v5285 = vmax.f32 %v5134, 0.0
      %v5286 = vmax.f32 %v4945, 0.0
      %v5287 = vmax.f32 %v4947, 0.0
      %v5288 = vmax.f32 %v5138, 0.0
      %v5289 = vmax.f32 %v5140, 0.0
      %v5290 = vmax.f32 %v4949, 0.0
      %v5291 = vmax.f32 %v4951, 0.0
      %v5292 = vmax.f32 %v5142, 0.0
      %v5293 = vmax.f32 %v5144, 0.0
      %v5294 = vmax.f32 %v4955, 0.0
      %v5295 = vmax.f32 %v4957, 0.0
      %v5296 = vmax.f32 %v5148, 0.0
      %v5297 = vmax.f32 %v5150, 0.0
      %v5298 = vmax.f32 %v4959, 0.0
      %v5299 = vmax.f32 %v4961, 0.0
      %v5300 = vmax.f32 %v5152, 0.0
      %v5301 = vmax.f32 %v5154, 0.0
      %v5302 = vmax.f32 %v4965, 0.0
      %v5303 = vmax.f32 %v4967, 0.0
      %v5304 = vmax.f32 %v5158, 0.0
      %v5305 = vmax.f32 %v5160, 0.0
      %v5306 = vmax.f32 %v4969, 0.0
      %v5307 = vmax.f32 %v4971, 0.0
      %v5308 = vmax.f32 %v5162, 0.0
      %v5309 = vmax.f32 %v5164, 0.0
      %v5310 = vmax.f32 %v4975, 0.0
      %v5311 = vmax.f32 %v4977, 0.0
      %v5312 = vmax.f32 %v5168, 0.0
      %v5313 = vmax.f32 %v5170, 0.0
      %v5314 = vmax.f32 %v4979, 0.0
      %v5315 = vmax.f32 %v4981, 0.0
      %v5316 = vmax.f32 %v5172, 0.0
      %v5317 = vmax.f32 %v5174, 0.0
      %v5318 = vmax.f32 %v4985, 0.0
      %v5319 = vmax.f32 %v4987, 0.0
      %v5320 = vmax.f32 %v5178, 0.0
      %v5321 = vmax.f32 %v5180, 0.0
      %v5322 = vmax.f32 %v4989, 0.0
      %v5323 = vmax.f32 %v4991, 0.0
      %v5324 = vmax.f32 %v5182, 0.0
      %v5325 = vmax.f32 %v5184, 0.0
      %v5326 = vmax.f32 %v4995, 0.0
      %v5327 = vmax.f32 %v4997, 0.0
      %v5328 = vmax.f32 %v5188, 0.0
      %v5329 = vmax.f32 %v5190, 0.0
      %v5330 = vmax.f32 %v4999, 0.0
      %v5331 = vmax.f32 %v5001, 0.0
      %v5332 = vmax.f32 %v5192, 0.0
      %v5333 = vmax.f32 %v5194, 0.0
      %v5334 = vmax.f32 %v5005, 0.0
      %v5335 = vmax.f32 %v5007, 0.0
      %v5336 = vmax.f32 %v5198, 0.0
      %v5337 = vmax.f32 %v5200, 0.0
      %v5338 = vmax.f32 %v5009, 0.0
      %v5339 = vmax.f32 %v5011, 0.0
      %v5340 = vmax.f32 %v5202, 0.0
      %v5341 = vmax.f32 %v5204, 0.0
      %v5342 = vmax.f32 %v5015, 0.0
      %v5343 = vmax.f32 %v5017, 0.0
      %v5344 = vmax.f32 %v5208, 0.0
      %v5345 = vmax.f32 %v5210, 0.0
      %v5346 = vmax.f32 %v5019, 0.0
      %v5347 = vmax.f32 %v5021, 0.0
      %v5348 = vmax.f32 %v5212, 0.0
      %v5349 = vmax.f32 %v5214, 0.0
      %v5350 = vmax.f32 %v5025, 0.0
      %v5351 = vmax.f32 %v5027, 0.0
      %v5352 = vmax.f32 %v5218, 0.0
      %v5353 = vmax.f32 %v5220, 0.0
      %v5354 = vmax.f32 %v5029, 0.0
      %v5355 = vmax.f32 %v5031, 0.0
      %v5356 = vmax.f32 %v5222, 0.0
      %v5357 = vmax.f32 %v5224, 0.0
      %v5358 = vmax.f32 %v5035, 0.0
      %v5359 = vmax.f32 %v5037, 0.0
      %v5360 = vmax.f32 %v5228, 0.0
      %v5361 = vmax.f32 %v5230, 0.0
      %v5362 = vmax.f32 %v5039, 0.0
      %v5363 = vmax.f32 %v5041, 0.0
      %v5364 = vmax.f32 %v5232, 0.0
      %v5365 = vmax.f32 %v5234, 0.0
      %v5366 = vmax.f32 %v5045, 0.0
      %v5367 = vmax.f32 %v5047, 0.0
      %v5368 = vmax.f32 %v5238, 0.0
      %v5369 = vmax.f32 %v5240, 0.0
      %v5370 = vmax.f32 %v5049, 0.0
      %v5371 = vmax.f32 %v5051, 0.0
      %v5372 = vmax.f32 %v5242, 0.0
      %v5373 = vmax.f32 %v5244, 0.0
      %v5374 = vpack.c.bf16 %v5250, %v5246
      %v5375 = vpack.c.bf16 %v5251, %v5247
      %v5376 = vpack.c.bf16 %v5252, %v5248
      %v5377 = vpack.c.bf16 %v5253, %v5249
      %v5378 = vpack.c.bf16 %v5258, %v5254
      %v5379 = vpack.c.bf16 %v5259, %v5255
      %v5380 = vpack.c.bf16 %v5260, %v5256
      %v5381 = vpack.c.bf16 %v5261, %v5257
      %v5382 = vpack.c.bf16 %v5266, %v5262
      %v5383 = vpack.c.bf16 %v5267, %v5263
      %v5384 = vpack.c.bf16 %v5268, %v5264
      %v5385 = vpack.c.bf16 %v5269, %v5265
      %v5386 = vpack.c.bf16 %v5274, %v5270
      %v5387 = vpack.c.bf16 %v5275, %v5271
      %v5388 = vpack.c.bf16 %v5276, %v5272
      %v5389 = vpack.c.bf16 %v5277, %v5273
      %v5390 = vpack.c.bf16 %v5282, %v5278
      %v5391 = vpack.c.bf16 %v5283, %v5279
      %v5392 = vpack.c.bf16 %v5284, %v5280
      %v5393 = vpack.c.bf16 %v5285, %v5281
      %v5394 = vpack.c.bf16 %v5290, %v5286
      %v5395 = vpack.c.bf16 %v5291, %v5287
      %v5396 = vpack.c.bf16 %v5292, %v5288
      %v5397 = vpack.c.bf16 %v5293, %v5289
      %v5398 = vpack.c.bf16 %v5298, %v5294
      %v5399 = vpack.c.bf16 %v5299, %v5295
      %v5400 = vpack.c.bf16 %v5300, %v5296
      %v5401 = vpack.c.bf16 %v5301, %v5297
      %v5402 = vpack.c.bf16 %v5306, %v5302
      %v5403 = vpack.c.bf16 %v5307, %v5303
      %v5404 = vpack.c.bf16 %v5308, %v5304
      %v5405 = vpack.c.bf16 %v5309, %v5305
      %v5406 = vpack.c.bf16 %v5314, %v5310
      %v5407 = vpack.c.bf16 %v5315, %v5311
      %v5408 = vpack.c.bf16 %v5316, %v5312
      %v5409 = vpack.c.bf16 %v5317, %v5313
      %v5410 = vpack.c.bf16 %v5322, %v5318
      %v5411 = vpack.c.bf16 %v5323, %v5319
      %v5412 = vpack.c.bf16 %v5324, %v5320
      %v5413 = vpack.c.bf16 %v5325, %v5321
      %v5414 = vpack.c.bf16 %v5330, %v5326
      %v5415 = vpack.c.bf16 %v5331, %v5327
      %v5416 = vpack.c.bf16 %v5332, %v5328
      %v5417 = vpack.c.bf16 %v5333, %v5329
      %v5418 = vpack.c.bf16 %v5338, %v5334
      %v5419 = vpack.c.bf16 %v5339, %v5335
      %v5420 = vpack.c.bf16 %v5340, %v5336
      %v5421 = vpack.c.bf16 %v5341, %v5337
      %v5422 = vpack.c.bf16 %v5346, %v5342
      %v5423 = vpack.c.bf16 %v5347, %v5343
      %v5424 = vpack.c.bf16 %v5348, %v5344
      %v5425 = vpack.c.bf16 %v5349, %v5345
      %v5426 = vpack.c.bf16 %v5354, %v5350
      %v5427 = vpack.c.bf16 %v5355, %v5351
      %v5428 = vpack.c.bf16 %v5356, %v5352
      %v5429 = vpack.c.bf16 %v5357, %v5353
      %v5430 = vpack.c.bf16 %v5362, %v5358
      %v5431 = vpack.c.bf16 %v5363, %v5359
      %v5432 = vpack.c.bf16 %v5364, %v5360
      %v5433 = vpack.c.bf16 %v5365, %v5361
      %v5434 = vpack.c.bf16 %v5370, %v5366
      %v5435 = vpack.c.bf16 %v5371, %v5367
      %v5436 = vpack.c.bf16 %v5372, %v5368
      %v5437 = vpack.c.bf16 %v5373, %v5369
      %v5438 = vld [vmem:[%s7] sm:$0xff]
      %v5439 = vld [vmem:[%s7 + $0x8] sm:$0xff]
      %v5440 = vld [vmem:[%s7 + $0x10] sm:$0xff]
      %v5441 = vld [vmem:[%s7 + $0x18] sm:$0xf]
      %v5442 = vld [vmem:[%s7 + $0x1c] sm:$0xff]
      %v5443 = vld [vmem:[%s7 + $0x24] sm:$0xff]
      %v5444 = vld [vmem:[%s7 + $0x2c] sm:$0xff]
      %v5445 = vld [vmem:[%s7 + $0x34] sm:$0xf]
      %v5446 = vld [vmem:[%s7 + $0x38] sm:$0xff]
      %v5447 = vld [vmem:[%s7 + $0x40] sm:$0xff]
      %v5448 = vld [vmem:[%s7 + $0x48] sm:$0xff]
      %v5449 = vld [vmem:[%s7 + $0x50] sm:$0xf]
      %v5450 = vld [vmem:[%s7 + $0x54] sm:$0xff]
      %v5451 = vld [vmem:[%s7 + $0x5c] sm:$0xff]
      %v5452 = vld [vmem:[%s7 + $0x64] sm:$0xff]
      %v5453 = vld [vmem:[%s7 + $0x6c] sm:$0xf]
      %v5454 = vld [vmem:[%s7 + $0x70] sm:$0xff]
      %v5455 = vld [vmem:[%s7 + $0x78] sm:$0xff]
      %v5456 = vld [vmem:[%s7 + $0x80] sm:$0xff]
      %v5457 = vld [vmem:[%s7 + $0x88] sm:$0xf]
      %v5458 = vld [vmem:[%s7 + $0x8c] sm:$0xff]
      %v5459 = vld [vmem:[%s7 + $0x94] sm:$0xff]
      %v5460 = vld [vmem:[%s7 + $0x9c] sm:$0xff]
      %v5461 = vld [vmem:[%s7 + $0xa4] sm:$0xf]
      %v5462 = vld [vmem:[%s7 + $0xa8] sm:$0xff]
      %v5463 = vld [vmem:[%s7 + $0xb0] sm:$0xff]
      %v5464 = vld [vmem:[%s7 + $0xb8] sm:$0xff]
      %v5465 = vld [vmem:[%s7 + $0xc0] sm:$0xf]
      %v5466 = vld [vmem:[%s7 + $0xc4] sm:$0xff]
      %v5467 = vld [vmem:[%s7 + $0xcc] sm:$0xff]
      %v5468 = vld [vmem:[%s7 + $0xd4] sm:$0xff]
      %v5469 = vld [vmem:[%s7 + $0xdc] sm:$0xf]
      %v5470 = vld [vmem:[%s7 + $0xe0] sm:$0xff]
      %v5471 = vld [vmem:[%s7 + $0xe8] sm:$0xff]
      %v5472 = vld [vmem:[%s7 + $0xf0] sm:$0xff]
      %v5473 = vld [vmem:[%s7 + $0xf8] sm:$0xf]
      %v5474 = vld [vmem:[%s7 + $0xfc] sm:$0xff]
      %v5475 = vld [vmem:[%s7 + $0x104] sm:$0xff]
      %v5476 = vld [vmem:[%s7 + $0x10c] sm:$0xff]
      %v5477 = vld [vmem:[%s7 + $0x114] sm:$0xf]
      %v5478 = vld [vmem:[%s7 + $0x118] sm:$0xff]
      %v5479 = vld [vmem:[%s7 + $0x120] sm:$0xff]
      %v5480 = vld [vmem:[%s7 + $0x128] sm:$0xff]
      %v5481 = vld [vmem:[%s7 + $0x130] sm:$0xf]
      %v5482 = vld [vmem:[%s7 + $0x134] sm:$0xff]
      %v5483 = vld [vmem:[%s7 + $0x13c] sm:$0xff]
      %v5484 = vld [vmem:[%s7 + $0x144] sm:$0xff]
      %v5485 = vld [vmem:[%s7 + $0x14c] sm:$0xf]
      %v5486 = vld [vmem:[%s7 + $0x150] sm:$0xff]
      %v5487 = vld [vmem:[%s7 + $0x158] sm:$0xff]
      %v5488 = vld [vmem:[%s7 + $0x160] sm:$0xff]
      %v5489 = vld [vmem:[%s7 + $0x168] sm:$0xf]
      %v5490 = vld [vmem:[%s7 + $0x16c] sm:$0xff]
      %v5491 = vld [vmem:[%s7 + $0x174] sm:$0xff]
      %v5492 = vld [vmem:[%s7 + $0x17c] sm:$0xff]
      %v5493 = vld [vmem:[%s7 + $0x184] sm:$0xf]
      %v5494 = vld [vmem:[%s7 + $0x188] sm:$0xff]
      %v5495 = vld [vmem:[%s7 + $0x190] sm:$0xff]
      %v5496 = vld [vmem:[%s7 + $0x198] sm:$0xff]
      %v5497 = vld [vmem:[%s7 + $0x1a0] sm:$0xf]
      %v5498 = vld [vmem:[%s7 + $0x1a4] sm:$0xff]
      %v5499 = vld [vmem:[%s7 + $0x1ac] sm:$0xff]
      %v5500 = vld [vmem:[%s7 + $0x1b4] sm:$0xff]
      %v5501 = vld [vmem:[%s7 + $0x1bc] sm:$0xf]
      %v5502 = vld [vmem:[%s7 + $0x1c0] sm:$0xff]
      %v5503 = vld [vmem:[%s7 + $0x1c8] sm:$0xff]
      %v5504 = vld [vmem:[%s7 + $0x1d0] sm:$0xff]
      %v5505 = vld [vmem:[%s7 + $0x1d8] sm:$0xf]
      %v5506 = vld [vmem:[%s7 + $0x1dc] sm:$0xff]
      %v5507 = vld [vmem:[%s7 + $0x1e4] sm:$0xff]
      %v5508 = vld [vmem:[%s7 + $0x1ec] sm:$0xff]
      %v5509 = vld [vmem:[%s7 + $0x1f4] sm:$0xf]
      %v5510 = vld [vmem:[%s7 + $0x1f8] sm:$0xff]
      %v5511 = vld [vmem:[%s7 + $0x200] sm:$0xff]
      %v5512 = vld [vmem:[%s7 + $0x208] sm:$0xff]
      %v5513 = vld [vmem:[%s7 + $0x210] sm:$0xf]
      %v5514 = vld [vmem:[%s7 + $0x214] sm:$0xff]
      %v5515 = vld [vmem:[%s7 + $0x21c] sm:$0xff]
      %v5516 = vld [vmem:[%s7 + $0x224] sm:$0xff]
      %v5517 = vld [vmem:[%s7 + $0x22c] sm:$0xf]
      %v5518 = vld [vmem:[%s7 + $0x230] sm:$0xff]
      %v5519 = vld [vmem:[%s7 + $0x238] sm:$0xff]
      %v5520 = vld [vmem:[%s7 + $0x240] sm:$0xff]
      %v5521 = vld [vmem:[%s7 + $0x248] sm:$0xf]
      %v5522 = vld [vmem:[%s7 + $0x24c] sm:$0xff]
      %v5523 = vld [vmem:[%s7 + $0x254] sm:$0xff]
      %v5524 = vld [vmem:[%s7 + $0x25c] sm:$0xff]
      %v5525 = vld [vmem:[%s7 + $0x264] sm:$0xf]
      %v5526 = vld [vmem:[%s7 + $0x268] sm:$0xff]
      %v5527 = vld [vmem:[%s7 + $0x270] sm:$0xff]
      %v5528 = vld [vmem:[%s7 + $0x278] sm:$0xff]
      %v5529 = vld [vmem:[%s7 + $0x280] sm:$0xf]
      %v5530 = vld [vmem:[%s7 + $0x284] sm:$0xff]
      %v5531 = vld [vmem:[%s7 + $0x28c] sm:$0xff]
      %v5532 = vld [vmem:[%s7 + $0x294] sm:$0xff]
      %v5533 = vld [vmem:[%s7 + $0x29c] sm:$0xf]
      %v5534 = vld [vmem:[%s7 + $0x2a0] sm:$0xff]
      %v5535 = vld [vmem:[%s7 + $0x2a8] sm:$0xff]
      %v5536 = vld [vmem:[%s7 + $0x2b0] sm:$0xff]
      %v5537 = vld [vmem:[%s7 + $0x2b8] sm:$0xf]
      %v5538 = vld [vmem:[%s7 + $0x2bc] sm:$0xff]
      %v5539 = vld [vmem:[%s7 + $0x2c4] sm:$0xff]
      %v5540 = vld [vmem:[%s7 + $0x2cc] sm:$0xff]
      %v5541 = vld [vmem:[%s7 + $0x2d4] sm:$0xf]
      %v5542 = vld [vmem:[%s7 + $0x2d8] sm:$0xff]
      %v5543 = vld [vmem:[%s7 + $0x2e0] sm:$0xff]
      %v5544 = vld [vmem:[%s7 + $0x2e8] sm:$0xff]
      %v5545 = vld [vmem:[%s7 + $0x2f0] sm:$0xf]
      %v5546 = vld [vmem:[%s7 + $0x2f4] sm:$0xff]
      %v5547 = vld [vmem:[%s7 + $0x2fc] sm:$0xff]
      %v5548 = vld [vmem:[%s7 + $0x304] sm:$0xff]
      %v5549 = vld [vmem:[%s7 + $0x30c] sm:$0xf]
      %v5550 = vld [vmem:[%s7 + $0x310] sm:$0xff]
      %v5551 = vld [vmem:[%s7 + $0x318] sm:$0xff]
      %v5552 = vld [vmem:[%s7 + $0x320] sm:$0xff]
      %v5553 = vld [vmem:[%s7 + $0x328] sm:$0xf]
      %v5554 = vld [vmem:[%s7 + $0x32c] sm:$0xff]
      %v5555 = vld [vmem:[%s7 + $0x334] sm:$0xff]
      %v5556 = vld [vmem:[%s7 + $0x33c] sm:$0xff]
      %v5557 = vld [vmem:[%s7 + $0x344] sm:$0xf]
      %v5558 = vld [vmem:[%s7 + $0x348] sm:$0xff]
      %v5559 = vld [vmem:[%s7 + $0x350] sm:$0xff]
      %v5560 = vld [vmem:[%s7 + $0x358] sm:$0xff]
      %v5561 = vld [vmem:[%s7 + $0x360] sm:$0xf]
      %v5562 = vld [vmem:[%s7 + $0x364] sm:$0xff]
      %v5563 = vld [vmem:[%s7 + $0x36c] sm:$0xff]
      %v5564 = vld [vmem:[%s7 + $0x374] sm:$0xff]
      %v5565 = vld [vmem:[%s7 + $0x37c] sm:$0xf]
      %v5566 = vld [vmem:[%s7 + $0x380] sm:$0xff]
      %v5567 = vld [vmem:[%s7 + $0x388] sm:$0xff]
      %v5568 = vld [vmem:[%s7 + $0x390] sm:$0xff]
      %v5569 = vld [vmem:[%s7 + $0x398] sm:$0xf]
      %v5570 = vld [vmem:[%s7 + $0x39c] sm:$0xff]
      %v5571 = vld [vmem:[%s7 + $0x3a4] sm:$0xff]
      %v5572 = vld [vmem:[%s7 + $0x3ac] sm:$0xff]
      %v5573 = vld [vmem:[%s7 + $0x3b4] sm:$0xf]
      %v5574 = vld [vmem:[%s7 + $0x3b8] sm:$0xff]
      %v5575 = vld [vmem:[%s7 + $0x3c0] sm:$0xff]
      %v5576 = vld [vmem:[%s7 + $0x3c8] sm:$0xff]
      %v5577 = vld [vmem:[%s7 + $0x3d0] sm:$0xf]
      %v5578 = vld [vmem:[%s7 + $0x3d4] sm:$0xff]
      %v5579 = vld [vmem:[%s7 + $0x3dc] sm:$0xff]
      %v5580 = vld [vmem:[%s7 + $0x3e4] sm:$0xff]
      %v5581 = vld [vmem:[%s7 + $0x3ec] sm:$0xf]
      %v5582 = vld [vmem:[%s7 + $0x3f0] sm:$0xff]
      %v5583 = vld [vmem:[%s7 + $0x3f8] sm:$0xff]
      %v5584 = vld [vmem:[%s7 + $0x400] sm:$0xff]
      %v5585 = vld [vmem:[%s7 + $0x408] sm:$0xf]
      %v5586 = vld [vmem:[%s7 + $0x40c] sm:$0xff]
      %v5587 = vld [vmem:[%s7 + $0x414] sm:$0xff]
      %v5588 = vld [vmem:[%s7 + $0x41c] sm:$0xff]
      %v5589 = vld [vmem:[%s7 + $0x424] sm:$0xf]
      %v5590 = vld [vmem:[%s7 + $0x428] sm:$0xff]
      %v5591 = vld [vmem:[%s7 + $0x430] sm:$0xff]
      %v5592 = vld [vmem:[%s7 + $0x438] sm:$0xff]
      %v5593 = vld [vmem:[%s7 + $0x440] sm:$0xf]
      %v5594 = vld [vmem:[%s7 + $0x444] sm:$0xff]
      %v5595 = vld [vmem:[%s7 + $0x44c] sm:$0xff]
      %v5596 = vld [vmem:[%s7 + $0x454] sm:$0xff]
      %v5597 = vld [vmem:[%s7 + $0x45c] sm:$0xf]
      %v5598 = vld [vmem:[%s7 + $0x460] sm:$0xff]
      %v5599 = vld [vmem:[%s7 + $0x468] sm:$0xff]
      %v5600 = vld [vmem:[%s7 + $0x470] sm:$0xff]
      %v5601 = vld [vmem:[%s7 + $0x478] sm:$0xf]
      %v5602 = vld [vmem:[%s7 + $0x47c] sm:$0xff]
      %v5603 = vld [vmem:[%s7 + $0x484] sm:$0xff]
      %v5604 = vld [vmem:[%s7 + $0x48c] sm:$0xff]
      %v5605 = vld [vmem:[%s7 + $0x494] sm:$0xf]
      %v5606 = vld [vmem:[%s7 + $0x498] sm:$0xff]
      %v5607 = vld [vmem:[%s7 + $0x4a0] sm:$0xff]
      %v5608 = vld [vmem:[%s7 + $0x4a8] sm:$0xff]
      %v5609 = vld [vmem:[%s7 + $0x4b0] sm:$0xf]
      %v5610 = vld [vmem:[%s7 + $0x4b4] sm:$0xff]
      %v5611 = vld [vmem:[%s7 + $0x4bc] sm:$0xff]
      %v5612 = vld [vmem:[%s7 + $0x4c4] sm:$0xff]
      %v5613 = vld [vmem:[%s7 + $0x4cc] sm:$0xf]
      %v5614 = vld [vmem:[%s7 + $0x4d0] sm:$0xff]
      %v5615 = vld [vmem:[%s7 + $0x4d8] sm:$0xff]
      %v5616 = vld [vmem:[%s7 + $0x4e0] sm:$0xff]
      %v5617 = vld [vmem:[%s7 + $0x4e8] sm:$0xf]
      %v5618 = vld [vmem:[%s7 + $0x4ec] sm:$0xff]
      %v5619 = vld [vmem:[%s7 + $0x4f4] sm:$0xff]
      %v5620 = vld [vmem:[%s7 + $0x4fc] sm:$0xff]
      %v5621 = vld [vmem:[%s7 + $0x504] sm:$0xf]
      %v5622 = vld [vmem:[%s7 + $0x508] sm:$0xff]
      %v5623 = vld [vmem:[%s7 + $0x510] sm:$0xff]
      %v5624 = vld [vmem:[%s7 + $0x518] sm:$0xff]
      %v5625 = vld [vmem:[%s7 + $0x520] sm:$0xf]
      %v5626 = vld [vmem:[%s7 + $0x524] sm:$0xff]
      %v5627 = vld [vmem:[%s7 + $0x52c] sm:$0xff]
      %v5628 = vld [vmem:[%s7 + $0x534] sm:$0xff]
      %v5629 = vld [vmem:[%s7 + $0x53c] sm:$0xf]
      %v5630 = vld [vmem:[%s7 + $0x540] sm:$0xff]
      %v5631 = vld [vmem:[%s7 + $0x548] sm:$0xff]
      %v5632 = vld [vmem:[%s7 + $0x550] sm:$0xff]
      %v5633 = vld [vmem:[%s7 + $0x558] sm:$0xf]
      %v5634 = vld [vmem:[%s7 + $0x55c] sm:$0xff]
      %v5635 = vld [vmem:[%s7 + $0x564] sm:$0xff]
      %v5636 = vld [vmem:[%s7 + $0x56c] sm:$0xff]
      %v5637 = vld [vmem:[%s7 + $0x574] sm:$0xf]
      %v5638 = vld [vmem:[%s7 + $0x578] sm:$0xff]
      %v5639 = vld [vmem:[%s7 + $0x580] sm:$0xff]
      %v5640 = vld [vmem:[%s7 + $0x588] sm:$0xff]
      %v5641 = vld [vmem:[%s7 + $0x590] sm:$0xf]
      %v5642 = vld [vmem:[%s7 + $0x594] sm:$0xff]
      %v5643 = vld [vmem:[%s7 + $0x59c] sm:$0xff]
      %v5644 = vld [vmem:[%s7 + $0x5a4] sm:$0xff]
      %v5645 = vld [vmem:[%s7 + $0x5ac] sm:$0xf]
      %v5646 = vld [vmem:[%s7 + $0x5b0] sm:$0xff]
      %v5647 = vld [vmem:[%s7 + $0x5b8] sm:$0xff]
      %v5648 = vld [vmem:[%s7 + $0x5c0] sm:$0xff]
      %v5649 = vld [vmem:[%s7 + $0x5c8] sm:$0xf]
      %v5650 = vld [vmem:[%s7 + $0x5cc] sm:$0xff]
      %v5651 = vld [vmem:[%s7 + $0x5d4] sm:$0xff]
      %v5652 = vld [vmem:[%s7 + $0x5dc] sm:$0xff]
      %v5653 = vld [vmem:[%s7 + $0x5e4] sm:$0xf]
      %v5654 = vld [vmem:[%s7 + $0x5e8] sm:$0xff]
      %v5655 = vld [vmem:[%s7 + $0x5f0] sm:$0xff]
      %v5656 = vld [vmem:[%s7 + $0x5f8] sm:$0xff]
      %v5657 = vld [vmem:[%s7 + $0x600] sm:$0xf]
      %v5658 = vld [vmem:[%s7 + $0x604] sm:$0xff]
      %v5659 = vld [vmem:[%s7 + $0x60c] sm:$0xff]
      %v5660 = vld [vmem:[%s7 + $0x614] sm:$0xff]
      %v5661 = vld [vmem:[%s7 + $0x61c] sm:$0xf]
      %v5662 = vld [vmem:[%s7 + $0x620] sm:$0xff]
      %v5663 = vld [vmem:[%s7 + $0x628] sm:$0xff]
      %v5664 = vld [vmem:[%s7 + $0x630] sm:$0xff]
      %v5665 = vld [vmem:[%s7 + $0x638] sm:$0xf]
      %v5666 = vld [vmem:[%s7 + $0x63c] sm:$0xff]
      %v5667 = vld [vmem:[%s7 + $0x644] sm:$0xff]
      %v5668 = vld [vmem:[%s7 + $0x64c] sm:$0xff]
      %v5669 = vld [vmem:[%s7 + $0x654] sm:$0xf]
      %v5670 = vld [vmem:[%s7 + $0x658] sm:$0xff]
      %v5671 = vld [vmem:[%s7 + $0x660] sm:$0xff]
      %v5672 = vld [vmem:[%s7 + $0x668] sm:$0xff]
      %v5673 = vld [vmem:[%s7 + $0x670] sm:$0xf]
      %v5674 = vld [vmem:[%s7 + $0x674] sm:$0xff]
      %v5675 = vld [vmem:[%s7 + $0x67c] sm:$0xff]
      %v5676 = vld [vmem:[%s7 + $0x684] sm:$0xff]
      %v5677 = vld [vmem:[%s7 + $0x68c] sm:$0xf]
      %v5678 = vld [vmem:[%s7 + $0x690] sm:$0xff]
      %v5679 = vld [vmem:[%s7 + $0x698] sm:$0xff]
      %v5680 = vld [vmem:[%s7 + $0x6a0] sm:$0xff]
      %v5681 = vld [vmem:[%s7 + $0x6a8] sm:$0xf]
      %v5682 = vld [vmem:[%s7 + $0x6ac] sm:$0xff]
      %v5683 = vld [vmem:[%s7 + $0x6b4] sm:$0xff]
      %v5684 = vld [vmem:[%s7 + $0x6bc] sm:$0xff]
      %v5685 = vld [vmem:[%s7 + $0x6c4] sm:$0xf]
      %v5686 = vld [vmem:[%s7 + $0x6c8] sm:$0xff]
      %v5687 = vld [vmem:[%s7 + $0x6d0] sm:$0xff]
      %v5688 = vld [vmem:[%s7 + $0x6d8] sm:$0xff]
      %v5689 = vld [vmem:[%s7 + $0x6e0] sm:$0xf]
      %v5690 = vld [vmem:[%s7 + $0x6e4] sm:$0xff]
      %v5691 = vld [vmem:[%s7 + $0x6ec] sm:$0xff]
      %v5692 = vld [vmem:[%s7 + $0x6f4] sm:$0xff]
      %v5693 = vld [vmem:[%s7 + $0x6fc] sm:$0xf]
      %v5694 = vld [vmem:[%s8] sm:$0x7f]
      %v5696 = vlaneseq
      %v5697 = vshrl.u32 %v5696, 7
      %v5698 = vsub.s32 0, %v5697
      %v5699 = vrot.slane %v5694, %v5698
      %v5700 = vlaneseq
      %v5701 = vshrl.u32 %v5700, 7
      %v5702 = vsub.s32 1, %v5701
      %v5703 = vrot.slane %v5694, %v5702
      %v5704 = vlaneseq
      %v5705 = vshrl.u32 %v5704, 7
      %v5706 = vsub.s32 2, %v5705
      %v5707 = vrot.slane %v5694, %v5706
      %v5708 = vlaneseq
      %v5709 = vshrl.u32 %v5708, 7
      %v5710 = vsub.s32 3, %v5709
      %v5711 = vrot.slane %v5694, %v5710
      %v5712 = vlaneseq
      %v5713 = vshrl.u32 %v5712, 7
      %v5714 = vsub.s32 4, %v5713
      %v5715 = vrot.slane %v5694, %v5714
      %v5716 = vlaneseq
      %v5717 = vshrl.u32 %v5716, 7
      %v5718 = vsub.s32 5, %v5717
      %v5719 = vrot.slane %v5694, %v5718
      %v5720 = vlaneseq
      %v5721 = vshrl.u32 %v5720, 7
      %v5722 = vsub.s32 6, %v5721
      %v5723 = vrot.slane %v5694, %v5722
      %v5987 = vunpack.c.l.b16 %v5438
      %v5988 = vunpack.c.h.b16 %v5438
      %v5989 = vunpack.c.l.b16 %v5439
      %v5990 = vunpack.c.h.b16 %v5439
      %v5991 = vunpack.c.l.b16 %v5440
      %v5992 = vunpack.c.h.b16 %v5440
      %v5993 = vunpack.c.l.b16 %v5441
      %v5994 = vunpack.c.l.b16 %v5442
      %v5995 = vunpack.c.h.b16 %v5442
      %v5996 = vunpack.c.l.b16 %v5443
      %v5997 = vunpack.c.h.b16 %v5443
      %v5998 = vunpack.c.l.b16 %v5444
      %v5999 = vunpack.c.h.b16 %v5444
      %v6000 = vunpack.c.l.b16 %v5445
      %v6001 = vunpack.c.l.b16 %v5446
      %v6002 = vunpack.c.h.b16 %v5446
      %v6003 = vunpack.c.l.b16 %v5447
      %v6004 = vunpack.c.h.b16 %v5447
      %v6005 = vunpack.c.l.b16 %v5448
      %v6006 = vunpack.c.h.b16 %v5448
      %v6007 = vunpack.c.l.b16 %v5449
      %v6008 = vunpack.c.l.b16 %v5450
      %v6009 = vunpack.c.h.b16 %v5450
      %v6010 = vunpack.c.l.b16 %v5451
      %v6011 = vunpack.c.h.b16 %v5451
      %v6012 = vunpack.c.l.b16 %v5452
      %v6013 = vunpack.c.h.b16 %v5452
      %v6014 = vunpack.c.l.b16 %v5453
      %v6015 = vunpack.c.l.b16 %v5454
      %v6016 = vunpack.c.h.b16 %v5454
      %v6017 = vunpack.c.l.b16 %v5455
      %v6018 = vunpack.c.h.b16 %v5455
      %v6019 = vunpack.c.l.b16 %v5456
      %v6020 = vunpack.c.h.b16 %v5456
      %v6021 = vunpack.c.l.b16 %v5457
      %v6022 = vunpack.c.l.b16 %v5458
      %v6023 = vunpack.c.h.b16 %v5458
      %v6024 = vunpack.c.l.b16 %v5459
      %v6025 = vunpack.c.h.b16 %v5459
      %v6026 = vunpack.c.l.b16 %v5460
      %v6027 = vunpack.c.h.b16 %v5460
      %v6028 = vunpack.c.l.b16 %v5461
      %v6029 = vunpack.c.l.b16 %v5462
      %v6030 = vunpack.c.h.b16 %v5462
      %v6031 = vunpack.c.l.b16 %v5463
      %v6032 = vunpack.c.h.b16 %v5463
      %v6033 = vunpack.c.l.b16 %v5464
      %v6034 = vunpack.c.h.b16 %v5464
      %v6035 = vunpack.c.l.b16 %v5465
      %v6036 = vunpack.c.l.b16 %v5466
      %v6037 = vunpack.c.h.b16 %v5466
      %v6038 = vunpack.c.l.b16 %v5467
      %v6039 = vunpack.c.h.b16 %v5467
      %v6040 = vunpack.c.l.b16 %v5468
      %v6041 = vunpack.c.h.b16 %v5468
      %v6042 = vunpack.c.l.b16 %v5469
      %v6043 = vunpack.c.l.b16 %v5470
      %v6044 = vunpack.c.h.b16 %v5470
      %v6045 = vunpack.c.l.b16 %v5471
      %v6046 = vunpack.c.h.b16 %v5471
      %v6047 = vunpack.c.l.b16 %v5472
      %v6048 = vunpack.c.h.b16 %v5472
      %v6049 = vunpack.c.l.b16 %v5473
      %v6050 = vunpack.c.l.b16 %v5474
      %v6051 = vunpack.c.h.b16 %v5474
      %v6052 = vunpack.c.l.b16 %v5475
      %v6053 = vunpack.c.h.b16 %v5475
      %v6054 = vunpack.c.l.b16 %v5476
      %v6055 = vunpack.c.h.b16 %v5476
      %v6056 = vunpack.c.l.b16 %v5477
      %v6057 = vunpack.c.l.b16 %v5478
      %v6058 = vunpack.c.h.b16 %v5478
      %v6059 = vunpack.c.l.b16 %v5479
      %v6060 = vunpack.c.h.b16 %v5479
      %v6061 = vunpack.c.l.b16 %v5480
      %v6062 = vunpack.c.h.b16 %v5480
      %v6063 = vunpack.c.l.b16 %v5481
      %v6064 = vunpack.c.l.b16 %v5482
      %v6065 = vunpack.c.h.b16 %v5482
      %v6066 = vunpack.c.l.b16 %v5483
      %v6067 = vunpack.c.h.b16 %v5483
      %v6068 = vunpack.c.l.b16 %v5484
      %v6069 = vunpack.c.h.b16 %v5484
      %v6070 = vunpack.c.l.b16 %v5485
      %v6071 = vunpack.c.l.b16 %v5486
      %v6072 = vunpack.c.h.b16 %v5486
      %v6073 = vunpack.c.l.b16 %v5487
      %v6074 = vunpack.c.h.b16 %v5487
      %v6075 = vunpack.c.l.b16 %v5488
      %v6076 = vunpack.c.h.b16 %v5488
      %v6077 = vunpack.c.l.b16 %v5489
      %v6078 = vunpack.c.l.b16 %v5490
      %v6079 = vunpack.c.h.b16 %v5490
      %v6080 = vunpack.c.l.b16 %v5491
      %v6081 = vunpack.c.h.b16 %v5491
      %v6082 = vunpack.c.l.b16 %v5492
      %v6083 = vunpack.c.h.b16 %v5492
      %v6084 = vunpack.c.l.b16 %v5493
      %v6085 = vunpack.c.l.b16 %v5494
      %v6086 = vunpack.c.h.b16 %v5494
      %v6087 = vunpack.c.l.b16 %v5495
      %v6088 = vunpack.c.h.b16 %v5495
      %v6089 = vunpack.c.l.b16 %v5496
      %v6090 = vunpack.c.h.b16 %v5496
      %v6091 = vunpack.c.l.b16 %v5497
      %v6092 = vunpack.c.l.b16 %v5498
      %v6093 = vunpack.c.h.b16 %v5498
      %v6094 = vunpack.c.l.b16 %v5499
      %v6095 = vunpack.c.h.b16 %v5499
      %v6096 = vunpack.c.l.b16 %v5500
      %v6097 = vunpack.c.h.b16 %v5500
      %v6098 = vunpack.c.l.b16 %v5501
      %v6099 = vunpack.c.l.b16 %v5502
      %v6100 = vunpack.c.h.b16 %v5502
      %v6101 = vunpack.c.l.b16 %v5503
      %v6102 = vunpack.c.h.b16 %v5503
      %v6103 = vunpack.c.l.b16 %v5504
      %v6104 = vunpack.c.h.b16 %v5504
      %v6105 = vunpack.c.l.b16 %v5505
      %v6106 = vunpack.c.l.b16 %v5506
      %v6107 = vunpack.c.h.b16 %v5506
      %v6108 = vunpack.c.l.b16 %v5507
      %v6109 = vunpack.c.h.b16 %v5507
      %v6110 = vunpack.c.l.b16 %v5508
      %v6111 = vunpack.c.h.b16 %v5508
      %v6112 = vunpack.c.l.b16 %v5509
      %v6113 = vunpack.c.l.b16 %v5510
      %v6114 = vunpack.c.h.b16 %v5510
      %v6115 = vunpack.c.l.b16 %v5511
      %v6116 = vunpack.c.h.b16 %v5511
      %v6117 = vunpack.c.l.b16 %v5512
      %v6118 = vunpack.c.h.b16 %v5512
      %v6119 = vunpack.c.l.b16 %v5513
      %v6120 = vunpack.c.l.b16 %v5514
      %v6121 = vunpack.c.h.b16 %v5514
      %v6122 = vunpack.c.l.b16 %v5515
      %v6123 = vunpack.c.h.b16 %v5515
      %v6124 = vunpack.c.l.b16 %v5516
      %v6125 = vunpack.c.h.b16 %v5516
      %v6126 = vunpack.c.l.b16 %v5517
      %v6127 = vunpack.c.l.b16 %v5518
      %v6128 = vunpack.c.h.b16 %v5518
      %v6129 = vunpack.c.l.b16 %v5519
      %v6130 = vunpack.c.h.b16 %v5519
      %v6131 = vunpack.c.l.b16 %v5520
      %v6132 = vunpack.c.h.b16 %v5520
      %v6133 = vunpack.c.l.b16 %v5521
      %v6134 = vunpack.c.l.b16 %v5522
      %v6135 = vunpack.c.h.b16 %v5522
      %v6136 = vunpack.c.l.b16 %v5523
      %v6137 = vunpack.c.h.b16 %v5523
      %v6138 = vunpack.c.l.b16 %v5524
      %v6139 = vunpack.c.h.b16 %v5524
      %v6140 = vunpack.c.l.b16 %v5525
      %v6141 = vunpack.c.l.b16 %v5526
      %v6142 = vunpack.c.h.b16 %v5526
      %v6143 = vunpack.c.l.b16 %v5527
      %v6144 = vunpack.c.h.b16 %v5527
      %v6145 = vunpack.c.l.b16 %v5528
      %v6146 = vunpack.c.h.b16 %v5528
      %v6147 = vunpack.c.l.b16 %v5529
      %v6148 = vunpack.c.l.b16 %v5530
      %v6149 = vunpack.c.h.b16 %v5530
      %v6150 = vunpack.c.l.b16 %v5531
      %v6151 = vunpack.c.h.b16 %v5531
      %v6152 = vunpack.c.l.b16 %v5532
      %v6153 = vunpack.c.h.b16 %v5532
      %v6154 = vunpack.c.l.b16 %v5533
      %v6155 = vunpack.c.l.b16 %v5534
      %v6156 = vunpack.c.h.b16 %v5534
      %v6157 = vunpack.c.l.b16 %v5535
      %v6158 = vunpack.c.h.b16 %v5535
      %v6159 = vunpack.c.l.b16 %v5536
      %v6160 = vunpack.c.h.b16 %v5536
      %v6161 = vunpack.c.l.b16 %v5537
      %v6162 = vunpack.c.l.b16 %v5538
      %v6163 = vunpack.c.h.b16 %v5538
      %v6164 = vunpack.c.l.b16 %v5539
      %v6165 = vunpack.c.h.b16 %v5539
      %v6166 = vunpack.c.l.b16 %v5540
      %v6167 = vunpack.c.h.b16 %v5540
      %v6168 = vunpack.c.l.b16 %v5541
      %v6169 = vunpack.c.l.b16 %v5542
      %v6170 = vunpack.c.h.b16 %v5542
      %v6171 = vunpack.c.l.b16 %v5543
      %v6172 = vunpack.c.h.b16 %v5543
      %v6173 = vunpack.c.l.b16 %v5544
      %v6174 = vunpack.c.h.b16 %v5544
      %v6175 = vunpack.c.l.b16 %v5545
      %v6176 = vunpack.c.l.b16 %v5546
      %v6177 = vunpack.c.h.b16 %v5546
      %v6178 = vunpack.c.l.b16 %v5547
      %v6179 = vunpack.c.h.b16 %v5547
      %v6180 = vunpack.c.l.b16 %v5548
      %v6181 = vunpack.c.h.b16 %v5548
      %v6182 = vunpack.c.l.b16 %v5549
      %v6183 = vunpack.c.l.b16 %v5550
      %v6184 = vunpack.c.h.b16 %v5550
      %v6185 = vunpack.c.l.b16 %v5551
      %v6186 = vunpack.c.h.b16 %v5551
      %v6187 = vunpack.c.l.b16 %v5552
      %v6188 = vunpack.c.h.b16 %v5552
      %v6189 = vunpack.c.l.b16 %v5553
      %v6190 = vunpack.c.l.b16 %v5554
      %v6191 = vunpack.c.h.b16 %v5554
      %v6192 = vunpack.c.l.b16 %v5555
      %v6193 = vunpack.c.h.b16 %v5555
      %v6194 = vunpack.c.l.b16 %v5556
      %v6195 = vunpack.c.h.b16 %v5556
      %v6196 = vunpack.c.l.b16 %v5557
      %v6197 = vunpack.c.l.b16 %v5558
      %v6198 = vunpack.c.h.b16 %v5558
      %v6199 = vunpack.c.l.b16 %v5559
      %v6200 = vunpack.c.h.b16 %v5559
      %v6201 = vunpack.c.l.b16 %v5560
      %v6202 = vunpack.c.h.b16 %v5560
      %v6203 = vunpack.c.l.b16 %v5561
      %v6204 = vunpack.c.l.b16 %v5562
      %v6205 = vunpack.c.h.b16 %v5562
      %v6206 = vunpack.c.l.b16 %v5563
      %v6207 = vunpack.c.h.b16 %v5563
      %v6208 = vunpack.c.l.b16 %v5564
      %v6209 = vunpack.c.h.b16 %v5564
      %v6210 = vunpack.c.l.b16 %v5565
      %v6211 = vunpack.c.l.b16 %v5566
      %v6212 = vunpack.c.h.b16 %v5566
      %v6213 = vunpack.c.l.b16 %v5567
      %v6214 = vunpack.c.h.b16 %v5567
      %v6215 = vunpack.c.l.b16 %v5568
      %v6216 = vunpack.c.h.b16 %v5568
      %v6217 = vunpack.c.l.b16 %v5569
      %v6218 = vunpack.c.l.b16 %v5570
      %v6219 = vunpack.c.h.b16 %v5570
      %v6220 = vunpack.c.l.b16 %v5571
      %v6221 = vunpack.c.h.b16 %v5571
      %v6222 = vunpack.c.l.b16 %v5572
      %v6223 = vunpack.c.h.b16 %v5572
      %v6224 = vunpack.c.l.b16 %v5573
      %v6225 = vunpack.c.l.b16 %v5574
      %v6226 = vunpack.c.h.b16 %v5574
      %v6227 = vunpack.c.l.b16 %v5575
      %v6228 = vunpack.c.h.b16 %v5575
      %v6229 = vunpack.c.l.b16 %v5576
      %v6230 = vunpack.c.h.b16 %v5576
      %v6231 = vunpack.c.l.b16 %v5577
      %v6232 = vunpack.c.l.b16 %v5578
      %v6233 = vunpack.c.h.b16 %v5578
      %v6234 = vunpack.c.l.b16 %v5579
      %v6235 = vunpack.c.h.b16 %v5579
      %v6236 = vunpack.c.l.b16 %v5580
      %v6237 = vunpack.c.h.b16 %v5580
      %v6238 = vunpack.c.l.b16 %v5581
      %v6239 = vunpack.c.l.b16 %v5582
      %v6240 = vunpack.c.h.b16 %v5582
      %v6241 = vunpack.c.l.b16 %v5583
      %v6242 = vunpack.c.h.b16 %v5583
      %v6243 = vunpack.c.l.b16 %v5584
      %v6244 = vunpack.c.h.b16 %v5584
      %v6245 = vunpack.c.l.b16 %v5585
      %v6246 = vunpack.c.l.b16 %v5586
      %v6247 = vunpack.c.h.b16 %v5586
      %v6248 = vunpack.c.l.b16 %v5587
      %v6249 = vunpack.c.h.b16 %v5587
      %v6250 = vunpack.c.l.b16 %v5588
      %v6251 = vunpack.c.h.b16 %v5588
      %v6252 = vunpack.c.l.b16 %v5589
      %v6253 = vunpack.c.l.b16 %v5590
      %v6254 = vunpack.c.h.b16 %v5590
      %v6255 = vunpack.c.l.b16 %v5591
      %v6256 = vunpack.c.h.b16 %v5591
      %v6257 = vunpack.c.l.b16 %v5592
      %v6258 = vunpack.c.h.b16 %v5592
      %v6259 = vunpack.c.l.b16 %v5593
      %v6260 = vunpack.c.l.b16 %v5594
      %v6261 = vunpack.c.h.b16 %v5594
      %v6262 = vunpack.c.l.b16 %v5595
      %v6263 = vunpack.c.h.b16 %v5595
      %v6264 = vunpack.c.l.b16 %v5596
      %v6265 = vunpack.c.h.b16 %v5596
      %v6266 = vunpack.c.l.b16 %v5597
      %v6267 = vunpack.c.l.b16 %v5598
      %v6268 = vunpack.c.h.b16 %v5598
      %v6269 = vunpack.c.l.b16 %v5599
      %v6270 = vunpack.c.h.b16 %v5599
      %v6271 = vunpack.c.l.b16 %v5600
      %v6272 = vunpack.c.h.b16 %v5600
      %v6273 = vunpack.c.l.b16 %v5601
      %v6274 = vunpack.c.l.b16 %v5602
      %v6275 = vunpack.c.h.b16 %v5602
      %v6276 = vunpack.c.l.b16 %v5603
      %v6277 = vunpack.c.h.b16 %v5603
      %v6278 = vunpack.c.l.b16 %v5604
      %v6279 = vunpack.c.h.b16 %v5604
      %v6280 = vunpack.c.l.b16 %v5605
      %v6281 = vunpack.c.l.b16 %v5606
      %v6282 = vunpack.c.h.b16 %v5606
      %v6283 = vunpack.c.l.b16 %v5607
      %v6284 = vunpack.c.h.b16 %v5607
      %v6285 = vunpack.c.l.b16 %v5608
      %v6286 = vunpack.c.h.b16 %v5608
      %v6287 = vunpack.c.l.b16 %v5609
      %v6288 = vunpack.c.l.b16 %v5610
      %v6289 = vunpack.c.h.b16 %v5610
      %v6290 = vunpack.c.l.b16 %v5611
      %v6291 = vunpack.c.h.b16 %v5611
      %v6292 = vunpack.c.l.b16 %v5612
      %v6293 = vunpack.c.h.b16 %v5612
      %v6294 = vunpack.c.l.b16 %v5613
      %v6295 = vunpack.c.l.b16 %v5614
      %v6296 = vunpack.c.h.b16 %v5614
      %v6297 = vunpack.c.l.b16 %v5615
      %v6298 = vunpack.c.h.b16 %v5615
      %v6299 = vunpack.c.l.b16 %v5616
      %v6300 = vunpack.c.h.b16 %v5616
      %v6301 = vunpack.c.l.b16 %v5617
      %v6302 = vunpack.c.l.b16 %v5618
      %v6303 = vunpack.c.h.b16 %v5618
      %v6304 = vunpack.c.l.b16 %v5619
      %v6305 = vunpack.c.h.b16 %v5619
      %v6306 = vunpack.c.l.b16 %v5620
      %v6307 = vunpack.c.h.b16 %v5620
      %v6308 = vunpack.c.l.b16 %v5621
      %v6309 = vunpack.c.l.b16 %v5622
      %v6310 = vunpack.c.h.b16 %v5622
      %v6311 = vunpack.c.l.b16 %v5623
      %v6312 = vunpack.c.h.b16 %v5623
      %v6313 = vunpack.c.l.b16 %v5624
      %v6314 = vunpack.c.h.b16 %v5624
      %v6315 = vunpack.c.l.b16 %v5625
      %v6316 = vunpack.c.l.b16 %v5626
      %v6317 = vunpack.c.h.b16 %v5626
      %v6318 = vunpack.c.l.b16 %v5627
      %v6319 = vunpack.c.h.b16 %v5627
      %v6320 = vunpack.c.l.b16 %v5628
      %v6321 = vunpack.c.h.b16 %v5628
      %v6322 = vunpack.c.l.b16 %v5629
      %v6323 = vunpack.c.l.b16 %v5630
      %v6324 = vunpack.c.h.b16 %v5630
      %v6325 = vunpack.c.l.b16 %v5631
      %v6326 = vunpack.c.h.b16 %v5631
      %v6327 = vunpack.c.l.b16 %v5632
      %v6328 = vunpack.c.h.b16 %v5632
      %v6329 = vunpack.c.l.b16 %v5633
      %v6330 = vunpack.c.l.b16 %v5634
      %v6331 = vunpack.c.h.b16 %v5634
      %v6332 = vunpack.c.l.b16 %v5635
      %v6333 = vunpack.c.h.b16 %v5635
      %v6334 = vunpack.c.l.b16 %v5636
      %v6335 = vunpack.c.h.b16 %v5636
      %v6336 = vunpack.c.l.b16 %v5637
      %v6337 = vunpack.c.l.b16 %v5638
      %v6338 = vunpack.c.h.b16 %v5638
      %v6339 = vunpack.c.l.b16 %v5639
      %v6340 = vunpack.c.h.b16 %v5639
      %v6341 = vunpack.c.l.b16 %v5640
      %v6342 = vunpack.c.h.b16 %v5640
      %v6343 = vunpack.c.l.b16 %v5641
      %v6344 = vunpack.c.l.b16 %v5642
      %v6345 = vunpack.c.h.b16 %v5642
      %v6346 = vunpack.c.l.b16 %v5643
      %v6347 = vunpack.c.h.b16 %v5643
      %v6348 = vunpack.c.l.b16 %v5644
      %v6349 = vunpack.c.h.b16 %v5644
      %v6350 = vunpack.c.l.b16 %v5645
      %v6351 = vunpack.c.l.b16 %v5646
      %v6352 = vunpack.c.h.b16 %v5646
      %v6353 = vunpack.c.l.b16 %v5647
      %v6354 = vunpack.c.h.b16 %v5647
      %v6355 = vunpack.c.l.b16 %v5648
      %v6356 = vunpack.c.h.b16 %v5648
      %v6357 = vunpack.c.l.b16 %v5649
      %v6358 = vunpack.c.l.b16 %v5650
      %v6359 = vunpack.c.h.b16 %v5650
      %v6360 = vunpack.c.l.b16 %v5651
      %v6361 = vunpack.c.h.b16 %v5651
      %v6362 = vunpack.c.l.b16 %v5652
      %v6363 = vunpack.c.h.b16 %v5652
      %v6364 = vunpack.c.l.b16 %v5653
      %v6365 = vunpack.c.l.b16 %v5654
      %v6366 = vunpack.c.h.b16 %v5654
      %v6367 = vunpack.c.l.b16 %v5655
      %v6368 = vunpack.c.h.b16 %v5655
      %v6369 = vunpack.c.l.b16 %v5656
      %v6370 = vunpack.c.h.b16 %v5656
      %v6371 = vunpack.c.l.b16 %v5657
      %v6372 = vunpack.c.l.b16 %v5658
      %v6373 = vunpack.c.h.b16 %v5658
      %v6374 = vunpack.c.l.b16 %v5659
      %v6375 = vunpack.c.h.b16 %v5659
      %v6376 = vunpack.c.l.b16 %v5660
      %v6377 = vunpack.c.h.b16 %v5660
      %v6378 = vunpack.c.l.b16 %v5661
      %v6379 = vunpack.c.l.b16 %v5662
      %v6380 = vunpack.c.h.b16 %v5662
      %v6381 = vunpack.c.l.b16 %v5663
      %v6382 = vunpack.c.h.b16 %v5663
      %v6383 = vunpack.c.l.b16 %v5664
      %v6384 = vunpack.c.h.b16 %v5664
      %v6385 = vunpack.c.l.b16 %v5665
      %v6386 = vunpack.c.l.b16 %v5666
      %v6387 = vunpack.c.h.b16 %v5666
      %v6388 = vunpack.c.l.b16 %v5667
      %v6389 = vunpack.c.h.b16 %v5667
      %v6390 = vunpack.c.l.b16 %v5668
      %v6391 = vunpack.c.h.b16 %v5668
      %v6392 = vunpack.c.l.b16 %v5669
      %v6393 = vunpack.c.l.b16 %v5670
      %v6394 = vunpack.c.h.b16 %v5670
      %v6395 = vunpack.c.l.b16 %v5671
      %v6396 = vunpack.c.h.b16 %v5671
      %v6397 = vunpack.c.l.b16 %v5672
      %v6398 = vunpack.c.h.b16 %v5672
      %v6399 = vunpack.c.l.b16 %v5673
      %v6400 = vunpack.c.l.b16 %v5674
      %v6401 = vunpack.c.h.b16 %v5674
      %v6402 = vunpack.c.l.b16 %v5675
      %v6403 = vunpack.c.h.b16 %v5675
      %v6404 = vunpack.c.l.b16 %v5676
      %v6405 = vunpack.c.h.b16 %v5676
      %v6406 = vunpack.c.l.b16 %v5677
      %v6407 = vunpack.c.l.b16 %v5678
      %v6408 = vunpack.c.h.b16 %v5678
      %v6409 = vunpack.c.l.b16 %v5679
      %v6410 = vunpack.c.h.b16 %v5679
      %v6411 = vunpack.c.l.b16 %v5680
      %v6412 = vunpack.c.h.b16 %v5680
      %v6413 = vunpack.c.l.b16 %v5681
      %v6414 = vunpack.c.l.b16 %v5682
      %v6415 = vunpack.c.h.b16 %v5682
      %v6416 = vunpack.c.l.b16 %v5683
      %v6417 = vunpack.c.h.b16 %v5683
      %v6418 = vunpack.c.l.b16 %v5684
      %v6419 = vunpack.c.h.b16 %v5684
      %v6420 = vunpack.c.l.b16 %v5685
      %v6421 = vunpack.c.l.b16 %v5686
      %v6422 = vunpack.c.h.b16 %v5686
      %v6423 = vunpack.c.l.b16 %v5687
      %v6424 = vunpack.c.h.b16 %v5687
      %v6425 = vunpack.c.l.b16 %v5688
      %v6426 = vunpack.c.h.b16 %v5688
      %v6427 = vunpack.c.l.b16 %v5689
      %v6428 = vunpack.c.l.b16 %v5690
      %v6429 = vunpack.c.h.b16 %v5690
      %v6430 = vunpack.c.l.b16 %v5691
      %v6431 = vunpack.c.h.b16 %v5691
      %v6432 = vunpack.c.l.b16 %v5692
      %v6433 = vunpack.c.h.b16 %v5692
      %v6434 = vunpack.c.l.b16 %v5693
      %v6435 = vpack.c.b16 %v5994, %v5987
      %v6436 = vpack.c.b16 %v5995, %v5988
      %v6437 = vpack.c.b16 %v5996, %v5989
      %v6438 = vpack.c.b16 %v5997, %v5990
      %v6439 = vpack.c.b16 %v5998, %v5991
      %v6440 = vpack.c.b16 %v5999, %v5992
      %v6441 = vpack.c.b16 %v6000, %v5993
      %v6442 = vpack.c.b16 %v6008, %v6001
      %v6443 = vpack.c.b16 %v6009, %v6002
      %v6444 = vpack.c.b16 %v6010, %v6003
      %v6445 = vpack.c.b16 %v6011, %v6004
      %v6446 = vpack.c.b16 %v6012, %v6005
      %v6447 = vpack.c.b16 %v6013, %v6006
      %v6448 = vpack.c.b16 %v6014, %v6007
      %v6449 = vpack.c.b16 %v6022, %v6015
      %v6450 = vpack.c.b16 %v6023, %v6016
      %v6451 = vpack.c.b16 %v6024, %v6017
      %v6452 = vpack.c.b16 %v6025, %v6018
      %v6453 = vpack.c.b16 %v6026, %v6019
      %v6454 = vpack.c.b16 %v6027, %v6020
      %v6455 = vpack.c.b16 %v6028, %v6021
      %v6456 = vpack.c.b16 %v6036, %v6029
      %v6457 = vpack.c.b16 %v6037, %v6030
      %v6458 = vpack.c.b16 %v6038, %v6031
      %v6459 = vpack.c.b16 %v6039, %v6032
      %v6460 = vpack.c.b16 %v6040, %v6033
      %v6461 = vpack.c.b16 %v6041, %v6034
      %v6462 = vpack.c.b16 %v6042, %v6035
      %v6463 = vpack.c.b16 %v6050, %v6043
      %v6464 = vpack.c.b16 %v6051, %v6044
      %v6465 = vpack.c.b16 %v6052, %v6045
      %v6466 = vpack.c.b16 %v6053, %v6046
      %v6467 = vpack.c.b16 %v6054, %v6047
      %v6468 = vpack.c.b16 %v6055, %v6048
      %v6469 = vpack.c.b16 %v6056, %v6049
      %v6470 = vpack.c.b16 %v6064, %v6057
      %v6471 = vpack.c.b16 %v6065, %v6058
      %v6472 = vpack.c.b16 %v6066, %v6059
      %v6473 = vpack.c.b16 %v6067, %v6060
      %v6474 = vpack.c.b16 %v6068, %v6061
      %v6475 = vpack.c.b16 %v6069, %v6062
      %v6476 = vpack.c.b16 %v6070, %v6063
      %v6477 = vpack.c.b16 %v6078, %v6071
      %v6478 = vpack.c.b16 %v6079, %v6072
      %v6479 = vpack.c.b16 %v6080, %v6073
      %v6480 = vpack.c.b16 %v6081, %v6074
      %v6481 = vpack.c.b16 %v6082, %v6075
      %v6482 = vpack.c.b16 %v6083, %v6076
      %v6483 = vpack.c.b16 %v6084, %v6077
      %v6484 = vpack.c.b16 %v6092, %v6085
      %v6485 = vpack.c.b16 %v6093, %v6086
      %v6486 = vpack.c.b16 %v6094, %v6087
      %v6487 = vpack.c.b16 %v6095, %v6088
      %v6488 = vpack.c.b16 %v6096, %v6089
      %v6489 = vpack.c.b16 %v6097, %v6090
      %v6490 = vpack.c.b16 %v6098, %v6091
      %v6491 = vpack.c.b16 %v6106, %v6099
      %v6492 = vpack.c.b16 %v6107, %v6100
      %v6493 = vpack.c.b16 %v6108, %v6101
      %v6494 = vpack.c.b16 %v6109, %v6102
      %v6495 = vpack.c.b16 %v6110, %v6103
      %v6496 = vpack.c.b16 %v6111, %v6104
      %v6497 = vpack.c.b16 %v6112, %v6105
      %v6498 = vpack.c.b16 %v6120, %v6113
      %v6499 = vpack.c.b16 %v6121, %v6114
      %v6500 = vpack.c.b16 %v6122, %v6115
      %v6501 = vpack.c.b16 %v6123, %v6116
      %v6502 = vpack.c.b16 %v6124, %v6117
      %v6503 = vpack.c.b16 %v6125, %v6118
      %v6504 = vpack.c.b16 %v6126, %v6119
      %v6505 = vpack.c.b16 %v6134, %v6127
      %v6506 = vpack.c.b16 %v6135, %v6128
      %v6507 = vpack.c.b16 %v6136, %v6129
      %v6508 = vpack.c.b16 %v6137, %v6130
      %v6509 = vpack.c.b16 %v6138, %v6131
      %v6510 = vpack.c.b16 %v6139, %v6132
      %v6511 = vpack.c.b16 %v6140, %v6133
      %v6512 = vpack.c.b16 %v6148, %v6141
      %v6513 = vpack.c.b16 %v6149, %v6142
      %v6514 = vpack.c.b16 %v6150, %v6143
      %v6515 = vpack.c.b16 %v6151, %v6144
      %v6516 = vpack.c.b16 %v6152, %v6145
      %v6517 = vpack.c.b16 %v6153, %v6146
      %v6518 = vpack.c.b16 %v6154, %v6147
      %v6519 = vpack.c.b16 %v6162, %v6155
      %v6520 = vpack.c.b16 %v6163, %v6156
      %v6521 = vpack.c.b16 %v6164, %v6157
      %v6522 = vpack.c.b16 %v6165, %v6158
      %v6523 = vpack.c.b16 %v6166, %v6159
      %v6524 = vpack.c.b16 %v6167, %v6160
      %v6525 = vpack.c.b16 %v6168, %v6161
      %v6526 = vpack.c.b16 %v6176, %v6169
      %v6527 = vpack.c.b16 %v6177, %v6170
      %v6528 = vpack.c.b16 %v6178, %v6171
      %v6529 = vpack.c.b16 %v6179, %v6172
      %v6530 = vpack.c.b16 %v6180, %v6173
      %v6531 = vpack.c.b16 %v6181, %v6174
      %v6532 = vpack.c.b16 %v6182, %v6175
      %v6533 = vpack.c.b16 %v6190, %v6183
      %v6534 = vpack.c.b16 %v6191, %v6184
      %v6535 = vpack.c.b16 %v6192, %v6185
      %v6536 = vpack.c.b16 %v6193, %v6186
      %v6537 = vpack.c.b16 %v6194, %v6187
      %v6538 = vpack.c.b16 %v6195, %v6188
      %v6539 = vpack.c.b16 %v6196, %v6189
      %v6540 = vpack.c.b16 %v6204, %v6197
      %v6541 = vpack.c.b16 %v6205, %v6198
      %v6542 = vpack.c.b16 %v6206, %v6199
      %v6543 = vpack.c.b16 %v6207, %v6200
      %v6544 = vpack.c.b16 %v6208, %v6201
      %v6545 = vpack.c.b16 %v6209, %v6202
      %v6546 = vpack.c.b16 %v6210, %v6203
      %v6547 = vpack.c.b16 %v6218, %v6211
      %v6548 = vpack.c.b16 %v6219, %v6212
      %v6549 = vpack.c.b16 %v6220, %v6213
      %v6550 = vpack.c.b16 %v6221, %v6214
      %v6551 = vpack.c.b16 %v6222, %v6215
      %v6552 = vpack.c.b16 %v6223, %v6216
      %v6553 = vpack.c.b16 %v6224, %v6217
      %v6554 = vpack.c.b16 %v6232, %v6225
      %v6555 = vpack.c.b16 %v6233, %v6226
      %v6556 = vpack.c.b16 %v6234, %v6227
      %v6557 = vpack.c.b16 %v6235, %v6228
      %v6558 = vpack.c.b16 %v6236, %v6229
      %v6559 = vpack.c.b16 %v6237, %v6230
      %v6560 = vpack.c.b16 %v6238, %v6231
      %v6561 = vpack.c.b16 %v6246, %v6239
      %v6562 = vpack.c.b16 %v6247, %v6240
      %v6563 = vpack.c.b16 %v6248, %v6241
      %v6564 = vpack.c.b16 %v6249, %v6242
      %v6565 = vpack.c.b16 %v6250, %v6243
      %v6566 = vpack.c.b16 %v6251, %v6244
      %v6567 = vpack.c.b16 %v6252, %v6245
      %v6568 = vpack.c.b16 %v6260, %v6253
      %v6569 = vpack.c.b16 %v6261, %v6254
      %v6570 = vpack.c.b16 %v6262, %v6255
      %v6571 = vpack.c.b16 %v6263, %v6256
      %v6572 = vpack.c.b16 %v6264, %v6257
      %v6573 = vpack.c.b16 %v6265, %v6258
      %v6574 = vpack.c.b16 %v6266, %v6259
      %v6575 = vpack.c.b16 %v6274, %v6267
      %v6576 = vpack.c.b16 %v6275, %v6268
      %v6577 = vpack.c.b16 %v6276, %v6269
      %v6578 = vpack.c.b16 %v6277, %v6270
      %v6579 = vpack.c.b16 %v6278, %v6271
      %v6580 = vpack.c.b16 %v6279, %v6272
      %v6581 = vpack.c.b16 %v6280, %v6273
      %v6582 = vpack.c.b16 %v6288, %v6281
      %v6583 = vpack.c.b16 %v6289, %v6282
      %v6584 = vpack.c.b16 %v6290, %v6283
      %v6585 = vpack.c.b16 %v6291, %v6284
      %v6586 = vpack.c.b16 %v6292, %v6285
      %v6587 = vpack.c.b16 %v6293, %v6286
      %v6588 = vpack.c.b16 %v6294, %v6287
      %v6589 = vpack.c.b16 %v6302, %v6295
      %v6590 = vpack.c.b16 %v6303, %v6296
      %v6591 = vpack.c.b16 %v6304, %v6297
      %v6592 = vpack.c.b16 %v6305, %v6298
      %v6593 = vpack.c.b16 %v6306, %v6299
      %v6594 = vpack.c.b16 %v6307, %v6300
      %v6595 = vpack.c.b16 %v6308, %v6301
      %v6596 = vpack.c.b16 %v6316, %v6309
      %v6597 = vpack.c.b16 %v6317, %v6310
      %v6598 = vpack.c.b16 %v6318, %v6311
      %v6599 = vpack.c.b16 %v6319, %v6312
      %v6600 = vpack.c.b16 %v6320, %v6313
      %v6601 = vpack.c.b16 %v6321, %v6314
      %v6602 = vpack.c.b16 %v6322, %v6315
      %v6603 = vpack.c.b16 %v6330, %v6323
      %v6604 = vpack.c.b16 %v6331, %v6324
      %v6605 = vpack.c.b16 %v6332, %v6325
      %v6606 = vpack.c.b16 %v6333, %v6326
      %v6607 = vpack.c.b16 %v6334, %v6327
      %v6608 = vpack.c.b16 %v6335, %v6328
      %v6609 = vpack.c.b16 %v6336, %v6329
      %v6610 = vpack.c.b16 %v6344, %v6337
      %v6611 = vpack.c.b16 %v6345, %v6338
      %v6612 = vpack.c.b16 %v6346, %v6339
      %v6613 = vpack.c.b16 %v6347, %v6340
      %v6614 = vpack.c.b16 %v6348, %v6341
      %v6615 = vpack.c.b16 %v6349, %v6342
      %v6616 = vpack.c.b16 %v6350, %v6343
      %v6617 = vpack.c.b16 %v6358, %v6351
      %v6618 = vpack.c.b16 %v6359, %v6352
      %v6619 = vpack.c.b16 %v6360, %v6353
      %v6620 = vpack.c.b16 %v6361, %v6354
      %v6621 = vpack.c.b16 %v6362, %v6355
      %v6622 = vpack.c.b16 %v6363, %v6356
      %v6623 = vpack.c.b16 %v6364, %v6357
      %v6624 = vpack.c.b16 %v6372, %v6365
      %v6625 = vpack.c.b16 %v6373, %v6366
      %v6626 = vpack.c.b16 %v6374, %v6367
      %v6627 = vpack.c.b16 %v6375, %v6368
      %v6628 = vpack.c.b16 %v6376, %v6369
      %v6629 = vpack.c.b16 %v6377, %v6370
      %v6630 = vpack.c.b16 %v6378, %v6371
      %v6631 = vpack.c.b16 %v6386, %v6379
      %v6632 = vpack.c.b16 %v6387, %v6380
      %v6633 = vpack.c.b16 %v6388, %v6381
      %v6634 = vpack.c.b16 %v6389, %v6382
      %v6635 = vpack.c.b16 %v6390, %v6383
      %v6636 = vpack.c.b16 %v6391, %v6384
      %v6637 = vpack.c.b16 %v6392, %v6385
      %v6638 = vpack.c.b16 %v6400, %v6393
      %v6639 = vpack.c.b16 %v6401, %v6394
      %v6640 = vpack.c.b16 %v6402, %v6395
      %v6641 = vpack.c.b16 %v6403, %v6396
      %v6642 = vpack.c.b16 %v6404, %v6397
      %v6643 = vpack.c.b16 %v6405, %v6398
      %v6644 = vpack.c.b16 %v6406, %v6399
      %v6645 = vpack.c.b16 %v6414, %v6407
      %v6646 = vpack.c.b16 %v6415, %v6408
      %v6647 = vpack.c.b16 %v6416, %v6409
      %v6648 = vpack.c.b16 %v6417, %v6410
      %v6649 = vpack.c.b16 %v6418, %v6411
      %v6650 = vpack.c.b16 %v6419, %v6412
      %v6651 = vpack.c.b16 %v6420, %v6413
      %v6652 = vpack.c.b16 %v6428, %v6421
      %v6653 = vpack.c.b16 %v6429, %v6422
      %v6654 = vpack.c.b16 %v6430, %v6423
      %v6655 = vpack.c.b16 %v6431, %v6424
      %v6656 = vpack.c.b16 %v6432, %v6425
      %v6657 = vpack.c.b16 %v6433, %v6426
      %v6658 = vpack.c.b16 %v6434, %v6427
      %6883 = vmatprep.subr.bf16.mxu0 %v6436
      %6884 = vmatpush1.bf16.msra.mxu0 %v6435
      %6885 = vmatprep.subr.bf16.mxu0 %v6443
      %6886 = vmatpush1.bf16.msra.mxu0 %v6442
      %6887 = vmatprep.subr.bf16.mxu0 %v6450
      %6888 = vmatpush1.bf16.msra.mxu0 %v6449
      %6889 = vmatprep.subr.bf16.mxu0 %v6457
      %6890 = vmatpush1.bf16.msra.mxu0 %v6456
      %6891 = vmatprep.subr.bf16.mxu0 %v6464
      %6892 = vmatpush1.bf16.msra.mxu0 %v6463
      %6893 = vmatprep.subr.bf16.mxu0 %v6471
      %6894 = vmatpush1.bf16.msra.mxu0 %v6470
      %6895 = vmatprep.subr.bf16.mxu0 %v6478
      %6896 = vmatpush1.bf16.msra.mxu0 %v6477
      %6897 = vmatprep.subr.bf16.mxu0 %v6485
      %6898 = vmatpush1.bf16.msra.mxu0 %v6484
      %6899 = vmatprep.subr.bf16.mxu0 %v6492
      %6900 = vmatpush1.bf16.msra.mxu0 %v6491
      %6901 = vmatprep.subr.bf16.mxu0 %v6499
      %6902 = vmatpush1.bf16.msra.mxu0 %v6498
      %6903 = vmatprep.subr.bf16.mxu0 %v6506
      %6904 = vmatpush1.bf16.msra.mxu0 %v6505
      %6905 = vmatprep.subr.bf16.mxu0 %v6513
      %6906 = vmatpush1.bf16.msra.mxu0 %v6512
      %6907 = vmatprep.subr.bf16.mxu0 %v6520
      %6908 = vmatpush1.bf16.msra.mxu0 %v6519
      %6909 = vmatprep.subr.bf16.mxu0 %v6527
      %6910 = vmatpush1.bf16.msra.mxu0 %v6526
      %6911 = vmatprep.subr.bf16.mxu0 %v6534
      %6912 = vmatpush1.bf16.msra.mxu0 %v6533
      %6913 = vmatprep.subr.bf16.mxu0 %v6541
      %6914 = vmatpush1.bf16.msra.mxu0 %v6540
      %6915 = vmatprep.mubr.bf16.mxu0 %v5375
      %6916 = vmatmul.mubr.bf16.gmra.mrb[0].mxu0 %v5374
      %v6917 = vpop.f32.mrb[0].mxu0
      %v6918 = vadd.f32 %v5699, %v6917
      %v6919 = vpop.f32.mrb[0].mxu0
      %v6920 = vadd.f32 %v5703, %v6919
      %v6921 = vpop.f32.mrb[0].mxu0
      %v6922 = vadd.f32 %v5699, %v6921
      %v6923 = vpop.f32.mrb[0].mxu0
      %v6924 = vadd.f32 %v5703, %v6923
      %6925 = vmatprep.mubr.bf16.mxu0 %v5379
      %6926 = vmatmul.mubr.bf16.gmra.mrb[0].mxu0 %v5378
      %v6927 = vpop.f32.mrb[0].mxu0
      %v6928 = vadd.f32 %v5699, %v6927
      %v6929 = vpop.f32.mrb[0].mxu0
      %v6930 = vadd.f32 %v5703, %v6929
      %v6931 = vpop.f32.mrb[0].mxu0
      %v6932 = vadd.f32 %v5699, %v6931
      %v6933 = vpop.f32.mrb[0].mxu0
      %v6934 = vadd.f32 %v5703, %v6933
      %6935 = vmatprep.mubr.bf16.mxu0 %v5383
      %6936 = vmatmul.mubr.bf16.gmra.mrb[0].mxu0 %v5382
      %v6937 = vpop.f32.mrb[0].mxu0
      %v6938 = vadd.f32 %v5699, %v6937
      %v6939 = vpop.f32.mrb[0].mxu0
      %v6940 = vadd.f32 %v5703, %v6939
      %v6941 = vpop.f32.mrb[0].mxu0
      %v6942 = vadd.f32 %v5699, %v6941
      %v6943 = vpop.f32.mrb[0].mxu0
      %v6944 = vadd.f32 %v5703, %v6943
      %6945 = vmatprep.mubr.bf16.mxu0 %v5387
      %6946 = vmatmul.mubr.bf16.gmra.mrb[0].mxu0 %v5386
      %v6947 = vpop.f32.mrb[0].mxu0
      %v6948 = vadd.f32 %v5699, %v6947
      %v6949 = vpop.f32.mrb[0].mxu0
      %v6950 = vadd.f32 %v5703, %v6949
      %v6951 = vpop.f32.mrb[0].mxu0
      %v6952 = vadd.f32 %v5699, %v6951
      %v6953 = vpop.f32.mrb[0].mxu0
      %v6954 = vadd.f32 %v5703, %v6953
      %6955 = vmatprep.mubr.bf16.mxu0 %v5391
      %6956 = vmatmul.mubr.bf16.gmra.mrb[0].mxu0 %v5390
      %v6957 = vpop.f32.mrb[0].mxu0
      %v6958 = vadd.f32 %v5699, %v6957
      %v6959 = vpop.f32.mrb[0].mxu0
      %v6960 = vadd.f32 %v5703, %v6959
      %v6961 = vpop.f32.mrb[0].mxu0
      %v6962 = vadd.f32 %v5699, %v6961
      %v6963 = vpop.f32.mrb[0].mxu0
      %v6964 = vadd.f32 %v5703, %v6963
      %6965 = vmatprep.mubr.bf16.mxu0 %v5395
      %6966 = vmatmul.mubr.bf16.gmra.mrb[0].mxu0 %v5394
      %v6967 = vpop.f32.mrb[0].mxu0
      %v6968 = vadd.f32 %v5699, %v6967
      %v6969 = vpop.f32.mrb[0].mxu0
      %v6970 = vadd.f32 %v5703, %v6969
      %v6971 = vpop.f32.mrb[0].mxu0
      %v6972 = vadd.f32 %v5699, %v6971
      %v6973 = vpop.f32.mrb[0].mxu0
      %v6974 = vadd.f32 %v5703, %v6973
      %6975 = vmatprep.mubr.bf16.mxu0 %v5399
      %6976 = vmatmul.mubr.bf16.gmra.mrb[0].mxu0 %v5398
      %v6977 = vpop.f32.mrb[0].mxu0
      %v6978 = vadd.f32 %v5699, %v6977
      %v6979 = vpop.f32.mrb[0].mxu0
      %v6980 = vadd.f32 %v5703, %v6979
      %v6981 = vpop.f32.mrb[0].mxu0
      %v6982 = vadd.f32 %v5699, %v6981
      %v6983 = vpop.f32.mrb[0].mxu0
      %v6984 = vadd.f32 %v5703, %v6983
      %6985 = vmatprep.mubr.bf16.mxu0 %v5403
      %6986 = vmatmul.mubr.bf16.gmra.mrb[0].mxu0 %v5402
      %v6987 = vpop.f32.mrb[0].mxu0
      %v6988 = vadd.f32 %v5699, %v6987
      %v6989 = vpop.f32.mrb[0].mxu0
      %v6990 = vadd.f32 %v5703, %v6989
      %v6991 = vpop.f32.mrb[0].mxu0
      %v6992 = vadd.f32 %v5699, %v6991
      %v6993 = vpop.f32.mrb[0].mxu0
      %v6994 = vadd.f32 %v5703, %v6993
      %6995 = vmatprep.mubr.bf16.mxu0 %v5407
      %6996 = vmatmul.mubr.bf16.gmra.mrb[0].mxu0 %v5406
      %v6997 = vpop.f32.mrb[0].mxu0
      %v6998 = vadd.f32 %v5699, %v6997
      %v6999 = vpop.f32.mrb[0].mxu0
      %v7000 = vadd.f32 %v5703, %v6999
      %v7001 = vpop.f32.mrb[0].mxu0
      %v7002 = vadd.f32 %v5699, %v7001
      %v7003 = vpop.f32.mrb[0].mxu0
      %v7004 = vadd.f32 %v5703, %v7003
      %7005 = vmatprep.mubr.bf16.mxu0 %v5411
      %7006 = vmatmul.mubr.bf16.gmra.mrb[0].mxu0 %v5410
      %v7007 = vpop.f32.mrb[0].mxu0
      %v7008 = vadd.f32 %v5699, %v7007
      %v7009 = vpop.f32.mrb[0].mxu0
      %v7010 = vadd.f32 %v5703, %v7009
      %v7011 = vpop.f32.mrb[0].mxu0
      %v7012 = vadd.f32 %v5699, %v7011
      %v7013 = vpop.f32.mrb[0].mxu0
      %v7014 = vadd.f32 %v5703, %v7013
      %7015 = vmatprep.mubr.bf16.mxu0 %v5415
      %7016 = vmatmul.mubr.bf16.gmra.mrb[0].mxu0 %v5414
      %v7017 = vpop.f32.mrb[0].mxu0
      %v7018 = vadd.f32 %v5699, %v7017
      %v7019 = vpop.f32.mrb[0].mxu0
      %v7020 = vadd.f32 %v5703, %v7019
      %v7021 = vpop.f32.mrb[0].mxu0
      %v7022 = vadd.f32 %v5699, %v7021
      %v7023 = vpop.f32.mrb[0].mxu0
      %v7024 = vadd.f32 %v5703, %v7023
      %7025 = vmatprep.mubr.bf16.mxu0 %v5419
      %7026 = vmatmul.mubr.bf16.gmra.mrb[0].mxu0 %v5418
      %v7027 = vpop.f32.mrb[0].mxu0
      %v7028 = vadd.f32 %v5699, %v7027
      %v7029 = vpop.f32.mrb[0].mxu0
      %v7030 = vadd.f32 %v5703, %v7029
      %v7031 = vpop.f32.mrb[0].mxu0
      %v7032 = vadd.f32 %v5699, %v7031
      %v7033 = vpop.f32.mrb[0].mxu0
      %v7034 = vadd.f32 %v5703, %v7033
      %7035 = vmatprep.mubr.bf16.mxu0 %v5423
      %7036 = vmatmul.mubr.bf16.gmra.mrb[0].mxu0 %v5422
      %v7037 = vpop.f32.mrb[0].mxu0
      %v7038 = vadd.f32 %v5699, %v7037
      %v7039 = vpop.f32.mrb[0].mxu0
      %v7040 = vadd.f32 %v5703, %v7039
      %v7041 = vpop.f32.mrb[0].mxu0
      %v7042 = vadd.f32 %v5699, %v7041
      %v7043 = vpop.f32.mrb[0].mxu0
      %v7044 = vadd.f32 %v5703, %v7043
      %7045 = vmatprep.mubr.bf16.mxu0 %v5427
      %7046 = vmatmul.mubr.bf16.gmra.mrb[0].mxu0 %v5426
      %v7047 = vpop.f32.mrb[0].mxu0
      %v7048 = vadd.f32 %v5699, %v7047
      %v7049 = vpop.f32.mrb[0].mxu0
      %v7050 = vadd.f32 %v5703, %v7049
      %v7051 = vpop.f32.mrb[0].mxu0
      %v7052 = vadd.f32 %v5699, %v7051
      %v7053 = vpop.f32.mrb[0].mxu0
      %v7054 = vadd.f32 %v5703, %v7053
      %7055 = vmatprep.mubr.bf16.mxu0 %v5431
      %7056 = vmatmul.mubr.bf16.gmra.mrb[0].mxu0 %v5430
      %v7057 = vpop.f32.mrb[0].mxu0
      %v7058 = vadd.f32 %v5699, %v7057
      %v7059 = vpop.f32.mrb[0].mxu0
      %v7060 = vadd.f32 %v5703, %v7059
      %v7061 = vpop.f32.mrb[0].mxu0
      %v7062 = vadd.f32 %v5699, %v7061
      %v7063 = vpop.f32.mrb[0].mxu0
      %v7064 = vadd.f32 %v5703, %v7063
      %7065 = vmatprep.mubr.bf16.mxu0 %v5435
      %7066 = vmatmul.mubr.bf16.gmra.mrb[0].mxu0 %v5434
      %v7067 = vpop.f32.mrb[0].mxu0
      %v7068 = vadd.f32 %v5699, %v7067
      %v7069 = vpop.f32.mrb[0].mxu0
      %v7070 = vadd.f32 %v5703, %v7069
      %v7071 = vpop.f32.mrb[0].mxu0
      %v7072 = vadd.f32 %v5699, %v7071
      %v7073 = vpop.f32.mrb[0].mxu0
      %v7074 = vadd.f32 %v5703, %v7073
      %7075 = vdwg.mxu0
      %7076 = vmatprep.subr.bf16.mxu0 %v6548
      %7077 = vmatpush1.bf16.msra.mxu0 %v6547
      %7078 = vmatprep.subr.bf16.mxu0 %v6555
      %7079 = vmatpush1.bf16.msra.mxu0 %v6554
      %7080 = vmatprep.subr.bf16.mxu0 %v6562
      %7081 = vmatpush1.bf16.msra.mxu0 %v6561
      %7082 = vmatprep.subr.bf16.mxu0 %v6569
      %7083 = vmatpush1.bf16.msra.mxu0 %v6568
      %7084 = vmatprep.subr.bf16.mxu0 %v6576
      %7085 = vmatpush1.bf16.msra.mxu0 %v6575
      %7086 = vmatprep.subr.bf16.mxu0 %v6583
      %7087 = vmatpush1.bf16.msra.mxu0 %v6582
      %7088 = vmatprep.subr.bf16.mxu0 %v6590
      %7089 = vmatpush1.bf16.msra.mxu0 %v6589
      %7090 = vmatprep.subr.bf16.mxu0 %v6597
      %7091 = vmatpush1.bf16.msra.mxu0 %v6596
      %7092 = vmatprep.subr.bf16.mxu0 %v6604
      %7093 = vmatpush1.bf16.msra.mxu0 %v6603
      %7094 = vmatprep.subr.bf16.mxu0 %v6611
      %7095 = vmatpush1.bf16.msra.mxu0 %v6610
      %7096 = vmatprep.subr.bf16.mxu0 %v6618
      %7097 = vmatpush1.bf16.msra.mxu0 %v6617
      %7098 = vmatprep.subr.bf16.mxu0 %v6625
      %7099 = vmatpush1.bf16.msra.mxu0 %v6624
      %7100 = vmatprep.subr.bf16.mxu0 %v6632
      %7101 = vmatpush1.bf16.msra.mxu0 %v6631
      %7102 = vmatprep.subr.bf16.mxu0 %v6639
      %7103 = vmatpush1.bf16.msra.mxu0 %v6638
      %7104 = vmatprep.subr.bf16.mxu0 %v6646
      %7105 = vmatpush1.bf16.msra.mxu0 %v6645
      %7106 = vmatprep.subr.bf16.mxu0 %v6653
      %7107 = vmatpush1.bf16.msra.mxu0 %v6652
      %7108 = vmatprep.mubr.bf16.mxu0 %v5377
      %7109 = vmatmul.mubr.bf16.gmra.mrb[0].mxu0 %v5376
      %v7110 = vpop.f32.mrb[0].mxu0
      %v7111 = vadd.f32 %v6918, %v7110
      %v7112 = vpop.f32.mrb[0].mxu0
      %v7113 = vadd.f32 %v6920, %v7112
      %v7114 = vpop.f32.mrb[0].mxu0
      %v7115 = vadd.f32 %v6922, %v7114
      %v7116 = vpop.f32.mrb[0].mxu0
      %v7117 = vadd.f32 %v6924, %v7116
      %7118 = vmatprep.mubr.bf16.mxu0 %v5381
      %7119 = vmatmul.mubr.bf16.gmra.mrb[0].mxu0 %v5380
      %v7120 = vpop.f32.mrb[0].mxu0
      %v7121 = vadd.f32 %v6928, %v7120
      %v7122 = vpop.f32.mrb[0].mxu0
      %v7123 = vadd.f32 %v6930, %v7122
      %v7124 = vpop.f32.mrb[0].mxu0
      %v7125 = vadd.f32 %v6932, %v7124
      %v7126 = vpop.f32.mrb[0].mxu0
      %v7127 = vadd.f32 %v6934, %v7126
      %7128 = vmatprep.mubr.bf16.mxu0 %v5385
      %7129 = vmatmul.mubr.bf16.gmra.mrb[0].mxu0 %v5384
      %v7130 = vpop.f32.mrb[0].mxu0
      %v7131 = vadd.f32 %v6938, %v7130
      %v7132 = vpop.f32.mrb[0].mxu0
      %v7133 = vadd.f32 %v6940, %v7132
      %v7134 = vpop.f32.mrb[0].mxu0
      %v7135 = vadd.f32 %v6942, %v7134
      %v7136 = vpop.f32.mrb[0].mxu0
      %v7137 = vadd.f32 %v6944, %v7136
      %7138 = vmatprep.mubr.bf16.mxu0 %v5389
      %7139 = vmatmul.mubr.bf16.gmra.mrb[0].mxu0 %v5388
      %v7140 = vpop.f32.mrb[0].mxu0
      %v7141 = vadd.f32 %v6948, %v7140
      %v7142 = vpop.f32.mrb[0].mxu0
      %v7143 = vadd.f32 %v6950, %v7142
      %v7144 = vpop.f32.mrb[0].mxu0
      %v7145 = vadd.f32 %v6952, %v7144
      %v7146 = vpop.f32.mrb[0].mxu0
      %v7147 = vadd.f32 %v6954, %v7146
      %7148 = vmatprep.mubr.bf16.mxu0 %v5393
      %7149 = vmatmul.mubr.bf16.gmra.mrb[0].mxu0 %v5392
      %v7150 = vpop.f32.mrb[0].mxu0
      %v7151 = vadd.f32 %v6958, %v7150
      %v7152 = vpop.f32.mrb[0].mxu0
      %v7153 = vadd.f32 %v6960, %v7152
      %v7154 = vpop.f32.mrb[0].mxu0
      %v7155 = vadd.f32 %v6962, %v7154
      %v7156 = vpop.f32.mrb[0].mxu0
      %v7157 = vadd.f32 %v6964, %v7156
      %7158 = vmatprep.mubr.bf16.mxu0 %v5397
      %7159 = vmatmul.mubr.bf16.gmra.mrb[0].mxu0 %v5396
      %v7160 = vpop.f32.mrb[0].mxu0
      %v7161 = vadd.f32 %v6968, %v7160
      %v7162 = vpop.f32.mrb[0].mxu0
      %v7163 = vadd.f32 %v6970, %v7162
      %v7164 = vpop.f32.mrb[0].mxu0
      %v7165 = vadd.f32 %v6972, %v7164
      %v7166 = vpop.f32.mrb[0].mxu0
      %v7167 = vadd.f32 %v6974, %v7166
      %7168 = vmatprep.mubr.bf16.mxu0 %v5401
      %7169 = vmatmul.mubr.bf16.gmra.mrb[0].mxu0 %v5400
      %v7170 = vpop.f32.mrb[0].mxu0
      %v7171 = vadd.f32 %v6978, %v7170
      %v7172 = vpop.f32.mrb[0].mxu0
      %v7173 = vadd.f32 %v6980, %v7172
      %v7174 = vpop.f32.mrb[0].mxu0
      %v7175 = vadd.f32 %v6982, %v7174
      %v7176 = vpop.f32.mrb[0].mxu0
      %v7177 = vadd.f32 %v6984, %v7176
      %7178 = vmatprep.mubr.bf16.mxu0 %v5405
      %7179 = vmatmul.mubr.bf16.gmra.mrb[0].mxu0 %v5404
      %v7180 = vpop.f32.mrb[0].mxu0
      %v7181 = vadd.f32 %v6988, %v7180
      %v7182 = vpop.f32.mrb[0].mxu0
      %v7183 = vadd.f32 %v6990, %v7182
      %v7184 = vpop.f32.mrb[0].mxu0
      %v7185 = vadd.f32 %v6992, %v7184
      %v7186 = vpop.f32.mrb[0].mxu0
      %v7187 = vadd.f32 %v6994, %v7186
      %7188 = vmatprep.mubr.bf16.mxu0 %v5409
      %7189 = vmatmul.mubr.bf16.gmra.mrb[0].mxu0 %v5408
      %v7190 = vpop.f32.mrb[0].mxu0
      %v7191 = vadd.f32 %v6998, %v7190
      %v7192 = vpop.f32.mrb[0].mxu0
      %v7193 = vadd.f32 %v7000, %v7192
      %v7194 = vpop.f32.mrb[0].mxu0
      %v7195 = vadd.f32 %v7002, %v7194
      %v7196 = vpop.f32.mrb[0].mxu0
      %v7197 = vadd.f32 %v7004, %v7196
      %7198 = vmatprep.mubr.bf16.mxu0 %v5413
      %7199 = vmatmul.mubr.bf16.gmra.mrb[0].mxu0 %v5412
      %v7200 = vpop.f32.mrb[0].mxu0
      %v7201 = vadd.f32 %v7008, %v7200
      %v7202 = vpop.f32.mrb[0].mxu0
      %v7203 = vadd.f32 %v7010, %v7202
      %v7204 = vpop.f32.mrb[0].mxu0
      %v7205 = vadd.f32 %v7012, %v7204
      %v7206 = vpop.f32.mrb[0].mxu0
      %v7207 = vadd.f32 %v7014, %v7206
      %7208 = vmatprep.mubr.bf16.mxu0 %v5417
      %7209 = vmatmul.mubr.bf16.gmra.mrb[0].mxu0 %v5416
      %v7210 = vpop.f32.mrb[0].mxu0
      %v7211 = vadd.f32 %v7018, %v7210
      %v7212 = vpop.f32.mrb[0].mxu0
      %v7213 = vadd.f32 %v7020, %v7212
      %v7214 = vpop.f32.mrb[0].mxu0
      %v7215 = vadd.f32 %v7022, %v7214
      %v7216 = vpop.f32.mrb[0].mxu0
      %v7217 = vadd.f32 %v7024, %v7216
      %7218 = vmatprep.mubr.bf16.mxu0 %v5421
      %7219 = vmatmul.mubr.bf16.gmra.mrb[0].mxu0 %v5420
      %v7220 = vpop.f32.mrb[0].mxu0
      %v7221 = vadd.f32 %v7028, %v7220
      %v7222 = vpop.f32.mrb[0].mxu0
      %v7223 = vadd.f32 %v7030, %v7222
      %v7224 = vpop.f32.mrb[0].mxu0
      %v7225 = vadd.f32 %v7032, %v7224
      %v7226 = vpop.f32.mrb[0].mxu0
      %v7227 = vadd.f32 %v7034, %v7226
      %7228 = vmatprep.mubr.bf16.mxu0 %v5425
      %7229 = vmatmul.mubr.bf16.gmra.mrb[0].mxu0 %v5424
      %v7230 = vpop.f32.mrb[0].mxu0
      %v7231 = vadd.f32 %v7038, %v7230
      %v7232 = vpop.f32.mrb[0].mxu0
      %v7233 = vadd.f32 %v7040, %v7232
      %v7234 = vpop.f32.mrb[0].mxu0
      %v7235 = vadd.f32 %v7042, %v7234
      %v7236 = vpop.f32.mrb[0].mxu0
      %v7237 = vadd.f32 %v7044, %v7236
      %7238 = vmatprep.mubr.bf16.mxu0 %v5429
      %7239 = vmatmul.mubr.bf16.gmra.mrb[0].mxu0 %v5428
      %v7240 = vpop.f32.mrb[0].mxu0
      %v7241 = vadd.f32 %v7048, %v7240
      %v7242 = vpop.f32.mrb[0].mxu0
      %v7243 = vadd.f32 %v7050, %v7242
      %v7244 = vpop.f32.mrb[0].mxu0
      %v7245 = vadd.f32 %v7052, %v7244
      %v7246 = vpop.f32.mrb[0].mxu0
      %v7247 = vadd.f32 %v7054, %v7246
      %7248 = vmatprep.mubr.bf16.mxu0 %v5433
      %7249 = vmatmul.mubr.bf16.gmra.mrb[0].mxu0 %v5432
      %v7250 = vpop.f32.mrb[0].mxu0
      %v7251 = vadd.f32 %v7058, %v7250
      %v7252 = vpop.f32.mrb[0].mxu0
      %v7253 = vadd.f32 %v7060, %v7252
      %v7254 = vpop.f32.mrb[0].mxu0
      %v7255 = vadd.f32 %v7062, %v7254
      %v7256 = vpop.f32.mrb[0].mxu0
      %v7257 = vadd.f32 %v7064, %v7256
      %7258 = vmatprep.mubr.bf16.mxu0 %v5437
      %7259 = vmatmul.mubr.bf16.gmra.mrb[0].mxu0 %v5436
      %v7260 = vpop.f32.mrb[0].mxu0
      %v7261 = vadd.f32 %v7068, %v7260
      %v7262 = vpop.f32.mrb[0].mxu0
      %v7263 = vadd.f32 %v7070, %v7262
      %v7264 = vpop.f32.mrb[0].mxu0
      %v7265 = vadd.f32 %v7072, %v7264
      %v7266 = vpop.f32.mrb[0].mxu0
      %v7267 = vadd.f32 %v7074, %v7266
      %7268 = vdwg.mxu0
      %7269 = vmatprep.subr.bf16.mxu0 %v6438
      %7270 = vmatpush1.bf16.msra.mxu0 %v6437
      %7271 = vmatprep.subr.bf16.mxu0 %v6445
      %7272 = vmatpush1.bf16.msra.mxu0 %v6444
      %7273 = vmatprep.subr.bf16.mxu0 %v6452
      %7274 = vmatpush1.bf16.msra.mxu0 %v6451
      %7275 = vmatprep.subr.bf16.mxu0 %v6459
      %7276 = vmatpush1.bf16.msra.mxu0 %v6458
      %7277 = vmatprep.subr.bf16.mxu0 %v6466
      %7278 = vmatpush1.bf16.msra.mxu0 %v6465
      %7279 = vmatprep.subr.bf16.mxu0 %v6473
      %7280 = vmatpush1.bf16.msra.mxu0 %v6472
      %7281 = vmatprep.subr.bf16.mxu0 %v6480
      %7282 = vmatpush1.bf16.msra.mxu0 %v6479
      %7283 = vmatprep.subr.bf16.mxu0 %v6487
      %7284 = vmatpush1.bf16.msra.mxu0 %v6486
      %7285 = vmatprep.subr.bf16.mxu0 %v6494
      %7286 = vmatpush1.bf16.msra.mxu0 %v6493
      %7287 = vmatprep.subr.bf16.mxu0 %v6501
      %7288 = vmatpush1.bf16.msra.mxu0 %v6500
      %7289 = vmatprep.subr.bf16.mxu0 %v6508
      %7290 = vmatpush1.bf16.msra.mxu0 %v6507
      %7291 = vmatprep.subr.bf16.mxu0 %v6515
      %7292 = vmatpush1.bf16.msra.mxu0 %v6514
      %7293 = vmatprep.subr.bf16.mxu0 %v6522
      %7294 = vmatpush1.bf16.msra.mxu0 %v6521
      %7295 = vmatprep.subr.bf16.mxu0 %v6529
      %7296 = vmatpush1.bf16.msra.mxu0 %v6528
      %7297 = vmatprep.subr.bf16.mxu0 %v6536
      %7298 = vmatpush1.bf16.msra.mxu0 %v6535
      %7299 = vmatprep.subr.bf16.mxu0 %v6543
      %7300 = vmatpush1.bf16.msra.mxu0 %v6542
      %7301 = vmatprep.mubr.bf16.mxu0 %v5375
      %7302 = vmatmul.mubr.bf16.gmra.mrb[0].mxu0 %v5374
      %v7303 = vpop.f32.mrb[0].mxu0
      %v7304 = vadd.f32 %v5707, %v7303
      %v7305 = vpop.f32.mrb[0].mxu0
      %v7306 = vadd.f32 %v5711, %v7305
      %v7307 = vpop.f32.mrb[0].mxu0
      %v7308 = vadd.f32 %v5707, %v7307
      %v7309 = vpop.f32.mrb[0].mxu0
      %v7310 = vadd.f32 %v5711, %v7309
      %7311 = vmatprep.mubr.bf16.mxu0 %v5379
      %7312 = vmatmul.mubr.bf16.gmra.mrb[0].mxu0 %v5378
      %v7313 = vpop.f32.mrb[0].mxu0
      %v7314 = vadd.f32 %v5707, %v7313
      %v7315 = vpop.f32.mrb[0].mxu0
      %v7316 = vadd.f32 %v5711, %v7315
      %v7317 = vpop.f32.mrb[0].mxu0
      %v7318 = vadd.f32 %v5707, %v7317
      %v7319 = vpop.f32.mrb[0].mxu0
      %v7320 = vadd.f32 %v5711, %v7319
      %7321 = vmatprep.mubr.bf16.mxu0 %v5383
      %7322 = vmatmul.mubr.bf16.gmra.mrb[0].mxu0 %v5382
      %v7323 = vpop.f32.mrb[0].mxu0
      %v7324 = vadd.f32 %v5707, %v7323
      %v7325 = vpop.f32.mrb[0].mxu0
      %v7326 = vadd.f32 %v5711, %v7325
      %v7327 = vpop.f32.mrb[0].mxu0
      %v7328 = vadd.f32 %v5707, %v7327
      %v7329 = vpop.f32.mrb[0].mxu0
      %v7330 = vadd.f32 %v5711, %v7329
      %7331 = vmatprep.mubr.bf16.mxu0 %v5387
      %7332 = vmatmul.mubr.bf16.gmra.mrb[0].mxu0 %v5386
      %v7333 = vpop.f32.mrb[0].mxu0
      %v7334 = vadd.f32 %v5707, %v7333
      %v7335 = vpop.f32.mrb[0].mxu0
      %v7336 = vadd.f32 %v5711, %v7335
      %v7337 = vpop.f32.mrb[0].mxu0
      %v7338 = vadd.f32 %v5707, %v7337
      %v7339 = vpop.f32.mrb[0].mxu0
      %v7340 = vadd.f32 %v5711, %v7339
      %7341 = vmatprep.mubr.bf16.mxu0 %v5391
      %7342 = vmatmul.mubr.bf16.gmra.mrb[0].mxu0 %v5390
      %v7343 = vpop.f32.mrb[0].mxu0
      %v7344 = vadd.f32 %v5707, %v7343
      %v7345 = vpop.f32.mrb[0].mxu0
      %v7346 = vadd.f32 %v5711, %v7345
      %v7347 = vpop.f32.mrb[0].mxu0
      %v7348 = vadd.f32 %v5707, %v7347
      %v7349 = vpop.f32.mrb[0].mxu0
      %v7350 = vadd.f32 %v5711, %v7349
      %7351 = vmatprep.mubr.bf16.mxu0 %v5395
      %7352 = vmatmul.mubr.bf16.gmra.mrb[0].mxu0 %v5394
      %v7353 = vpop.f32.mrb[0].mxu0
      %v7354 = vadd.f32 %v5707, %v7353
      %v7355 = vpop.f32.mrb[0].mxu0
      %v7356 = vadd.f32 %v5711, %v7355
      %v7357 = vpop.f32.mrb[0].mxu0
      %v7358 = vadd.f32 %v5707, %v7357
      %v7359 = vpop.f32.mrb[0].mxu0
      %v7360 = vadd.f32 %v5711, %v7359
      %7361 = vmatprep.mubr.bf16.mxu0 %v5399
      %7362 = vmatmul.mubr.bf16.gmra.mrb[0].mxu0 %v5398
      %v7363 = vpop.f32.mrb[0].mxu0
      %v7364 = vadd.f32 %v5707, %v7363
      %v7365 = vpop.f32.mrb[0].mxu0
      %v7366 = vadd.f32 %v5711, %v7365
      %v7367 = vpop.f32.mrb[0].mxu0
      %v7368 = vadd.f32 %v5707, %v7367
      %v7369 = vpop.f32.mrb[0].mxu0
      %v7370 = vadd.f32 %v5711, %v7369
      %7371 = vmatprep.mubr.bf16.mxu0 %v5403
      %7372 = vmatmul.mubr.bf16.gmra.mrb[0].mxu0 %v5402
      %v7373 = vpop.f32.mrb[0].mxu0
      %v7374 = vadd.f32 %v5707, %v7373
      %v7375 = vpop.f32.mrb[0].mxu0
      %v7376 = vadd.f32 %v5711, %v7375
      %v7377 = vpop.f32.mrb[0].mxu0
      %v7378 = vadd.f32 %v5707, %v7377
      %v7379 = vpop.f32.mrb[0].mxu0
      %v7380 = vadd.f32 %v5711, %v7379
      %7381 = vmatprep.mubr.bf16.mxu0 %v5407
      %7382 = vmatmul.mubr.bf16.gmra.mrb[0].mxu0 %v5406
      %v7383 = vpop.f32.mrb[0].mxu0
      %v7384 = vadd.f32 %v5707, %v7383
      %v7385 = vpop.f32.mrb[0].mxu0
      %v7386 = vadd.f32 %v5711, %v7385
      %v7387 = vpop.f32.mrb[0].mxu0
      %v7388 = vadd.f32 %v5707, %v7387
      %v7389 = vpop.f32.mrb[0].mxu0
      %v7390 = vadd.f32 %v5711, %v7389
      %7391 = vmatprep.mubr.bf16.mxu0 %v5411
      %7392 = vmatmul.mubr.bf16.gmra.mrb[0].mxu0 %v5410
      %v7393 = vpop.f32.mrb[0].mxu0
      %v7394 = vadd.f32 %v5707, %v7393
      %v7395 = vpop.f32.mrb[0].mxu0
      %v7396 = vadd.f32 %v5711, %v7395
      %v7397 = vpop.f32.mrb[0].mxu0
      %v7398 = vadd.f32 %v5707, %v7397
      %v7399 = vpop.f32.mrb[0].mxu0
      %v7400 = vadd.f32 %v5711, %v7399
      %7401 = vmatprep.mubr.bf16.mxu0 %v5415
      %7402 = vmatmul.mubr.bf16.gmra.mrb[0].mxu0 %v5414
      %v7403 = vpop.f32.mrb[0].mxu0
      %v7404 = vadd.f32 %v5707, %v7403
      %v7405 = vpop.f32.mrb[0].mxu0
      %v7406 = vadd.f32 %v5711, %v7405
      %v7407 = vpop.f32.mrb[0].mxu0
      %v7408 = vadd.f32 %v5707, %v7407
      %v7409 = vpop.f32.mrb[0].mxu0
      %v7410 = vadd.f32 %v5711, %v7409
      %7411 = vmatprep.mubr.bf16.mxu0 %v5419
      %7412 = vmatmul.mubr.bf16.gmra.mrb[0].mxu0 %v5418
      %v7413 = vpop.f32.mrb[0].mxu0
      %v7414 = vadd.f32 %v5707, %v7413
      %v7415 = vpop.f32.mrb[0].mxu0
      %v7416 = vadd.f32 %v5711, %v7415
      %v7417 = vpop.f32.mrb[0].mxu0
      %v7418 = vadd.f32 %v5707, %v7417
      %v7419 = vpop.f32.mrb[0].mxu0
      %v7420 = vadd.f32 %v5711, %v7419
      %7421 = vmatprep.mubr.bf16.mxu0 %v5423
      %7422 = vmatmul.mubr.bf16.gmra.mrb[0].mxu0 %v5422
      %v7423 = vpop.f32.mrb[0].mxu0
      %v7424 = vadd.f32 %v5707, %v7423
      %v7425 = vpop.f32.mrb[0].mxu0
      %v7426 = vadd.f32 %v5711, %v7425
      %v7427 = vpop.f32.mrb[0].mxu0
      %v7428 = vadd.f32 %v5707, %v7427
      %v7429 = vpop.f32.mrb[0].mxu0
      %v7430 = vadd.f32 %v5711, %v7429
      %7431 = vmatprep.mubr.bf16.mxu0 %v5427
      %7432 = vmatmul.mubr.bf16.gmra.mrb[0].mxu0 %v5426
      %v7433 = vpop.f32.mrb[0].mxu0
      %v7434 = vadd.f32 %v5707, %v7433
      %v7435 = vpop.f32.mrb[0].mxu0
      %v7436 = vadd.f32 %v5711, %v7435
      %v7437 = vpop.f32.mrb[0].mxu0
      %v7438 = vadd.f32 %v5707, %v7437
      %v7439 = vpop.f32.mrb[0].mxu0
      %v7440 = vadd.f32 %v5711, %v7439
      %7441 = vmatprep.mubr.bf16.mxu0 %v5431
      %7442 = vmatmul.mubr.bf16.gmra.mrb[0].mxu0 %v5430
      %v7443 = vpop.f32.mrb[0].mxu0
      %v7444 = vadd.f32 %v5707, %v7443
      %v7445 = vpop.f32.mrb[0].mxu0
      %v7446 = vadd.f32 %v5711, %v7445
      %v7447 = vpop.f32.mrb[0].mxu0
      %v7448 = vadd.f32 %v5707, %v7447
      %v7449 = vpop.f32.mrb[0].mxu0
      %v7450 = vadd.f32 %v5711, %v7449
      %7451 = vmatprep.mubr.bf16.mxu0 %v5435
      %7452 = vmatmul.mubr.bf16.gmra.mrb[0].mxu0 %v5434
      %v7453 = vpop.f32.mrb[0].mxu0
      %v7454 = vadd.f32 %v5707, %v7453
      %v7455 = vpop.f32.mrb[0].mxu0
      %v7456 = vadd.f32 %v5711, %v7455
      %v7457 = vpop.f32.mrb[0].mxu0
      %v7458 = vadd.f32 %v5707, %v7457
      %v7459 = vpop.f32.mrb[0].mxu0
      %v7460 = vadd.f32 %v5711, %v7459
      %7461 = vdwg.mxu0
      %7462 = vmatprep.subr.bf16.mxu0 %v6550
      %7463 = vmatpush1.bf16.msra.mxu0 %v6549
      %7464 = vmatprep.subr.bf16.mxu0 %v6557
      %7465 = vmatpush1.bf16.msra.mxu0 %v6556
      %7466 = vmatprep.subr.bf16.mxu0 %v6564
      %7467 = vmatpush1.bf16.msra.mxu0 %v6563
      %7468 = vmatprep.subr.bf16.mxu0 %v6571
      %7469 = vmatpush1.bf16.msra.mxu0 %v6570
      %7470 = vmatprep.subr.bf16.mxu0 %v6578
      %7471 = vmatpush1.bf16.msra.mxu0 %v6577
      %7472 = vmatprep.subr.bf16.mxu0 %v6585
      %7473 = vmatpush1.bf16.msra.mxu0 %v6584
      %7474 = vmatprep.subr.bf16.mxu0 %v6592
      %7475 = vmatpush1.bf16.msra.mxu0 %v6591
      %7476 = vmatprep.subr.bf16.mxu0 %v6599
      %7477 = vmatpush1.bf16.msra.mxu0 %v6598
      %7478 = vmatprep.subr.bf16.mxu0 %v6606
      %7479 = vmatpush1.bf16.msra.mxu0 %v6605
      %7480 = vmatprep.subr.bf16.mxu0 %v6613
      %7481 = vmatpush1.bf16.msra.mxu0 %v6612
      %7482 = vmatprep.subr.bf16.mxu0 %v6620
      %7483 = vmatpush1.bf16.msra.mxu0 %v6619
      %7484 = vmatprep.subr.bf16.mxu0 %v6627
      %7485 = vmatpush1.bf16.msra.mxu0 %v6626
      %7486 = vmatprep.subr.bf16.mxu0 %v6634
      %7487 = vmatpush1.bf16.msra.mxu0 %v6633
      %7488 = vmatprep.subr.bf16.mxu0 %v6641
      %7489 = vmatpush1.bf16.msra.mxu0 %v6640
      %7490 = vmatprep.subr.bf16.mxu0 %v6648
      %7491 = vmatpush1.bf16.msra.mxu0 %v6647
      %7492 = vmatprep.subr.bf16.mxu0 %v6655
      %7493 = vmatpush1.bf16.msra.mxu0 %v6654
      %7494 = vmatprep.mubr.bf16.mxu0 %v5377
      %7495 = vmatmul.mubr.bf16.gmra.mrb[0].mxu0 %v5376
      %v7496 = vpop.f32.mrb[0].mxu0
      %v7497 = vadd.f32 %v7304, %v7496
      %v7498 = vpop.f32.mrb[0].mxu0
      %v7499 = vadd.f32 %v7306, %v7498
      %v7500 = vpop.f32.mrb[0].mxu0
      %v7501 = vadd.f32 %v7308, %v7500
      %v7502 = vpop.f32.mrb[0].mxu0
      %v7503 = vadd.f32 %v7310, %v7502
      %7504 = vmatprep.mubr.bf16.mxu0 %v5381
      %7505 = vmatmul.mubr.bf16.gmra.mrb[0].mxu0 %v5380
      %v7506 = vpop.f32.mrb[0].mxu0
      %v7507 = vadd.f32 %v7314, %v7506
      %v7508 = vpop.f32.mrb[0].mxu0
      %v7509 = vadd.f32 %v7316, %v7508
      %v7510 = vpop.f32.mrb[0].mxu0
      %v7511 = vadd.f32 %v7318, %v7510
      %v7512 = vpop.f32.mrb[0].mxu0
      %v7513 = vadd.f32 %v7320, %v7512
      %7514 = vmatprep.mubr.bf16.mxu0 %v5385
      %7515 = vmatmul.mubr.bf16.gmra.mrb[0].mxu0 %v5384
      %v7516 = vpop.f32.mrb[0].mxu0
      %v7517 = vadd.f32 %v7324, %v7516
      %v7518 = vpop.f32.mrb[0].mxu0
      %v7519 = vadd.f32 %v7326, %v7518
      %v7520 = vpop.f32.mrb[0].mxu0
      %v7521 = vadd.f32 %v7328, %v7520
      %v7522 = vpop.f32.mrb[0].mxu0
      %v7523 = vadd.f32 %v7330, %v7522
      %7524 = vmatprep.mubr.bf16.mxu0 %v5389
      %7525 = vmatmul.mubr.bf16.gmra.mrb[0].mxu0 %v5388
      %v7526 = vpop.f32.mrb[0].mxu0
      %v7527 = vadd.f32 %v7334, %v7526
      %v7528 = vpop.f32.mrb[0].mxu0
      %v7529 = vadd.f32 %v7336, %v7528
      %v7530 = vpop.f32.mrb[0].mxu0
      %v7531 = vadd.f32 %v7338, %v7530
      %v7532 = vpop.f32.mrb[0].mxu0
      %v7533 = vadd.f32 %v7340, %v7532
      %7534 = vmatprep.mubr.bf16.mxu0 %v5393
      %7535 = vmatmul.mubr.bf16.gmra.mrb[0].mxu0 %v5392
      %v7536 = vpop.f32.mrb[0].mxu0
      %v7537 = vadd.f32 %v7344, %v7536
      %v7538 = vpop.f32.mrb[0].mxu0
      %v7539 = vadd.f32 %v7346, %v7538
      %v7540 = vpop.f32.mrb[0].mxu0
      %v7541 = vadd.f32 %v7348, %v7540
      %v7542 = vpop.f32.mrb[0].mxu0
      %v7543 = vadd.f32 %v7350, %v7542
      %7544 = vmatprep.mubr.bf16.mxu0 %v5397
      %7545 = vmatmul.mubr.bf16.gmra.mrb[0].mxu0 %v5396
      %v7546 = vpop.f32.mrb[0].mxu0
      %v7547 = vadd.f32 %v7354, %v7546
      %v7548 = vpop.f32.mrb[0].mxu0
      %v7549 = vadd.f32 %v7356, %v7548
      %v7550 = vpop.f32.mrb[0].mxu0
      %v7551 = vadd.f32 %v7358, %v7550
      %v7552 = vpop.f32.mrb[0].mxu0
      %v7553 = vadd.f32 %v7360, %v7552
      %7554 = vmatprep.mubr.bf16.mxu0 %v5401
      %7555 = vmatmul.mubr.bf16.gmra.mrb[0].mxu0 %v5400
      %v7556 = vpop.f32.mrb[0].mxu0
      %v7557 = vadd.f32 %v7364, %v7556
      %v7558 = vpop.f32.mrb[0].mxu0
      %v7559 = vadd.f32 %v7366, %v7558
      %v7560 = vpop.f32.mrb[0].mxu0
      %v7561 = vadd.f32 %v7368, %v7560
      %v7562 = vpop.f32.mrb[0].mxu0
      %v7563 = vadd.f32 %v7370, %v7562
      %7564 = vmatprep.mubr.bf16.mxu0 %v5405
      %7565 = vmatmul.mubr.bf16.gmra.mrb[0].mxu0 %v5404
      %v7566 = vpop.f32.mrb[0].mxu0
      %v7567 = vadd.f32 %v7374, %v7566
      %v7568 = vpop.f32.mrb[0].mxu0
      %v7569 = vadd.f32 %v7376, %v7568
      %v7570 = vpop.f32.mrb[0].mxu0
      %v7571 = vadd.f32 %v7378, %v7570
      %v7572 = vpop.f32.mrb[0].mxu0
      %v7573 = vadd.f32 %v7380, %v7572
      %7574 = vmatprep.mubr.bf16.mxu0 %v5409
      %7575 = vmatmul.mubr.bf16.gmra.mrb[0].mxu0 %v5408
      %v7576 = vpop.f32.mrb[0].mxu0
      %v7577 = vadd.f32 %v7384, %v7576
      %v7578 = vpop.f32.mrb[0].mxu0
      %v7579 = vadd.f32 %v7386, %v7578
      %v7580 = vpop.f32.mrb[0].mxu0
      %v7581 = vadd.f32 %v7388, %v7580
      %v7582 = vpop.f32.mrb[0].mxu0
      %v7583 = vadd.f32 %v7390, %v7582
      %7584 = vmatprep.mubr.bf16.mxu0 %v5413
      %7585 = vmatmul.mubr.bf16.gmra.mrb[0].mxu0 %v5412
      %v7586 = vpop.f32.mrb[0].mxu0
      %v7587 = vadd.f32 %v7394, %v7586
      %v7588 = vpop.f32.mrb[0].mxu0
      %v7589 = vadd.f32 %v7396, %v7588
      %v7590 = vpop.f32.mrb[0].mxu0
      %v7591 = vadd.f32 %v7398, %v7590
      %v7592 = vpop.f32.mrb[0].mxu0
      %v7593 = vadd.f32 %v7400, %v7592
      %7594 = vmatprep.mubr.bf16.mxu0 %v5417
      %7595 = vmatmul.mubr.bf16.gmra.mrb[0].mxu0 %v5416
      %v7596 = vpop.f32.mrb[0].mxu0
      %v7597 = vadd.f32 %v7404, %v7596
      %v7598 = vpop.f32.mrb[0].mxu0
      %v7599 = vadd.f32 %v7406, %v7598
      %v7600 = vpop.f32.mrb[0].mxu0
      %v7601 = vadd.f32 %v7408, %v7600
      %v7602 = vpop.f32.mrb[0].mxu0
      %v7603 = vadd.f32 %v7410, %v7602
      %7604 = vmatprep.mubr.bf16.mxu0 %v5421
      %7605 = vmatmul.mubr.bf16.gmra.mrb[0].mxu0 %v5420
      %v7606 = vpop.f32.mrb[0].mxu0
      %v7607 = vadd.f32 %v7414, %v7606
      %v7608 = vpop.f32.mrb[0].mxu0
      %v7609 = vadd.f32 %v7416, %v7608
      %v7610 = vpop.f32.mrb[0].mxu0
      %v7611 = vadd.f32 %v7418, %v7610
      %v7612 = vpop.f32.mrb[0].mxu0
      %v7613 = vadd.f32 %v7420, %v7612
      %7614 = vmatprep.mubr.bf16.mxu0 %v5425
      %7615 = vmatmul.mubr.bf16.gmra.mrb[0].mxu0 %v5424
      %v7616 = vpop.f32.mrb[0].mxu0
      %v7617 = vadd.f32 %v7424, %v7616
      %v7618 = vpop.f32.mrb[0].mxu0
      %v7619 = vadd.f32 %v7426, %v7618
      %v7620 = vpop.f32.mrb[0].mxu0
      %v7621 = vadd.f32 %v7428, %v7620
      %v7622 = vpop.f32.mrb[0].mxu0
      %v7623 = vadd.f32 %v7430, %v7622
      %7624 = vmatprep.mubr.bf16.mxu0 %v5429
      %7625 = vmatmul.mubr.bf16.gmra.mrb[0].mxu0 %v5428
      %v7626 = vpop.f32.mrb[0].mxu0
      %v7627 = vadd.f32 %v7434, %v7626
      %v7628 = vpop.f32.mrb[0].mxu0
      %v7629 = vadd.f32 %v7436, %v7628
      %v7630 = vpop.f32.mrb[0].mxu0
      %v7631 = vadd.f32 %v7438, %v7630
      %v7632 = vpop.f32.mrb[0].mxu0
      %v7633 = vadd.f32 %v7440, %v7632
      %7634 = vmatprep.mubr.bf16.mxu0 %v5433
      %7635 = vmatmul.mubr.bf16.gmra.mrb[0].mxu0 %v5432
      %v7636 = vpop.f32.mrb[0].mxu0
      %v7637 = vadd.f32 %v7444, %v7636
      %v7638 = vpop.f32.mrb[0].mxu0
      %v7639 = vadd.f32 %v7446, %v7638
      %v7640 = vpop.f32.mrb[0].mxu0
      %v7641 = vadd.f32 %v7448, %v7640
      %v7642 = vpop.f32.mrb[0].mxu0
      %v7643 = vadd.f32 %v7450, %v7642
      %7644 = vmatprep.mubr.bf16.mxu0 %v5437
      %7645 = vmatmul.mubr.bf16.gmra.mrb[0].mxu0 %v5436
      %v7646 = vpop.f32.mrb[0].mxu0
      %v7647 = vadd.f32 %v7454, %v7646
      %v7648 = vpop.f32.mrb[0].mxu0
      %v7649 = vadd.f32 %v7456, %v7648
      %v7650 = vpop.f32.mrb[0].mxu0
      %v7651 = vadd.f32 %v7458, %v7650
      %v7652 = vpop.f32.mrb[0].mxu0
      %v7653 = vadd.f32 %v7460, %v7652
      %7654 = vdwg.mxu0
      %7655 = vmatprep.subr.bf16.mxu0 %v6440
      %7656 = vmatpush1.bf16.msra.mxu0 %v6439
      %7657 = vmatprep.subr.bf16.mxu0 %v6447
      %7658 = vmatpush1.bf16.msra.mxu0 %v6446
      %7659 = vmatprep.subr.bf16.mxu0 %v6454
      %7660 = vmatpush1.bf16.msra.mxu0 %v6453
      %7661 = vmatprep.subr.bf16.mxu0 %v6461
      %7662 = vmatpush1.bf16.msra.mxu0 %v6460
      %7663 = vmatprep.subr.bf16.mxu0 %v6468
      %7664 = vmatpush1.bf16.msra.mxu0 %v6467
      %7665 = vmatprep.subr.bf16.mxu0 %v6475
      %7666 = vmatpush1.bf16.msra.mxu0 %v6474
      %7667 = vmatprep.subr.bf16.mxu0 %v6482
      %7668 = vmatpush1.bf16.msra.mxu0 %v6481
      %7669 = vmatprep.subr.bf16.mxu0 %v6489
      %7670 = vmatpush1.bf16.msra.mxu0 %v6488
      %7671 = vmatprep.subr.bf16.mxu0 %v6496
      %7672 = vmatpush1.bf16.msra.mxu0 %v6495
      %7673 = vmatprep.subr.bf16.mxu0 %v6503
      %7674 = vmatpush1.bf16.msra.mxu0 %v6502
      %7675 = vmatprep.subr.bf16.mxu0 %v6510
      %7676 = vmatpush1.bf16.msra.mxu0 %v6509
      %7677 = vmatprep.subr.bf16.mxu0 %v6517
      %7678 = vmatpush1.bf16.msra.mxu0 %v6516
      %7679 = vmatprep.subr.bf16.mxu0 %v6524
      %7680 = vmatpush1.bf16.msra.mxu0 %v6523
      %7681 = vmatprep.subr.bf16.mxu0 %v6531
      %7682 = vmatpush1.bf16.msra.mxu0 %v6530
      %7683 = vmatprep.subr.bf16.mxu0 %v6538
      %7684 = vmatpush1.bf16.msra.mxu0 %v6537
      %7685 = vmatprep.subr.bf16.mxu0 %v6545
      %7686 = vmatpush1.bf16.msra.mxu0 %v6544
      %7687 = vmatprep.mubr.bf16.mxu0 %v5375
      %7688 = vmatmul.mubr.bf16.gmra.mrb[0].mxu0 %v5374
      %v7689 = vpop.f32.mrb[0].mxu0
      %v7690 = vadd.f32 %v5715, %v7689
      %v7691 = vpop.f32.mrb[0].mxu0
      %v7692 = vadd.f32 %v5719, %v7691
      %v7693 = vpop.f32.mrb[0].mxu0
      %v7694 = vadd.f32 %v5715, %v7693
      %v7695 = vpop.f32.mrb[0].mxu0
      %v7696 = vadd.f32 %v5719, %v7695
      %7697 = vmatprep.mubr.bf16.mxu0 %v5379
      %7698 = vmatmul.mubr.bf16.gmra.mrb[0].mxu0 %v5378
      %v7699 = vpop.f32.mrb[0].mxu0
      %v7700 = vadd.f32 %v5715, %v7699
      %v7701 = vpop.f32.mrb[0].mxu0
      %v7702 = vadd.f32 %v5719, %v7701
      %v7703 = vpop.f32.mrb[0].mxu0
      %v7704 = vadd.f32 %v5715, %v7703
      %v7705 = vpop.f32.mrb[0].mxu0
      %v7706 = vadd.f32 %v5719, %v7705
      %7707 = vmatprep.mubr.bf16.mxu0 %v5383
      %7708 = vmatmul.mubr.bf16.gmra.mrb[0].mxu0 %v5382
      %v7709 = vpop.f32.mrb[0].mxu0
      %v7710 = vadd.f32 %v5715, %v7709
      %v7711 = vpop.f32.mrb[0].mxu0
      %v7712 = vadd.f32 %v5719, %v7711
      %v7713 = vpop.f32.mrb[0].mxu0
      %v7714 = vadd.f32 %v5715, %v7713
      %v7715 = vpop.f32.mrb[0].mxu0
      %v7716 = vadd.f32 %v5719, %v7715
      %7717 = vmatprep.mubr.bf16.mxu0 %v5387
      %7718 = vmatmul.mubr.bf16.gmra.mrb[0].mxu0 %v5386
      %v7719 = vpop.f32.mrb[0].mxu0
      %v7720 = vadd.f32 %v5715, %v7719
      %v7721 = vpop.f32.mrb[0].mxu0
      %v7722 = vadd.f32 %v5719, %v7721
      %v7723 = vpop.f32.mrb[0].mxu0
      %v7724 = vadd.f32 %v5715, %v7723
      %v7725 = vpop.f32.mrb[0].mxu0
      %v7726 = vadd.f32 %v5719, %v7725
      %7727 = vmatprep.mubr.bf16.mxu0 %v5391
      %7728 = vmatmul.mubr.bf16.gmra.mrb[0].mxu0 %v5390
      %v7729 = vpop.f32.mrb[0].mxu0
      %v7730 = vadd.f32 %v5715, %v7729
      %v7731 = vpop.f32.mrb[0].mxu0
      %v7732 = vadd.f32 %v5719, %v7731
      %v7733 = vpop.f32.mrb[0].mxu0
      %v7734 = vadd.f32 %v5715, %v7733
      %v7735 = vpop.f32.mrb[0].mxu0
      %v7736 = vadd.f32 %v5719, %v7735
      %7737 = vmatprep.mubr.bf16.mxu0 %v5395
      %7738 = vmatmul.mubr.bf16.gmra.mrb[0].mxu0 %v5394
      %v7739 = vpop.f32.mrb[0].mxu0
      %v7740 = vadd.f32 %v5715, %v7739
      %v7741 = vpop.f32.mrb[0].mxu0
      %v7742 = vadd.f32 %v5719, %v7741
      %v7743 = vpop.f32.mrb[0].mxu0
      %v7744 = vadd.f32 %v5715, %v7743
      %v7745 = vpop.f32.mrb[0].mxu0
      %v7746 = vadd.f32 %v5719, %v7745
      %7747 = vmatprep.mubr.bf16.mxu0 %v5399
      %7748 = vmatmul.mubr.bf16.gmra.mrb[0].mxu0 %v5398
      %v7749 = vpop.f32.mrb[0].mxu0
      %v7750 = vadd.f32 %v5715, %v7749
      %v7751 = vpop.f32.mrb[0].mxu0
      %v7752 = vadd.f32 %v5719, %v7751
      %v7753 = vpop.f32.mrb[0].mxu0
      %v7754 = vadd.f32 %v5715, %v7753
      %v7755 = vpop.f32.mrb[0].mxu0
      %v7756 = vadd.f32 %v5719, %v7755
      %7757 = vmatprep.mubr.bf16.mxu0 %v5403
      %7758 = vmatmul.mubr.bf16.gmra.mrb[0].mxu0 %v5402
      %v7759 = vpop.f32.mrb[0].mxu0
      %v7760 = vadd.f32 %v5715, %v7759
      %v7761 = vpop.f32.mrb[0].mxu0
      %v7762 = vadd.f32 %v5719, %v7761
      %v7763 = vpop.f32.mrb[0].mxu0
      %v7764 = vadd.f32 %v5715, %v7763
      %v7765 = vpop.f32.mrb[0].mxu0
      %v7766 = vadd.f32 %v5719, %v7765
      %7767 = vmatprep.mubr.bf16.mxu0 %v5407
      %7768 = vmatmul.mubr.bf16.gmra.mrb[0].mxu0 %v5406
      %v7769 = vpop.f32.mrb[0].mxu0
      %v7770 = vadd.f32 %v5715, %v7769
      %v7771 = vpop.f32.mrb[0].mxu0
      %v7772 = vadd.f32 %v5719, %v7771
      %v7773 = vpop.f32.mrb[0].mxu0
      %v7774 = vadd.f32 %v5715, %v7773
      %v7775 = vpop.f32.mrb[0].mxu0
      %v7776 = vadd.f32 %v5719, %v7775
      %7777 = vmatprep.mubr.bf16.mxu0 %v5411
      %7778 = vmatmul.mubr.bf16.gmra.mrb[0].mxu0 %v5410
      %v7779 = vpop.f32.mrb[0].mxu0
      %v7780 = vadd.f32 %v5715, %v7779
      %v7781 = vpop.f32.mrb[0].mxu0
      %v7782 = vadd.f32 %v5719, %v7781
      %v7783 = vpop.f32.mrb[0].mxu0
      %v7784 = vadd.f32 %v5715, %v7783
      %v7785 = vpop.f32.mrb[0].mxu0
      %v7786 = vadd.f32 %v5719, %v7785
      %7787 = vmatprep.mubr.bf16.mxu0 %v5415
      %7788 = vmatmul.mubr.bf16.gmra.mrb[0].mxu0 %v5414
      %v7789 = vpop.f32.mrb[0].mxu0
      %v7790 = vadd.f32 %v5715, %v7789
      %v7791 = vpop.f32.mrb[0].mxu0
      %v7792 = vadd.f32 %v5719, %v7791
      %v7793 = vpop.f32.mrb[0].mxu0
      %v7794 = vadd.f32 %v5715, %v7793
      %v7795 = vpop.f32.mrb[0].mxu0
      %v7796 = vadd.f32 %v5719, %v7795
      %7797 = vmatprep.mubr.bf16.mxu0 %v5419
      %7798 = vmatmul.mubr.bf16.gmra.mrb[0].mxu0 %v5418
      %v7799 = vpop.f32.mrb[0].mxu0
      %v7800 = vadd.f32 %v5715, %v7799
      %v7801 = vpop.f32.mrb[0].mxu0
      %v7802 = vadd.f32 %v5719, %v7801
      %v7803 = vpop.f32.mrb[0].mxu0
      %v7804 = vadd.f32 %v5715, %v7803
      %v7805 = vpop.f32.mrb[0].mxu0
      %v7806 = vadd.f32 %v5719, %v7805
      %7807 = vmatprep.mubr.bf16.mxu0 %v5423
      %7808 = vmatmul.mubr.bf16.gmra.mrb[0].mxu0 %v5422
      %v7809 = vpop.f32.mrb[0].mxu0
      %v7810 = vadd.f32 %v5715, %v7809
      %v7811 = vpop.f32.mrb[0].mxu0
      %v7812 = vadd.f32 %v5719, %v7811
      %v7813 = vpop.f32.mrb[0].mxu0
      %v7814 = vadd.f32 %v5715, %v7813
      %v7815 = vpop.f32.mrb[0].mxu0
      %v7816 = vadd.f32 %v5719, %v7815
      %7817 = vmatprep.mubr.bf16.mxu0 %v5427
      %7818 = vmatmul.mubr.bf16.gmra.mrb[0].mxu0 %v5426
      %v7819 = vpop.f32.mrb[0].mxu0
      %v7820 = vadd.f32 %v5715, %v7819
      %v7821 = vpop.f32.mrb[0].mxu0
      %v7822 = vadd.f32 %v5719, %v7821
      %v7823 = vpop.f32.mrb[0].mxu0
      %v7824 = vadd.f32 %v5715, %v7823
      %v7825 = vpop.f32.mrb[0].mxu0
      %v7826 = vadd.f32 %v5719, %v7825
      %7827 = vmatprep.mubr.bf16.mxu0 %v5431
      %7828 = vmatmul.mubr.bf16.gmra.mrb[0].mxu0 %v5430
      %v7829 = vpop.f32.mrb[0].mxu0
      %v7830 = vadd.f32 %v5715, %v7829
      %v7831 = vpop.f32.mrb[0].mxu0
      %v7832 = vadd.f32 %v5719, %v7831
      %v7833 = vpop.f32.mrb[0].mxu0
      %v7834 = vadd.f32 %v5715, %v7833
      %v7835 = vpop.f32.mrb[0].mxu0
      %v7836 = vadd.f32 %v5719, %v7835
      %7837 = vmatprep.mubr.bf16.mxu0 %v5435
      %7838 = vmatmul.mubr.bf16.gmra.mrb[0].mxu0 %v5434
      %v7839 = vpop.f32.mrb[0].mxu0
      %v7840 = vadd.f32 %v5715, %v7839
      %v7841 = vpop.f32.mrb[0].mxu0
      %v7842 = vadd.f32 %v5719, %v7841
      %v7843 = vpop.f32.mrb[0].mxu0
      %v7844 = vadd.f32 %v5715, %v7843
      %v7845 = vpop.f32.mrb[0].mxu0
      %v7846 = vadd.f32 %v5719, %v7845
      %7847 = vdwg.mxu0
      %7848 = vmatprep.subr.bf16.mxu0 %v6552
      %7849 = vmatpush1.bf16.msra.mxu0 %v6551
      %7850 = vmatprep.subr.bf16.mxu0 %v6559
      %7851 = vmatpush1.bf16.msra.mxu0 %v6558
      %7852 = vmatprep.subr.bf16.mxu0 %v6566
      %7853 = vmatpush1.bf16.msra.mxu0 %v6565
      %7854 = vmatprep.subr.bf16.mxu0 %v6573
      %7855 = vmatpush1.bf16.msra.mxu0 %v6572
      %7856 = vmatprep.subr.bf16.mxu0 %v6580
      %7857 = vmatpush1.bf16.msra.mxu0 %v6579
      %7858 = vmatprep.subr.bf16.mxu0 %v6587
      %7859 = vmatpush1.bf16.msra.mxu0 %v6586
      %7860 = vmatprep.subr.bf16.mxu0 %v6594
      %7861 = vmatpush1.bf16.msra.mxu0 %v6593
      %7862 = vmatprep.subr.bf16.mxu0 %v6601
      %7863 = vmatpush1.bf16.msra.mxu0 %v6600
      %7864 = vmatprep.subr.bf16.mxu0 %v6608
      %7865 = vmatpush1.bf16.msra.mxu0 %v6607
      %7866 = vmatprep.subr.bf16.mxu0 %v6615
      %7867 = vmatpush1.bf16.msra.mxu0 %v6614
      %7868 = vmatprep.subr.bf16.mxu0 %v6622
      %7869 = vmatpush1.bf16.msra.mxu0 %v6621
      %7870 = vmatprep.subr.bf16.mxu0 %v6629
      %7871 = vmatpush1.bf16.msra.mxu0 %v6628
      %7872 = vmatprep.subr.bf16.mxu0 %v6636
      %7873 = vmatpush1.bf16.msra.mxu0 %v6635
      %7874 = vmatprep.subr.bf16.mxu0 %v6643
      %7875 = vmatpush1.bf16.msra.mxu0 %v6642
      %7876 = vmatprep.subr.bf16.mxu0 %v6650
      %7877 = vmatpush1.bf16.msra.mxu0 %v6649
      %7878 = vmatprep.subr.bf16.mxu0 %v6657
      %7879 = vmatpush1.bf16.msra.mxu0 %v6656
      %7880 = vmatprep.mubr.bf16.mxu0 %v5377
      %7881 = vmatmul.mubr.bf16.gmra.mrb[0].mxu0 %v5376
      %v7882 = vpop.f32.mrb[0].mxu0
      %v7883 = vadd.f32 %v7690, %v7882
      %v7884 = vpop.f32.mrb[0].mxu0
      %v7885 = vadd.f32 %v7692, %v7884
      %v7886 = vpop.f32.mrb[0].mxu0
      %v7887 = vadd.f32 %v7694, %v7886
      %v7888 = vpop.f32.mrb[0].mxu0
      %v7889 = vadd.f32 %v7696, %v7888
      %7890 = vmatprep.mubr.bf16.mxu0 %v5381
      %7891 = vmatmul.mubr.bf16.gmra.mrb[0].mxu0 %v5380
      %v7892 = vpop.f32.mrb[0].mxu0
      %v7893 = vadd.f32 %v7700, %v7892
      %v7894 = vpop.f32.mrb[0].mxu0
      %v7895 = vadd.f32 %v7702, %v7894
      %v7896 = vpop.f32.mrb[0].mxu0
      %v7897 = vadd.f32 %v7704, %v7896
      %v7898 = vpop.f32.mrb[0].mxu0
      %v7899 = vadd.f32 %v7706, %v7898
      %7900 = vmatprep.mubr.bf16.mxu0 %v5385
      %7901 = vmatmul.mubr.bf16.gmra.mrb[0].mxu0 %v5384
      %v7902 = vpop.f32.mrb[0].mxu0
      %v7903 = vadd.f32 %v7710, %v7902
      %v7904 = vpop.f32.mrb[0].mxu0
      %v7905 = vadd.f32 %v7712, %v7904
      %v7906 = vpop.f32.mrb[0].mxu0
      %v7907 = vadd.f32 %v7714, %v7906
      %v7908 = vpop.f32.mrb[0].mxu0
      %v7909 = vadd.f32 %v7716, %v7908
      %7910 = vmatprep.mubr.bf16.mxu0 %v5389
      %7911 = vmatmul.mubr.bf16.gmra.mrb[0].mxu0 %v5388
      %v7912 = vpop.f32.mrb[0].mxu0
      %v7913 = vadd.f32 %v7720, %v7912
      %v7914 = vpop.f32.mrb[0].mxu0
      %v7915 = vadd.f32 %v7722, %v7914
      %v7916 = vpop.f32.mrb[0].mxu0
      %v7917 = vadd.f32 %v7724, %v7916
      %v7918 = vpop.f32.mrb[0].mxu0
      %v7919 = vadd.f32 %v7726, %v7918
      %7920 = vmatprep.mubr.bf16.mxu0 %v5393
      %7921 = vmatmul.mubr.bf16.gmra.mrb[0].mxu0 %v5392
      %v7922 = vpop.f32.mrb[0].mxu0
      %v7923 = vadd.f32 %v7730, %v7922
      %v7924 = vpop.f32.mrb[0].mxu0
      %v7925 = vadd.f32 %v7732, %v7924
      %v7926 = vpop.f32.mrb[0].mxu0
      %v7927 = vadd.f32 %v7734, %v7926
      %v7928 = vpop.f32.mrb[0].mxu0
      %v7929 = vadd.f32 %v7736, %v7928
      %7930 = vmatprep.mubr.bf16.mxu0 %v5397
      %7931 = vmatmul.mubr.bf16.gmra.mrb[0].mxu0 %v5396
      %v7932 = vpop.f32.mrb[0].mxu0
      %v7933 = vadd.f32 %v7740, %v7932
      %v7934 = vpop.f32.mrb[0].mxu0
      %v7935 = vadd.f32 %v7742, %v7934
      %v7936 = vpop.f32.mrb[0].mxu0
      %v7937 = vadd.f32 %v7744, %v7936
      %v7938 = vpop.f32.mrb[0].mxu0
      %v7939 = vadd.f32 %v7746, %v7938
      %7940 = vmatprep.mubr.bf16.mxu0 %v5401
      %7941 = vmatmul.mubr.bf16.gmra.mrb[0].mxu0 %v5400
      %v7942 = vpop.f32.mrb[0].mxu0
      %v7943 = vadd.f32 %v7750, %v7942
      %v7944 = vpop.f32.mrb[0].mxu0
      %v7945 = vadd.f32 %v7752, %v7944
      %v7946 = vpop.f32.mrb[0].mxu0
      %v7947 = vadd.f32 %v7754, %v7946
      %v7948 = vpop.f32.mrb[0].mxu0
      %v7949 = vadd.f32 %v7756, %v7948
      %7950 = vmatprep.mubr.bf16.mxu0 %v5405
      %7951 = vmatmul.mubr.bf16.gmra.mrb[0].mxu0 %v5404
      %v7952 = vpop.f32.mrb[0].mxu0
      %v7953 = vadd.f32 %v7760, %v7952
      %v7954 = vpop.f32.mrb[0].mxu0
      %v7955 = vadd.f32 %v7762, %v7954
      %v7956 = vpop.f32.mrb[0].mxu0
      %v7957 = vadd.f32 %v7764, %v7956
      %v7958 = vpop.f32.mrb[0].mxu0
      %v7959 = vadd.f32 %v7766, %v7958
      %7960 = vmatprep.mubr.bf16.mxu0 %v5409
      %7961 = vmatmul.mubr.bf16.gmra.mrb[0].mxu0 %v5408
      %v7962 = vpop.f32.mrb[0].mxu0
      %v7963 = vadd.f32 %v7770, %v7962
      %v7964 = vpop.f32.mrb[0].mxu0
      %v7965 = vadd.f32 %v7772, %v7964
      %v7966 = vpop.f32.mrb[0].mxu0
      %v7967 = vadd.f32 %v7774, %v7966
      %v7968 = vpop.f32.mrb[0].mxu0
      %v7969 = vadd.f32 %v7776, %v7968
      %7970 = vmatprep.mubr.bf16.mxu0 %v5413
      %7971 = vmatmul.mubr.bf16.gmra.mrb[0].mxu0 %v5412
      %v7972 = vpop.f32.mrb[0].mxu0
      %v7973 = vadd.f32 %v7780, %v7972
      %v7974 = vpop.f32.mrb[0].mxu0
      %v7975 = vadd.f32 %v7782, %v7974
      %v7976 = vpop.f32.mrb[0].mxu0
      %v7977 = vadd.f32 %v7784, %v7976
      %v7978 = vpop.f32.mrb[0].mxu0
      %v7979 = vadd.f32 %v7786, %v7978
      %7980 = vmatprep.mubr.bf16.mxu0 %v5417
      %7981 = vmatmul.mubr.bf16.gmra.mrb[0].mxu0 %v5416
      %v7982 = vpop.f32.mrb[0].mxu0
      %v7983 = vadd.f32 %v7790, %v7982
      %v7984 = vpop.f32.mrb[0].mxu0
      %v7985 = vadd.f32 %v7792, %v7984
      %v7986 = vpop.f32.mrb[0].mxu0
      %v7987 = vadd.f32 %v7794, %v7986
      %v7988 = vpop.f32.mrb[0].mxu0
      %v7989 = vadd.f32 %v7796, %v7988
      %7990 = vmatprep.mubr.bf16.mxu0 %v5421
      %7991 = vmatmul.mubr.bf16.gmra.mrb[0].mxu0 %v5420
      %v7992 = vpop.f32.mrb[0].mxu0
      %v7993 = vadd.f32 %v7800, %v7992
      %v7994 = vpop.f32.mrb[0].mxu0
      %v7995 = vadd.f32 %v7802, %v7994
      %v7996 = vpop.f32.mrb[0].mxu0
      %v7997 = vadd.f32 %v7804, %v7996
      %v7998 = vpop.f32.mrb[0].mxu0
      %v7999 = vadd.f32 %v7806, %v7998
      %8000 = vmatprep.mubr.bf16.mxu0 %v5425
      %8001 = vmatmul.mubr.bf16.gmra.mrb[0].mxu0 %v5424
      %v8002 = vpop.f32.mrb[0].mxu0
      %v8003 = vadd.f32 %v7810, %v8002
      %v8004 = vpop.f32.mrb[0].mxu0
      %v8005 = vadd.f32 %v7812, %v8004
      %v8006 = vpop.f32.mrb[0].mxu0
      %v8007 = vadd.f32 %v7814, %v8006
      %v8008 = vpop.f32.mrb[0].mxu0
      %v8009 = vadd.f32 %v7816, %v8008
      %8010 = vmatprep.mubr.bf16.mxu0 %v5429
      %8011 = vmatmul.mubr.bf16.gmra.mrb[0].mxu0 %v5428
      %v8012 = vpop.f32.mrb[0].mxu0
      %v8013 = vadd.f32 %v7820, %v8012
      %v8014 = vpop.f32.mrb[0].mxu0
      %v8015 = vadd.f32 %v7822, %v8014
      %v8016 = vpop.f32.mrb[0].mxu0
      %v8017 = vadd.f32 %v7824, %v8016
      %v8018 = vpop.f32.mrb[0].mxu0
      %v8019 = vadd.f32 %v7826, %v8018
      %8020 = vmatprep.mubr.bf16.mxu0 %v5433
      %8021 = vmatmul.mubr.bf16.gmra.mrb[0].mxu0 %v5432
      %v8022 = vpop.f32.mrb[0].mxu0
      %v8023 = vadd.f32 %v7830, %v8022
      %v8024 = vpop.f32.mrb[0].mxu0
      %v8025 = vadd.f32 %v7832, %v8024
      %v8026 = vpop.f32.mrb[0].mxu0
      %v8027 = vadd.f32 %v7834, %v8026
      %v8028 = vpop.f32.mrb[0].mxu0
      %v8029 = vadd.f32 %v7836, %v8028
      %8030 = vmatprep.mubr.bf16.mxu0 %v5437
      %8031 = vmatmul.mubr.bf16.gmra.mrb[0].mxu0 %v5436
      %v8032 = vpop.f32.mrb[0].mxu0
      %v8033 = vadd.f32 %v7840, %v8032
      %v8034 = vpop.f32.mrb[0].mxu0
      %v8035 = vadd.f32 %v7842, %v8034
      %v8036 = vpop.f32.mrb[0].mxu0
      %v8037 = vadd.f32 %v7844, %v8036
      %v8038 = vpop.f32.mrb[0].mxu0
      %v8039 = vadd.f32 %v7846, %v8038
      %8040 = vdwg.mxu0
      %8041 = vmatprep.subr.bf16.mxu0 0
      %8042 = vmatpush1.bf16.msra.mxu0 %v6441
      %8043 = vmatprep.subr.bf16.mxu0 0
      %8044 = vmatpush1.bf16.msra.mxu0 %v6448
      %8045 = vmatprep.subr.bf16.mxu0 0
      %8046 = vmatpush1.bf16.msra.mxu0 %v6455
      %8047 = vmatprep.subr.bf16.mxu0 0
      %8048 = vmatpush1.bf16.msra.mxu0 %v6462
      %8049 = vmatprep.subr.bf16.mxu0 0
      %8050 = vmatpush1.bf16.msra.mxu0 %v6469
      %8051 = vmatprep.subr.bf16.mxu0 0
      %8052 = vmatpush1.bf16.msra.mxu0 %v6476
      %8053 = vmatprep.subr.bf16.mxu0 0
      %8054 = vmatpush1.bf16.msra.mxu0 %v6483
      %8055 = vmatprep.subr.bf16.mxu0 0
      %8056 = vmatpush1.bf16.msra.mxu0 %v6490
      %8057 = vmatprep.subr.bf16.mxu0 0
      %8058 = vmatpush1.bf16.msra.mxu0 %v6497
      %8059 = vmatprep.subr.bf16.mxu0 0
      %8060 = vmatpush1.bf16.msra.mxu0 %v6504
      %8061 = vmatprep.subr.bf16.mxu0 0
      %8062 = vmatpush1.bf16.msra.mxu0 %v6511
      %8063 = vmatprep.subr.bf16.mxu0 0
      %8064 = vmatpush1.bf16.msra.mxu0 %v6518
      %8065 = vmatprep.subr.bf16.mxu0 0
      %8066 = vmatpush1.bf16.msra.mxu0 %v6525
      %8067 = vmatprep.subr.bf16.mxu0 0
      %8068 = vmatpush1.bf16.msra.mxu0 %v6532
      %8069 = vmatprep.subr.bf16.mxu0 0
      %8070 = vmatpush1.bf16.msra.mxu0 %v6539
      %8071 = vmatprep.subr.bf16.mxu0 0
      %8072 = vmatpush1.bf16.msra.mxu0 %v6546
      %8073 = vmatprep.mubr.bf16.mxu0 %v5375
      %8074 = vmatmul.mubr.bf16.gmra.mrb[0].mxu0 %v5374
      %v8075 = vpop.f32.mrb[0].mxu0
      %v8076 = vadd.f32 %v5723, %v8075
      %v8077 = vpop.f32.mrb[0].mxu0
      %v8078 = vpop.f32.mrb[0].mxu0
      %v8079 = vadd.f32 %v5723, %v8078
      %v8080 = vpop.f32.mrb[0].mxu0
      %8081 = vmatprep.mubr.bf16.mxu0 %v5379
      %8082 = vmatmul.mubr.bf16.gmra.mrb[0].mxu0 %v5378
      %v8083 = vpop.f32.mrb[0].mxu0
      %v8084 = vadd.f32 %v5723, %v8083
      %v8085 = vpop.f32.mrb[0].mxu0
      %v8086 = vpop.f32.mrb[0].mxu0
      %v8087 = vadd.f32 %v5723, %v8086
      %v8088 = vpop.f32.mrb[0].mxu0
      %8089 = vmatprep.mubr.bf16.mxu0 %v5383
      %8090 = vmatmul.mubr.bf16.gmra.mrb[0].mxu0 %v5382
      %v8091 = vpop.f32.mrb[0].mxu0
      %v8092 = vadd.f32 %v5723, %v8091
      %v8093 = vpop.f32.mrb[0].mxu0
      %v8094 = vpop.f32.mrb[0].mxu0
      %v8095 = vadd.f32 %v5723, %v8094
      %v8096 = vpop.f32.mrb[0].mxu0
      %8097 = vmatprep.mubr.bf16.mxu0 %v5387
      %8098 = vmatmul.mubr.bf16.gmra.mrb[0].mxu0 %v5386
      %v8099 = vpop.f32.mrb[0].mxu0
      %v8100 = vadd.f32 %v5723, %v8099
      %v8101 = vpop.f32.mrb[0].mxu0
      %v8102 = vpop.f32.mrb[0].mxu0
      %v8103 = vadd.f32 %v5723, %v8102
      %v8104 = vpop.f32.mrb[0].mxu0
      %8105 = vmatprep.mubr.bf16.mxu0 %v5391
      %8106 = vmatmul.mubr.bf16.gmra.mrb[0].mxu0 %v5390
      %v8107 = vpop.f32.mrb[0].mxu0
      %v8108 = vadd.f32 %v5723, %v8107
      %v8109 = vpop.f32.mrb[0].mxu0
      %v8110 = vpop.f32.mrb[0].mxu0
      %v8111 = vadd.f32 %v5723, %v8110
      %v8112 = vpop.f32.mrb[0].mxu0
      %8113 = vmatprep.mubr.bf16.mxu0 %v5395
      %8114 = vmatmul.mubr.bf16.gmra.mrb[0].mxu0 %v5394
      %v8115 = vpop.f32.mrb[0].mxu0
      %v8116 = vadd.f32 %v5723, %v8115
      %v8117 = vpop.f32.mrb[0].mxu0
      %v8118 = vpop.f32.mrb[0].mxu0
      %v8119 = vadd.f32 %v5723, %v8118
      %v8120 = vpop.f32.mrb[0].mxu0
      %8121 = vmatprep.mubr.bf16.mxu0 %v5399
      %8122 = vmatmul.mubr.bf16.gmra.mrb[0].mxu0 %v5398
      %v8123 = vpop.f32.mrb[0].mxu0
      %v8124 = vadd.f32 %v5723, %v8123
      %v8125 = vpop.f32.mrb[0].mxu0
      %v8126 = vpop.f32.mrb[0].mxu0
      %v8127 = vadd.f32 %v5723, %v8126
      %v8128 = vpop.f32.mrb[0].mxu0
      %8129 = vmatprep.mubr.bf16.mxu0 %v5403
      %8130 = vmatmul.mubr.bf16.gmra.mrb[0].mxu0 %v5402
      %v8131 = vpop.f32.mrb[0].mxu0
      %v8132 = vadd.f32 %v5723, %v8131
      %v8133 = vpop.f32.mrb[0].mxu0
      %v8134 = vpop.f32.mrb[0].mxu0
      %v8135 = vadd.f32 %v5723, %v8134
      %v8136 = vpop.f32.mrb[0].mxu0
      %8137 = vmatprep.mubr.bf16.mxu0 %v5407
      %8138 = vmatmul.mubr.bf16.gmra.mrb[0].mxu0 %v5406
      %v8139 = vpop.f32.mrb[0].mxu0
      %v8140 = vadd.f32 %v5723, %v8139
      %v8141 = vpop.f32.mrb[0].mxu0
      %v8142 = vpop.f32.mrb[0].mxu0
      %v8143 = vadd.f32 %v5723, %v8142
      %v8144 = vpop.f32.mrb[0].mxu0
      %8145 = vmatprep.mubr.bf16.mxu0 %v5411
      %8146 = vmatmul.mubr.bf16.gmra.mrb[0].mxu0 %v5410
      %v8147 = vpop.f32.mrb[0].mxu0
      %v8148 = vadd.f32 %v5723, %v8147
      %v8149 = vpop.f32.mrb[0].mxu0
      %v8150 = vpop.f32.mrb[0].mxu0
      %v8151 = vadd.f32 %v5723, %v8150
      %v8152 = vpop.f32.mrb[0].mxu0
      %8153 = vmatprep.mubr.bf16.mxu0 %v5415
      %8154 = vmatmul.mubr.bf16.gmra.mrb[0].mxu0 %v5414
      %v8155 = vpop.f32.mrb[0].mxu0
      %v8156 = vadd.f32 %v5723, %v8155
      %v8157 = vpop.f32.mrb[0].mxu0
      %v8158 = vpop.f32.mrb[0].mxu0
      %v8159 = vadd.f32 %v5723, %v8158
      %v8160 = vpop.f32.mrb[0].mxu0
      %8161 = vmatprep.mubr.bf16.mxu0 %v5419
      %8162 = vmatmul.mubr.bf16.gmra.mrb[0].mxu0 %v5418
      %v8163 = vpop.f32.mrb[0].mxu0
      %v8164 = vadd.f32 %v5723, %v8163
      %v8165 = vpop.f32.mrb[0].mxu0
      %v8166 = vpop.f32.mrb[0].mxu0
      %v8167 = vadd.f32 %v5723, %v8166
      %v8168 = vpop.f32.mrb[0].mxu0
      %8169 = vmatprep.mubr.bf16.mxu0 %v5423
      %8170 = vmatmul.mubr.bf16.gmra.mrb[0].mxu0 %v5422
      %v8171 = vpop.f32.mrb[0].mxu0
      %v8172 = vadd.f32 %v5723, %v8171
      %v8173 = vpop.f32.mrb[0].mxu0
      %v8174 = vpop.f32.mrb[0].mxu0
      %v8175 = vadd.f32 %v5723, %v8174
      %v8176 = vpop.f32.mrb[0].mxu0
      %8177 = vmatprep.mubr.bf16.mxu0 %v5427
      %8178 = vmatmul.mubr.bf16.gmra.mrb[0].mxu0 %v5426
      %v8179 = vpop.f32.mrb[0].mxu0
      %v8180 = vadd.f32 %v5723, %v8179
      %v8181 = vpop.f32.mrb[0].mxu0
      %v8182 = vpop.f32.mrb[0].mxu0
      %v8183 = vadd.f32 %v5723, %v8182
      %v8184 = vpop.f32.mrb[0].mxu0
      %8185 = vmatprep.mubr.bf16.mxu0 %v5431
      %8186 = vmatmul.mubr.bf16.gmra.mrb[0].mxu0 %v5430
      %v8187 = vpop.f32.mrb[0].mxu0
      %v8188 = vadd.f32 %v5723, %v8187
      %v8189 = vpop.f32.mrb[0].mxu0
      %v8190 = vpop.f32.mrb[0].mxu0
      %v8191 = vadd.f32 %v5723, %v8190
      %v8192 = vpop.f32.mrb[0].mxu0
      %8193 = vmatprep.mubr.bf16.mxu0 %v5435
      %8194 = vmatmul.mubr.bf16.gmra.mrb[0].mxu0 %v5434
      %v8195 = vpop.f32.mrb[0].mxu0
      %v8196 = vadd.f32 %v5723, %v8195
      %v8197 = vpop.f32.mrb[0].mxu0
      %v8198 = vpop.f32.mrb[0].mxu0
      %v8199 = vadd.f32 %v5723, %v8198
      %v8200 = vpop.f32.mrb[0].mxu0
      %8201 = vdwg.mxu0
      %8202 = vmatprep.subr.bf16.mxu0 0
      %8203 = vmatpush1.bf16.msra.mxu0 %v6553
      %8204 = vmatprep.subr.bf16.mxu0 0
      %8205 = vmatpush1.bf16.msra.mxu0 %v6560
      %8206 = vmatprep.subr.bf16.mxu0 0
      %8207 = vmatpush1.bf16.msra.mxu0 %v6567
      %8208 = vmatprep.subr.bf16.mxu0 0
      %8209 = vmatpush1.bf16.msra.mxu0 %v6574
      %8210 = vmatprep.subr.bf16.mxu0 0
      %8211 = vmatpush1.bf16.msra.mxu0 %v6581
      %8212 = vmatprep.subr.bf16.mxu0 0
      %8213 = vmatpush1.bf16.msra.mxu0 %v6588
      %8214 = vmatprep.subr.bf16.mxu0 0
      %8215 = vmatpush1.bf16.msra.mxu0 %v6595
      %8216 = vmatprep.subr.bf16.mxu0 0
      %8217 = vmatpush1.bf16.msra.mxu0 %v6602
      %8218 = vmatprep.subr.bf16.mxu0 0
      %8219 = vmatpush1.bf16.msra.mxu0 %v6609
      %8220 = vmatprep.subr.bf16.mxu0 0
      %8221 = vmatpush1.bf16.msra.mxu0 %v6616
      %8222 = vmatprep.subr.bf16.mxu0 0
      %8223 = vmatpush1.bf16.msra.mxu0 %v6623
      %8224 = vmatprep.subr.bf16.mxu0 0
      %8225 = vmatpush1.bf16.msra.mxu0 %v6630
      %8226 = vmatprep.subr.bf16.mxu0 0
      %8227 = vmatpush1.bf16.msra.mxu0 %v6637
      %8228 = vmatprep.subr.bf16.mxu0 0
      %8229 = vmatpush1.bf16.msra.mxu0 %v6644
      %8230 = vmatprep.subr.bf16.mxu0 0
      %8231 = vmatpush1.bf16.msra.mxu0 %v6651
      %8232 = vmatprep.subr.bf16.mxu0 0
      %8233 = vmatpush1.bf16.msra.mxu0 %v6658
      %8234 = vmatprep.mubr.bf16.mxu0 %v5377
      %8235 = vmatmul.mubr.bf16.gmra.mrb[0].mxu0 %v5376
      %v8236 = vpop.f32.mrb[0].mxu0
      %v8237 = vadd.f32 %v8076, %v8236
      %v8238 = vpop.f32.mrb[0].mxu0
      %v8239 = vpop.f32.mrb[0].mxu0
      %v8240 = vadd.f32 %v8079, %v8239
      %v8241 = vpop.f32.mrb[0].mxu0
      %8242 = vmatprep.mubr.bf16.mxu0 %v5381
      %8243 = vmatmul.mubr.bf16.gmra.mrb[0].mxu0 %v5380
      %v8244 = vpop.f32.mrb[0].mxu0
      %v8245 = vadd.f32 %v8084, %v8244
      %v8246 = vpop.f32.mrb[0].mxu0
      %v8247 = vpop.f32.mrb[0].mxu0
      %v8248 = vadd.f32 %v8087, %v8247
      %v8249 = vpop.f32.mrb[0].mxu0
      %8250 = vmatprep.mubr.bf16.mxu0 %v5385
      %8251 = vmatmul.mubr.bf16.gmra.mrb[0].mxu0 %v5384
      %v8252 = vpop.f32.mrb[0].mxu0
      %v8253 = vadd.f32 %v8092, %v8252
      %v8254 = vpop.f32.mrb[0].mxu0
      %v8255 = vpop.f32.mrb[0].mxu0
      %v8256 = vadd.f32 %v8095, %v8255
      %v8257 = vpop.f32.mrb[0].mxu0
      %8258 = vmatprep.mubr.bf16.mxu0 %v5389
      %8259 = vmatmul.mubr.bf16.gmra.mrb[0].mxu0 %v5388
      %v8260 = vpop.f32.mrb[0].mxu0
      %v8261 = vadd.f32 %v8100, %v8260
      %v8262 = vpop.f32.mrb[0].mxu0
      %v8263 = vpop.f32.mrb[0].mxu0
      %v8264 = vadd.f32 %v8103, %v8263
      %v8265 = vpop.f32.mrb[0].mxu0
      %8266 = vmatprep.mubr.bf16.mxu0 %v5393
      %8267 = vmatmul.mubr.bf16.gmra.mrb[0].mxu0 %v5392
      %v8268 = vpop.f32.mrb[0].mxu0
      %v8269 = vadd.f32 %v8108, %v8268
      %v8270 = vpop.f32.mrb[0].mxu0
      %v8271 = vpop.f32.mrb[0].mxu0
      %v8272 = vadd.f32 %v8111, %v8271
      %v8273 = vpop.f32.mrb[0].mxu0
      %8274 = vmatprep.mubr.bf16.mxu0 %v5397
      %8275 = vmatmul.mubr.bf16.gmra.mrb[0].mxu0 %v5396
      %v8276 = vpop.f32.mrb[0].mxu0
      %v8277 = vadd.f32 %v8116, %v8276
      %v8278 = vpop.f32.mrb[0].mxu0
      %v8279 = vpop.f32.mrb[0].mxu0
      %v8280 = vadd.f32 %v8119, %v8279
      %v8281 = vpop.f32.mrb[0].mxu0
      %8282 = vmatprep.mubr.bf16.mxu0 %v5401
      %8283 = vmatmul.mubr.bf16.gmra.mrb[0].mxu0 %v5400
      %v8284 = vpop.f32.mrb[0].mxu0
      %v8285 = vadd.f32 %v8124, %v8284
      %v8286 = vpop.f32.mrb[0].mxu0
      %v8287 = vpop.f32.mrb[0].mxu0
      %v8288 = vadd.f32 %v8127, %v8287
      %v8289 = vpop.f32.mrb[0].mxu0
      %8290 = vmatprep.mubr.bf16.mxu0 %v5405
      %8291 = vmatmul.mubr.bf16.gmra.mrb[0].mxu0 %v5404
      %v8292 = vpop.f32.mrb[0].mxu0
      %v8293 = vadd.f32 %v8132, %v8292
      %v8294 = vpop.f32.mrb[0].mxu0
      %v8295 = vpop.f32.mrb[0].mxu0
      %v8296 = vadd.f32 %v8135, %v8295
      %v8297 = vpop.f32.mrb[0].mxu0
      %8298 = vmatprep.mubr.bf16.mxu0 %v5409
      %8299 = vmatmul.mubr.bf16.gmra.mrb[0].mxu0 %v5408
      %v8300 = vpop.f32.mrb[0].mxu0
      %v8301 = vadd.f32 %v8140, %v8300
      %v8302 = vpop.f32.mrb[0].mxu0
      %v8303 = vpop.f32.mrb[0].mxu0
      %v8304 = vadd.f32 %v8143, %v8303
      %v8305 = vpop.f32.mrb[0].mxu0
      %8306 = vmatprep.mubr.bf16.mxu0 %v5413
      %8307 = vmatmul.mubr.bf16.gmra.mrb[0].mxu0 %v5412
      %v8308 = vpop.f32.mrb[0].mxu0
      %v8309 = vadd.f32 %v8148, %v8308
      %v8310 = vpop.f32.mrb[0].mxu0
      %v8311 = vpop.f32.mrb[0].mxu0
      %v8312 = vadd.f32 %v8151, %v8311
      %v8313 = vpop.f32.mrb[0].mxu0
      %8314 = vmatprep.mubr.bf16.mxu0 %v5417
      %8315 = vmatmul.mubr.bf16.gmra.mrb[0].mxu0 %v5416
      %v8316 = vpop.f32.mrb[0].mxu0
      %v8317 = vadd.f32 %v8156, %v8316
      %v8318 = vpop.f32.mrb[0].mxu0
      %v8319 = vpop.f32.mrb[0].mxu0
      %v8320 = vadd.f32 %v8159, %v8319
      %v8321 = vpop.f32.mrb[0].mxu0
      %8322 = vmatprep.mubr.bf16.mxu0 %v5421
      %8323 = vmatmul.mubr.bf16.gmra.mrb[0].mxu0 %v5420
      %v8324 = vpop.f32.mrb[0].mxu0
      %v8325 = vadd.f32 %v8164, %v8324
      %v8326 = vpop.f32.mrb[0].mxu0
      %v8327 = vpop.f32.mrb[0].mxu0
      %v8328 = vadd.f32 %v8167, %v8327
      %v8329 = vpop.f32.mrb[0].mxu0
      %8330 = vmatprep.mubr.bf16.mxu0 %v5425
      %8331 = vmatmul.mubr.bf16.gmra.mrb[0].mxu0 %v5424
      %v8332 = vpop.f32.mrb[0].mxu0
      %v8333 = vadd.f32 %v8172, %v8332
      %v8334 = vpop.f32.mrb[0].mxu0
      %v8335 = vpop.f32.mrb[0].mxu0
      %v8336 = vadd.f32 %v8175, %v8335
      %v8337 = vpop.f32.mrb[0].mxu0
      %8338 = vmatprep.mubr.bf16.mxu0 %v5429
      %8339 = vmatmul.mubr.bf16.gmra.mrb[0].mxu0 %v5428
      %v8340 = vpop.f32.mrb[0].mxu0
      %v8341 = vadd.f32 %v8180, %v8340
      %v8342 = vpop.f32.mrb[0].mxu0
      %v8343 = vpop.f32.mrb[0].mxu0
      %v8344 = vadd.f32 %v8183, %v8343
      %v8345 = vpop.f32.mrb[0].mxu0
      %8346 = vmatprep.mubr.bf16.mxu0 %v5433
      %8347 = vmatmul.mubr.bf16.gmra.mrb[0].mxu0 %v5432
      %v8348 = vpop.f32.mrb[0].mxu0
      %v8349 = vadd.f32 %v8188, %v8348
      %v8350 = vpop.f32.mrb[0].mxu0
      %v8351 = vpop.f32.mrb[0].mxu0
      %v8352 = vadd.f32 %v8191, %v8351
      %v8353 = vpop.f32.mrb[0].mxu0
      %8354 = vmatprep.mubr.bf16.mxu0 %v5437
      %8355 = vmatmul.mubr.bf16.gmra.mrb[0].mxu0 %v5436
      %v8356 = vpop.f32.mrb[0].mxu0
      %v8357 = vadd.f32 %v8196, %v8356
      %v8358 = vpop.f32.mrb[0].mxu0
      %v8359 = vpop.f32.mrb[0].mxu0
      %v8360 = vadd.f32 %v8199, %v8359
      %v8361 = vpop.f32.mrb[0].mxu0
      %8362 = vdwg.mxu0
      %v8363 = vtanh.pop %v7111
      %v8364 = vtanh.pop %v7113
      %v8365 = vtanh.pop %v7497
      %v8366 = vtanh.pop %v7499
      %v8367 = vtanh.pop %v7883
      %v8368 = vtanh.pop %v7885
      %v8369 = vtanh.pop %v8237
      %v8370 = vtanh.pop %v7115
      %v8371 = vtanh.pop %v7117
      %v8372 = vtanh.pop %v7501
      %v8373 = vtanh.pop %v7503
      %v8374 = vtanh.pop %v7887
      %v8375 = vtanh.pop %v7889
      %v8376 = vtanh.pop %v8240
      %v8377 = vtanh.pop %v7121
      %v8378 = vtanh.pop %v7123
      %v8379 = vtanh.pop %v7507
      %v8380 = vtanh.pop %v7509
      %v8381 = vtanh.pop %v7893
      %v8382 = vtanh.pop %v7895
      %v8383 = vtanh.pop %v8245
      %v8384 = vtanh.pop %v7125
      %v8385 = vtanh.pop %v7127
      %v8386 = vtanh.pop %v7511
      %v8387 = vtanh.pop %v7513
      %v8388 = vtanh.pop %v7897
      %v8389 = vtanh.pop %v7899
      %v8390 = vtanh.pop %v8248
      %v8391 = vtanh.pop %v7131
      %v8392 = vtanh.pop %v7133
      %v8393 = vtanh.pop %v7517
      %v8394 = vtanh.pop %v7519
      %v8395 = vtanh.pop %v7903
      %v8396 = vtanh.pop %v7905
      %v8397 = vtanh.pop %v8253
      %v8398 = vtanh.pop %v7135
      %v8399 = vtanh.pop %v7137
      %v8400 = vtanh.pop %v7521
      %v8401 = vtanh.pop %v7523
      %v8402 = vtanh.pop %v7907
      %v8403 = vtanh.pop %v7909
      %v8404 = vtanh.pop %v8256
      %v8405 = vtanh.pop %v7141
      %v8406 = vtanh.pop %v7143
      %v8407 = vtanh.pop %v7527
      %v8408 = vtanh.pop %v7529
      %v8409 = vtanh.pop %v7913
      %v8410 = vtanh.pop %v7915
      %v8411 = vtanh.pop %v8261
      %v8412 = vtanh.pop %v7145
      %v8413 = vtanh.pop %v7147
      %v8414 = vtanh.pop %v7531
      %v8415 = vtanh.pop %v7533
      %v8416 = vtanh.pop %v7917
      %v8417 = vtanh.pop %v7919
      %v8418 = vtanh.pop %v8264
      %v8419 = vtanh.pop %v7151
      %v8420 = vtanh.pop %v7153
      %v8421 = vtanh.pop %v7537
      %v8422 = vtanh.pop %v7539
      %v8423 = vtanh.pop %v7923
      %v8424 = vtanh.pop %v7925
      %v8425 = vtanh.pop %v8269
      %v8426 = vtanh.pop %v7155
      %v8427 = vtanh.pop %v7157
      %v8428 = vtanh.pop %v7541
      %v8429 = vtanh.pop %v7543
      %v8430 = vtanh.pop %v7927
      %v8431 = vtanh.pop %v7929
      %v8432 = vtanh.pop %v8272
      %v8433 = vtanh.pop %v7161
      %v8434 = vtanh.pop %v7163
      %v8435 = vtanh.pop %v7547
      %v8436 = vtanh.pop %v7549
      %v8437 = vtanh.pop %v7933
      %v8438 = vtanh.pop %v7935
      %v8439 = vtanh.pop %v8277
      %v8440 = vtanh.pop %v7165
      %v8441 = vtanh.pop %v7167
      %v8442 = vtanh.pop %v7551
      %v8443 = vtanh.pop %v7553
      %v8444 = vtanh.pop %v7937
      %v8445 = vtanh.pop %v7939
      %v8446 = vtanh.pop %v8280
      %v8447 = vtanh.pop %v7171
      %v8448 = vtanh.pop %v7173
      %v8449 = vtanh.pop %v7557
      %v8450 = vtanh.pop %v7559
      %v8451 = vtanh.pop %v7943
      %v8452 = vtanh.pop %v7945
      %v8453 = vtanh.pop %v8285
      %v8454 = vtanh.pop %v7175
      %v8455 = vtanh.pop %v7177
      %v8456 = vtanh.pop %v7561
      %v8457 = vtanh.pop %v7563
      %v8458 = vtanh.pop %v7947
      %v8459 = vtanh.pop %v7949
      %v8460 = vtanh.pop %v8288
      %v8461 = vtanh.pop %v7181
      %v8462 = vtanh.pop %v7183
      %v8463 = vtanh.pop %v7567
      %v8464 = vtanh.pop %v7569
      %v8465 = vtanh.pop %v7953
      %v8466 = vtanh.pop %v7955
      %v8467 = vtanh.pop %v8293
      %v8468 = vtanh.pop %v7185
      %v8469 = vtanh.pop %v7187
      %v8470 = vtanh.pop %v7571
      %v8471 = vtanh.pop %v7573
      %v8472 = vtanh.pop %v7957
      %v8473 = vtanh.pop %v7959
      %v8474 = vtanh.pop %v8296
      %v8475 = vtanh.pop %v7191
      %v8476 = vtanh.pop %v7193
      %v8477 = vtanh.pop %v7577
      %v8478 = vtanh.pop %v7579
      %v8479 = vtanh.pop %v7963
      %v8480 = vtanh.pop %v7965
      %v8481 = vtanh.pop %v8301
      %v8482 = vtanh.pop %v7195
      %v8483 = vtanh.pop %v7197
      %v8484 = vtanh.pop %v7581
      %v8485 = vtanh.pop %v7583
      %v8486 = vtanh.pop %v7967
      %v8487 = vtanh.pop %v7969
      %v8488 = vtanh.pop %v8304
      %v8489 = vtanh.pop %v7201
      %v8490 = vtanh.pop %v7203
      %v8491 = vtanh.pop %v7587
      %v8492 = vtanh.pop %v7589
      %v8493 = vtanh.pop %v7973
      %v8494 = vtanh.pop %v7975
      %v8495 = vtanh.pop %v8309
      %v8496 = vtanh.pop %v7205
      %v8497 = vtanh.pop %v7207
      %v8498 = vtanh.pop %v7591
      %v8499 = vtanh.pop %v7593
      %v8500 = vtanh.pop %v7977
      %v8501 = vtanh.pop %v7979
      %v8502 = vtanh.pop %v8312
      %v8503 = vtanh.pop %v7211
      %v8504 = vtanh.pop %v7213
      %v8505 = vtanh.pop %v7597
      %v8506 = vtanh.pop %v7599
      %v8507 = vtanh.pop %v7983
      %v8508 = vtanh.pop %v7985
      %v8509 = vtanh.pop %v8317
      %v8510 = vtanh.pop %v7215
      %v8511 = vtanh.pop %v7217
      %v8512 = vtanh.pop %v7601
      %v8513 = vtanh.pop %v7603
      %v8514 = vtanh.pop %v7987
      %v8515 = vtanh.pop %v7989
      %v8516 = vtanh.pop %v8320
      %v8517 = vtanh.pop %v7221
      %v8518 = vtanh.pop %v7223
      %v8519 = vtanh.pop %v7607
      %v8520 = vtanh.pop %v7609
      %v8521 = vtanh.pop %v7993
      %v8522 = vtanh.pop %v7995
      %v8523 = vtanh.pop %v8325
      %v8524 = vtanh.pop %v7225
      %v8525 = vtanh.pop %v7227
      %v8526 = vtanh.pop %v7611
      %v8527 = vtanh.pop %v7613
      %v8528 = vtanh.pop %v7997
      %v8529 = vtanh.pop %v7999
      %v8530 = vtanh.pop %v8328
      %v8531 = vtanh.pop %v7231
      %v8532 = vtanh.pop %v7233
      %v8533 = vtanh.pop %v7617
      %v8534 = vtanh.pop %v7619
      %v8535 = vtanh.pop %v8003
      %v8536 = vtanh.pop %v8005
      %v8537 = vtanh.pop %v8333
      %v8538 = vtanh.pop %v7235
      %v8539 = vtanh.pop %v7237
      %v8540 = vtanh.pop %v7621
      %v8541 = vtanh.pop %v7623
      %v8542 = vtanh.pop %v8007
      %v8543 = vtanh.pop %v8009
      %v8544 = vtanh.pop %v8336
      %v8545 = vtanh.pop %v7241
      %v8546 = vtanh.pop %v7243
      %v8547 = vtanh.pop %v7627
      %v8548 = vtanh.pop %v7629
      %v8549 = vtanh.pop %v8013
      %v8550 = vtanh.pop %v8015
      %v8551 = vtanh.pop %v8341
      %v8552 = vtanh.pop %v7245
      %v8553 = vtanh.pop %v7247
      %v8554 = vtanh.pop %v7631
      %v8555 = vtanh.pop %v7633
      %v8556 = vtanh.pop %v8017
      %v8557 = vtanh.pop %v8019
      %v8558 = vtanh.pop %v8344
      %v8559 = vtanh.pop %v7251
      %v8560 = vtanh.pop %v7253
      %v8561 = vtanh.pop %v7637
      %v8562 = vtanh.pop %v7639
      %v8563 = vtanh.pop %v8023
      %v8564 = vtanh.pop %v8025
      %v8565 = vtanh.pop %v8349
      %v8566 = vtanh.pop %v7255
      %v8567 = vtanh.pop %v7257
      %v8568 = vtanh.pop %v7641
      %v8569 = vtanh.pop %v7643
      %v8570 = vtanh.pop %v8027
      %v8571 = vtanh.pop %v8029
      %v8572 = vtanh.pop %v8352
      %v8573 = vtanh.pop %v7261
      %v8574 = vtanh.pop %v7263
      %v8575 = vtanh.pop %v7647
      %v8576 = vtanh.pop %v7649
      %v8577 = vtanh.pop %v8033
      %v8578 = vtanh.pop %v8035
      %v8579 = vtanh.pop %v8357
      %v8580 = vtanh.pop %v7265
      %v8581 = vtanh.pop %v7267
      %v8582 = vtanh.pop %v7651
      %v8583 = vtanh.pop %v7653
      %v8584 = vtanh.pop %v8037
      %v8585 = vtanh.pop %v8039
      %v8586 = vtanh.pop %v8360
      %8587 = vst [vmem:[%s339] sm:$0xff] %v8363
      %8588 = vst [vmem:[%s339 + $0x8] sm:$0xff] %v8364
      %8589 = vst [vmem:[%s339 + $0x10] sm:$0xff] %v8365
      %8590 = vst [vmem:[%s339 + $0x18] sm:$0xff] %v8366
      %8591 = vst [vmem:[%s339 + $0x20] sm:$0xff] %v8367
      %8592 = vst [vmem:[%s339 + $0x28] sm:$0xff] %v8368
      %8593 = vst.msk [vmem:[%s339 + $0x30] sm:$0xff] %vm2228, %v8369
      %8594 = vst [vmem:[%s339 + $0x38] sm:$0xff] %v8370
      %8595 = vst [vmem:[%s339 + $0x40] sm:$0xff] %v8371
      %8596 = vst [vmem:[%s339 + $0x48] sm:$0xff] %v8372
      %8597 = vst [vmem:[%s339 + $0x50] sm:$0xff] %v8373
      %8598 = vst [vmem:[%s339 + $0x58] sm:$0xff] %v8374
      %8599 = vst [vmem:[%s339 + $0x60] sm:$0xff] %v8375
      %8600 = vst.msk [vmem:[%s339 + $0x68] sm:$0xff] %vm2228, %v8376
      %8601 = vst [vmem:[%s339 + $0x70] sm:$0xff] %v8377
      %8602 = vst [vmem:[%s339 + $0x78] sm:$0xff] %v8378
      %8603 = vst [vmem:[%s339 + $0x80] sm:$0xff] %v8379
      %8604 = vst [vmem:[%s339 + $0x88] sm:$0xff] %v8380
      %8605 = vst [vmem:[%s339 + $0x90] sm:$0xff] %v8381
      %8606 = vst [vmem:[%s339 + $0x98] sm:$0xff] %v8382
      %8607 = vst.msk [vmem:[%s339 + $0xa0] sm:$0xff] %vm2228, %v8383
      %8608 = vst [vmem:[%s339 + $0xa8] sm:$0xff] %v8384
      %8609 = vst [vmem:[%s339 + $0xb0] sm:$0xff] %v8385
      %8610 = vst [vmem:[%s339 + $0xb8] sm:$0xff] %v8386
      %8611 = vst [vmem:[%s339 + $0xc0] sm:$0xff] %v8387
      %8612 = vst [vmem:[%s339 + $0xc8] sm:$0xff] %v8388
      %8613 = vst [vmem:[%s339 + $0xd0] sm:$0xff] %v8389
      %8614 = vst.msk [vmem:[%s339 + $0xd8] sm:$0xff] %vm2228, %v8390
      %8615 = vst [vmem:[%s339 + $0xe0] sm:$0xff] %v8391
      %8616 = vst [vmem:[%s339 + $0xe8] sm:$0xff] %v8392
      %8617 = vst [vmem:[%s339 + $0xf0] sm:$0xff] %v8393
      %8618 = vst [vmem:[%s339 + $0xf8] sm:$0xff] %v8394
      %8619 = vst [vmem:[%s339 + $0x100] sm:$0xff] %v8395
      %8620 = vst [vmem:[%s339 + $0x108] sm:$0xff] %v8396
      %8621 = vst.msk [vmem:[%s339 + $0x110] sm:$0xff] %vm2228, %v8397
      %8622 = vst [vmem:[%s339 + $0x118] sm:$0xff] %v8398
      %8623 = vst [vmem:[%s339 + $0x120] sm:$0xff] %v8399
      %8624 = vst [vmem:[%s339 + $0x128] sm:$0xff] %v8400
      %8625 = vst [vmem:[%s339 + $0x130] sm:$0xff] %v8401
      %8626 = vst [vmem:[%s339 + $0x138] sm:$0xff] %v8402
      %8627 = vst [vmem:[%s339 + $0x140] sm:$0xff] %v8403
      %8628 = vst.msk [vmem:[%s339 + $0x148] sm:$0xff] %vm2228, %v8404
      %8629 = vst [vmem:[%s339 + $0x150] sm:$0xff] %v8405
      %8630 = vst [vmem:[%s339 + $0x158] sm:$0xff] %v8406
      %8631 = vst [vmem:[%s339 + $0x160] sm:$0xff] %v8407
      %8632 = vst [vmem:[%s339 + $0x168] sm:$0xff] %v8408
      %8633 = vst [vmem:[%s339 + $0x170] sm:$0xff] %v8409
      %8634 = vst [vmem:[%s339 + $0x178] sm:$0xff] %v8410
      %8635 = vst.msk [vmem:[%s339 + $0x180] sm:$0xff] %vm2228, %v8411
      %8636 = vst [vmem:[%s339 + $0x188] sm:$0xff] %v8412
      %8637 = vst [vmem:[%s339 + $0x190] sm:$0xff] %v8413
      %8638 = vst [vmem:[%s339 + $0x198] sm:$0xff] %v8414
      %8639 = vst [vmem:[%s339 + $0x1a0] sm:$0xff] %v8415
      %8640 = vst [vmem:[%s339 + $0x1a8] sm:$0xff] %v8416
      %8641 = vst [vmem:[%s339 + $0x1b0] sm:$0xff] %v8417
      %8642 = vst.msk [vmem:[%s339 + $0x1b8] sm:$0xff] %vm2228, %v8418
      %8643 = vst [vmem:[%s339 + $0x1c0] sm:$0xff] %v8419
      %8644 = vst [vmem:[%s339 + $0x1c8] sm:$0xff] %v8420
      %8645 = vst [vmem:[%s339 + $0x1d0] sm:$0xff] %v8421
      %8646 = vst [vmem:[%s339 + $0x1d8] sm:$0xff] %v8422
      %8647 = vst [vmem:[%s339 + $0x1e0] sm:$0xff] %v8423
      %8648 = vst [vmem:[%s339 + $0x1e8] sm:$0xff] %v8424
      %8649 = vst.msk [vmem:[%s339 + $0x1f0] sm:$0xff] %vm2228, %v8425
      %8650 = vst [vmem:[%s339 + $0x1f8] sm:$0xff] %v8426
      %8651 = vst [vmem:[%s339 + $0x200] sm:$0xff] %v8427
      %8652 = vst [vmem:[%s339 + $0x208] sm:$0xff] %v8428
      %8653 = vst [vmem:[%s339 + $0x210] sm:$0xff] %v8429
      %8654 = vst [vmem:[%s339 + $0x218] sm:$0xff] %v8430
      %8655 = vst [vmem:[%s339 + $0x220] sm:$0xff] %v8431
      %8656 = vst.msk [vmem:[%s339 + $0x228] sm:$0xff] %vm2228, %v8432
      %8657 = vst [vmem:[%s339 + $0x230] sm:$0xff] %v8433
      %8658 = vst [vmem:[%s339 + $0x238] sm:$0xff] %v8434
      %8659 = vst [vmem:[%s339 + $0x240] sm:$0xff] %v8435
      %8660 = vst [vmem:[%s339 + $0x248] sm:$0xff] %v8436
      %8661 = vst [vmem:[%s339 + $0x250] sm:$0xff] %v8437
      %8662 = vst [vmem:[%s339 + $0x258] sm:$0xff] %v8438
      %8663 = vst.msk [vmem:[%s339 + $0x260] sm:$0xff] %vm2228, %v8439
      %8664 = vst [vmem:[%s339 + $0x268] sm:$0xff] %v8440
      %8665 = vst [vmem:[%s339 + $0x270] sm:$0xff] %v8441
      %8666 = vst [vmem:[%s339 + $0x278] sm:$0xff] %v8442
      %8667 = vst [vmem:[%s339 + $0x280] sm:$0xff] %v8443
      %8668 = vst [vmem:[%s339 + $0x288] sm:$0xff] %v8444
      %8669 = vst [vmem:[%s339 + $0x290] sm:$0xff] %v8445
      %8670 = vst.msk [vmem:[%s339 + $0x298] sm:$0xff] %vm2228, %v8446
      %8671 = vst [vmem:[%s339 + $0x2a0] sm:$0xff] %v8447
      %8672 = vst [vmem:[%s339 + $0x2a8] sm:$0xff] %v8448
      %8673 = vst [vmem:[%s339 + $0x2b0] sm:$0xff] %v8449
      %8674 = vst [vmem:[%s339 + $0x2b8] sm:$0xff] %v8450
      %8675 = vst [vmem:[%s339 + $0x2c0] sm:$0xff] %v8451
      %8676 = vst [vmem:[%s339 + $0x2c8] sm:$0xff] %v8452
      %8677 = vst.msk [vmem:[%s339 + $0x2d0] sm:$0xff] %vm2228, %v8453
      %8678 = vst [vmem:[%s339 + $0x2d8] sm:$0xff] %v8454
      %8679 = vst [vmem:[%s339 + $0x2e0] sm:$0xff] %v8455
      %8680 = vst [vmem:[%s339 + $0x2e8] sm:$0xff] %v8456
      %8681 = vst [vmem:[%s339 + $0x2f0] sm:$0xff] %v8457
      %8682 = vst [vmem:[%s339 + $0x2f8] sm:$0xff] %v8458
      %8683 = vst [vmem:[%s339 + $0x300] sm:$0xff] %v8459
      %8684 = vst.msk [vmem:[%s339 + $0x308] sm:$0xff] %vm2228, %v8460
      %8685 = vst [vmem:[%s339 + $0x310] sm:$0xff] %v8461
      %8686 = vst [vmem:[%s339 + $0x318] sm:$0xff] %v8462
      %8687 = vst [vmem:[%s339 + $0x320] sm:$0xff] %v8463
      %8688 = vst [vmem:[%s339 + $0x328] sm:$0xff] %v8464
      %8689 = vst [vmem:[%s339 + $0x330] sm:$0xff] %v8465
      %8690 = vst [vmem:[%s339 + $0x338] sm:$0xff] %v8466
      %8691 = vst.msk [vmem:[%s339 + $0x340] sm:$0xff] %vm2228, %v8467
      %8692 = vst [vmem:[%s339 + $0x348] sm:$0xff] %v8468
      %8693 = vst [vmem:[%s339 + $0x350] sm:$0xff] %v8469
      %8694 = vst [vmem:[%s339 + $0x358] sm:$0xff] %v8470
      %8695 = vst [vmem:[%s339 + $0x360] sm:$0xff] %v8471
      %8696 = vst [vmem:[%s339 + $0x368] sm:$0xff] %v8472
      %8697 = vst [vmem:[%s339 + $0x370] sm:$0xff] %v8473
      %8698 = vst.msk [vmem:[%s339 + $0x378] sm:$0xff] %vm2228, %v8474
      %8699 = vst [vmem:[%s339 + $0x380] sm:$0xff] %v8475
      %8700 = vst [vmem:[%s339 + $0x388] sm:$0xff] %v8476
      %8701 = vst [vmem:[%s339 + $0x390] sm:$0xff] %v8477
      %8702 = vst [vmem:[%s339 + $0x398] sm:$0xff] %v8478
      %8703 = vst [vmem:[%s339 + $0x3a0] sm:$0xff] %v8479
      %8704 = vst [vmem:[%s339 + $0x3a8] sm:$0xff] %v8480
      %8705 = vst.msk [vmem:[%s339 + $0x3b0] sm:$0xff] %vm2228, %v8481
      %8706 = vst [vmem:[%s339 + $0x3b8] sm:$0xff] %v8482
      %8707 = vst [vmem:[%s339 + $0x3c0] sm:$0xff] %v8483
      %8708 = vst [vmem:[%s339 + $0x3c8] sm:$0xff] %v8484
      %8709 = vst [vmem:[%s339 + $0x3d0] sm:$0xff] %v8485
      %8710 = vst [vmem:[%s339 + $0x3d8] sm:$0xff] %v8486
      %8711 = vst [vmem:[%s339 + $0x3e0] sm:$0xff] %v8487
      %8712 = vst.msk [vmem:[%s339 + $0x3e8] sm:$0xff] %vm2228, %v8488
      %8713 = vst [vmem:[%s339 + $0x3f0] sm:$0xff] %v8489
      %8714 = vst [vmem:[%s339 + $0x3f8] sm:$0xff] %v8490
      %8715 = vst [vmem:[%s339 + $0x400] sm:$0xff] %v8491
      %8716 = vst [vmem:[%s339 + $0x408] sm:$0xff] %v8492
      %8717 = vst [vmem:[%s339 + $0x410] sm:$0xff] %v8493
      %8718 = vst [vmem:[%s339 + $0x418] sm:$0xff] %v8494
      %8719 = vst.msk [vmem:[%s339 + $0x420] sm:$0xff] %vm2228, %v8495
      %8720 = vst [vmem:[%s339 + $0x428] sm:$0xff] %v8496
      %8721 = vst [vmem:[%s339 + $0x430] sm:$0xff] %v8497
      %8722 = vst [vmem:[%s339 + $0x438] sm:$0xff] %v8498
      %8723 = vst [vmem:[%s339 + $0x440] sm:$0xff] %v8499
      %8724 = vst [vmem:[%s339 + $0x448] sm:$0xff] %v8500
      %8725 = vst [vmem:[%s339 + $0x450] sm:$0xff] %v8501
      %8726 = vst.msk [vmem:[%s339 + $0x458] sm:$0xff] %vm2228, %v8502
      %8727 = vst [vmem:[%s339 + $0x460] sm:$0xff] %v8503
      %8728 = vst [vmem:[%s339 + $0x468] sm:$0xff] %v8504
      %8729 = vst [vmem:[%s339 + $0x470] sm:$0xff] %v8505
      %8730 = vst [vmem:[%s339 + $0x478] sm:$0xff] %v8506
      %8731 = vst [vmem:[%s339 + $0x480] sm:$0xff] %v8507
      %8732 = vst [vmem:[%s339 + $0x488] sm:$0xff] %v8508
      %8733 = vst.msk [vmem:[%s339 + $0x490] sm:$0xff] %vm2228, %v8509
      %8734 = vst [vmem:[%s339 + $0x498] sm:$0xff] %v8510
      %8735 = vst [vmem:[%s339 + $0x4a0] sm:$0xff] %v8511
      %8736 = vst [vmem:[%s339 + $0x4a8] sm:$0xff] %v8512
      %8737 = vst [vmem:[%s339 + $0x4b0] sm:$0xff] %v8513
      %8738 = vst [vmem:[%s339 + $0x4b8] sm:$0xff] %v8514
      %8739 = vst [vmem:[%s339 + $0x4c0] sm:$0xff] %v8515
      %8740 = vst.msk [vmem:[%s339 + $0x4c8] sm:$0xff] %vm2228, %v8516
      %8741 = vst [vmem:[%s339 + $0x4d0] sm:$0xff] %v8517
      %8742 = vst [vmem:[%s339 + $0x4d8] sm:$0xff] %v8518
      %8743 = vst [vmem:[%s339 + $0x4e0] sm:$0xff] %v8519
      %8744 = vst [vmem:[%s339 + $0x4e8] sm:$0xff] %v8520
      %8745 = vst [vmem:[%s339 + $0x4f0] sm:$0xff] %v8521
      %8746 = vst [vmem:[%s339 + $0x4f8] sm:$0xff] %v8522
      %8747 = vst.msk [vmem:[%s339 + $0x500] sm:$0xff] %vm2228, %v8523
      %8748 = vst [vmem:[%s339 + $0x508] sm:$0xff] %v8524
      %8749 = vst [vmem:[%s339 + $0x510] sm:$0xff] %v8525
      %8750 = vst [vmem:[%s339 + $0x518] sm:$0xff] %v8526
      %8751 = vst [vmem:[%s339 + $0x520] sm:$0xff] %v8527
      %8752 = vst [vmem:[%s339 + $0x528] sm:$0xff] %v8528
      %8753 = vst [vmem:[%s339 + $0x530] sm:$0xff] %v8529
      %8754 = vst.msk [vmem:[%s339 + $0x538] sm:$0xff] %vm2228, %v8530
      %8755 = vst [vmem:[%s339 + $0x540] sm:$0xff] %v8531
      %8756 = vst [vmem:[%s339 + $0x548] sm:$0xff] %v8532
      %8757 = vst [vmem:[%s339 + $0x550] sm:$0xff] %v8533
      %8758 = vst [vmem:[%s339 + $0x558] sm:$0xff] %v8534
      %8759 = vst [vmem:[%s339 + $0x560] sm:$0xff] %v8535
      %8760 = vst [vmem:[%s339 + $0x568] sm:$0xff] %v8536
      %8761 = vst.msk [vmem:[%s339 + $0x570] sm:$0xff] %vm2228, %v8537
      %8762 = vst [vmem:[%s339 + $0x578] sm:$0xff] %v8538
      %8763 = vst [vmem:[%s339 + $0x580] sm:$0xff] %v8539
      %8764 = vst [vmem:[%s339 + $0x588] sm:$0xff] %v8540
      %8765 = vst [vmem:[%s339 + $0x590] sm:$0xff] %v8541
      %8766 = vst [vmem:[%s339 + $0x598] sm:$0xff] %v8542
      %8767 = vst [vmem:[%s339 + $0x5a0] sm:$0xff] %v8543
      %8768 = vst.msk [vmem:[%s339 + $0x5a8] sm:$0xff] %vm2228, %v8544
      %8769 = vst [vmem:[%s339 + $0x5b0] sm:$0xff] %v8545
      %8770 = vst [vmem:[%s339 + $0x5b8] sm:$0xff] %v8546
      %8771 = vst [vmem:[%s339 + $0x5c0] sm:$0xff] %v8547
      %8772 = vst [vmem:[%s339 + $0x5c8] sm:$0xff] %v8548
      %8773 = vst [vmem:[%s339 + $0x5d0] sm:$0xff] %v8549
      %8774 = vst [vmem:[%s339 + $0x5d8] sm:$0xff] %v8550
      %8775 = vst.msk [vmem:[%s339 + $0x5e0] sm:$0xff] %vm2228, %v8551
      %8776 = vst [vmem:[%s339 + $0x5e8] sm:$0xff] %v8552
      %8777 = vst [vmem:[%s339 + $0x5f0] sm:$0xff] %v8553
      %8778 = vst [vmem:[%s339 + $0x5f8] sm:$0xff] %v8554
      %8779 = vst [vmem:[%s339 + $0x600] sm:$0xff] %v8555
      %8780 = vst [vmem:[%s339 + $0x608] sm:$0xff] %v8556
      %8781 = vst [vmem:[%s339 + $0x610] sm:$0xff] %v8557
      %8782 = vst.msk [vmem:[%s339 + $0x618] sm:$0xff] %vm2228, %v8558
      %8783 = vst [vmem:[%s339 + $0x620] sm:$0xff] %v8559
      %8784 = vst [vmem:[%s339 + $0x628] sm:$0xff] %v8560
      %8785 = vst [vmem:[%s339 + $0x630] sm:$0xff] %v8561
      %8786 = vst [vmem:[%s339 + $0x638] sm:$0xff] %v8562
      %8787 = vst [vmem:[%s339 + $0x640] sm:$0xff] %v8563
      %8788 = vst [vmem:[%s339 + $0x648] sm:$0xff] %v8564
      %8789 = vst.msk [vmem:[%s339 + $0x650] sm:$0xff] %vm2228, %v8565
      %8790 = vst [vmem:[%s339 + $0x658] sm:$0xff] %v8566
      %8791 = vst [vmem:[%s339 + $0x660] sm:$0xff] %v8567
      %8792 = vst [vmem:[%s339 + $0x668] sm:$0xff] %v8568
      %8793 = vst [vmem:[%s339 + $0x670] sm:$0xff] %v8569
      %8794 = vst [vmem:[%s339 + $0x678] sm:$0xff] %v8570
      %8795 = vst [vmem:[%s339 + $0x680] sm:$0xff] %v8571
      %8796 = vst.msk [vmem:[%s339 + $0x688] sm:$0xff] %vm2228, %v8572
      %8797 = vst [vmem:[%s339 + $0x690] sm:$0xff] %v8573
      %8798 = vst [vmem:[%s339 + $0x698] sm:$0xff] %v8574
      %8799 = vst [vmem:[%s339 + $0x6a0] sm:$0xff] %v8575
      %8800 = vst [vmem:[%s339 + $0x6a8] sm:$0xff] %v8576
      %8801 = vst [vmem:[%s339 + $0x6b0] sm:$0xff] %v8577
      %8802 = vst [vmem:[%s339 + $0x6b8] sm:$0xff] %v8578
      %8803 = vst.msk [vmem:[%s339 + $0x6c0] sm:$0xff] %vm2228, %v8579
      %8804 = vst [vmem:[%s339 + $0x6c8] sm:$0xff] %v8580
      %8805 = vst [vmem:[%s339 + $0x6d0] sm:$0xff] %v8581
      %8806 = vst [vmem:[%s339 + $0x6d8] sm:$0xff] %v8582
      %8807 = vst [vmem:[%s339 + $0x6e0] sm:$0xff] %v8583
      %8808 = vst [vmem:[%s339 + $0x6e8] sm:$0xff] %v8584
      %8809 = vst [vmem:[%s339 + $0x6f0] sm:$0xff] %v8585
      %8810 = vst.msk [vmem:[%s339 + $0x6f8] sm:$0xff] %vm2228, %v8586
      %s8811 = smul.u32 32, %s20
      %p8812 = scmp.lt.s32.totalorder %s8811, 63
      %s8813 = scalar_select %p8812, %s8811, 63
      %s8814 = smul.addr %s8813, 7
      %s8815 = smul.addr %s8814, 8
      %s8816 = scalar_lea.vmem %s9, %s8815
      // Predicated region
      $region57: #{tpu_custom_call.1} parent=55 // pred_check
        %p8817 = pneg %p232
      $region58: #{tpu_custom_call.1} parent=55 // pred_check_branch
        %8819 = sbr.rel (%p8817) target = $region60
      $region59: #{tpu_custom_call.1} parent=55 // pred_region
        %s8820 = smul.u32 32, %s20
      $region60: #{tpu_custom_call.1} parent=55 // pred_fallthru
        _
    $region56: #{tpu_custom_call.1} parent=5 // pred_fallthru
      _
    %p8821 = scmp.le.s32.totalorder 2, %s15
    // Predicated region
    $region61: #{tpu_custom_call.1} parent=5 // pred_check
      %p8822 = pneg %p8821
    $region62: #{tpu_custom_call.1} parent=5 // pred_check_branch
      %8824 = sbr.rel (%p8822) target = $region64
    $region63: #{tpu_custom_call.1} parent=5 // pred_region
      %s8825 = ssub.s32 %s15, 2
      // Predicated region
      $region65: #{tpu_custom_call.1} parent=63 // pred_check
        %p8826 = pneg %p238
      $region66: #{tpu_custom_call.1} parent=63 // pred_check_branch
        %8828 = sbr.rel (%p8826) target = $region68
      $region67: #{tpu_custom_call.1} parent=63 // pred_region
        %s8829 = smul.u32 32, %s21
        %p8830 = scmp.lt.s32.totalorder %s8829, 63
        %s8831 = scalar_select %p8830, %s8829, 63
        %s8832 = smul.addr %s8831, 7
        %s8833 = smul.addr %s8832, 8
        %s8834 = scalar_lea.vmem %s9, %s8833
      $region68: #{tpu_custom_call.1} parent=63 // pred_fallthru
        _
    $region64: #{tpu_custom_call.1} parent=5 // pred_fallthru
      _
  $region6: #{tpu_custom_call.1} parent=0 // loop_footer
    %s19 = sadd.s32 1, %s15
  $region7: #{tpu_custom_call.1} parent=0 // loop_footer_branch
    %14 = sbr.rel target = $region3
  $region8: #{tpu_custom_call.1} parent=0 // loop_exit
    _

</llo_original>
